<compile_context>
chip_gen: v7x
topology: tpu7x:2x2x1
jax: 0.10.0
libtpu: 0.0.40
codegen_flags: <defaults>
</compile_context>

<pallas_src>
import functools

import jax
import jax.numpy as jnp
from jax.experimental import pallas as pl
from jax.experimental.pallas import tpu as pltpu

_LANE = 128
_HALO_W = 16          # left/right halo width of the h scratch (bf16 sublane tile)
_BN_EPS = 1e-5


def _round_up(x, m):
    return (x + m - 1) // m * m


# ----------------------------------------------------------------------------
# VMEM budgeting (per-generation, review items 8/9)
# ----------------------------------------------------------------------------
def _vmem_capacity_bytes():
    try:
        return int(pltpu.get_tpu_info().vmem_capacity_bytes)
    except Exception:
        return 64 * 1024 * 1024        # conservative: v7x per-TensorCore VMEM


def _vmem_limit_bytes():
    cap = _vmem_capacity_bytes()
    return int(min(cap * 3 // 4, 100 * 1024 * 1024))


def _step_vmem_bytes(th, H, W, Cp, Cop):
    # Rough per-grid-step working set (bf16 blocks double-buffered, f32 temps).
    wp = _round_up(W + 2, 16)
    x_block = (H + 4) * wp * Cp * 2 * 2              # full padded image, 2 bufs
    out_block = th * W * Cop * 2 * 2                 # bf16 output tile, 2 bufs
    hpad = (th + 2) * (W + 2 * _HALO_W) * Cop * 2    # h scratch
    cats = (th + 4) * W * 3 * Cp * 2 + (th + 2) * W * 3 * Cop * 2
    accs = (th + 2) * W * Cop * 4 * 3                # f32 accumulators / temps
    return x_block + out_block + hpad + cats + accs


def _pick_tile_h(H, W, Cp, Cop, vmem_budget):
    # Largest divisor of H that fits the budget; capped so each image gets at
    # least 2 row tiles once H >= 16 (more pipeline / megacore steps, bounded
    # accumulator live range).
    cap = max(8, H // 2)
    best = 1
    for th in range(1, min(H, cap) + 1):
        if H % th == 0 and _step_vmem_bytes(th, H, W, Cp, Cop) <= vmem_budget:
            best = th
    return best


# ----------------------------------------------------------------------------
# Fused kernel
# ----------------------------------------------------------------------------
def _resblock_kernel(x_ref, w1_ref, b1_ref, w2_ref, b2_ref, *rest,
                     H, W, TH, has_proj):
    # x_ref   : (1, H+4, W+2, Cp)   bf16 spatially pre-padded input (full image)
    # w1_ref  : (3, 3*Cp, Cop)      bf16 conv1 weight, BN1 scale folded, kw folded into K
    # b1_ref  : (1, Cop)            f32 folded BN1 bias
    # w2_ref  : (3, 3*Cop, Cop)     bf16 conv2 weight (BN2 scale folded, kw folded)
    # b2_ref  : (1, Cop)            f32 folded BN2 bias
    # proj    : ws_ref (Cp, Cop) bf16 (BNs scale folded), bs_ref (1, Cop) f32
    # out_ref : (1, TH, W, Cop)     bf16 output row tile
    # hpad_ref: (TH+2, W+2*_HALO_W, Cop) bf16 scratch; holds h rows [r0-1, r0+TH]
    if has_proj:
        ws_ref, bs_ref, out_ref, hpad_ref = rest
    else:
        out_ref, hpad_ref = rest

    Cp = x_ref.shape[-1]
    Cop = out_ref.shape[-1]
    t = pl.program_id(1)
    r0 = pl.multiple_of(t * TH, TH)
    LH = _HALO_W

    # Row slab of the pre-padded input covering image rows [r0-2, r0+TH+2).
    slab = x_ref[0, pl.ds(r0, TH + 4), :, :]               # (TH+4, W+2, Cp) bf16

    # ---- conv1 + BN1 + ReLU: kw taps folded into the contraction dimension ----
    xcat = jnp.concatenate(
        [slab[:, 0:W, :], slab[:, 1:W + 1, :], slab[:, 2:W + 2, :]],
        axis=-1)                                            # (TH+4, W, 3*Cp)
    h = None
    for kh in range(3):   # 3 chained MXU dots (K = 3*Cp), f32 accumulation, no
        p = xcat[kh:kh + TH + 2, :, :].reshape((TH + 2) * W, 3 * Cp)
        d = jnp.dot(p, w1_ref[kh], preferred_element_type=jnp.float32)
        h = d if h is None else h + d                       # VPU epilogue only after the loop
    h = jnp.maximum(h + b1_ref[...], 0.0)                   # folded-BN bias + ReLU

    # Stash h rows [r0-1, r0+TH] with a zero W-halo.  Only the halo columns are
    # zeroed (border-only); the interior store starts at sublane offset 16 so it
    # is an unmasked aligned store.
    zcol = jnp.zeros((TH + 2, 1, Cop), hpad_ref.dtype)
    hpad_ref[:, LH - 1:LH, :] = zcol
    hpad_ref[:, LH + W:LH + W + 1, :] = zcol
    hpad_ref[:, LH:LH + W, :] = h.astype(hpad_ref.dtype).reshape(TH + 2, W, Cop)

    zrow = jnp.zeros((1,) + hpad_ref.shape[1:], hpad_ref.dtype)

    @pl.when(t == 0)
    def _():                    # h row -1 of the image is conv2 zero padding
        hpad_ref[0:1, :, :] = zrow

    @pl.when(t == pl.num_programs(1) - 1)
    def _():                    # h row H of the image is conv2 zero padding
        hpad_ref[TH + 1:TH + 2, :, :] = zrow

    # ---- conv2 + BN2 (kw folded) over h rows [r0-1, r0+TH] ----
    hcat = jnp.concatenate(
        [hpad_ref[:, LH - 1:LH - 1 + W, :],
         hpad_ref[:, LH:LH + W, :],
         hpad_ref[:, LH + 1:LH + 1 + W, :]],
        axis=-1)                                            # (TH+2, W, 3*Cop)
    y = None
    for kh in range(3):
        p = hcat[kh:kh + TH, :, :].reshape(TH * W, 3 * Cop)
        d = jnp.dot(p, w2_ref[kh], preferred_element_type=jnp.float32)
        y = d if y is None else y + d
    y = y + b2_ref[...]

    # ---- shortcut (1x1 projection + folded BN, or identity), add, ReLU ----
    x_int = slab[2:2 + TH, 1:1 + W, :]                      # (TH, W, Cp) bf16
    if has_proj:
        sc = jnp.dot(x_int.reshape(TH * W, Cp), ws_ref[...],
                     preferred_element_type=jnp.float32) + bs_ref[...]
    else:
        sc = x_int.reshape(TH * W, Cp).astype(jnp.float32)

    out = jnp.maximum(y + sc, 0.0)
    out_ref[0] = out.reshape(TH, W, Cop).astype(out_ref.dtype)


# ----------------------------------------------------------------------------
# pallas_call wrapper (NHWC, channel/spatial padded, bf16 inputs, bf16 output)
# ----------------------------------------------------------------------------
def _fused_resblock(x, w1f, b1, w2f, b2, proj, tile_h):
    N, Hp4, Wp2, Cp = x.shape
    H, W = Hp4 - 4, Wp2 - 2
    Cop = w1f.shape[-1]
    has_proj = proj is not None
    T = H // tile_h

    inputs = [x, w1f, b1, w2f, b2]
    if has_proj:
        inputs += list(proj)

    kern = functools.partial(_resblock_kernel, H=H, W=W, TH=tile_h,
                             has_proj=has_proj)

    def build(weight_mode):
        def const_spec(shape):
            idx = lambda n, t: (0,) * len(shape)
            if weight_mode is None:
                return pl.BlockSpec(shape, idx)
            return pl.BlockSpec(shape, idx, pipeline_mode=weight_mode)

        in_specs = [
            # full padded image; block index constant over t, so it is only
            # (re-)DMA'd when the batch index changes.
            pl.BlockSpec((1, Hp4, Wp2, Cp), lambda n, t: (n, 0, 0, 0)),
            const_spec((3, 3 * Cp, Cop)),
            const_spec((1, Cop)),
            const_spec((3, 3 * Cop, Cop)),
            const_spec((1, Cop)),
        ]
        if has_proj:
            in_specs += [const_spec((Cp, Cop)), const_spec((1, Cop))]

        return pl.pallas_call(
            kern,
            out_shape=jax.ShapeDtypeStruct((N, H, W, Cop), jnp.bfloat16),
            grid_spec=pltpu.PrefetchScalarGridSpec(
                num_scalar_prefetch=0,
                grid=(N, T),
                in_specs=in_specs,
                out_specs=pl.BlockSpec((1, tile_h, W, Cop),
                                       lambda n, t: (n, t, 0, 0)),
                scratch_shapes=[
                    pltpu.VMEM((tile_h + 2, W + 2 * _HALO_W, Cop), jnp.bfloat16),
                ]),
            compiler_params=pltpu.CompilerParams(
                dimension_semantics=("parallel", "parallel"),
                vmem_limit_bytes=_vmem_limit_bytes()),
        )(*inputs)

    try:
        # Constant-index weights/biases: single buffer (double-buffering them is
        # pure VMEM waste at wide-channel layers).
        return build(pl.Buffered(1))
    except Exception:
        # Fallback for jax versions without pipeline_mode / Buffered(1) support.
        return build(None)


# ----------------------------------------------------------------------------
# ResBlock: params + host-side weight folding + forward
# ----------------------------------------------------------------------------
def _bn_fold(key, c):
    k1, k2, k3, k4 = jax.random.split(key, 4)
    gamma = 1.0 + 0.1 * jax.random.normal(k1, (c,), jnp.float32)
    beta = 0.1 * jax.random.normal(k2, (c,), jnp.float32)
    mean = 0.1 * jax.random.normal(k3, (c,), jnp.float32)
    var = jnp.abs(jax.random.normal(k4, (c,), jnp.float32)) + 0.5
    scale = gamma / jnp.sqrt(var + _BN_EPS)
    bias = beta - mean * scale
    return scale, bias


def init_resblock_params(key, inplanes, outchannel, stride=1):
    ks = jax.random.split(key, 6)
    p = {
        "w1": 0.1 * jax.random.normal(ks[0], (3, 3, inplanes, outchannel), jnp.float32),
        "bn1": _bn_fold(ks[1], outchannel),
        "w2": 0.1 * jax.random.normal(ks[2], (3, 3, outchannel, outchannel), jnp.float32),
        "bn2": _bn_fold(ks[3], outchannel),
    }
    if stride != 1 or inplanes != outchannel:
        p["ws"] = 0.1 * jax.random.normal(ks[4], (inplanes, outchannel), jnp.float32)
        p["bns"] = _bn_fold(ks[5], outchannel)
    return p


def _fold_conv3x3(w, scale, cip, cop):
    # (3,3,Ci,Co) HWIO: fold BN scale into output channels (in f32, before the
    # bf16 cast), zero-pad channels to full lanes, fold kw into the K dim.
    w = w.astype(jnp.float32) * scale.astype(jnp.float32)
    w = jnp.pad(w, ((0, 0), (0, 0),
                    (0, cip - w.shape[2]), (0, cop - w.shape[3])))
    return w.reshape(3, 3 * cip, cop).astype(jnp.bfloat16)


def _fold_proj(w, scale, cip, cop):
    w = w.astype(jnp.float32) * scale.astype(jnp.float32)
    w = jnp.pad(w, ((0, cip - w.shape[0]), (0, cop - w.shape[1])))
    return w.astype(jnp.bfloat16)


def _pad_bias(b, cop):
    return jnp.pad(b.astype(jnp.float32), (0, cop - b.shape[0])).reshape(1, cop)


def resblock_forward_nhwc(x_nhwc, params, stride=1):
    # TODO(synk): stride > 1 would subsample the tap slices / shortcut;
    # only the stride=1 configuration of ResBlock is implemented.
    assert stride == 1, "only stride=1 implemented"
    N, H, W, Cin = x_nhwc.shape
    Cout = params["w1"].shape[-1]
    assert params["w1"].shape[-2] == Cin
    Cp = _round_up(Cin, _LANE)
    Cop = _round_up(Cout, _LANE)
    has_proj = "ws" in params
    if not has_proj:
        assert Cp == Cop, "identity shortcut requires matching channel padding"

    # One pad op: spatial halo (2 rows / 1 col each side) + channel pad to full
    # 128 lanes + bf16 cast.  The channel pad already forces a copy, so the
    # spatial halo adds no extra HBM traffic.
    x = jnp.pad(x_nhwc.astype(jnp.bfloat16),
                ((0, 0), (2, 2), (1, 1), (0, Cp - Cin)))

    s1, b1 = params["bn1"]
    s2, b2 = params["bn2"]
    w1f = _fold_conv3x3(params["w1"], s1, Cp, Cop)
    w2f = _fold_conv3x3(params["w2"], s2, Cop, Cop)
    b1p = _pad_bias(b1, Cop)
    b2p = _pad_bias(b2, Cop)
    proj = None
    if has_proj:
        ss, bs = params["bns"]
        proj = (_fold_proj(params["ws"], ss, Cp, Cop), _pad_bias(bs, Cop))

    tile_h = _pick_tile_h(H, W, Cp, Cop, _vmem_capacity_bytes() // 2)
    out = _fused_resblock(x, w1f, b1p, w2f, b2p, proj, tile_h)
    # TODO(synk): in a full network keep the padded Cop (and bf16) through the
    # next block and slice once at the end instead of per block.
    return out[..., :Cout]


def resblock_forward(x_nchw, params, stride=1):
    # NCHW <-> NHWC only at the PyTorch-facing boundary; in a full network this
    # transpose should be done once, not per block.  Output stays bf16 (the
    # next block would cast to bf16 at entry anyway).
    x = jnp.transpose(x_nchw, (0, 2, 3, 1))
    out = resblock_forward_nhwc(x, params, stride=stride)
    return jnp.transpose(out, (0, 3, 1, 2))


# ----------------------------------------------------------------------------
# Pure-JAX reference (mirrors the kernel's quantization: bf16 activations and
# BN-scale-folded bf16 weights, f32 accumulation).
# ----------------------------------------------------------------------------
def resblock_ref(x_nchw, params):
    f32 = jnp.float32

    def q(a):
        return a.astype(jnp.bfloat16).astype(f32)

    x = q(jnp.transpose(x_nchw, (0, 2, 3, 1)))
    s1, b1 = params["bn1"]
    s2, b2 = params["bn2"]

    def conv3(v, w, s):
        return jax.lax.conv_general_dilated(
            v, q(w * s), (1, 1), [(1, 1), (1, 1)],
            dimension_numbers=("NHWC", "HWIO", "NHWC"),
            precision=jax.lax.Precision.HIGHEST)

    h = jax.nn.relu(conv3(x, params["w1"], s1) + b1)
    h = q(h)
    y = conv3(h, params["w2"], s2) + b2
    if "ws" in params:
        ss, bs = params["bns"]
        sc = jnp.einsum("nhwc,cd->nhwd", x, q(params["ws"] * ss),
                        precision=jax.lax.Precision.HIGHEST) + bs
    else:
        sc = x
    out = jax.nn.relu(y + sc)
    return jnp.transpose(out, (0, 3, 1, 2))


# ----------------------------------------------------------------------------
if __name__ == "__main__":
    key = jax.random.PRNGKey(0)
    kx1, kp1, kx2, kp2 = jax.random.split(key, 4)

    # Config 1: projection shortcut active (inplanes != outchannel).
    N, INPLANES, OUTCHANNEL, H, W = 2, 4, 8, 16, 16
    x1 = jax.random.normal(kx1, (N, INPLANES, H, W), jnp.float32)   # NCHW
    p1 = init_resblock_params(kp1, INPLANES, OUTCHANNEL, stride=1)
    out1 = jax.block_until_ready(resblock_forward(x1, p1))
    ref1 = jax.block_until_ready(resblock_ref(x1, p1))
    assert out1.shape == (N, OUTCHANNEL, H, W)
    # bf16 output -> tolerance covers bf16 rounding of the result.
    assert jnp.allclose(out1.astype(jnp.float32), ref1, atol=2e-2, rtol=2e-2), \
        "mismatch (projection)"

    # Config 2: identity shortcut (inplanes == outchannel).
    x2 = jax.random.normal(kx2, (N, OUTCHANNEL, H, W), jnp.float32)
    p2 = init_resblock_params(kp2, OUTCHANNEL, OUTCHANNEL, stride=1)
    out2 = jax.block_until_ready(resblock_forward(x2, p2))
    ref2 = jax.block_until_ready(resblock_ref(x2, p2))
    assert out2.shape == (N, OUTCHANNEL, H, W)
    assert jnp.allclose(out2.astype(jnp.float32), ref2, atol=2e-2, rtol=2e-2), \
        "mismatch (identity)"

    print("KERNEL_OK")
</pallas_src>

<mosaic_0001>
module attributes {stable_mosaic.version = 11 : i64} {
  func.func @_resblock_kernel(%arg0: i32, %arg1: i32, %arg2: memref<1x20x18x128xbf16, #tpu.memory_space<vmem>>, %arg3: memref<3x384x128xbf16, #tpu.memory_space<vmem>>, %arg4: memref<1x128xf32, #tpu.memory_space<vmem>>, %arg5: memref<3x384x128xbf16, #tpu.memory_space<vmem>>, %arg6: memref<1x128xf32, #tpu.memory_space<vmem>>, %arg7: memref<128x128xbf16, #tpu.memory_space<vmem>>, %arg8: memref<1x128xf32, #tpu.memory_space<vmem>>, %arg9: memref<1x8x16x128xbf16, #tpu.memory_space<vmem>>, %arg10: memref<10x48x128xbf16, #tpu.memory_space<vmem>>) attributes {dimension_semantics = [#tpu.dimension_semantics<parallel>, #tpu.dimension_semantics<parallel>], iteration_bounds = array<i64: 2, 2>, scalar_prefetch = 0 : i64, scratch_operands = 1 : i64, tpu.core_type = #tpu.core_type<tc>, window_params = [{transform_indices = @transform_0, window_bounds = array<i64: 1, 20, 18, 128>}, {pipeline_mode = #tpu.pipeline_mode<synchronous>, transform_indices = @transform_1, window_bounds = array<i64: 3, 384, 128>}, {pipeline_mode = #tpu.pipeline_mode<synchronous>, transform_indices = @transform_2, window_bounds = array<i64: 1, 128>}, {pipeline_mode = #tpu.pipeline_mode<synchronous>, transform_indices = @transform_3, window_bounds = array<i64: 3, 384, 128>}, {pipeline_mode = #tpu.pipeline_mode<synchronous>, transform_indices = @transform_4, window_bounds = array<i64: 1, 128>}, {pipeline_mode = #tpu.pipeline_mode<synchronous>, transform_indices = @transform_5, window_bounds = array<i64: 128, 128>}, {pipeline_mode = #tpu.pipeline_mode<synchronous>, transform_indices = @transform_6, window_bounds = array<i64: 1, 128>}, {transform_indices = @transform_7, window_bounds = array<i64: 1, 8, 16, 128>}]} {
    %c8_i32 = arith.constant 8 : i32
    %0 = arith.muli %arg1, %c8_i32 : i32
    %1 = tpu.assume_multiple %0, 8 : i32
    %c0 = arith.constant 0 : index
    %2 = arith.index_cast %1 : i32 to index
    %c0_0 = arith.constant 0 : index
    %c0_1 = arith.constant 0 : index
    %3 = vector.load %arg2[%c0, %2, %c0_0, %c0_1] : memref<1x20x18x128xbf16, #tpu.memory_space<vmem>>, vector<1x12x18x128xbf16>
    %4 = vector.shape_cast %3 : vector<1x12x18x128xbf16> to vector<12x18x128xbf16>
    %5 = vector.extract_strided_slice %4 {offsets = [0, 0, 0], sizes = [12, 16, 128], strides = [1, 1, 1]} : vector<12x18x128xbf16> to vector<12x16x128xbf16>
    %6 = vector.extract_strided_slice %4 {offsets = [0, 1, 0], sizes = [12, 16, 128], strides = [1, 1, 1]} : vector<12x18x128xbf16> to vector<12x16x128xbf16>
    %7 = vector.extract_strided_slice %4 {offsets = [0, 2, 0], sizes = [12, 16, 128], strides = [1, 1, 1]} : vector<12x18x128xbf16> to vector<12x16x128xbf16>
    %8 = tpu.concatenate %5, %6, %7 in 2 : vector<12x16x128xbf16>, vector<12x16x128xbf16>, vector<12x16x128xbf16> -> vector<12x16x384xbf16>
    %9 = vector.extract_strided_slice %8 {offsets = [0, 0, 0], sizes = [10, 16, 384], strides = [1, 1, 1]} : vector<12x16x384xbf16> to vector<10x16x384xbf16>
    %10 = vector.shape_cast %9 : vector<10x16x384xbf16> to vector<160x384xbf16>
    %c0_2 = arith.constant 0 : index
    %c0_3 = arith.constant 0 : index
    %c0_4 = arith.constant 0 : index
    %11 = vector.load %arg3[%c0_2, %c0_3, %c0_4] : memref<3x384x128xbf16, #tpu.memory_space<vmem>>, vector<1x384x128xbf16>
    %12 = vector.shape_cast %11 : vector<1x384x128xbf16> to vector<384x128xbf16>
    %cst = arith.constant dense<0.000000e+00> : vector<160x128xf32>
    %13 = tpu.matmul %10, %12, %cst {dimension_numbers = #tpu.dot_dimension_numbers<[1], [0], [0], [1], [0, 0, 1, 1], [], []>} : vector<160x384xbf16>, vector<384x128xbf16>, vector<160x128xf32> -> vector<160x128xf32>
    %14 = vector.extract_strided_slice %8 {offsets = [1, 0, 0], sizes = [10, 16, 384], strides = [1, 1, 1]} : vector<12x16x384xbf16> to vector<10x16x384xbf16>
    %15 = vector.shape_cast %14 : vector<10x16x384xbf16> to vector<160x384xbf16>
    %c1 = arith.constant 1 : index
    %c0_5 = arith.constant 0 : index
    %c0_6 = arith.constant 0 : index
    %16 = vector.load %arg3[%c1, %c0_5, %c0_6] : memref<3x384x128xbf16, #tpu.memory_space<vmem>>, vector<1x384x128xbf16>
    %17 = vector.shape_cast %16 : vector<1x384x128xbf16> to vector<384x128xbf16>
    %cst_7 = arith.constant dense<0.000000e+00> : vector<160x128xf32>
    %18 = tpu.matmul %15, %17, %cst_7 {dimension_numbers = #tpu.dot_dimension_numbers<[1], [0], [0], [1], [0, 0, 1, 1], [], []>} : vector<160x384xbf16>, vector<384x128xbf16>, vector<160x128xf32> -> vector<160x128xf32>
    %19 = arith.addf %13, %18 : vector<160x128xf32>
    %20 = vector.extract_strided_slice %8 {offsets = [2, 0, 0], sizes = [10, 16, 384], strides = [1, 1, 1]} : vector<12x16x384xbf16> to vector<10x16x384xbf16>
    %21 = vector.shape_cast %20 : vector<10x16x384xbf16> to vector<160x384xbf16>
    %c2 = arith.constant 2 : index
    %c0_8 = arith.constant 0 : index
    %c0_9 = arith.constant 0 : index
    %22 = vector.load %arg3[%c2, %c0_8, %c0_9] : memref<3x384x128xbf16, #tpu.memory_space<vmem>>, vector<1x384x128xbf16>
    %23 = vector.shape_cast %22 : vector<1x384x128xbf16> to vector<384x128xbf16>
    %cst_10 = arith.constant dense<0.000000e+00> : vector<160x128xf32>
    %24 = tpu.matmul %21, %23, %cst_10 {dimension_numbers = #tpu.dot_dimension_numbers<[1], [0], [0], [1], [0, 0, 1, 1], [], []>} : vector<160x384xbf16>, vector<384x128xbf16>, vector<160x128xf32> -> vector<160x128xf32>
    %25 = arith.addf %19, %24 : vector<160x128xf32>
    %c0_11 = arith.constant 0 : index
    %c0_12 = arith.constant 0 : index
    %26 = vector.load %arg4[%c0_11, %c0_12] : memref<1x128xf32, #tpu.memory_space<vmem>>, vector<1x128xf32>
    %27 = vector.broadcast %26 : vector<1x128xf32> to vector<160x128xf32>
    %28 = arith.addf %25, %27 : vector<160x128xf32>
    %cst_13 = arith.constant 0.000000e+00 : f32
    %29 = vector.broadcast %cst_13 : f32 to vector<160x128xf32>
    %30 = arith.maximumf %28, %29 : vector<160x128xf32>
    %cst_14 = arith.constant 0.000000e+00 : bf16
    %31 = vector.broadcast %cst_14 : bf16 to vector<10x1x128xbf16>
    %c0_15 = arith.constant 0 : index
    %c15 = arith.constant 15 : index
    %c0_16 = arith.constant 0 : index
    %32 = vector.load %arg10[%c0_15, %c15, %c0_16] : memref<10x48x128xbf16, #tpu.memory_space<vmem>>, vector<10x1x128xbf16>
    tpu.vector_store %arg10[%c0_15, %c15, %c0_16], %31 {strides = array<i32>} : memref<10x48x128xbf16, #tpu.memory_space<vmem>>, vector<10x1x128xbf16>,
    %c0_17 = arith.constant 0 : index
    %c32 = arith.constant 32 : index
    %c0_18 = arith.constant 0 : index
    %33 = vector.load %arg10[%c0_17, %c32, %c0_18] : memref<10x48x128xbf16, #tpu.memory_space<vmem>>, vector<10x1x128xbf16>
    tpu.vector_store %arg10[%c0_17, %c32, %c0_18], %31 {strides = array<i32>} : memref<10x48x128xbf16, #tpu.memory_space<vmem>>, vector<10x1x128xbf16>,
    %34 = arith.truncf %30 : vector<160x128xf32> to vector<160x128xbf16>
    %35 = vector.shape_cast %34 : vector<160x128xbf16> to vector<10x16x128xbf16>
    %c0_19 = arith.constant 0 : index
    %c16 = arith.constant 16 : index
    %c0_20 = arith.constant 0 : index
    %36 = vector.load %arg10[%c0_19, %c16, %c0_20] : memref<10x48x128xbf16, #tpu.memory_space<vmem>>, vector<10x16x128xbf16>
    tpu.vector_store %arg10[%c0_19, %c16, %c0_20], %35 {strides = array<i32>} : memref<10x48x128xbf16, #tpu.memory_space<vmem>>, vector<10x16x128xbf16>,
    %cst_21 = arith.constant 0.000000e+00 : bf16
    %37 = vector.broadcast %cst_21 : bf16 to vector<1x48x128xbf16>
    %c0_i32 = arith.constant 0 : i32
    %38 = arith.cmpi eq, %arg1, %c0_i32 : i32
    %39 = arith.extui %38 : i1 to i32
    %c0_i32_22 = arith.constant 0 : i32
    %40 = arith.cmpi ne, %39, %c0_i32_22 : i32
    scf.if %40 {
      %c0_56 = arith.constant 0 : index
      %c0_57 = arith.constant 0 : index
      %c0_58 = arith.constant 0 : index
      %83 = vector.load %arg10[%c0_56, %c0_57, %c0_58] : memref<10x48x128xbf16, #tpu.memory_space<vmem>>, vector<1x48x128xbf16>
      tpu.vector_store %arg10[%c0_56, %c0_57, %c0_58], %37 {strides = array<i32>} : memref<10x48x128xbf16, #tpu.memory_space<vmem>>, vector<1x48x128xbf16>,
    } else {
    }
    %c1_i32 = arith.constant 1 : i32
    %41 = arith.cmpi eq, %arg1, %c1_i32 : i32
    %42 = arith.extui %41 : i1 to i32
    %c0_i32_23 = arith.constant 0 : i32
    %43 = arith.cmpi ne, %42, %c0_i32_23 : i32
    scf.if %43 {
      %c9 = arith.constant 9 : index
      %c0_56 = arith.constant 0 : index
      %c0_57 = arith.constant 0 : index
      %83 = vector.load %arg10[%c9, %c0_56, %c0_57] : memref<10x48x128xbf16, #tpu.memory_space<vmem>>, vector<1x48x128xbf16>
      tpu.vector_store %arg10[%c9, %c0_56, %c0_57], %37 {strides = array<i32>} : memref<10x48x128xbf16, #tpu.memory_space<vmem>>, vector<1x48x128xbf16>,
    } else {
    }
    %c0_24 = arith.constant 0 : index
    %c15_25 = arith.constant 15 : index
    %c0_26 = arith.constant 0 : index
    %44 = vector.load %arg10[%c0_24, %c15_25, %c0_26] : memref<10x48x128xbf16, #tpu.memory_space<vmem>>, vector<10x16x128xbf16>
    %c0_27 = arith.constant 0 : index
    %c16_28 = arith.constant 16 : index
    %c0_29 = arith.constant 0 : index
    %45 = vector.load %arg10[%c0_27, %c16_28, %c0_29] : memref<10x48x128xbf16, #tpu.memory_space<vmem>>, vector<10x16x128xbf16>
    %c0_30 = arith.constant 0 : index
    %c17 = arith.constant 17 : index
    %c0_31 = arith.constant 0 : index
    %46 = vector.load %arg10[%c0_30, %c17, %c0_31] : memref<10x48x128xbf16, #tpu.memory_space<vmem>>, vector<10x16x128xbf16>
    %47 = tpu.concatenate %44, %45, %46 in 2 : vector<10x16x128xbf16>, vector<10x16x128xbf16>, vector<10x16x128xbf16> -> vector<10x16x384xbf16>
    %48 = vector.extract_strided_slice %47 {offsets = [0, 0, 0], sizes = [8, 16, 384], strides = [1, 1, 1]} : vector<10x16x384xbf16> to vector<8x16x384xbf16>
    %49 = vector.shape_cast %48 : vector<8x16x384xbf16> to vector<128x384xbf16>
    %c0_32 = arith.constant 0 : index
    %c0_33 = arith.constant 0 : index
    %c0_34 = arith.constant 0 : index
    %50 = vector.load %arg5[%c0_32, %c0_33, %c0_34] : memref<3x384x128xbf16, #tpu.memory_space<vmem>>, vector<1x384x128xbf16>
    %51 = vector.shape_cast %50 : vector<1x384x128xbf16> to vector<384x128xbf16>
    %cst_35 = arith.constant dense<0.000000e+00> : vector<128x128xf32>
    %52 = tpu.matmul %49, %51, %cst_35 {dimension_numbers = #tpu.dot_dimension_numbers<[1], [0], [0], [1], [0, 0, 1, 1], [], []>} : vector<128x384xbf16>, vector<384x128xbf16>, vector<128x128xf32> -> vector<128x128xf32>
    %53 = vector.extract_strided_slice %47 {offsets = [1, 0, 0], sizes = [8, 16, 384], strides = [1, 1, 1]} : vector<10x16x384xbf16> to vector<8x16x384xbf16>
    %54 = vector.shape_cast %53 : vector<8x16x384xbf16> to vector<128x384xbf16>
    %c1_36 = arith.constant 1 : index
    %c0_37 = arith.constant 0 : index
    %c0_38 = arith.constant 0 : index
    %55 = vector.load %arg5[%c1_36, %c0_37, %c0_38] : memref<3x384x128xbf16, #tpu.memory_space<vmem>>, vector<1x384x128xbf16>
    %56 = vector.shape_cast %55 : vector<1x384x128xbf16> to vector<384x128xbf16>
    %cst_39 = arith.constant dense<0.000000e+00> : vector<128x128xf32>
    %57 = tpu.matmul %54, %56, %cst_39 {dimension_numbers = #tpu.dot_dimension_numbers<[1], [0], [0], [1], [0, 0, 1, 1], [], []>} : vector<128x384xbf16>, vector<384x128xbf16>, vector<128x128xf32> -> vector<128x128xf32>
    %58 = arith.addf %52, %57 : vector<128x128xf32>
    %59 = vector.extract_strided_slice %47 {offsets = [2, 0, 0], sizes = [8, 16, 384], strides = [1, 1, 1]} : vector<10x16x384xbf16> to vector<8x16x384xbf16>
    %60 = vector.shape_cast %59 : vector<8x16x384xbf16> to vector<128x384xbf16>
    %c2_40 = arith.constant 2 : index
    %c0_41 = arith.constant 0 : index
    %c0_42 = arith.constant 0 : index
    %61 = vector.load %arg5[%c2_40, %c0_41, %c0_42] : memref<3x384x128xbf16, #tpu.memory_space<vmem>>, vector<1x384x128xbf16>
    %62 = vector.shape_cast %61 : vector<1x384x128xbf16> to vector<384x128xbf16>
    %cst_43 = arith.constant dense<0.000000e+00> : vector<128x128xf32>
    %63 = tpu.matmul %60, %62, %cst_43 {dimension_numbers = #tpu.dot_dimension_numbers<[1], [0], [0], [1], [0, 0, 1, 1], [], []>} : vector<128x384xbf16>, vector<384x128xbf16>, vector<128x128xf32> -> vector<128x128xf32>
    %64 = arith.addf %58, %63 : vector<128x128xf32>
    %c0_44 = arith.constant 0 : index
    %c0_45 = arith.constant 0 : index
    %65 = vector.load %arg6[%c0_44, %c0_45] : memref<1x128xf32, #tpu.memory_space<vmem>>, vector<1x128xf32>
    %66 = vector.broadcast %65 : vector<1x128xf32> to vector<128x128xf32>
    %67 = arith.addf %64, %66 : vector<128x128xf32>
    %68 = vector.extract_strided_slice %4 {offsets = [2, 1, 0], sizes = [8, 16, 128], strides = [1, 1, 1]} : vector<12x18x128xbf16> to vector<8x16x128xbf16>
    %69 = vector.shape_cast %68 : vector<8x16x128xbf16> to vector<128x128xbf16>
    %c0_46 = arith.constant 0 : index
    %c0_47 = arith.constant 0 : index
    %70 = vector.load %arg7[%c0_46, %c0_47] : memref<128x128xbf16, #tpu.memory_space<vmem>>, vector<128x128xbf16>
    %cst_48 = arith.constant dense<0.000000e+00> : vector<128x128xf32>
    %71 = tpu.matmul %69, %70, %cst_48 {dimension_numbers = #tpu.dot_dimension_numbers<[1], [0], [0], [1], [0, 0, 1, 1], [], []>} : vector<128x128xbf16>, vector<128x128xbf16>, vector<128x128xf32> -> vector<128x128xf32>
    %c0_49 = arith.constant 0 : index
    %c0_50 = arith.constant 0 : index
    %72 = vector.load %arg8[%c0_49, %c0_50] : memref<1x128xf32, #tpu.memory_space<vmem>>, vector<1x128xf32>
    %73 = vector.broadcast %72 : vector<1x128xf32> to vector<128x128xf32>
    %74 = arith.addf %71, %73 : vector<128x128xf32>
    %75 = arith.addf %67, %74 : vector<128x128xf32>
    %cst_51 = arith.constant 0.000000e+00 : f32
    %76 = vector.broadcast %cst_51 : f32 to vector<128x128xf32>
    %77 = arith.maximumf %75, %76 : vector<128x128xf32>
    %78 = vector.shape_cast %77 : vector<128x128xf32> to vector<8x16x128xf32>
    %79 = arith.truncf %78 : vector<8x16x128xf32> to vector<8x16x128xbf16>
    %c0_52 = arith.constant 0 : index
    %c0_53 = arith.constant 0 : index
    %c0_54 = arith.constant 0 : index
    %c0_55 = arith.constant 0 : index
    %80 = vector.load %arg9[%c0_52, %c0_53, %c0_54, %c0_55] : memref<1x8x16x128xbf16, #tpu.memory_space<vmem>>, vector<1x8x16x128xbf16>
    %81 = vector.shape_cast %80 : vector<1x8x16x128xbf16> to vector<8x16x128xbf16>
    %82 = vector.shape_cast %79 : vector<8x16x128xbf16> to vector<1x8x16x128xbf16>
    tpu.vector_store %arg9[%c0_52, %c0_53, %c0_54, %c0_55], %82 {strides = array<i32>} : memref<1x8x16x128xbf16, #tpu.memory_space<vmem>>, vector<1x8x16x128xbf16>,
    return
  }
  func.func @transform_0(%arg0: i32, %arg1: i32) -> (i32, i32, i32, i32) {
    %c0_i32 = arith.constant 0 : i32
    %c0_i32_0 = arith.constant 0 : i32
    %c0_i32_1 = arith.constant 0 : i32
    %c0_i32_2 = arith.constant 0 : i32
    return %arg0, %c0_i32, %c0_i32_0, %c0_i32_1 : i32, i32, i32, i32
  }
  func.func @transform_1(%arg0: i32, %arg1: i32) -> (i32, i32, i32) {
    %c0_i32 = arith.constant 0 : i32
    %c0_i32_0 = arith.constant 0 : i32
    %c0_i32_1 = arith.constant 0 : i32
    %c0_i32_2 = arith.constant 0 : i32
    return %c0_i32, %c0_i32_0, %c0_i32_1 : i32, i32, i32
  }
  func.func @transform_2(%arg0: i32, %arg1: i32) -> (i32, i32) {
    %c0_i32 = arith.constant 0 : i32
    %c0_i32_0 = arith.constant 0 : i32
    %c0_i32_1 = arith.constant 0 : i32
    return %c0_i32, %c0_i32_0 : i32, i32
  }
  func.func @transform_3(%arg0: i32, %arg1: i32) -> (i32, i32, i32) {
    %c0_i32 = arith.constant 0 : i32
    %c0_i32_0 = arith.constant 0 : i32
    %c0_i32_1 = arith.constant 0 : i32
    %c0_i32_2 = arith.constant 0 : i32
    return %c0_i32, %c0_i32_0, %c0_i32_1 : i32, i32, i32
  }
  func.func @transform_4(%arg0: i32, %arg1: i32) -> (i32, i32) {
    %c0_i32 = arith.constant 0 : i32
    %c0_i32_0 = arith.constant 0 : i32
    %c0_i32_1 = arith.constant 0 : i32
    return %c0_i32, %c0_i32_0 : i32, i32
  }
  func.func @transform_5(%arg0: i32, %arg1: i32) -> (i32, i32) {
    %c0_i32 = arith.constant 0 : i32
    %c0_i32_0 = arith.constant 0 : i32
    %c0_i32_1 = arith.constant 0 : i32
    return %c0_i32, %c0_i32_0 : i32, i32
  }
  func.func @transform_6(%arg0: i32, %arg1: i32) -> (i32, i32) {
    %c0_i32 = arith.constant 0 : i32
    %c0_i32_0 = arith.constant 0 : i32
    %c0_i32_1 = arith.constant 0 : i32
    return %c0_i32, %c0_i32_0 : i32, i32
  }
  func.func @transform_7(%arg0: i32, %arg1: i32) -> (i32, i32, i32, i32) {
    %c0_i32 = arith.constant 0 : i32
    %c0_i32_0 = arith.constant 0 : i32
    %c0_i32_1 = arith.constant 0 : i32
    return %arg0, %arg1, %c0_i32, %c0_i32_0 : i32, i32, i32, i32
  }
}

module attributes {stable_mosaic.version = 11 : i64} {
  func.func @_resblock_kernel(%arg0: i32, %arg1: i32, %arg2: memref<1x20x18x128xbf16, #tpu.memory_space<vmem>>, %arg3: memref<3x384x128xbf16, #tpu.memory_space<vmem>>, %arg4: memref<1x128xf32, #tpu.memory_space<vmem>>, %arg5: memref<3x384x128xbf16, #tpu.memory_space<vmem>>, %arg6: memref<1x128xf32, #tpu.memory_space<vmem>>, %arg7: memref<128x128xbf16, #tpu.memory_space<vmem>>, %arg8: memref<1x128xf32, #tpu.memory_space<vmem>>, %arg9: memref<1x8x16x128xbf16, #tpu.memory_space<vmem>>, %arg10: memref<10x48x128xbf16, #tpu.memory_space<vmem>>) attributes {dimension_semantics = [#tpu.dimension_semantics<parallel>, #tpu.dimension_semantics<parallel>], iteration_bounds = array<i64: 2, 2>, scalar_prefetch = 0 : i64, scratch_operands = 1 : i64, tpu.core_type = #tpu.core_type<tc>, window_params = [{transform_indices = @transform_0, window_bounds = array<i64: 1, 20, 18, 128>}, {pipeline_mode = #tpu.pipeline_mode<synchronous>, transform_indices = @transform_1, window_bounds = array<i64: 3, 384, 128>}, {pipeline_mode = #tpu.pipeline_mode<synchronous>, transform_indices = @transform_2, window_bounds = array<i64: 1, 128>}, {pipeline_mode = #tpu.pipeline_mode<synchronous>, transform_indices = @transform_3, window_bounds = array<i64: 3, 384, 128>}, {pipeline_mode = #tpu.pipeline_mode<synchronous>, transform_indices = @transform_4, window_bounds = array<i64: 1, 128>}, {pipeline_mode = #tpu.pipeline_mode<synchronous>, transform_indices = @transform_5, window_bounds = array<i64: 128, 128>}, {pipeline_mode = #tpu.pipeline_mode<synchronous>, transform_indices = @transform_6, window_bounds = array<i64: 1, 128>}, {transform_indices = @transform_7, window_bounds = array<i64: 1, 8, 16, 128>}]} {
    %c8_i32 = arith.constant 8 : i32
    %0 = arith.muli %arg1, %c8_i32 : i32
    %1 = tpu.assume_multiple %0, 8 : i32
    %c0 = arith.constant 0 : index
    %2 = arith.index_cast %1 : i32 to index
    %c0_0 = arith.constant 0 : index
    %c0_1 = arith.constant 0 : index
    %3 = vector.load %arg2[%c0, %2, %c0_0, %c0_1] : memref<1x20x18x128xbf16, #tpu.memory_space<vmem>>, vector<1x12x18x128xbf16>
    %4 = vector.shape_cast %3 : vector<1x12x18x128xbf16> to vector<12x18x128xbf16>
    %5 = vector.extract_strided_slice %4 {offsets = [0, 0, 0], sizes = [12, 16, 128], strides = [1, 1, 1]} : vector<12x18x128xbf16> to vector<12x16x128xbf16>
    %6 = vector.extract_strided_slice %4 {offsets = [0, 1, 0], sizes = [12, 16, 128], strides = [1, 1, 1]} : vector<12x18x128xbf16> to vector<12x16x128xbf16>
    %7 = vector.extract_strided_slice %4 {offsets = [0, 2, 0], sizes = [12, 16, 128], strides = [1, 1, 1]} : vector<12x18x128xbf16> to vector<12x16x128xbf16>
    %8 = tpu.concatenate %5, %6, %7 in 2 : vector<12x16x128xbf16>, vector<12x16x128xbf16>, vector<12x16x128xbf16> -> vector<12x16x384xbf16>
    %9 = vector.extract_strided_slice %8 {offsets = [0, 0, 0], sizes = [10, 16, 384], strides = [1, 1, 1]} : vector<12x16x384xbf16> to vector<10x16x384xbf16>
    %10 = vector.shape_cast %9 : vector<10x16x384xbf16> to vector<160x384xbf16>
    %c0_2 = arith.constant 0 : index
    %c0_3 = arith.constant 0 : index
    %c0_4 = arith.constant 0 : index
    %11 = vector.load %arg3[%c0_2, %c0_3, %c0_4] : memref<3x384x128xbf16, #tpu.memory_space<vmem>>, vector<1x384x128xbf16>
    %12 = vector.shape_cast %11 : vector<1x384x128xbf16> to vector<384x128xbf16>
    %cst = arith.constant dense<0.000000e+00> : vector<160x128xf32>
    %13 = tpu.matmul %10, %12, %cst {dimension_numbers = #tpu.dot_dimension_numbers<[1], [0], [0], [1], [0, 0, 1, 1], [], []>} : vector<160x384xbf16>, vector<384x128xbf16>, vector<160x128xf32> -> vector<160x128xf32>
    %14 = vector.extract_strided_slice %8 {offsets = [1, 0, 0], sizes = [10, 16, 384], strides = [1, 1, 1]} : vector<12x16x384xbf16> to vector<10x16x384xbf16>
    %15 = vector.shape_cast %14 : vector<10x16x384xbf16> to vector<160x384xbf16>
    %c1 = arith.constant 1 : index
    %c0_5 = arith.constant 0 : index
    %c0_6 = arith.constant 0 : index
    %16 = vector.load %arg3[%c1, %c0_5, %c0_6] : memref<3x384x128xbf16, #tpu.memory_space<vmem>>, vector<1x384x128xbf16>
    %17 = vector.shape_cast %16 : vector<1x384x128xbf16> to vector<384x128xbf16>
    %cst_7 = arith.constant dense<0.000000e+00> : vector<160x128xf32>
    %18 = tpu.matmul %15, %17, %cst_7 {dimension_numbers = #tpu.dot_dimension_numbers<[1], [0], [0], [1], [0, 0, 1, 1], [], []>} : vector<160x384xbf16>, vector<384x128xbf16>, vector<160x128xf32> -> vector<160x128xf32>
    %19 = arith.addf %13, %18 : vector<160x128xf32>
    %20 = vector.extract_strided_slice %8 {offsets = [2, 0, 0], sizes = [10, 16, 384], strides = [1, 1, 1]} : vector<12x16x384xbf16> to vector<10x16x384xbf16>
    %21 = vector.shape_cast %20 : vector<10x16x384xbf16> to vector<160x384xbf16>
    %c2 = arith.constant 2 : index
    %c0_8 = arith.constant 0 : index
    %c0_9 = arith.constant 0 : index
    %22 = vector.load %arg3[%c2, %c0_8, %c0_9] : memref<3x384x128xbf16, #tpu.memory_space<vmem>>, vector<1x384x128xbf16>
    %23 = vector.shape_cast %22 : vector<1x384x128xbf16> to vector<384x128xbf16>
    %cst_10 = arith.constant dense<0.000000e+00> : vector<160x128xf32>
    %24 = tpu.matmul %21, %23, %cst_10 {dimension_numbers = #tpu.dot_dimension_numbers<[1], [0], [0], [1], [0, 0, 1, 1], [], []>} : vector<160x384xbf16>, vector<384x128xbf16>, vector<160x128xf32> -> vector<160x128xf32>
    %25 = arith.addf %19, %24 : vector<160x128xf32>
    %c0_11 = arith.constant 0 : index
    %c0_12 = arith.constant 0 : index
    %26 = vector.load %arg4[%c0_11, %c0_12] : memref<1x128xf32, #tpu.memory_space<vmem>>, vector<1x128xf32>
    %27 = vector.broadcast %26 : vector<1x128xf32> to vector<160x128xf32>
    %28 = arith.addf %25, %27 : vector<160x128xf32>
    %cst_13 = arith.constant 0.000000e+00 : f32
    %29 = vector.broadcast %cst_13 : f32 to vector<160x128xf32>
    %30 = arith.maximumf %28, %29 : vector<160x128xf32>
    %cst_14 = arith.constant 0.000000e+00 : bf16
    %31 = vector.broadcast %cst_14 : bf16 to vector<10x1x128xbf16>
    %c0_15 = arith.constant 0 : index
    %c15 = arith.constant 15 : index
    %c0_16 = arith.constant 0 : index
    %32 = vector.load %arg10[%c0_15, %c15, %c0_16] : memref<10x48x128xbf16, #tpu.memory_space<vmem>>, vector<10x1x128xbf16>
    tpu.vector_store %arg10[%c0_15, %c15, %c0_16], %31 {strides = array<i32>} : memref<10x48x128xbf16, #tpu.memory_space<vmem>>, vector<10x1x128xbf16>,
    %c0_17 = arith.constant 0 : index
    %c32 = arith.constant 32 : index
    %c0_18 = arith.constant 0 : index
    %33 = vector.load %arg10[%c0_17, %c32, %c0_18] : memref<10x48x128xbf16, #tpu.memory_space<vmem>>, vector<10x1x128xbf16>
    tpu.vector_store %arg10[%c0_17, %c32, %c0_18], %31 {strides = array<i32>} : memref<10x48x128xbf16, #tpu.memory_space<vmem>>, vector<10x1x128xbf16>,
    %34 = arith.truncf %30 : vector<160x128xf32> to vector<160x128xbf16>
    %35 = vector.shape_cast %34 : vector<160x128xbf16> to vector<10x16x128xbf16>
    %c0_19 = arith.constant 0 : index
    %c16 = arith.constant 16 : index
    %c0_20 = arith.constant 0 : index
    %36 = vector.load %arg10[%c0_19, %c16, %c0_20] : memref<10x48x128xbf16, #tpu.memory_space<vmem>>, vector<10x16x128xbf16>
    tpu.vector_store %arg10[%c0_19, %c16, %c0_20], %35 {strides = array<i32>} : memref<10x48x128xbf16, #tpu.memory_space<vmem>>, vector<10x16x128xbf16>,
    %cst_21 = arith.constant 0.000000e+00 : bf16
    %37 = vector.broadcast %cst_21 : bf16 to vector<1x48x128xbf16>
    %c0_i32 = arith.constant 0 : i32
    %38 = arith.cmpi eq, %arg1, %c0_i32 : i32
    %39 = arith.extui %38 : i1 to i32
    %c0_i32_22 = arith.constant 0 : i32
    %40 = arith.cmpi ne, %39, %c0_i32_22 : i32
    scf.if %40 {
      %c0_56 = arith.constant 0 : index
      %c0_57 = arith.constant 0 : index
      %c0_58 = arith.constant 0 : index
      %83 = vector.load %arg10[%c0_56, %c0_57, %c0_58] : memref<10x48x128xbf16, #tpu.memory_space<vmem>>, vector<1x48x128xbf16>
      tpu.vector_store %arg10[%c0_56, %c0_57, %c0_58], %37 {strides = array<i32>} : memref<10x48x128xbf16, #tpu.memory_space<vmem>>, vector<1x48x128xbf16>,
    } else {
    }
    %c1_i32 = arith.constant 1 : i32
    %41 = arith.cmpi eq, %arg1, %c1_i32 : i32
    %42 = arith.extui %41 : i1 to i32
    %c0_i32_23 = arith.constant 0 : i32
    %43 = arith.cmpi ne, %42, %c0_i32_23 : i32
    scf.if %43 {
      %c9 = arith.constant 9 : index
      %c0_56 = arith.constant 0 : index
      %c0_57 = arith.constant 0 : index
      %83 = vector.load %arg10[%c9, %c0_56, %c0_57] : memref<10x48x128xbf16, #tpu.memory_space<vmem>>, vector<1x48x128xbf16>
      tpu.vector_store %arg10[%c9, %c0_56, %c0_57], %37 {strides = array<i32>} : memref<10x48x128xbf16, #tpu.memory_space<vmem>>, vector<1x48x128xbf16>,
    } else {
    }
    %c0_24 = arith.constant 0 : index
    %c15_25 = arith.constant 15 : index
    %c0_26 = arith.constant 0 : index
    %44 = vector.load %arg10[%c0_24, %c15_25, %c0_26] : memref<10x48x128xbf16, #tpu.memory_space<vmem>>, vector<10x16x128xbf16>
    %c0_27 = arith.constant 0 : index
    %c16_28 = arith.constant 16 : index
    %c0_29 = arith.constant 0 : index
    %45 = vector.load %arg10[%c0_27, %c16_28, %c0_29] : memref<10x48x128xbf16, #tpu.memory_space<vmem>>, vector<10x16x128xbf16>
    %c0_30 = arith.constant 0 : index
    %c17 = arith.constant 17 : index
    %c0_31 = arith.constant 0 : index
    %46 = vector.load %arg10[%c0_30, %c17, %c0_31] : memref<10x48x128xbf16, #tpu.memory_space<vmem>>, vector<10x16x128xbf16>
    %47 = tpu.concatenate %44, %45, %46 in 2 : vector<10x16x128xbf16>, vector<10x16x128xbf16>, vector<10x16x128xbf16> -> vector<10x16x384xbf16>
    %48 = vector.extract_strided_slice %47 {offsets = [0, 0, 0], sizes = [8, 16, 384], strides = [1, 1, 1]} : vector<10x16x384xbf16> to vector<8x16x384xbf16>
    %49 = vector.shape_cast %48 : vector<8x16x384xbf16> to vector<128x384xbf16>
    %c0_32 = arith.constant 0 : index
    %c0_33 = arith.constant 0 : index
    %c0_34 = arith.constant 0 : index
    %50 = vector.load %arg5[%c0_32, %c0_33, %c0_34] : memref<3x384x128xbf16, #tpu.memory_space<vmem>>, vector<1x384x128xbf16>
    %51 = vector.shape_cast %50 : vector<1x384x128xbf16> to vector<384x128xbf16>
    %cst_35 = arith.constant dense<0.000000e+00> : vector<128x128xf32>
    %52 = tpu.matmul %49, %51, %cst_35 {dimension_numbers = #tpu.dot_dimension_numbers<[1], [0], [0], [1], [0, 0, 1, 1], [], []>} : vector<128x384xbf16>, vector<384x128xbf16>, vector<128x128xf32> -> vector<128x128xf32>
    %53 = vector.extract_strided_slice %47 {offsets = [1, 0, 0], sizes = [8, 16, 384], strides = [1, 1, 1]} : vector<10x16x384xbf16> to vector<8x16x384xbf16>
    %54 = vector.shape_cast %53 : vector<8x16x384xbf16> to vector<128x384xbf16>
    %c1_36 = arith.constant 1 : index
    %c0_37 = arith.constant 0 : index
    %c0_38 = arith.constant 0 : index
    %55 = vector.load %arg5[%c1_36, %c0_37, %c0_38] : memref<3x384x128xbf16, #tpu.memory_space<vmem>>, vector<1x384x128xbf16>
    %56 = vector.shape_cast %55 : vector<1x384x128xbf16> to vector<384x128xbf16>
    %cst_39 = arith.constant dense<0.000000e+00> : vector<128x128xf32>
    %57 = tpu.matmul %54, %56, %cst_39 {dimension_numbers = #tpu.dot_dimension_numbers<[1], [0], [0], [1], [0, 0, 1, 1], [], []>} : vector<128x384xbf16>, vector<384x128xbf16>, vector<128x128xf32> -> vector<128x128xf32>
    %58 = arith.addf %52, %57 : vector<128x128xf32>
    %59 = vector.extract_strided_slice %47 {offsets = [2, 0, 0], sizes = [8, 16, 384], strides = [1, 1, 1]} : vector<10x16x384xbf16> to vector<8x16x384xbf16>
    %60 = vector.shape_cast %59 : vector<8x16x384xbf16> to vector<128x384xbf16>
    %c2_40 = arith.constant 2 : index
    %c0_41 = arith.constant 0 : index
    %c0_42 = arith.constant 0 : index
    %61 = vector.load %arg5[%c2_40, %c0_41, %c0_42] : memref<3x384x128xbf16, #tpu.memory_space<vmem>>, vector<1x384x128xbf16>
    %62 = vector.shape_cast %61 : vector<1x384x128xbf16> to vector<384x128xbf16>
    %cst_43 = arith.constant dense<0.000000e+00> : vector<128x128xf32>
    %63 = tpu.matmul %60, %62, %cst_43 {dimension_numbers = #tpu.dot_dimension_numbers<[1], [0], [0], [1], [0, 0, 1, 1], [], []>} : vector<128x384xbf16>, vector<384x128xbf16>, vector<128x128xf32> -> vector<128x128xf32>
    %64 = arith.addf %58, %63 : vector<128x128xf32>
    %c0_44 = arith.constant 0 : index
    %c0_45 = arith.constant 0 : index
    %65 = vector.load %arg6[%c0_44, %c0_45] : memref<1x128xf32, #tpu.memory_space<vmem>>, vector<1x128xf32>
    %66 = vector.broadcast %65 : vector<1x128xf32> to vector<128x128xf32>
    %67 = arith.addf %64, %66 : vector<128x128xf32>
    %68 = vector.extract_strided_slice %4 {offsets = [2, 1, 0], sizes = [8, 16, 128], strides = [1, 1, 1]} : vector<12x18x128xbf16> to vector<8x16x128xbf16>
    %69 = vector.shape_cast %68 : vector<8x16x128xbf16> to vector<128x128xbf16>
    %c0_46 = arith.constant 0 : index
    %c0_47 = arith.constant 0 : index
    %70 = vector.load %arg7[%c0_46, %c0_47] : memref<128x128xbf16, #tpu.memory_space<vmem>>, vector<128x128xbf16>
    %cst_48 = arith.constant dense<0.000000e+00> : vector<128x128xf32>
    %71 = tpu.matmul %69, %70, %cst_48 {dimension_numbers = #tpu.dot_dimension_numbers<[1], [0], [0], [1], [0, 0, 1, 1], [], []>} : vector<128x128xbf16>, vector<128x128xbf16>, vector<128x128xf32> -> vector<128x128xf32>
    %c0_49 = arith.constant 0 : index
    %c0_50 = arith.constant 0 : index
    %72 = vector.load %arg8[%c0_49, %c0_50] : memref<1x128xf32, #tpu.memory_space<vmem>>, vector<1x128xf32>
    %73 = vector.broadcast %72 : vector<1x128xf32> to vector<128x128xf32>
    %74 = arith.addf %71, %73 : vector<128x128xf32>
    %75 = arith.addf %67, %74 : vector<128x128xf32>
    %cst_51 = arith.constant 0.000000e+00 : f32
    %76 = vector.broadcast %cst_51 : f32 to vector<128x128xf32>
    %77 = arith.maximumf %75, %76 : vector<128x128xf32>
    %78 = vector.shape_cast %77 : vector<128x128xf32> to vector<8x16x128xf32>
    %79 = arith.truncf %78 : vector<8x16x128xf32> to vector<8x16x128xbf16>
    %c0_52 = arith.constant 0 : index
    %c0_53 = arith.constant 0 : index
    %c0_54 = arith.constant 0 : index
    %c0_55 = arith.constant 0 : index
    %80 = vector.load %arg9[%c0_52, %c0_53, %c0_54, %c0_55] : memref<1x8x16x128xbf16, #tpu.memory_space<vmem>>, vector<1x8x16x128xbf16>
    %81 = vector.shape_cast %80 : vector<1x8x16x128xbf16> to vector<8x16x128xbf16>
    %82 = vector.shape_cast %79 : vector<8x16x128xbf16> to vector<1x8x16x128xbf16>
    tpu.vector_store %arg9[%c0_52, %c0_53, %c0_54, %c0_55], %82 {strides = array<i32>} : memref<1x8x16x128xbf16, #tpu.memory_space<vmem>>, vector<1x8x16x128xbf16>,
    return
  }
  func.func @transform_0(%arg0: i32, %arg1: i32) -> (i32, i32, i32, i32) {
    %c0_i32 = arith.constant 0 : i32
    %c0_i32_0 = arith.constant 0 : i32
    %c0_i32_1 = arith.constant 0 : i32
    %c0_i32_2 = arith.constant 0 : i32
    return %arg0, %c0_i32, %c0_i32_0, %c0_i32_1 : i32, i32, i32, i32
  }
  func.func @transform_1(%arg0: i32, %arg1: i32) -> (i32, i32, i32) {
    %c0_i32 = arith.constant 0 : i32
    %c0_i32_0 = arith.constant 0 : i32
    %c0_i32_1 = arith.constant 0 : i32
    %c0_i32_2 = arith.constant 0 : i32
    return %c0_i32, %c0_i32_0, %c0_i32_1 : i32, i32, i32
  }
  func.func @transform_2(%arg0: i32, %arg1: i32) -> (i32, i32) {
    %c0_i32 = arith.constant 0 : i32
    %c0_i32_0 = arith.constant 0 : i32
    %c0_i32_1 = arith.constant 0 : i32
    return %c0_i32, %c0_i32_0 : i32, i32
  }
  func.func @transform_3(%arg0: i32, %arg1: i32) -> (i32, i32, i32) {
    %c0_i32 = arith.constant 0 : i32
    %c0_i32_0 = arith.constant 0 : i32
    %c0_i32_1 = arith.constant 0 : i32
    %c0_i32_2 = arith.constant 0 : i32
    return %c0_i32, %c0_i32_0, %c0_i32_1 : i32, i32, i32
  }
  func.func @transform_4(%arg0: i32, %arg1: i32) -> (i32, i32) {
    %c0_i32 = arith.constant 0 : i32
    %c0_i32_0 = arith.constant 0 : i32
    %c0_i32_1 = arith.constant 0 : i32
    return %c0_i32, %c0_i32_0 : i32, i32
  }
  func.func @transform_5(%arg0: i32, %arg1: i32) -> (i32, i32) {
    %c0_i32 = arith.constant 0 : i32
    %c0_i32_0 = arith.constant 0 : i32
    %c0_i32_1 = arith.constant 0 : i32
    return %c0_i32, %c0_i32_0 : i32, i32
  }
  func.func @transform_6(%arg0: i32, %arg1: i32) -> (i32, i32) {
    %c0_i32 = arith.constant 0 : i32
    %c0_i32_0 = arith.constant 0 : i32
    %c0_i32_1 = arith.constant 0 : i32
    return %c0_i32, %c0_i32_0 : i32, i32
  }
  func.func @transform_7(%arg0: i32, %arg1: i32) -> (i32, i32, i32, i32) {
    %c0_i32 = arith.constant 0 : i32
    %c0_i32_0 = arith.constant 0 : i32
    %c0_i32_1 = arith.constant 0 : i32
    return %arg0, %arg1, %c0_i32, %c0_i32_0 : i32, i32, i32, i32
  }
}

</mosaic_0001>

<llo_original>
// kernel: tpu_custom_call.1
$region0: #{tpu_custom_call.1}
  #allocation0 [shape = 'u32[]', space=smem, size = 0x4, offset = 0x4, fixed_abs, tag = 'smem constant byte address 0x4 - core index']
  #allocation1 [shape = 'u32[144,128]{1,0:T(1,128)}', space=vmem, size = 0x12000, scoped, tag = 'internal scratch']
  #allocation2 [shape = 'bf16[10,48,128]{2,1,0:T(16,128)(2,1)}', space=vmem, size = 0x1e000, scoped, tag = 'scratch operand']
  %s0 = inlined_call_operand.vmem [shape: bf16[2,20,18,128], index: 0, kind: input, shape index: {}]
  %s1 = inlined_call_operand.vmem [shape: bf16[3,384,128], index: 1, kind: input, shape index: {}]
  %s2 = inlined_call_operand.vmem [shape: f32[1,128], index: 2, kind: input, shape index: {}]
  %s3 = inlined_call_operand.hbm [shape: bf16[3,384,128], index: 3, kind: input, shape index: {}]
  %s4 = inlined_call_operand.vmem [shape: f32[1,128], index: 4, kind: input, shape index: {}]
  %s5 = inlined_call_operand.vmem [shape: bf16[128,128], index: 5, kind: input, shape index: {}]
  %s6 = inlined_call_operand.vmem [shape: f32[1,128], index: 6, kind: input, shape index: {}]
  %s7 = inlined_call_operand.hbm [shape: bf16[2,16,16,128], index: 7, kind: output, shape index: {}]
  %s8 = sld [smem:[#allocation0]]
  $region73: #{tpu_custom_call.1} parent=0
    _
  %s10 = ssub.s32 1, %s8
  %s11 = scalar_select 0, %s10, %s8
  $region1: #{tpu_custom_call.1} parent=0
    #allocation3 [shape = 'u8[294912]{0}', space=vmem, size = 0x48000, scoped, tag = 'input window, operand 3, single buffered']
    #allocation4 [shape = 's32[2]{0}', space=sflag, size = 0x8, scoped, tag = 'scoped memory for tpu_custom_call.1']
    #allocation5 [shape = 's32[2]{0}', space=sflag, size = 0x8, scoped, tag = 'scoped memory for tpu_custom_call.1']
    #allocation6 [shape = 'u8[65536]{0}', space=vmem, size = 0x10000, scoped, tag = 'output window, operand 0']
    %12 = vsyncpa [#allocation4], 0
    %13 = vsyncpa [#allocation5], 0
    %s14 = scalar_lea.sflag [#allocation5], 1
    %15 = vsyncpa %s14, 0
    loop: start=0, step=1, limit=6
    $region2: #{tpu_custom_call.1} parent=1 // loop_pre_header
      _
    $region3: #{tpu_custom_call.1} parent=1 // loop_header
      %s17 = sphi 0, %s21
      %p18 = scmp.ge.s32.totalorder %s17, 6
      %s24 = sphi 0, %s36
      %s25 = sphi 0, %s32
      %s26 = sphi 0, %s24
      %s27 = sphi 0, %s25
      %s28 = sphi 0, %s26
      %s29 = sphi 0, %s27
      %s39 = sphi 0, %s41
      %s42 = sphi 0, %s39
      %s43 = sphi 0, %s42
      %s59 = sphi 0, %s43
      %s63 = sphi 0, %s63
      %s65 = sphi 0, %s63
      %s66 = sphi 0, %s65
      %s80 = sphi 0, %s66
      %s84 = sphi 0, %s84
      %s86 = sphi 0, %s84
      %s87 = sphi 0, %s86
      %s101 = sphi 0, %s87
      %s105 = sphi 0, %s105
      %s107 = sphi 0, %s105
      %s108 = sphi 0, %s107
      %s122 = sphi 0, %s108
      %s126 = sphi 0, %s126
      %s128 = sphi 0, %s126
      %s129 = sphi 0, %s128
      %s143 = sphi 0, %s129
      %s147 = sphi 0, %s147
      %s149 = sphi 0, %s147
      %s150 = sphi 0, %s149
      %s164 = sphi 0, %s150
      %s168 = sphi 0, %s168
      %s170 = sphi 0, %s168
      %s171 = sphi 0, %s170
      %s185 = sphi 0, %s171
      %s193 = sphi 0, %s195
      %s196 = sphi 0, %s193
      %s197 = sphi 0, %s196
      %s213 = sphi 0, %s197
    $region4: #{tpu_custom_call.1} parent=1 // loop_header_branch
      %20 = sbr.rel (%p18) target = $region8
    $region5: #{tpu_custom_call.1} parent=1 // loop_body
      %s22 = ssub.s32 %s17, 1
      %s23 = ssub.s32 %s17, 2
      %s30 = sadd.s32 1, %s25
      %p31 = scmp.ge.s32.totalorder %s30, 2
      %s32 = scalar_select %p31, 0, %s30
      %s33 = sadd.s32 1, %s24
      %s34 = scalar_select %p31, %s33, %s24
      %p35 = scmp.ge.s32.totalorder %s34, 2
      %s36 = scalar_select %p35, 0, %s34
      %s37 = ssub.s32 %s24, %s36
      %p38 = scmp.eq.s32.totalorder %s37, 0
      %s40 = sadd.s32 %s39, 1
      %s41 = scalar_select %p38, %s39, %s40
      %p44 = pneg %p38
      %p45 = scmp.eq.s32.totalorder %s17, 3
      %p46 = por %p44, %p45
      %p47 = scmp.ne.s32.totalorder %s39, %s42
      %p48 = scmp.eq.s32.totalorder %s17, 0
      %p49 = por %p47, %p48
      %p50 = scmp.ne.s32.totalorder %s39, %s42
      %p51 = scmp.eq.s32.totalorder %s22, 3
      %p52 = por %p50, %p51
      %p53 = scmp.ne.s32.totalorder %s42, %s43
      %p54 = scmp.eq.s32.totalorder %s22, 0
      %p55 = por %p53, %p54
      %p56 = scmp.ne.s32.totalorder %s42, %s43
      %p57 = scmp.eq.s32.totalorder %s23, 3
      %p58 = por %p56, %p57
      %p60 = scmp.ne.s32.totalorder %s43, %s59
      %p61 = scmp.eq.s32.totalorder %s23, 0
      %p62 = por %p60, %p61
      %s64 = sadd.s32 %s63, 1
      %p67 = scmp.eq.s32.totalorder %s17, 3
      %p68 = scmp.ne.s32.totalorder %s63, %s65
      %p69 = scmp.eq.s32.totalorder %s17, 0
      %p70 = por %p68, %p69
      %p71 = scmp.ne.s32.totalorder %s63, %s65
      %p72 = scmp.eq.s32.totalorder %s22, 3
      %p73 = por %p71, %p72
      %p74 = scmp.ne.s32.totalorder %s65, %s66
      %p75 = scmp.eq.s32.totalorder %s22, 0
      %p76 = por %p74, %p75
      %p77 = scmp.ne.s32.totalorder %s65, %s66
      %p78 = scmp.eq.s32.totalorder %s23, 3
      %p79 = por %p77, %p78
      %p81 = scmp.ne.s32.totalorder %s66, %s80
      %p82 = scmp.eq.s32.totalorder %s23, 0
      %p83 = por %p81, %p82
      %s85 = sadd.s32 %s84, 1
      %p88 = scmp.eq.s32.totalorder %s17, 3
      %p89 = scmp.ne.s32.totalorder %s84, %s86
      %p90 = scmp.eq.s32.totalorder %s17, 0
      %p91 = por %p89, %p90
      %p92 = scmp.ne.s32.totalorder %s84, %s86
      %p93 = scmp.eq.s32.totalorder %s22, 3
      %p94 = por %p92, %p93
      %p95 = scmp.ne.s32.totalorder %s86, %s87
      %p96 = scmp.eq.s32.totalorder %s22, 0
      %p97 = por %p95, %p96
      %p98 = scmp.ne.s32.totalorder %s86, %s87
      %p99 = scmp.eq.s32.totalorder %s23, 3
      %p100 = por %p98, %p99
      %p102 = scmp.ne.s32.totalorder %s87, %s101
      %p103 = scmp.eq.s32.totalorder %s23, 0
      %p104 = por %p102, %p103
      %s106 = sadd.s32 %s105, 1
      %p109 = scmp.eq.s32.totalorder %s17, 3
      %p110 = scmp.ne.s32.totalorder %s105, %s107
      %p111 = scmp.eq.s32.totalorder %s17, 0
      %p112 = por %p110, %p111
      %p113 = scmp.ne.s32.totalorder %s105, %s107
      %p114 = scmp.eq.s32.totalorder %s22, 3
      %p115 = por %p113, %p114
      %p116 = scmp.ne.s32.totalorder %s107, %s108
      %p117 = scmp.eq.s32.totalorder %s22, 0
      %p118 = por %p116, %p117
      %p119 = scmp.ne.s32.totalorder %s107, %s108
      %p120 = scmp.eq.s32.totalorder %s23, 3
      %p121 = por %p119, %p120
      %p123 = scmp.ne.s32.totalorder %s108, %s122
      %p124 = scmp.eq.s32.totalorder %s23, 0
      %p125 = por %p123, %p124
      %s127 = sadd.s32 %s126, 1
      %p130 = scmp.eq.s32.totalorder %s17, 3
      %p131 = scmp.ne.s32.totalorder %s126, %s128
      %p132 = scmp.eq.s32.totalorder %s17, 0
      %p133 = por %p131, %p132
      %p134 = scmp.ne.s32.totalorder %s126, %s128
      %p135 = scmp.eq.s32.totalorder %s22, 3
      %p136 = por %p134, %p135
      %p137 = scmp.ne.s32.totalorder %s128, %s129
      %p138 = scmp.eq.s32.totalorder %s22, 0
      %p139 = por %p137, %p138
      %p140 = scmp.ne.s32.totalorder %s128, %s129
      %p141 = scmp.eq.s32.totalorder %s23, 3
      %p142 = por %p140, %p141
      %p144 = scmp.ne.s32.totalorder %s129, %s143
      %p145 = scmp.eq.s32.totalorder %s23, 0
      %p146 = por %p144, %p145
      %s148 = sadd.s32 %s147, 1
      %p151 = scmp.eq.s32.totalorder %s17, 3
      %p152 = scmp.ne.s32.totalorder %s147, %s149
      %p153 = scmp.eq.s32.totalorder %s17, 0
      %p154 = por %p152, %p153
      %p155 = scmp.ne.s32.totalorder %s147, %s149
      %p156 = scmp.eq.s32.totalorder %s22, 3
      %p157 = por %p155, %p156
      %p158 = scmp.ne.s32.totalorder %s149, %s150
      %p159 = scmp.eq.s32.totalorder %s22, 0
      %p160 = por %p158, %p159
      %p161 = scmp.ne.s32.totalorder %s149, %s150
      %p162 = scmp.eq.s32.totalorder %s23, 3
      %p163 = por %p161, %p162
      %p165 = scmp.ne.s32.totalorder %s150, %s164
      %p166 = scmp.eq.s32.totalorder %s23, 0
      %p167 = por %p165, %p166
      %s169 = sadd.s32 %s168, 1
      %p172 = scmp.eq.s32.totalorder %s17, 3
      %p173 = scmp.ne.s32.totalorder %s168, %s170
      %p174 = scmp.eq.s32.totalorder %s17, 0
      %p175 = por %p173, %p174
      %p176 = scmp.ne.s32.totalorder %s168, %s170
      %p177 = scmp.eq.s32.totalorder %s22, 3
      %p178 = por %p176, %p177
      %p179 = scmp.ne.s32.totalorder %s170, %s171
      %p180 = scmp.eq.s32.totalorder %s22, 0
      %p181 = por %p179, %p180
      %p182 = scmp.ne.s32.totalorder %s170, %s171
      %p183 = scmp.eq.s32.totalorder %s23, 3
      %p184 = por %p182, %p183
      %p186 = scmp.ne.s32.totalorder %s171, %s185
      %p187 = scmp.eq.s32.totalorder %s23, 0
      %p188 = por %p186, %p187
      %s189 = ssub.s32 %s24, %s36
      %s190 = ssub.s32 %s25, %s32
      %s191 = sor.u32 %s189, %s190
      %p192 = scmp.eq.s32.totalorder %s191, 0
      %s194 = sadd.s32 %s193, 1
      %s195 = scalar_select %p192, %s193, %s194
      %p198 = pneg %p192
      %p199 = scmp.eq.s32.totalorder %s17, 3
      %p200 = por %p198, %p199
      %p201 = scmp.ne.s32.totalorder %s193, %s196
      %p202 = scmp.eq.s32.totalorder %s17, 0
      %p203 = por %p201, %p202
      %p204 = scmp.ne.s32.totalorder %s193, %s196
      %p205 = scmp.eq.s32.totalorder %s22, 3
      %p206 = por %p204, %p205
      %p207 = scmp.ne.s32.totalorder %s196, %s197
      %p208 = scmp.eq.s32.totalorder %s22, 0
      %p209 = por %p207, %p208
      %p210 = scmp.ne.s32.totalorder %s196, %s197
      %p211 = scmp.eq.s32.totalorder %s23, 3
      %p212 = por %p210, %p211
      %p214 = scmp.ne.s32.totalorder %s197, %s213
      %p215 = scmp.eq.s32.totalorder %s23, 0
      %p216 = por %p214, %p215
      %p217 = scmp.le.s32.totalorder 1, %s17
      %p218 = scmp.lt.s32.totalorder %s17, 5
      %p219 = pnand %p217, %p218
      %p220 = pneg %p219
      // Predicated region
      $region9: #{tpu_custom_call.1} parent=5 // pred_check
        _
      $region10: #{tpu_custom_call.1} parent=5 // pred_check_branch
        %222 = sbr.rel (%p219) target = $region12
      $region11: #{tpu_custom_call.1} parent=5 // pred_region
        %s223 = ssub.s32 %s17, 1
        // Predicated region
        $region13: #{tpu_custom_call.1} parent=11 // pred_check
          %p224 = pneg %p76
        $region14: #{tpu_custom_call.1} parent=11 // pred_check_branch
          %226 = sbr.rel (%p224) target = $region16
        $region15: #{tpu_custom_call.1} parent=11 // pred_region
          _
        $region16: #{tpu_custom_call.1} parent=11 // pred_fallthru
          _
        // Predicated region
        $region17: #{tpu_custom_call.1} parent=11 // pred_check
          %p227 = pneg %p97
        $region18: #{tpu_custom_call.1} parent=11 // pred_check_branch
          %229 = sbr.rel (%p227) target = $region20
        $region19: #{tpu_custom_call.1} parent=11 // pred_region
          _
        $region20: #{tpu_custom_call.1} parent=11 // pred_fallthru
          _
        // Predicated region
        $region21: #{tpu_custom_call.1} parent=11 // pred_check
          %p230 = pneg %p118
        $region22: #{tpu_custom_call.1} parent=11 // pred_check_branch
          %232 = sbr.rel (%p230) target = $region24
        $region23: #{tpu_custom_call.1} parent=11 // pred_region
          %s234 = ssub.s32 9216, 9216
          %235 = vsyncadd [#allocation4], %s234
          %s236 = sshll.u32 [#allocation3], 4
          %s237 = int_to_ptr.vmem [resolvable:$true] %s236
          %242 = dma.hbm_to_vmem [thread:$0]  %s3, 9216, %s237, [#allocation4], 64, 64, 4
        $region24: #{tpu_custom_call.1} parent=11 // pred_fallthru
          _
        // Predicated region
        $region25: #{tpu_custom_call.1} parent=11 // pred_check
          %p243 = pneg %p139
        $region26: #{tpu_custom_call.1} parent=11 // pred_check_branch
          %245 = sbr.rel (%p243) target = $region28
        $region27: #{tpu_custom_call.1} parent=11 // pred_region
          _
        $region28: #{tpu_custom_call.1} parent=11 // pred_fallthru
          _
        // Predicated region
        $region29: #{tpu_custom_call.1} parent=11 // pred_check
          %p246 = pneg %p160
        $region30: #{tpu_custom_call.1} parent=11 // pred_check_branch
          %248 = sbr.rel (%p246) target = $region32
        $region31: #{tpu_custom_call.1} parent=11 // pred_region
          _
        $region32: #{tpu_custom_call.1} parent=11 // pred_fallthru
          _
        // Predicated region
        $region33: #{tpu_custom_call.1} parent=11 // pred_check
          %p249 = pneg %p181
        $region34: #{tpu_custom_call.1} parent=11 // pred_check_branch
          %251 = sbr.rel (%p249) target = $region36
        $region35: #{tpu_custom_call.1} parent=11 // pred_region
          _
        $region36: #{tpu_custom_call.1} parent=11 // pred_fallthru
          _
      $region12: #{tpu_custom_call.1} parent=5 // pred_fallthru
        _
      %p252 = scmp.lt.s32.totalorder %s17, 4
      // Predicated region
      $region37: #{tpu_custom_call.1} parent=5 // pred_check
        %p253 = pneg %p252
      $region38: #{tpu_custom_call.1} parent=5 // pred_check_branch
        %255 = sbr.rel (%p253) target = $region40
      $region39: #{tpu_custom_call.1} parent=5 // pred_region
        // Predicated region
        $region41: #{tpu_custom_call.1} parent=39 // pred_check
          %p256 = pneg %p49
        $region42: #{tpu_custom_call.1} parent=39 // pred_check_branch
          %258 = sbr.rel (%p256) target = $region44
        $region43: #{tpu_custom_call.1} parent=39 // pred_region
          %p259 = scmp.lt.s32.totalorder %s24, 1
          %s260 = scalar_select %p259, %s24, 1
          %s261 = smul.addr %s260, 60
          %s262 = smul.addr %s261, 4
          %s263 = scalar_lea.vmem %s0, %s262
        $region44: #{tpu_custom_call.1} parent=39 // pred_fallthru
          _
      $region40: #{tpu_custom_call.1} parent=5 // pred_fallthru
        _
      %p264 = scmp.le.s32.totalorder 1, %s17
      %p265 = scmp.lt.s32.totalorder %s17, 5
      %p266 = pnand %p264, %p265
      %p267 = pneg %p266
      // Predicated region
      $region45: #{tpu_custom_call.1} parent=5 // pred_check
        _
      $region46: #{tpu_custom_call.1} parent=5 // pred_check_branch
        %269 = sbr.rel (%p266) target = $region48
      $region47: #{tpu_custom_call.1} parent=5 // pred_region
        %s270 = ssub.s32 %s17, 1
        // Predicated region
        $region49: #{tpu_custom_call.1} parent=47 // pred_check
          %p271 = pneg %p118
        $region50: #{tpu_custom_call.1} parent=47 // pred_check_branch
          %273 = sbr.rel (%p271) target = $region52
        $region51: #{tpu_custom_call.1} parent=47 // pred_region
          %274 = dma.done [#allocation4], 9216
        $region52: #{tpu_custom_call.1} parent=47 // pred_fallthru
          _
        %p275 = scmp.lt.s32.totalorder %s26, 1
        %s276 = scalar_select %p275, %s26, 1
        %s277 = smul.addr %s276, 60
        %s278 = smul.addr %s277, 4
        %s279 = scalar_lea.vmem %s0, %s278
        %p280 = pneg %p55
        %p281 = pneg %p52
        %p282 = pneg %p76
        %p283 = pneg %p73
        %p284 = pneg %p97
        %p285 = pneg %p94
        %p286 = pneg %p118
        %p287 = pneg %p115
        %p288 = pneg %p139
        %p289 = pneg %p136
        %p290 = pneg %p160
        %p291 = pneg %p157
        %p292 = pneg %p181
        %p293 = pneg %p178
        %p294 = pneg %p209
        %p295 = pneg %p206
        %s296 = sand.u32 %s196, 1
        %s297 = scalar_lea.sflag [#allocation5], %s296
        %s298 = sand.u32 %s196, 1
        %s299 = smul.addr %s298, 64
        %s300 = scalar_lea.vmem [#allocation6], %s299
        %p301 = scmp.lt.s32.totalorder %s26, 1
        %s302 = scalar_select %p301, %s26, 1
        %s303 = smul.addr %s302, 60
        %s304 = smul.addr %s303, 4
        %s305 = scalar_lea.vmem %s0, %s304
        %s306 = smul.u32 8, %s27
        %s308 = smul.u32 %s27, 8
        %s309 = smul.u32 %s308, 3
        %s310 = smul.addr %s309, 4
        %s311 = scalar_lea.vmem %s305, %s310
        %v312 = vld [vmem:[%s311] sm:$0xf]
        %v313 = vld [vmem:[%s311 + $0x4] sm:$0xf]
        %v314 = vld [vmem:[%s311 + $0x8] sm:$0x1]
        %v315 = vld [vmem:[%s311 + $0xc] sm:$0xf]
        %v316 = vld [vmem:[%s311 + $0x10] sm:$0xf]
        %v317 = vld [vmem:[%s311 + $0x14] sm:$0x1]
        %v318 = vld [vmem:[%s311 + $0x18] sm:$0xf]
        %v319 = vld [vmem:[%s311 + $0x1c] sm:$0xf]
        %v320 = vld [vmem:[%s311 + $0x20] sm:$0x1]
        %v321 = vld [vmem:[%s311 + $0x24] sm:$0xf]
        %v322 = vld [vmem:[%s311 + $0x28] sm:$0xf]
        %v323 = vld [vmem:[%s311 + $0x2c] sm:$0x1]
        %v324 = vld [vmem:[%s311 + $0x30] sm:$0xf]
        %v325 = vld [vmem:[%s311 + $0x34] sm:$0xf]
        %v326 = vld [vmem:[%s311 + $0x38] sm:$0x1]
        %v327 = vld [vmem:[%s311 + $0x3c] sm:$0xf]
        %v328 = vld [vmem:[%s311 + $0x40] sm:$0xf]
        %v329 = vld [vmem:[%s311 + $0x44] sm:$0x1]
        %v330 = vld [vmem:[%s311 + $0x48] sm:$0xf]
        %v331 = vld [vmem:[%s311 + $0x4c] sm:$0xf]
        %v332 = vld [vmem:[%s311 + $0x50] sm:$0x1]
        %v333 = vld [vmem:[%s311 + $0x54] sm:$0xf]
        %v334 = vld [vmem:[%s311 + $0x58] sm:$0xf]
        %v335 = vld [vmem:[%s311 + $0x5c] sm:$0x1]
        %v336 = vld [vmem:[%s311 + $0x60] sm:$0xf]
        %v337 = vld [vmem:[%s311 + $0x64] sm:$0xf]
        %v338 = vld [vmem:[%s311 + $0x68] sm:$0x1]
        %v339 = vld [vmem:[%s311 + $0x6c] sm:$0xf]
        %v340 = vld [vmem:[%s311 + $0x70] sm:$0xf]
        %v341 = vld [vmem:[%s311 + $0x74] sm:$0x1]
        %v342 = vld [vmem:[%s311 + $0x78] sm:$0xf]
        %v343 = vld [vmem:[%s311 + $0x7c] sm:$0xf]
        %v344 = vld [vmem:[%s311 + $0x80] sm:$0x1]
        %v345 = vld [vmem:[%s311 + $0x84] sm:$0xf]
        %v346 = vld [vmem:[%s311 + $0x88] sm:$0xf]
        %v347 = vld [vmem:[%s311 + $0x8c] sm:$0x1]
        %v372 = vunpack.c.l.b16 %v312
        %v373 = vunpack.c.l.b16 %v313
        %v374 = vunpack.c.l.b16 %v315
        %v375 = vunpack.c.l.b16 %v316
        %v376 = vunpack.c.l.b16 %v318
        %v377 = vunpack.c.l.b16 %v319
        %v378 = vunpack.c.l.b16 %v321
        %v379 = vunpack.c.l.b16 %v322
        %v380 = vunpack.c.l.b16 %v324
        %v381 = vunpack.c.l.b16 %v325
        %v382 = vunpack.c.l.b16 %v327
        %v383 = vunpack.c.l.b16 %v328
        %v384 = vunpack.c.l.b16 %v330
        %v385 = vunpack.c.l.b16 %v331
        %v386 = vunpack.c.l.b16 %v333
        %v387 = vunpack.c.l.b16 %v334
        %v388 = vunpack.c.l.b16 %v336
        %v389 = vunpack.c.l.b16 %v337
        %v390 = vunpack.c.l.b16 %v339
        %v391 = vunpack.c.l.b16 %v340
        %v392 = vunpack.c.l.b16 %v342
        %v393 = vunpack.c.l.b16 %v343
        %v394 = vunpack.c.l.b16 %v345
        %v395 = vunpack.c.l.b16 %v346
        %v396 = vpack.c.b16 %v373, %v372
        %v397 = vpack.c.b16 %v375, %v374
        %v398 = vpack.c.b16 %v377, %v376
        %v399 = vpack.c.b16 %v379, %v378
        %v400 = vpack.c.b16 %v381, %v380
        %v401 = vpack.c.b16 %v383, %v382
        %v402 = vpack.c.b16 %v385, %v384
        %v403 = vpack.c.b16 %v387, %v386
        %v404 = vpack.c.b16 %v389, %v388
        %v405 = vpack.c.b16 %v391, %v390
        %v406 = vpack.c.b16 %v393, %v392
        %v407 = vpack.c.b16 %v395, %v394
        %v432 = vunpack.c.l.b16 %v314
        %v433 = vunpack.c.l.b16 %v317
        %v434 = vunpack.c.l.b16 %v320
        %v435 = vunpack.c.l.b16 %v323
        %v436 = vunpack.c.l.b16 %v326
        %v437 = vunpack.c.l.b16 %v329
        %v438 = vunpack.c.l.b16 %v332
        %v439 = vunpack.c.l.b16 %v335
        %v440 = vunpack.c.l.b16 %v338
        %v441 = vunpack.c.l.b16 %v341
        %v442 = vunpack.c.l.b16 %v344
        %v443 = vunpack.c.l.b16 %v347
        %v444 = vpack.c.b16 %v432, %v432
        %v445 = vpack.c.b16 %v433, %v433
        %v446 = vpack.c.b16 %v434, %v434
        %v447 = vpack.c.b16 %v435, %v435
        %v448 = vpack.c.b16 %v436, %v436
        %v449 = vpack.c.b16 %v437, %v437
        %v450 = vpack.c.b16 %v438, %v438
        %v451 = vpack.c.b16 %v439, %v439
        %v452 = vpack.c.b16 %v440, %v440
        %v453 = vpack.c.b16 %v441, %v441
        %v454 = vpack.c.b16 %v442, %v442
        %v455 = vpack.c.b16 %v443, %v443
        %vm456 = vsmask.f32 7424
        %v458 = vshrl.u32 %v396, 16
        %v460 = vshll.u32 %v396, 16
        %v462 = vrot.slane %v460, 1
        %v463 = vor.u32 %v458, %v462
        %v465 = vshll.u32 %v444, 16
        %v467 = vrot.slane %v465, 1
        %v468 = vsel %vm456, %v463, %v467
        %v470 = vshrl.u32 %v397, 16
        %v472 = vshll.u32 %v397, 16
        %v474 = vrot.slane %v472, 1
        %v475 = vor.u32 %v470, %v474
        %v477 = vshll.u32 %v445, 16
        %v479 = vrot.slane %v477, 1
        %v480 = vsel %vm456, %v475, %v479
        %v482 = vshrl.u32 %v398, 16
        %v484 = vshll.u32 %v398, 16
        %v486 = vrot.slane %v484, 1
        %v487 = vor.u32 %v482, %v486
        %v489 = vshll.u32 %v446, 16
        %v491 = vrot.slane %v489, 1
        %v492 = vsel %vm456, %v487, %v491
        %v494 = vshrl.u32 %v399, 16
        %v496 = vshll.u32 %v399, 16
        %v498 = vrot.slane %v496, 1
        %v499 = vor.u32 %v494, %v498
        %v501 = vshll.u32 %v447, 16
        %v503 = vrot.slane %v501, 1
        %v504 = vsel %vm456, %v499, %v503
        %v506 = vshrl.u32 %v400, 16
        %v508 = vshll.u32 %v400, 16
        %v510 = vrot.slane %v508, 1
        %v511 = vor.u32 %v506, %v510
        %v513 = vshll.u32 %v448, 16
        %v515 = vrot.slane %v513, 1
        %v516 = vsel %vm456, %v511, %v515
        %v518 = vshrl.u32 %v401, 16
        %v520 = vshll.u32 %v401, 16
        %v522 = vrot.slane %v520, 1
        %v523 = vor.u32 %v518, %v522
        %v525 = vshll.u32 %v449, 16
        %v527 = vrot.slane %v525, 1
        %v528 = vsel %vm456, %v523, %v527
        %v530 = vshrl.u32 %v402, 16
        %v532 = vshll.u32 %v402, 16
        %v534 = vrot.slane %v532, 1
        %v535 = vor.u32 %v530, %v534
        %v537 = vshll.u32 %v450, 16
        %v539 = vrot.slane %v537, 1
        %v540 = vsel %vm456, %v535, %v539
        %v542 = vshrl.u32 %v403, 16
        %v544 = vshll.u32 %v403, 16
        %v546 = vrot.slane %v544, 1
        %v547 = vor.u32 %v542, %v546
        %v549 = vshll.u32 %v451, 16
        %v551 = vrot.slane %v549, 1
        %v552 = vsel %vm456, %v547, %v551
        %v554 = vshrl.u32 %v404, 16
        %v556 = vshll.u32 %v404, 16
        %v558 = vrot.slane %v556, 1
        %v559 = vor.u32 %v554, %v558
        %v561 = vshll.u32 %v452, 16
        %v563 = vrot.slane %v561, 1
        %v564 = vsel %vm456, %v559, %v563
        %v566 = vshrl.u32 %v405, 16
        %v568 = vshll.u32 %v405, 16
        %v570 = vrot.slane %v568, 1
        %v571 = vor.u32 %v566, %v570
        %v573 = vshll.u32 %v453, 16
        %v575 = vrot.slane %v573, 1
        %v576 = vsel %vm456, %v571, %v575
        %v578 = vshrl.u32 %v406, 16
        %v580 = vshll.u32 %v406, 16
        %v582 = vrot.slane %v580, 1
        %v583 = vor.u32 %v578, %v582
        %v585 = vshll.u32 %v454, 16
        %v587 = vrot.slane %v585, 1
        %v588 = vsel %vm456, %v583, %v587
        %v590 = vshrl.u32 %v407, 16
        %v592 = vshll.u32 %v407, 16
        %v594 = vrot.slane %v592, 1
        %v595 = vor.u32 %v590, %v594
        %v597 = vshll.u32 %v455, 16
        %v599 = vrot.slane %v597, 1
        %v600 = vsel %vm456, %v595, %v599
        %vm613 = vcmask 1046528
        %v614 = vrot.slane %v396, 1
        %v615 = vrot.slane %v444, 1
        %v616 = vsel %vm613, %v614, %v615
        %v617 = vrot.slane %v397, 1
        %v618 = vrot.slane %v445, 1
        %v619 = vsel %vm613, %v617, %v618
        %v620 = vrot.slane %v398, 1
        %v621 = vrot.slane %v446, 1
        %v622 = vsel %vm613, %v620, %v621
        %v623 = vrot.slane %v399, 1
        %v624 = vrot.slane %v447, 1
        %v625 = vsel %vm613, %v623, %v624
        %v626 = vrot.slane %v400, 1
        %v627 = vrot.slane %v448, 1
        %v628 = vsel %vm613, %v626, %v627
        %v629 = vrot.slane %v401, 1
        %v630 = vrot.slane %v449, 1
        %v631 = vsel %vm613, %v629, %v630
        %v632 = vrot.slane %v402, 1
        %v633 = vrot.slane %v450, 1
        %v634 = vsel %vm613, %v632, %v633
        %v635 = vrot.slane %v403, 1
        %v636 = vrot.slane %v451, 1
        %v637 = vsel %vm613, %v635, %v636
        %v638 = vrot.slane %v404, 1
        %v639 = vrot.slane %v452, 1
        %v640 = vsel %vm613, %v638, %v639
        %v641 = vrot.slane %v405, 1
        %v642 = vrot.slane %v453, 1
        %v643 = vsel %vm613, %v641, %v642
        %v644 = vrot.slane %v406, 1
        %v645 = vrot.slane %v454, 1
        %v646 = vsel %vm613, %v644, %v645
        %v647 = vrot.slane %v407, 1
        %v648 = vrot.slane %v455, 1
        %v649 = vsel %vm613, %v647, %v648
        %v662 = vld [vmem:[%s1] sm:$0xf]
        %v663 = vld [vmem:[%s1 + $0x4] sm:$0xf]
        %v664 = vld [vmem:[%s1 + $0x8] sm:$0xf]
        %v665 = vld [vmem:[%s1 + $0xc] sm:$0xf]
        %v666 = vld [vmem:[%s1 + $0x10] sm:$0xf]
        %v667 = vld [vmem:[%s1 + $0x14] sm:$0xf]
        %v668 = vld [vmem:[%s1 + $0x18] sm:$0xf]
        %v669 = vld [vmem:[%s1 + $0x1c] sm:$0xf]
        %v670 = vld [vmem:[%s1 + $0x20] sm:$0xf]
        %v671 = vld [vmem:[%s1 + $0x24] sm:$0xf]
        %v672 = vld [vmem:[%s1 + $0x28] sm:$0xf]
        %v673 = vld [vmem:[%s1 + $0x2c] sm:$0xf]
        %v674 = vld [vmem:[%s1 + $0x30] sm:$0xf]
        %v675 = vld [vmem:[%s1 + $0x34] sm:$0xf]
        %v676 = vld [vmem:[%s1 + $0x38] sm:$0xf]
        %v677 = vld [vmem:[%s1 + $0x3c] sm:$0xf]
        %v678 = vld [vmem:[%s1 + $0x40] sm:$0xf]
        %v679 = vld [vmem:[%s1 + $0x44] sm:$0xf]
        %v680 = vld [vmem:[%s1 + $0x48] sm:$0xf]
        %v681 = vld [vmem:[%s1 + $0x4c] sm:$0xf]
        %v682 = vld [vmem:[%s1 + $0x50] sm:$0xf]
        %v683 = vld [vmem:[%s1 + $0x54] sm:$0xf]
        %v684 = vld [vmem:[%s1 + $0x58] sm:$0xf]
        %v685 = vld [vmem:[%s1 + $0x5c] sm:$0xf]
        %v686 = vld [vmem:[%s1 + $0x60] sm:$0xf]
        %v687 = vld [vmem:[%s1 + $0x64] sm:$0xf]
        %v688 = vld [vmem:[%s1 + $0x68] sm:$0xf]
        %v689 = vld [vmem:[%s1 + $0x6c] sm:$0xf]
        %v690 = vld [vmem:[%s1 + $0x70] sm:$0xf]
        %v691 = vld [vmem:[%s1 + $0x74] sm:$0xf]
        %v692 = vld [vmem:[%s1 + $0x78] sm:$0xf]
        %v693 = vld [vmem:[%s1 + $0x7c] sm:$0xf]
        %v694 = vld [vmem:[%s1 + $0x80] sm:$0xf]
        %v695 = vld [vmem:[%s1 + $0x84] sm:$0xf]
        %v696 = vld [vmem:[%s1 + $0x88] sm:$0xf]
        %v697 = vld [vmem:[%s1 + $0x8c] sm:$0xf]
        %v698 = vld [vmem:[%s1 + $0x90] sm:$0xf]
        %v699 = vld [vmem:[%s1 + $0x94] sm:$0xf]
        %v700 = vld [vmem:[%s1 + $0x98] sm:$0xf]
        %v701 = vld [vmem:[%s1 + $0x9c] sm:$0xf]
        %v702 = vld [vmem:[%s1 + $0xa0] sm:$0xf]
        %v703 = vld [vmem:[%s1 + $0xa4] sm:$0xf]
        %v704 = vld [vmem:[%s1 + $0xa8] sm:$0xf]
        %v705 = vld [vmem:[%s1 + $0xac] sm:$0xf]
        %v706 = vld [vmem:[%s1 + $0xb0] sm:$0xf]
        %v707 = vld [vmem:[%s1 + $0xb4] sm:$0xf]
        %v708 = vld [vmem:[%s1 + $0xb8] sm:$0xf]
        %v709 = vld [vmem:[%s1 + $0xbc] sm:$0xf]
        %s710 = scalar_lea.vmem %s1, 192
        %v711 = vld [vmem:[%s710] sm:$0xf]
        %v712 = vld [vmem:[%s710 + $0x4] sm:$0xf]
        %v713 = vld [vmem:[%s710 + $0x8] sm:$0xf]
        %v714 = vld [vmem:[%s710 + $0xc] sm:$0xf]
        %v715 = vld [vmem:[%s710 + $0x10] sm:$0xf]
        %v716 = vld [vmem:[%s710 + $0x14] sm:$0xf]
        %v717 = vld [vmem:[%s710 + $0x18] sm:$0xf]
        %v718 = vld [vmem:[%s710 + $0x1c] sm:$0xf]
        %v719 = vld [vmem:[%s710 + $0x20] sm:$0xf]
        %v720 = vld [vmem:[%s710 + $0x24] sm:$0xf]
        %v721 = vld [vmem:[%s710 + $0x28] sm:$0xf]
        %v722 = vld [vmem:[%s710 + $0x2c] sm:$0xf]
        %v723 = vld [vmem:[%s710 + $0x30] sm:$0xf]
        %v724 = vld [vmem:[%s710 + $0x34] sm:$0xf]
        %v725 = vld [vmem:[%s710 + $0x38] sm:$0xf]
        %v726 = vld [vmem:[%s710 + $0x3c] sm:$0xf]
        %v727 = vld [vmem:[%s710 + $0x40] sm:$0xf]
        %v728 = vld [vmem:[%s710 + $0x44] sm:$0xf]
        %v729 = vld [vmem:[%s710 + $0x48] sm:$0xf]
        %v730 = vld [vmem:[%s710 + $0x4c] sm:$0xf]
        %v731 = vld [vmem:[%s710 + $0x50] sm:$0xf]
        %v732 = vld [vmem:[%s710 + $0x54] sm:$0xf]
        %v733 = vld [vmem:[%s710 + $0x58] sm:$0xf]
        %v734 = vld [vmem:[%s710 + $0x5c] sm:$0xf]
        %v735 = vld [vmem:[%s710 + $0x60] sm:$0xf]
        %v736 = vld [vmem:[%s710 + $0x64] sm:$0xf]
        %v737 = vld [vmem:[%s710 + $0x68] sm:$0xf]
        %v738 = vld [vmem:[%s710 + $0x6c] sm:$0xf]
        %v739 = vld [vmem:[%s710 + $0x70] sm:$0xf]
        %v740 = vld [vmem:[%s710 + $0x74] sm:$0xf]
        %v741 = vld [vmem:[%s710 + $0x78] sm:$0xf]
        %v742 = vld [vmem:[%s710 + $0x7c] sm:$0xf]
        %v743 = vld [vmem:[%s710 + $0x80] sm:$0xf]
        %v744 = vld [vmem:[%s710 + $0x84] sm:$0xf]
        %v745 = vld [vmem:[%s710 + $0x88] sm:$0xf]
        %v746 = vld [vmem:[%s710 + $0x8c] sm:$0xf]
        %v747 = vld [vmem:[%s710 + $0x90] sm:$0xf]
        %v748 = vld [vmem:[%s710 + $0x94] sm:$0xf]
        %v749 = vld [vmem:[%s710 + $0x98] sm:$0xf]
        %v750 = vld [vmem:[%s710 + $0x9c] sm:$0xf]
        %v751 = vld [vmem:[%s710 + $0xa0] sm:$0xf]
        %v752 = vld [vmem:[%s710 + $0xa4] sm:$0xf]
        %v753 = vld [vmem:[%s710 + $0xa8] sm:$0xf]
        %v754 = vld [vmem:[%s710 + $0xac] sm:$0xf]
        %v755 = vld [vmem:[%s710 + $0xb0] sm:$0xf]
        %v756 = vld [vmem:[%s710 + $0xb4] sm:$0xf]
        %v757 = vld [vmem:[%s710 + $0xb8] sm:$0xf]
        %v758 = vld [vmem:[%s710 + $0xbc] sm:$0xf]
        %v807 = vunpack.c.l.b16 %v711
        %v808 = vunpack.c.l.b16 %v712
        %v809 = vunpack.c.l.b16 %v713
        %v810 = vunpack.c.l.b16 %v714
        %v811 = vunpack.c.l.b16 %v715
        %v812 = vunpack.c.l.b16 %v716
        %v813 = vunpack.c.l.b16 %v717
        %v814 = vunpack.c.l.b16 %v718
        %v815 = vunpack.c.l.b16 %v719
        %v816 = vunpack.c.l.b16 %v720
        %v817 = vunpack.c.l.b16 %v721
        %v818 = vunpack.c.l.b16 %v722
        %v819 = vunpack.c.l.b16 %v723
        %v820 = vunpack.c.l.b16 %v724
        %v821 = vunpack.c.l.b16 %v725
        %v822 = vunpack.c.l.b16 %v726
        %v823 = vunpack.c.l.b16 %v727
        %v824 = vunpack.c.l.b16 %v728
        %v825 = vunpack.c.l.b16 %v729
        %v826 = vunpack.c.l.b16 %v730
        %v827 = vunpack.c.l.b16 %v731
        %v828 = vunpack.c.l.b16 %v732
        %v829 = vunpack.c.l.b16 %v733
        %v830 = vunpack.c.l.b16 %v734
        %v831 = vunpack.c.l.b16 %v735
        %v832 = vunpack.c.l.b16 %v736
        %v833 = vunpack.c.l.b16 %v737
        %v834 = vunpack.c.l.b16 %v738
        %v835 = vunpack.c.l.b16 %v739
        %v836 = vunpack.c.l.b16 %v740
        %v837 = vunpack.c.l.b16 %v741
        %v838 = vunpack.c.l.b16 %v742
        %v839 = vunpack.c.l.b16 %v743
        %v840 = vunpack.c.l.b16 %v744
        %v841 = vunpack.c.l.b16 %v745
        %v842 = vunpack.c.l.b16 %v746
        %v843 = vunpack.c.l.b16 %v747
        %v844 = vunpack.c.l.b16 %v748
        %v845 = vunpack.c.l.b16 %v749
        %v846 = vunpack.c.l.b16 %v750
        %v847 = vunpack.c.l.b16 %v751
        %v848 = vunpack.c.l.b16 %v752
        %v849 = vunpack.c.l.b16 %v753
        %v850 = vunpack.c.l.b16 %v754
        %v851 = vunpack.c.l.b16 %v755
        %v852 = vunpack.c.l.b16 %v756
        %v853 = vunpack.c.l.b16 %v757
        %v854 = vunpack.c.l.b16 %v758
        %v855 = vpack.c.b16 %v808, %v807
        %v856 = vpack.c.b16 %v810, %v809
        %v857 = vpack.c.b16 %v812, %v811
        %v858 = vpack.c.b16 %v814, %v813
        %v859 = vpack.c.b16 %v816, %v815
        %v860 = vpack.c.b16 %v818, %v817
        %v861 = vpack.c.b16 %v820, %v819
        %v862 = vpack.c.b16 %v822, %v821
        %v863 = vpack.c.b16 %v824, %v823
        %v864 = vpack.c.b16 %v826, %v825
        %v865 = vpack.c.b16 %v828, %v827
        %v866 = vpack.c.b16 %v830, %v829
        %v867 = vpack.c.b16 %v832, %v831
        %v868 = vpack.c.b16 %v834, %v833
        %v869 = vpack.c.b16 %v836, %v835
        %v870 = vpack.c.b16 %v838, %v837
        %v871 = vpack.c.b16 %v840, %v839
        %v872 = vpack.c.b16 %v842, %v841
        %v873 = vpack.c.b16 %v844, %v843
        %v874 = vpack.c.b16 %v846, %v845
        %v875 = vpack.c.b16 %v848, %v847
        %v876 = vpack.c.b16 %v850, %v849
        %v877 = vpack.c.b16 %v852, %v851
        %v878 = vpack.c.b16 %v854, %v853
        %903 = vmatprep.subr.bf16.mxu0 0
        %904 = vmatpush1.bf16.msra.mxu0 %v855
        %905 = vmatprep.subr.bf16.mxu0 0
        %906 = vmatpush1.bf16.msra.mxu0 %v856
        %907 = vmatprep.subr.bf16.mxu0 0
        %908 = vmatpush1.bf16.msra.mxu0 %v857
        %909 = vmatprep.subr.bf16.mxu0 0
        %910 = vmatpush1.bf16.msra.mxu0 %v858
        %911 = vmatprep.subr.bf16.mxu0 0
        %912 = vmatpush1.bf16.msra.mxu0 %v859
        %913 = vmatprep.subr.bf16.mxu0 0
        %914 = vmatpush1.bf16.msra.mxu0 %v860
        %915 = vmatprep.subr.bf16.mxu0 0
        %916 = vmatpush1.bf16.msra.mxu0 %v861
        %917 = vmatprep.subr.bf16.mxu0 0
        %918 = vmatpush1.bf16.msra.mxu0 %v862
        %919 = vmatprep.subr.bf16.mxu0 0
        %920 = vmatpush1.bf16.msra.mxu0 %v863
        %921 = vmatprep.subr.bf16.mxu0 0
        %922 = vmatpush1.bf16.msra.mxu0 %v864
        %923 = vmatprep.subr.bf16.mxu0 0
        %924 = vmatpush1.bf16.msra.mxu0 %v865
        %925 = vmatprep.subr.bf16.mxu0 0
        %926 = vmatpush1.bf16.msra.mxu0 %v866
        %927 = vmatprep.subr.bf16.mxu0 0
        %928 = vmatpush1.bf16.msra.mxu0 %v867
        %929 = vmatprep.subr.bf16.mxu0 0
        %930 = vmatpush1.bf16.msra.mxu0 %v868
        %931 = vmatprep.subr.bf16.mxu0 0
        %932 = vmatpush1.bf16.msra.mxu0 %v869
        %933 = vmatprep.subr.bf16.mxu0 0
        %934 = vmatpush1.bf16.msra.mxu0 %v870
        %935 = vmatprep.mubr.bf16.mxu0 %v480
        %936 = vmatmul.mubr.bf16.gmra.mrb[0].mxu0 %v397
        %v937 = vpop.f32.mrb[0].mxu0
        %v938 = vadd.f32 0.0, %v937
        %v939 = vpop.f32.mrb[0].mxu0
        %v940 = vpop.f32.mrb[0].mxu0
        %v941 = vadd.f32 0.0, %v940
        %v942 = vpop.f32.mrb[0].mxu0
        %943 = vmatprep.mubr.bf16.mxu0 %v492
        %944 = vmatmul.mubr.bf16.gmra.mrb[0].mxu0 %v398
        %v945 = vpop.f32.mrb[0].mxu0
        %v946 = vadd.f32 0.0, %v945
        %v947 = vpop.f32.mrb[0].mxu0
        %v948 = vpop.f32.mrb[0].mxu0
        %v949 = vadd.f32 0.0, %v948
        %v950 = vpop.f32.mrb[0].mxu0
        %951 = vmatprep.mubr.bf16.mxu0 %v504
        %952 = vmatmul.mubr.bf16.gmra.mrb[0].mxu0 %v399
        %v953 = vpop.f32.mrb[0].mxu0
        %v954 = vadd.f32 0.0, %v953
        %v955 = vpop.f32.mrb[0].mxu0
        %v956 = vpop.f32.mrb[0].mxu0
        %v957 = vadd.f32 0.0, %v956
        %v958 = vpop.f32.mrb[0].mxu0
        %959 = vmatprep.mubr.bf16.mxu0 %v516
        %960 = vmatmul.mubr.bf16.gmra.mrb[0].mxu0 %v400
        %v961 = vpop.f32.mrb[0].mxu0
        %v962 = vadd.f32 0.0, %v961
        %v963 = vpop.f32.mrb[0].mxu0
        %v964 = vpop.f32.mrb[0].mxu0
        %v965 = vadd.f32 0.0, %v964
        %v966 = vpop.f32.mrb[0].mxu0
        %967 = vmatprep.mubr.bf16.mxu0 %v528
        %968 = vmatmul.mubr.bf16.gmra.mrb[0].mxu0 %v401
        %v969 = vpop.f32.mrb[0].mxu0
        %v970 = vadd.f32 0.0, %v969
        %v971 = vpop.f32.mrb[0].mxu0
        %v972 = vpop.f32.mrb[0].mxu0
        %v973 = vadd.f32 0.0, %v972
        %v974 = vpop.f32.mrb[0].mxu0
        %975 = vmatprep.mubr.bf16.mxu0 %v540
        %976 = vmatmul.mubr.bf16.gmra.mrb[0].mxu0 %v402
        %v977 = vpop.f32.mrb[0].mxu0
        %v978 = vadd.f32 0.0, %v977
        %v979 = vpop.f32.mrb[0].mxu0
        %v980 = vpop.f32.mrb[0].mxu0
        %v981 = vadd.f32 0.0, %v980
        %v982 = vpop.f32.mrb[0].mxu0
        %983 = vmatprep.mubr.bf16.mxu0 %v552
        %984 = vmatmul.mubr.bf16.gmra.mrb[0].mxu0 %v403
        %v985 = vpop.f32.mrb[0].mxu0
        %v986 = vadd.f32 0.0, %v985
        %v987 = vpop.f32.mrb[0].mxu0
        %v988 = vpop.f32.mrb[0].mxu0
        %v989 = vadd.f32 0.0, %v988
        %v990 = vpop.f32.mrb[0].mxu0
        %991 = vmatprep.mubr.bf16.mxu0 %v564
        %992 = vmatmul.mubr.bf16.gmra.mrb[0].mxu0 %v404
        %v993 = vpop.f32.mrb[0].mxu0
        %v994 = vadd.f32 0.0, %v993
        %v995 = vpop.f32.mrb[0].mxu0
        %v996 = vpop.f32.mrb[0].mxu0
        %v997 = vadd.f32 0.0, %v996
        %v998 = vpop.f32.mrb[0].mxu0
        %999 = vmatprep.mubr.bf16.mxu0 %v576
        %1000 = vmatmul.mubr.bf16.gmra.mrb[0].mxu0 %v405
        %v1001 = vpop.f32.mrb[0].mxu0
        %v1002 = vadd.f32 0.0, %v1001
        %v1003 = vpop.f32.mrb[0].mxu0
        %v1004 = vpop.f32.mrb[0].mxu0
        %v1005 = vadd.f32 0.0, %v1004
        %v1006 = vpop.f32.mrb[0].mxu0
        %1007 = vmatprep.mubr.bf16.mxu0 %v588
        %1008 = vmatmul.mubr.bf16.gmra.mrb[0].mxu0 %v406
        %v1009 = vpop.f32.mrb[0].mxu0
        %v1010 = vadd.f32 0.0, %v1009
        %v1011 = vpop.f32.mrb[0].mxu0
        %v1012 = vpop.f32.mrb[0].mxu0
        %v1013 = vadd.f32 0.0, %v1012
        %v1014 = vpop.f32.mrb[0].mxu0
        %1015 = vdwg.mxu0
        %1016 = vmatprep.subr.bf16.mxu0 0
        %1017 = vmatpush1.bf16.msra.mxu0 %v871
        %1018 = vmatprep.subr.bf16.mxu0 0
        %1019 = vmatpush1.bf16.msra.mxu0 %v872
        %1020 = vmatprep.subr.bf16.mxu0 0
        %1021 = vmatpush1.bf16.msra.mxu0 %v873
        %1022 = vmatprep.subr.bf16.mxu0 0
        %1023 = vmatpush1.bf16.msra.mxu0 %v874
        %1024 = vmatprep.subr.bf16.mxu0 0
        %1025 = vmatpush1.bf16.msra.mxu0 %v875
        %1026 = vmatprep.subr.bf16.mxu0 0
        %1027 = vmatpush1.bf16.msra.mxu0 %v876
        %1028 = vmatprep.subr.bf16.mxu0 0
        %1029 = vmatpush1.bf16.msra.mxu0 %v877
        %1030 = vmatprep.subr.bf16.mxu0 0
        %1031 = vmatpush1.bf16.msra.mxu0 %v878
        %1032 = vmatprep.subr.bf16.mxu0 0
        %1033 = vmatpush1.bf16.msra.mxu0 0
        %1034 = vmatprep.subr.bf16.mxu0 0
        %1035 = vmatpush1.bf16.msra.mxu0 0
        %1036 = vmatprep.subr.bf16.mxu0 0
        %1037 = vmatpush1.bf16.msra.mxu0 0
        %1038 = vmatprep.subr.bf16.mxu0 0
        %1039 = vmatpush1.bf16.msra.mxu0 0
        %1040 = vmatprep.subr.bf16.mxu0 0
        %1041 = vmatpush1.bf16.msra.mxu0 0
        %1042 = vmatprep.subr.bf16.mxu0 0
        %1043 = vmatpush1.bf16.msra.mxu0 0
        %1044 = vmatprep.subr.bf16.mxu0 0
        %1045 = vmatpush1.bf16.msra.mxu0 0
        %1046 = vmatprep.subr.bf16.mxu0 0
        %1047 = vmatpush1.bf16.msra.mxu0 0
        %1048 = vmatprep.mubr.bf16.mxu0 0
        %1049 = vmatmul.mubr.bf16.gmra.mrb[0].mxu0 %v619
        %v1050 = vpop.f32.mrb[0].mxu0
        %v1051 = vadd.f32 %v938, %v1050
        %v1052 = vpop.f32.mrb[0].mxu0
        %v1053 = vpop.f32.mrb[0].mxu0
        %v1054 = vadd.f32 %v941, %v1053
        %v1055 = vpop.f32.mrb[0].mxu0
        %1056 = vmatprep.mubr.bf16.mxu0 0
        %1057 = vmatmul.mubr.bf16.gmra.mrb[0].mxu0 %v622
        %v1058 = vpop.f32.mrb[0].mxu0
        %v1059 = vadd.f32 %v946, %v1058
        %v1060 = vpop.f32.mrb[0].mxu0
        %v1061 = vpop.f32.mrb[0].mxu0
        %v1062 = vadd.f32 %v949, %v1061
        %v1063 = vpop.f32.mrb[0].mxu0
        %1064 = vmatprep.mubr.bf16.mxu0 0
        %1065 = vmatmul.mubr.bf16.gmra.mrb[0].mxu0 %v625
        %v1066 = vpop.f32.mrb[0].mxu0
        %v1067 = vadd.f32 %v954, %v1066
        %v1068 = vpop.f32.mrb[0].mxu0
        %v1069 = vpop.f32.mrb[0].mxu0
        %v1070 = vadd.f32 %v957, %v1069
        %v1071 = vpop.f32.mrb[0].mxu0
        %1072 = vmatprep.mubr.bf16.mxu0 0
        %1073 = vmatmul.mubr.bf16.gmra.mrb[0].mxu0 %v628
        %v1074 = vpop.f32.mrb[0].mxu0
        %v1075 = vadd.f32 %v962, %v1074
        %v1076 = vpop.f32.mrb[0].mxu0
        %v1077 = vpop.f32.mrb[0].mxu0
        %v1078 = vadd.f32 %v965, %v1077
        %v1079 = vpop.f32.mrb[0].mxu0
        %1080 = vmatprep.mubr.bf16.mxu0 0
        %1081 = vmatmul.mubr.bf16.gmra.mrb[0].mxu0 %v631
        %v1082 = vpop.f32.mrb[0].mxu0
        %v1083 = vadd.f32 %v970, %v1082
        %v1084 = vpop.f32.mrb[0].mxu0
        %v1085 = vpop.f32.mrb[0].mxu0
        %v1086 = vadd.f32 %v973, %v1085
        %v1087 = vpop.f32.mrb[0].mxu0
        %1088 = vmatprep.mubr.bf16.mxu0 0
        %1089 = vmatmul.mubr.bf16.gmra.mrb[0].mxu0 %v634
        %v1090 = vpop.f32.mrb[0].mxu0
        %v1091 = vadd.f32 %v978, %v1090
        %v1092 = vpop.f32.mrb[0].mxu0
        %v1093 = vpop.f32.mrb[0].mxu0
        %v1094 = vadd.f32 %v981, %v1093
        %v1095 = vpop.f32.mrb[0].mxu0
        %1096 = vmatprep.mubr.bf16.mxu0 0
        %1097 = vmatmul.mubr.bf16.gmra.mrb[0].mxu0 %v637
        %v1098 = vpop.f32.mrb[0].mxu0
        %v1099 = vadd.f32 %v986, %v1098
        %v1100 = vpop.f32.mrb[0].mxu0
        %v1101 = vpop.f32.mrb[0].mxu0
        %v1102 = vadd.f32 %v989, %v1101
        %v1103 = vpop.f32.mrb[0].mxu0
        %1104 = vmatprep.mubr.bf16.mxu0 0
        %1105 = vmatmul.mubr.bf16.gmra.mrb[0].mxu0 %v640
        %v1106 = vpop.f32.mrb[0].mxu0
        %v1107 = vadd.f32 %v994, %v1106
        %v1108 = vpop.f32.mrb[0].mxu0
        %v1109 = vpop.f32.mrb[0].mxu0
        %v1110 = vadd.f32 %v997, %v1109
        %v1111 = vpop.f32.mrb[0].mxu0
        %1112 = vmatprep.mubr.bf16.mxu0 0
        %1113 = vmatmul.mubr.bf16.gmra.mrb[0].mxu0 %v643
        %v1114 = vpop.f32.mrb[0].mxu0
        %v1115 = vadd.f32 %v1002, %v1114
        %v1116 = vpop.f32.mrb[0].mxu0
        %v1117 = vpop.f32.mrb[0].mxu0
        %v1118 = vadd.f32 %v1005, %v1117
        %v1119 = vpop.f32.mrb[0].mxu0
        %1120 = vmatprep.mubr.bf16.mxu0 0
        %1121 = vmatmul.mubr.bf16.gmra.mrb[0].mxu0 %v646
        %v1122 = vpop.f32.mrb[0].mxu0
        %v1123 = vadd.f32 %v1010, %v1122
        %v1124 = vpop.f32.mrb[0].mxu0
        %v1125 = vpop.f32.mrb[0].mxu0
        %v1126 = vadd.f32 %v1013, %v1125
        %v1127 = vpop.f32.mrb[0].mxu0
        %1128 = vdwg.mxu0
        %v1177 = vunpack.c.l.b16 %v662
        %v1178 = vunpack.c.l.b16 %v663
        %v1179 = vunpack.c.l.b16 %v664
        %v1180 = vunpack.c.l.b16 %v665
        %v1181 = vunpack.c.l.b16 %v666
        %v1182 = vunpack.c.l.b16 %v667
        %v1183 = vunpack.c.l.b16 %v668
        %v1184 = vunpack.c.l.b16 %v669
        %v1185 = vunpack.c.l.b16 %v670
        %v1186 = vunpack.c.l.b16 %v671
        %v1187 = vunpack.c.l.b16 %v672
        %v1188 = vunpack.c.l.b16 %v673
        %v1189 = vunpack.c.l.b16 %v674
        %v1190 = vunpack.c.l.b16 %v675
        %v1191 = vunpack.c.l.b16 %v676
        %v1192 = vunpack.c.l.b16 %v677
        %v1193 = vunpack.c.l.b16 %v678
        %v1194 = vunpack.c.l.b16 %v679
        %v1195 = vunpack.c.l.b16 %v680
        %v1196 = vunpack.c.l.b16 %v681
        %v1197 = vunpack.c.l.b16 %v682
        %v1198 = vunpack.c.l.b16 %v683
        %v1199 = vunpack.c.l.b16 %v684
        %v1200 = vunpack.c.l.b16 %v685
        %v1201 = vunpack.c.l.b16 %v686
        %v1202 = vunpack.c.l.b16 %v687
        %v1203 = vunpack.c.l.b16 %v688
        %v1204 = vunpack.c.l.b16 %v689
        %v1205 = vunpack.c.l.b16 %v690
        %v1206 = vunpack.c.l.b16 %v691
        %v1207 = vunpack.c.l.b16 %v692
        %v1208 = vunpack.c.l.b16 %v693
        %v1209 = vunpack.c.l.b16 %v694
        %v1210 = vunpack.c.l.b16 %v695
        %v1211 = vunpack.c.l.b16 %v696
        %v1212 = vunpack.c.l.b16 %v697
        %v1213 = vunpack.c.l.b16 %v698
        %v1214 = vunpack.c.l.b16 %v699
        %v1215 = vunpack.c.l.b16 %v700
        %v1216 = vunpack.c.l.b16 %v701
        %v1217 = vunpack.c.l.b16 %v702
        %v1218 = vunpack.c.l.b16 %v703
        %v1219 = vunpack.c.l.b16 %v704
        %v1220 = vunpack.c.l.b16 %v705
        %v1221 = vunpack.c.l.b16 %v706
        %v1222 = vunpack.c.l.b16 %v707
        %v1223 = vunpack.c.l.b16 %v708
        %v1224 = vunpack.c.l.b16 %v709
        %v1225 = vpack.c.b16 %v1178, %v1177
        %v1226 = vpack.c.b16 %v1180, %v1179
        %v1227 = vpack.c.b16 %v1182, %v1181
        %v1228 = vpack.c.b16 %v1184, %v1183
        %v1229 = vpack.c.b16 %v1186, %v1185
        %v1230 = vpack.c.b16 %v1188, %v1187
        %v1231 = vpack.c.b16 %v1190, %v1189
        %v1232 = vpack.c.b16 %v1192, %v1191
        %v1233 = vpack.c.b16 %v1194, %v1193
        %v1234 = vpack.c.b16 %v1196, %v1195
        %v1235 = vpack.c.b16 %v1198, %v1197
        %v1236 = vpack.c.b16 %v1200, %v1199
        %v1237 = vpack.c.b16 %v1202, %v1201
        %v1238 = vpack.c.b16 %v1204, %v1203
        %v1239 = vpack.c.b16 %v1206, %v1205
        %v1240 = vpack.c.b16 %v1208, %v1207
        %v1241 = vpack.c.b16 %v1210, %v1209
        %v1242 = vpack.c.b16 %v1212, %v1211
        %v1243 = vpack.c.b16 %v1214, %v1213
        %v1244 = vpack.c.b16 %v1216, %v1215
        %v1245 = vpack.c.b16 %v1218, %v1217
        %v1246 = vpack.c.b16 %v1220, %v1219
        %v1247 = vpack.c.b16 %v1222, %v1221
        %v1248 = vpack.c.b16 %v1224, %v1223
        %1273 = vmatprep.subr.bf16.mxu0 0
        %1274 = vmatpush1.bf16.msra.mxu0 %v1225
        %1275 = vmatprep.subr.bf16.mxu0 0
        %1276 = vmatpush1.bf16.msra.mxu0 %v1226
        %1277 = vmatprep.subr.bf16.mxu0 0
        %1278 = vmatpush1.bf16.msra.mxu0 %v1227
        %1279 = vmatprep.subr.bf16.mxu0 0
        %1280 = vmatpush1.bf16.msra.mxu0 %v1228
        %1281 = vmatprep.subr.bf16.mxu0 0
        %1282 = vmatpush1.bf16.msra.mxu0 %v1229
        %1283 = vmatprep.subr.bf16.mxu0 0
        %1284 = vmatpush1.bf16.msra.mxu0 %v1230
        %1285 = vmatprep.subr.bf16.mxu0 0
        %1286 = vmatpush1.bf16.msra.mxu0 %v1231
        %1287 = vmatprep.subr.bf16.mxu0 0
        %1288 = vmatpush1.bf16.msra.mxu0 %v1232
        %1289 = vmatprep.subr.bf16.mxu0 0
        %1290 = vmatpush1.bf16.msra.mxu0 %v1233
        %1291 = vmatprep.subr.bf16.mxu0 0
        %1292 = vmatpush1.bf16.msra.mxu0 %v1234
        %1293 = vmatprep.subr.bf16.mxu0 0
        %1294 = vmatpush1.bf16.msra.mxu0 %v1235
        %1295 = vmatprep.subr.bf16.mxu0 0
        %1296 = vmatpush1.bf16.msra.mxu0 %v1236
        %1297 = vmatprep.subr.bf16.mxu0 0
        %1298 = vmatpush1.bf16.msra.mxu0 %v1237
        %1299 = vmatprep.subr.bf16.mxu0 0
        %1300 = vmatpush1.bf16.msra.mxu0 %v1238
        %1301 = vmatprep.subr.bf16.mxu0 0
        %1302 = vmatpush1.bf16.msra.mxu0 %v1239
        %1303 = vmatprep.subr.bf16.mxu0 0
        %1304 = vmatpush1.bf16.msra.mxu0 %v1240
        %1305 = vmatprep.mubr.bf16.mxu0 %v468
        %1306 = vmatmul.mubr.bf16.gmra.mrb[0].mxu0 %v396
        %v1307 = vpop.f32.mrb[0].mxu0
        %v1308 = vadd.f32 %v1051, %v1307
        %v1309 = vpop.f32.mrb[0].mxu0
        %v1310 = vpop.f32.mrb[0].mxu0
        %v1311 = vadd.f32 %v1054, %v1310
        %v1312 = vpop.f32.mrb[0].mxu0
        %1313 = vmatprep.mubr.bf16.mxu0 %v480
        %1314 = vmatmul.mubr.bf16.gmra.mrb[0].mxu0 %v397
        %v1315 = vpop.f32.mrb[0].mxu0
        %v1316 = vadd.f32 %v1059, %v1315
        %v1317 = vpop.f32.mrb[0].mxu0
        %v1318 = vpop.f32.mrb[0].mxu0
        %v1319 = vadd.f32 %v1062, %v1318
        %v1320 = vpop.f32.mrb[0].mxu0
        %1321 = vmatprep.mubr.bf16.mxu0 %v492
        %1322 = vmatmul.mubr.bf16.gmra.mrb[0].mxu0 %v398
        %v1323 = vpop.f32.mrb[0].mxu0
        %v1324 = vadd.f32 %v1067, %v1323
        %v1325 = vpop.f32.mrb[0].mxu0
        %v1326 = vpop.f32.mrb[0].mxu0
        %v1327 = vadd.f32 %v1070, %v1326
        %v1328 = vpop.f32.mrb[0].mxu0
        %1329 = vmatprep.mubr.bf16.mxu0 %v504
        %1330 = vmatmul.mubr.bf16.gmra.mrb[0].mxu0 %v399
        %v1331 = vpop.f32.mrb[0].mxu0
        %v1332 = vadd.f32 %v1075, %v1331
        %v1333 = vpop.f32.mrb[0].mxu0
        %v1334 = vpop.f32.mrb[0].mxu0
        %v1335 = vadd.f32 %v1078, %v1334
        %v1336 = vpop.f32.mrb[0].mxu0
        %1337 = vmatprep.mubr.bf16.mxu0 %v516
        %1338 = vmatmul.mubr.bf16.gmra.mrb[0].mxu0 %v400
        %v1339 = vpop.f32.mrb[0].mxu0
        %v1340 = vadd.f32 %v1083, %v1339
        %v1341 = vpop.f32.mrb[0].mxu0
        %v1342 = vpop.f32.mrb[0].mxu0
        %v1343 = vadd.f32 %v1086, %v1342
        %v1344 = vpop.f32.mrb[0].mxu0
        %1345 = vmatprep.mubr.bf16.mxu0 %v528
        %1346 = vmatmul.mubr.bf16.gmra.mrb[0].mxu0 %v401
        %v1347 = vpop.f32.mrb[0].mxu0
        %v1348 = vadd.f32 %v1091, %v1347
        %v1349 = vpop.f32.mrb[0].mxu0
        %v1350 = vpop.f32.mrb[0].mxu0
        %v1351 = vadd.f32 %v1094, %v1350
        %v1352 = vpop.f32.mrb[0].mxu0
        %1353 = vmatprep.mubr.bf16.mxu0 %v540
        %1354 = vmatmul.mubr.bf16.gmra.mrb[0].mxu0 %v402
        %v1355 = vpop.f32.mrb[0].mxu0
        %v1356 = vadd.f32 %v1099, %v1355
        %v1357 = vpop.f32.mrb[0].mxu0
        %v1358 = vpop.f32.mrb[0].mxu0
        %v1359 = vadd.f32 %v1102, %v1358
        %v1360 = vpop.f32.mrb[0].mxu0
        %1361 = vmatprep.mubr.bf16.mxu0 %v552
        %1362 = vmatmul.mubr.bf16.gmra.mrb[0].mxu0 %v403
        %v1363 = vpop.f32.mrb[0].mxu0
        %v1364 = vadd.f32 %v1107, %v1363
        %v1365 = vpop.f32.mrb[0].mxu0
        %v1366 = vpop.f32.mrb[0].mxu0
        %v1367 = vadd.f32 %v1110, %v1366
        %v1368 = vpop.f32.mrb[0].mxu0
        %1369 = vmatprep.mubr.bf16.mxu0 %v564
        %1370 = vmatmul.mubr.bf16.gmra.mrb[0].mxu0 %v404
        %v1371 = vpop.f32.mrb[0].mxu0
        %v1372 = vadd.f32 %v1115, %v1371
        %v1373 = vpop.f32.mrb[0].mxu0
        %v1374 = vpop.f32.mrb[0].mxu0
        %v1375 = vadd.f32 %v1118, %v1374
        %v1376 = vpop.f32.mrb[0].mxu0
        %1377 = vmatprep.mubr.bf16.mxu0 %v576
        %1378 = vmatmul.mubr.bf16.gmra.mrb[0].mxu0 %v405
        %v1379 = vpop.f32.mrb[0].mxu0
        %v1380 = vadd.f32 %v1123, %v1379
        %v1381 = vpop.f32.mrb[0].mxu0
        %v1382 = vpop.f32.mrb[0].mxu0
        %v1383 = vadd.f32 %v1126, %v1382
        %v1384 = vpop.f32.mrb[0].mxu0
        %1385 = vdwg.mxu0
        %1386 = vmatprep.subr.bf16.mxu0 0
        %1387 = vmatpush1.bf16.msra.mxu0 %v1241
        %1388 = vmatprep.subr.bf16.mxu0 0
        %1389 = vmatpush1.bf16.msra.mxu0 %v1242
        %1390 = vmatprep.subr.bf16.mxu0 0
        %1391 = vmatpush1.bf16.msra.mxu0 %v1243
        %1392 = vmatprep.subr.bf16.mxu0 0
        %1393 = vmatpush1.bf16.msra.mxu0 %v1244
        %1394 = vmatprep.subr.bf16.mxu0 0
        %1395 = vmatpush1.bf16.msra.mxu0 %v1245
        %1396 = vmatprep.subr.bf16.mxu0 0
        %1397 = vmatpush1.bf16.msra.mxu0 %v1246
        %1398 = vmatprep.subr.bf16.mxu0 0
        %1399 = vmatpush1.bf16.msra.mxu0 %v1247
        %1400 = vmatprep.subr.bf16.mxu0 0
        %1401 = vmatpush1.bf16.msra.mxu0 %v1248
        %1402 = vmatprep.subr.bf16.mxu0 0
        %1403 = vmatpush1.bf16.msra.mxu0 0
        %1404 = vmatprep.subr.bf16.mxu0 0
        %1405 = vmatpush1.bf16.msra.mxu0 0
        %1406 = vmatprep.subr.bf16.mxu0 0
        %1407 = vmatpush1.bf16.msra.mxu0 0
        %1408 = vmatprep.subr.bf16.mxu0 0
        %1409 = vmatpush1.bf16.msra.mxu0 0
        %1410 = vmatprep.subr.bf16.mxu0 0
        %1411 = vmatpush1.bf16.msra.mxu0 0
        %1412 = vmatprep.subr.bf16.mxu0 0
        %1413 = vmatpush1.bf16.msra.mxu0 0
        %1414 = vmatprep.subr.bf16.mxu0 0
        %1415 = vmatpush1.bf16.msra.mxu0 0
        %1416 = vmatprep.subr.bf16.mxu0 0
        %1417 = vmatpush1.bf16.msra.mxu0 0
        %1418 = vmatprep.mubr.bf16.mxu0 0
        %1419 = vmatmul.mubr.bf16.gmra.mrb[0].mxu0 %v616
        %v1420 = vpop.f32.mrb[0].mxu0
        %v1421 = vadd.f32 %v1308, %v1420
        %v1422 = vpop.f32.mrb[0].mxu0
        %v1423 = vpop.f32.mrb[0].mxu0
        %v1424 = vadd.f32 %v1311, %v1423
        %v1425 = vpop.f32.mrb[0].mxu0
        %1426 = vmatprep.mubr.bf16.mxu0 0
        %1427 = vmatmul.mubr.bf16.gmra.mrb[0].mxu0 %v619
        %v1428 = vpop.f32.mrb[0].mxu0
        %v1429 = vadd.f32 %v1316, %v1428
        %v1430 = vpop.f32.mrb[0].mxu0
        %v1431 = vpop.f32.mrb[0].mxu0
        %v1432 = vadd.f32 %v1319, %v1431
        %v1433 = vpop.f32.mrb[0].mxu0
        %1434 = vmatprep.mubr.bf16.mxu0 0
        %1435 = vmatmul.mubr.bf16.gmra.mrb[0].mxu0 %v622
        %v1436 = vpop.f32.mrb[0].mxu0
        %v1437 = vadd.f32 %v1324, %v1436
        %v1438 = vpop.f32.mrb[0].mxu0
        %v1439 = vpop.f32.mrb[0].mxu0
        %v1440 = vadd.f32 %v1327, %v1439
        %v1441 = vpop.f32.mrb[0].mxu0
        %1442 = vmatprep.mubr.bf16.mxu0 0
        %1443 = vmatmul.mubr.bf16.gmra.mrb[0].mxu0 %v625
        %v1444 = vpop.f32.mrb[0].mxu0
        %v1445 = vadd.f32 %v1332, %v1444
        %v1446 = vpop.f32.mrb[0].mxu0
        %v1447 = vpop.f32.mrb[0].mxu0
        %v1448 = vadd.f32 %v1335, %v1447
        %v1449 = vpop.f32.mrb[0].mxu0
        %1450 = vmatprep.mubr.bf16.mxu0 0
        %1451 = vmatmul.mubr.bf16.gmra.mrb[0].mxu0 %v628
        %v1452 = vpop.f32.mrb[0].mxu0
        %v1453 = vadd.f32 %v1340, %v1452
        %v1454 = vpop.f32.mrb[0].mxu0
        %v1455 = vpop.f32.mrb[0].mxu0
        %v1456 = vadd.f32 %v1343, %v1455
        %v1457 = vpop.f32.mrb[0].mxu0
        %1458 = vmatprep.mubr.bf16.mxu0 0
        %1459 = vmatmul.mubr.bf16.gmra.mrb[0].mxu0 %v631
        %v1460 = vpop.f32.mrb[0].mxu0
        %v1461 = vadd.f32 %v1348, %v1460
        %v1462 = vpop.f32.mrb[0].mxu0
        %v1463 = vpop.f32.mrb[0].mxu0
        %v1464 = vadd.f32 %v1351, %v1463
        %v1465 = vpop.f32.mrb[0].mxu0
        %1466 = vmatprep.mubr.bf16.mxu0 0
        %1467 = vmatmul.mubr.bf16.gmra.mrb[0].mxu0 %v634
        %v1468 = vpop.f32.mrb[0].mxu0
        %v1469 = vadd.f32 %v1356, %v1468
        %v1470 = vpop.f32.mrb[0].mxu0
        %v1471 = vpop.f32.mrb[0].mxu0
        %v1472 = vadd.f32 %v1359, %v1471
        %v1473 = vpop.f32.mrb[0].mxu0
        %1474 = vmatprep.mubr.bf16.mxu0 0
        %1475 = vmatmul.mubr.bf16.gmra.mrb[0].mxu0 %v637
        %v1476 = vpop.f32.mrb[0].mxu0
        %v1477 = vadd.f32 %v1364, %v1476
        %v1478 = vpop.f32.mrb[0].mxu0
        %v1479 = vpop.f32.mrb[0].mxu0
        %v1480 = vadd.f32 %v1367, %v1479
        %v1481 = vpop.f32.mrb[0].mxu0
        %1482 = vmatprep.mubr.bf16.mxu0 0
        %1483 = vmatmul.mubr.bf16.gmra.mrb[0].mxu0 %v640
        %v1484 = vpop.f32.mrb[0].mxu0
        %v1485 = vadd.f32 %v1372, %v1484
        %v1486 = vpop.f32.mrb[0].mxu0
        %v1487 = vpop.f32.mrb[0].mxu0
        %v1488 = vadd.f32 %v1375, %v1487
        %v1489 = vpop.f32.mrb[0].mxu0
        %1490 = vmatprep.mubr.bf16.mxu0 0
        %1491 = vmatmul.mubr.bf16.gmra.mrb[0].mxu0 %v643
        %v1492 = vpop.f32.mrb[0].mxu0
        %v1493 = vadd.f32 %v1380, %v1492
        %v1494 = vpop.f32.mrb[0].mxu0
        %v1495 = vpop.f32.mrb[0].mxu0
        %v1496 = vadd.f32 %v1383, %v1495
        %v1497 = vpop.f32.mrb[0].mxu0
        %1498 = vdwg.mxu0
        %s1499 = scalar_lea.vmem %s1, 384
        %v1500 = vld [vmem:[%s1499] sm:$0xf]
        %v1501 = vld [vmem:[%s1499 + $0x4] sm:$0xf]
        %v1502 = vld [vmem:[%s1499 + $0x8] sm:$0xf]
        %v1503 = vld [vmem:[%s1499 + $0xc] sm:$0xf]
        %v1504 = vld [vmem:[%s1499 + $0x10] sm:$0xf]
        %v1505 = vld [vmem:[%s1499 + $0x14] sm:$0xf]
        %v1506 = vld [vmem:[%s1499 + $0x18] sm:$0xf]
        %v1507 = vld [vmem:[%s1499 + $0x1c] sm:$0xf]
        %v1508 = vld [vmem:[%s1499 + $0x20] sm:$0xf]
        %v1509 = vld [vmem:[%s1499 + $0x24] sm:$0xf]
        %v1510 = vld [vmem:[%s1499 + $0x28] sm:$0xf]
        %v1511 = vld [vmem:[%s1499 + $0x2c] sm:$0xf]
        %v1512 = vld [vmem:[%s1499 + $0x30] sm:$0xf]
        %v1513 = vld [vmem:[%s1499 + $0x34] sm:$0xf]
        %v1514 = vld [vmem:[%s1499 + $0x38] sm:$0xf]
        %v1515 = vld [vmem:[%s1499 + $0x3c] sm:$0xf]
        %v1516 = vld [vmem:[%s1499 + $0x40] sm:$0xf]
        %v1517 = vld [vmem:[%s1499 + $0x44] sm:$0xf]
        %v1518 = vld [vmem:[%s1499 + $0x48] sm:$0xf]
        %v1519 = vld [vmem:[%s1499 + $0x4c] sm:$0xf]
        %v1520 = vld [vmem:[%s1499 + $0x50] sm:$0xf]
        %v1521 = vld [vmem:[%s1499 + $0x54] sm:$0xf]
        %v1522 = vld [vmem:[%s1499 + $0x58] sm:$0xf]
        %v1523 = vld [vmem:[%s1499 + $0x5c] sm:$0xf]
        %v1524 = vld [vmem:[%s1499 + $0x60] sm:$0xf]
        %v1525 = vld [vmem:[%s1499 + $0x64] sm:$0xf]
        %v1526 = vld [vmem:[%s1499 + $0x68] sm:$0xf]
        %v1527 = vld [vmem:[%s1499 + $0x6c] sm:$0xf]
        %v1528 = vld [vmem:[%s1499 + $0x70] sm:$0xf]
        %v1529 = vld [vmem:[%s1499 + $0x74] sm:$0xf]
        %v1530 = vld [vmem:[%s1499 + $0x78] sm:$0xf]
        %v1531 = vld [vmem:[%s1499 + $0x7c] sm:$0xf]
        %v1532 = vld [vmem:[%s1499 + $0x80] sm:$0xf]
        %v1533 = vld [vmem:[%s1499 + $0x84] sm:$0xf]
        %v1534 = vld [vmem:[%s1499 + $0x88] sm:$0xf]
        %v1535 = vld [vmem:[%s1499 + $0x8c] sm:$0xf]
        %v1536 = vld [vmem:[%s1499 + $0x90] sm:$0xf]
        %v1537 = vld [vmem:[%s1499 + $0x94] sm:$0xf]
        %v1538 = vld [vmem:[%s1499 + $0x98] sm:$0xf]
        %v1539 = vld [vmem:[%s1499 + $0x9c] sm:$0xf]
        %v1540 = vld [vmem:[%s1499 + $0xa0] sm:$0xf]
        %v1541 = vld [vmem:[%s1499 + $0xa4] sm:$0xf]
        %v1542 = vld [vmem:[%s1499 + $0xa8] sm:$0xf]
        %v1543 = vld [vmem:[%s1499 + $0xac] sm:$0xf]
        %v1544 = vld [vmem:[%s1499 + $0xb0] sm:$0xf]
        %v1545 = vld [vmem:[%s1499 + $0xb4] sm:$0xf]
        %v1546 = vld [vmem:[%s1499 + $0xb8] sm:$0xf]
        %v1547 = vld [vmem:[%s1499 + $0xbc] sm:$0xf]
        %v1596 = vunpack.c.l.b16 %v1500
        %v1597 = vunpack.c.l.b16 %v1501
        %v1598 = vunpack.c.l.b16 %v1502
        %v1599 = vunpack.c.l.b16 %v1503
        %v1600 = vunpack.c.l.b16 %v1504
        %v1601 = vunpack.c.l.b16 %v1505
        %v1602 = vunpack.c.l.b16 %v1506
        %v1603 = vunpack.c.l.b16 %v1507
        %v1604 = vunpack.c.l.b16 %v1508
        %v1605 = vunpack.c.l.b16 %v1509
        %v1606 = vunpack.c.l.b16 %v1510
        %v1607 = vunpack.c.l.b16 %v1511
        %v1608 = vunpack.c.l.b16 %v1512
        %v1609 = vunpack.c.l.b16 %v1513
        %v1610 = vunpack.c.l.b16 %v1514
        %v1611 = vunpack.c.l.b16 %v1515
        %v1612 = vunpack.c.l.b16 %v1516
        %v1613 = vunpack.c.l.b16 %v1517
        %v1614 = vunpack.c.l.b16 %v1518
        %v1615 = vunpack.c.l.b16 %v1519
        %v1616 = vunpack.c.l.b16 %v1520
        %v1617 = vunpack.c.l.b16 %v1521
        %v1618 = vunpack.c.l.b16 %v1522
        %v1619 = vunpack.c.l.b16 %v1523
        %v1620 = vunpack.c.l.b16 %v1524
        %v1621 = vunpack.c.l.b16 %v1525
        %v1622 = vunpack.c.l.b16 %v1526
        %v1623 = vunpack.c.l.b16 %v1527
        %v1624 = vunpack.c.l.b16 %v1528
        %v1625 = vunpack.c.l.b16 %v1529
        %v1626 = vunpack.c.l.b16 %v1530
        %v1627 = vunpack.c.l.b16 %v1531
        %v1628 = vunpack.c.l.b16 %v1532
        %v1629 = vunpack.c.l.b16 %v1533
        %v1630 = vunpack.c.l.b16 %v1534
        %v1631 = vunpack.c.l.b16 %v1535
        %v1632 = vunpack.c.l.b16 %v1536
        %v1633 = vunpack.c.l.b16 %v1537
        %v1634 = vunpack.c.l.b16 %v1538
        %v1635 = vunpack.c.l.b16 %v1539
        %v1636 = vunpack.c.l.b16 %v1540
        %v1637 = vunpack.c.l.b16 %v1541
        %v1638 = vunpack.c.l.b16 %v1542
        %v1639 = vunpack.c.l.b16 %v1543
        %v1640 = vunpack.c.l.b16 %v1544
        %v1641 = vunpack.c.l.b16 %v1545
        %v1642 = vunpack.c.l.b16 %v1546
        %v1643 = vunpack.c.l.b16 %v1547
        %v1644 = vpack.c.b16 %v1597, %v1596
        %v1645 = vpack.c.b16 %v1599, %v1598
        %v1646 = vpack.c.b16 %v1601, %v1600
        %v1647 = vpack.c.b16 %v1603, %v1602
        %v1648 = vpack.c.b16 %v1605, %v1604
        %v1649 = vpack.c.b16 %v1607, %v1606
        %v1650 = vpack.c.b16 %v1609, %v1608
        %v1651 = vpack.c.b16 %v1611, %v1610
        %v1652 = vpack.c.b16 %v1613, %v1612
        %v1653 = vpack.c.b16 %v1615, %v1614
        %v1654 = vpack.c.b16 %v1617, %v1616
        %v1655 = vpack.c.b16 %v1619, %v1618
        %v1656 = vpack.c.b16 %v1621, %v1620
        %v1657 = vpack.c.b16 %v1623, %v1622
        %v1658 = vpack.c.b16 %v1625, %v1624
        %v1659 = vpack.c.b16 %v1627, %v1626
        %v1660 = vpack.c.b16 %v1629, %v1628
        %v1661 = vpack.c.b16 %v1631, %v1630
        %v1662 = vpack.c.b16 %v1633, %v1632
        %v1663 = vpack.c.b16 %v1635, %v1634
        %v1664 = vpack.c.b16 %v1637, %v1636
        %v1665 = vpack.c.b16 %v1639, %v1638
        %v1666 = vpack.c.b16 %v1641, %v1640
        %v1667 = vpack.c.b16 %v1643, %v1642
        %1692 = vmatprep.subr.bf16.mxu0 0
        %1693 = vmatpush1.bf16.msra.mxu0 %v1644
        %1694 = vmatprep.subr.bf16.mxu0 0
        %1695 = vmatpush1.bf16.msra.mxu0 %v1645
        %1696 = vmatprep.subr.bf16.mxu0 0
        %1697 = vmatpush1.bf16.msra.mxu0 %v1646
        %1698 = vmatprep.subr.bf16.mxu0 0
        %1699 = vmatpush1.bf16.msra.mxu0 %v1647
        %1700 = vmatprep.subr.bf16.mxu0 0
        %1701 = vmatpush1.bf16.msra.mxu0 %v1648
        %1702 = vmatprep.subr.bf16.mxu0 0
        %1703 = vmatpush1.bf16.msra.mxu0 %v1649
        %1704 = vmatprep.subr.bf16.mxu0 0
        %1705 = vmatpush1.bf16.msra.mxu0 %v1650
        %1706 = vmatprep.subr.bf16.mxu0 0
        %1707 = vmatpush1.bf16.msra.mxu0 %v1651
        %1708 = vmatprep.subr.bf16.mxu0 0
        %1709 = vmatpush1.bf16.msra.mxu0 %v1652
        %1710 = vmatprep.subr.bf16.mxu0 0
        %1711 = vmatpush1.bf16.msra.mxu0 %v1653
        %1712 = vmatprep.subr.bf16.mxu0 0
        %1713 = vmatpush1.bf16.msra.mxu0 %v1654
        %1714 = vmatprep.subr.bf16.mxu0 0
        %1715 = vmatpush1.bf16.msra.mxu0 %v1655
        %1716 = vmatprep.subr.bf16.mxu0 0
        %1717 = vmatpush1.bf16.msra.mxu0 %v1656
        %1718 = vmatprep.subr.bf16.mxu0 0
        %1719 = vmatpush1.bf16.msra.mxu0 %v1657
        %1720 = vmatprep.subr.bf16.mxu0 0
        %1721 = vmatpush1.bf16.msra.mxu0 %v1658
        %1722 = vmatprep.subr.bf16.mxu0 0
        %1723 = vmatpush1.bf16.msra.mxu0 %v1659
        %1724 = vmatprep.mubr.bf16.mxu0 %v492
        %1725 = vmatmul.mubr.bf16.gmra.mrb[0].mxu0 %v398
        %v1726 = vpop.f32.mrb[0].mxu0
        %v1727 = vadd.f32 0.0, %v1726
        %v1728 = vpop.f32.mrb[0].mxu0
        %v1729 = vpop.f32.mrb[0].mxu0
        %v1730 = vadd.f32 0.0, %v1729
        %v1731 = vpop.f32.mrb[0].mxu0
        %1732 = vmatprep.mubr.bf16.mxu0 %v504
        %1733 = vmatmul.mubr.bf16.gmra.mrb[0].mxu0 %v399
        %v1734 = vpop.f32.mrb[0].mxu0
        %v1735 = vadd.f32 0.0, %v1734
        %v1736 = vpop.f32.mrb[0].mxu0
        %v1737 = vpop.f32.mrb[0].mxu0
        %v1738 = vadd.f32 0.0, %v1737
        %v1739 = vpop.f32.mrb[0].mxu0
        %1740 = vmatprep.mubr.bf16.mxu0 %v516
        %1741 = vmatmul.mubr.bf16.gmra.mrb[0].mxu0 %v400
        %v1742 = vpop.f32.mrb[0].mxu0
        %v1743 = vadd.f32 0.0, %v1742
        %v1744 = vpop.f32.mrb[0].mxu0
        %v1745 = vpop.f32.mrb[0].mxu0
        %v1746 = vadd.f32 0.0, %v1745
        %v1747 = vpop.f32.mrb[0].mxu0
        %1748 = vmatprep.mubr.bf16.mxu0 %v528
        %1749 = vmatmul.mubr.bf16.gmra.mrb[0].mxu0 %v401
        %v1750 = vpop.f32.mrb[0].mxu0
        %v1751 = vadd.f32 0.0, %v1750
        %v1752 = vpop.f32.mrb[0].mxu0
        %v1753 = vpop.f32.mrb[0].mxu0
        %v1754 = vadd.f32 0.0, %v1753
        %v1755 = vpop.f32.mrb[0].mxu0
        %1756 = vmatprep.mubr.bf16.mxu0 %v540
        %1757 = vmatmul.mubr.bf16.gmra.mrb[0].mxu0 %v402
        %v1758 = vpop.f32.mrb[0].mxu0
        %v1759 = vadd.f32 0.0, %v1758
        %v1760 = vpop.f32.mrb[0].mxu0
        %v1761 = vpop.f32.mrb[0].mxu0
        %v1762 = vadd.f32 0.0, %v1761
        %v1763 = vpop.f32.mrb[0].mxu0
        %1764 = vmatprep.mubr.bf16.mxu0 %v552
        %1765 = vmatmul.mubr.bf16.gmra.mrb[0].mxu0 %v403
        %v1766 = vpop.f32.mrb[0].mxu0
        %v1767 = vadd.f32 0.0, %v1766
        %v1768 = vpop.f32.mrb[0].mxu0
        %v1769 = vpop.f32.mrb[0].mxu0
        %v1770 = vadd.f32 0.0, %v1769
        %v1771 = vpop.f32.mrb[0].mxu0
        %1772 = vmatprep.mubr.bf16.mxu0 %v564
        %1773 = vmatmul.mubr.bf16.gmra.mrb[0].mxu0 %v404
        %v1774 = vpop.f32.mrb[0].mxu0
        %v1775 = vadd.f32 0.0, %v1774
        %v1776 = vpop.f32.mrb[0].mxu0
        %v1777 = vpop.f32.mrb[0].mxu0
        %v1778 = vadd.f32 0.0, %v1777
        %v1779 = vpop.f32.mrb[0].mxu0
        %1780 = vmatprep.mubr.bf16.mxu0 %v576
        %1781 = vmatmul.mubr.bf16.gmra.mrb[0].mxu0 %v405
        %v1782 = vpop.f32.mrb[0].mxu0
        %v1783 = vadd.f32 0.0, %v1782
        %v1784 = vpop.f32.mrb[0].mxu0
        %v1785 = vpop.f32.mrb[0].mxu0
        %v1786 = vadd.f32 0.0, %v1785
        %v1787 = vpop.f32.mrb[0].mxu0
        %1788 = vmatprep.mubr.bf16.mxu0 %v588
        %1789 = vmatmul.mubr.bf16.gmra.mrb[0].mxu0 %v406
        %v1790 = vpop.f32.mrb[0].mxu0
        %v1791 = vadd.f32 0.0, %v1790
        %v1792 = vpop.f32.mrb[0].mxu0
        %v1793 = vpop.f32.mrb[0].mxu0
        %v1794 = vadd.f32 0.0, %v1793
        %v1795 = vpop.f32.mrb[0].mxu0
        %1796 = vmatprep.mubr.bf16.mxu0 %v600
        %1797 = vmatmul.mubr.bf16.gmra.mrb[0].mxu0 %v407
        %v1798 = vpop.f32.mrb[0].mxu0
        %v1799 = vadd.f32 0.0, %v1798
        %v1800 = vpop.f32.mrb[0].mxu0
        %v1801 = vpop.f32.mrb[0].mxu0
        %v1802 = vadd.f32 0.0, %v1801
        %v1803 = vpop.f32.mrb[0].mxu0
        %1804 = vdwg.mxu0
        %1805 = vmatprep.subr.bf16.mxu0 0
        %1806 = vmatpush1.bf16.msra.mxu0 %v1660
        %1807 = vmatprep.subr.bf16.mxu0 0
        %1808 = vmatpush1.bf16.msra.mxu0 %v1661
        %1809 = vmatprep.subr.bf16.mxu0 0
        %1810 = vmatpush1.bf16.msra.mxu0 %v1662
        %1811 = vmatprep.subr.bf16.mxu0 0
        %1812 = vmatpush1.bf16.msra.mxu0 %v1663
        %1813 = vmatprep.subr.bf16.mxu0 0
        %1814 = vmatpush1.bf16.msra.mxu0 %v1664
        %1815 = vmatprep.subr.bf16.mxu0 0
        %1816 = vmatpush1.bf16.msra.mxu0 %v1665
        %1817 = vmatprep.subr.bf16.mxu0 0
        %1818 = vmatpush1.bf16.msra.mxu0 %v1666
        %1819 = vmatprep.subr.bf16.mxu0 0
        %1820 = vmatpush1.bf16.msra.mxu0 %v1667
        %1821 = vmatprep.subr.bf16.mxu0 0
        %1822 = vmatpush1.bf16.msra.mxu0 0
        %1823 = vmatprep.subr.bf16.mxu0 0
        %1824 = vmatpush1.bf16.msra.mxu0 0
        %1825 = vmatprep.subr.bf16.mxu0 0
        %1826 = vmatpush1.bf16.msra.mxu0 0
        %1827 = vmatprep.subr.bf16.mxu0 0
        %1828 = vmatpush1.bf16.msra.mxu0 0
        %1829 = vmatprep.subr.bf16.mxu0 0
        %1830 = vmatpush1.bf16.msra.mxu0 0
        %1831 = vmatprep.subr.bf16.mxu0 0
        %1832 = vmatpush1.bf16.msra.mxu0 0
        %1833 = vmatprep.subr.bf16.mxu0 0
        %1834 = vmatpush1.bf16.msra.mxu0 0
        %1835 = vmatprep.subr.bf16.mxu0 0
        %1836 = vmatpush1.bf16.msra.mxu0 0
        %1837 = vmatprep.mubr.bf16.mxu0 0
        %1838 = vmatmul.mubr.bf16.gmra.mrb[0].mxu0 %v622
        %v1839 = vpop.f32.mrb[0].mxu0
        %v1840 = vadd.f32 %v1727, %v1839
        %v1841 = vpop.f32.mrb[0].mxu0
        %v1842 = vpop.f32.mrb[0].mxu0
        %v1843 = vadd.f32 %v1730, %v1842
        %v1844 = vpop.f32.mrb[0].mxu0
        %1845 = vmatprep.mubr.bf16.mxu0 0
        %1846 = vmatmul.mubr.bf16.gmra.mrb[0].mxu0 %v625
        %v1847 = vpop.f32.mrb[0].mxu0
        %v1848 = vadd.f32 %v1735, %v1847
        %v1849 = vpop.f32.mrb[0].mxu0
        %v1850 = vpop.f32.mrb[0].mxu0
        %v1851 = vadd.f32 %v1738, %v1850
        %v1852 = vpop.f32.mrb[0].mxu0
        %1853 = vmatprep.mubr.bf16.mxu0 0
        %1854 = vmatmul.mubr.bf16.gmra.mrb[0].mxu0 %v628
        %v1855 = vpop.f32.mrb[0].mxu0
        %v1856 = vadd.f32 %v1743, %v1855
        %v1857 = vpop.f32.mrb[0].mxu0
        %v1858 = vpop.f32.mrb[0].mxu0
        %v1859 = vadd.f32 %v1746, %v1858
        %v1860 = vpop.f32.mrb[0].mxu0
        %1861 = vmatprep.mubr.bf16.mxu0 0
        %1862 = vmatmul.mubr.bf16.gmra.mrb[0].mxu0 %v631
        %v1863 = vpop.f32.mrb[0].mxu0
        %v1864 = vadd.f32 %v1751, %v1863
        %v1865 = vpop.f32.mrb[0].mxu0
        %v1866 = vpop.f32.mrb[0].mxu0
        %v1867 = vadd.f32 %v1754, %v1866
        %v1868 = vpop.f32.mrb[0].mxu0
        %1869 = vmatprep.mubr.bf16.mxu0 0
        %1870 = vmatmul.mubr.bf16.gmra.mrb[0].mxu0 %v634
        %v1871 = vpop.f32.mrb[0].mxu0
        %v1872 = vadd.f32 %v1759, %v1871
        %v1873 = vpop.f32.mrb[0].mxu0
        %v1874 = vpop.f32.mrb[0].mxu0
        %v1875 = vadd.f32 %v1762, %v1874
        %v1876 = vpop.f32.mrb[0].mxu0
        %1877 = vmatprep.mubr.bf16.mxu0 0
        %1878 = vmatmul.mubr.bf16.gmra.mrb[0].mxu0 %v637
        %v1879 = vpop.f32.mrb[0].mxu0
        %v1880 = vadd.f32 %v1767, %v1879
        %v1881 = vpop.f32.mrb[0].mxu0
        %v1882 = vpop.f32.mrb[0].mxu0
        %v1883 = vadd.f32 %v1770, %v1882
        %v1884 = vpop.f32.mrb[0].mxu0
        %1885 = vmatprep.mubr.bf16.mxu0 0
        %1886 = vmatmul.mubr.bf16.gmra.mrb[0].mxu0 %v640
        %v1887 = vpop.f32.mrb[0].mxu0
        %v1888 = vadd.f32 %v1775, %v1887
        %v1889 = vpop.f32.mrb[0].mxu0
        %v1890 = vpop.f32.mrb[0].mxu0
        %v1891 = vadd.f32 %v1778, %v1890
        %v1892 = vpop.f32.mrb[0].mxu0
        %1893 = vmatprep.mubr.bf16.mxu0 0
        %1894 = vmatmul.mubr.bf16.gmra.mrb[0].mxu0 %v643
        %v1895 = vpop.f32.mrb[0].mxu0
        %v1896 = vadd.f32 %v1783, %v1895
        %v1897 = vpop.f32.mrb[0].mxu0
        %v1898 = vpop.f32.mrb[0].mxu0
        %v1899 = vadd.f32 %v1786, %v1898
        %v1900 = vpop.f32.mrb[0].mxu0
        %1901 = vmatprep.mubr.bf16.mxu0 0
        %1902 = vmatmul.mubr.bf16.gmra.mrb[0].mxu0 %v646
        %v1903 = vpop.f32.mrb[0].mxu0
        %v1904 = vadd.f32 %v1791, %v1903
        %v1905 = vpop.f32.mrb[0].mxu0
        %v1906 = vpop.f32.mrb[0].mxu0
        %v1907 = vadd.f32 %v1794, %v1906
        %v1908 = vpop.f32.mrb[0].mxu0
        %1909 = vmatprep.mubr.bf16.mxu0 0
        %1910 = vmatmul.mubr.bf16.gmra.mrb[0].mxu0 %v649
        %v1911 = vpop.f32.mrb[0].mxu0
        %v1912 = vadd.f32 %v1799, %v1911
        %v1913 = vpop.f32.mrb[0].mxu0
        %v1914 = vpop.f32.mrb[0].mxu0
        %v1915 = vadd.f32 %v1802, %v1914
        %v1916 = vpop.f32.mrb[0].mxu0
        %1917 = vdwg.mxu0
        %v1918 = vadd.f32 %v1421, %v1840
        %v1919 = vadd.f32 %v1424, %v1843
        %v1920 = vadd.f32 %v1429, %v1848
        %v1921 = vadd.f32 %v1432, %v1851
        %v1922 = vadd.f32 %v1437, %v1856
        %v1923 = vadd.f32 %v1440, %v1859
        %v1924 = vadd.f32 %v1445, %v1864
        %v1925 = vadd.f32 %v1448, %v1867
        %v1926 = vadd.f32 %v1453, %v1872
        %v1927 = vadd.f32 %v1456, %v1875
        %v1928 = vadd.f32 %v1461, %v1880
        %v1929 = vadd.f32 %v1464, %v1883
        %v1930 = vadd.f32 %v1469, %v1888
        %v1931 = vadd.f32 %v1472, %v1891
        %v1932 = vadd.f32 %v1477, %v1896
        %v1933 = vadd.f32 %v1480, %v1899
        %v1934 = vadd.f32 %v1485, %v1904
        %v1935 = vadd.f32 %v1488, %v1907
        %v1936 = vadd.f32 %v1493, %v1912
        %v1937 = vadd.f32 %v1496, %v1915
        %v1938 = vld [vmem:[%s2] sm:$0x1]
        %v1940 = vlaneseq
        %v1941 = vshrl.u32 %v1940, 7
        %v1942 = vsub.s32 0, %v1941
        %v1943 = vrot.slane %v1938, %v1942
        %v1945 = vadd.f32 %v1918, %v1943
        %v1946 = vadd.f32 %v1919, %v1943
        %v1947 = vadd.f32 %v1920, %v1943
        %v1948 = vadd.f32 %v1921, %v1943
        %v1949 = vadd.f32 %v1922, %v1943
        %v1950 = vadd.f32 %v1923, %v1943
        %v1951 = vadd.f32 %v1924, %v1943
        %v1952 = vadd.f32 %v1925, %v1943
        %v1953 = vadd.f32 %v1926, %v1943
        %v1954 = vadd.f32 %v1927, %v1943
        %v1955 = vadd.f32 %v1928, %v1943
        %v1956 = vadd.f32 %v1929, %v1943
        %v1957 = vadd.f32 %v1930, %v1943
        %v1958 = vadd.f32 %v1931, %v1943
        %v1959 = vadd.f32 %v1932, %v1943
        %v1960 = vadd.f32 %v1933, %v1943
        %v1961 = vadd.f32 %v1934, %v1943
        %v1962 = vadd.f32 %v1935, %v1943
        %v1963 = vadd.f32 %v1936, %v1943
        %v1964 = vadd.f32 %v1937, %v1943
        %v1965 = vmax.f32 %v1945, 0.0
        %v1966 = vmax.f32 %v1946, 0.0
        %v1967 = vmax.f32 %v1947, 0.0
        %v1968 = vmax.f32 %v1948, 0.0
        %v1969 = vmax.f32 %v1949, 0.0
        %v1970 = vmax.f32 %v1950, 0.0
        %v1971 = vmax.f32 %v1951, 0.0
        %v1972 = vmax.f32 %v1952, 0.0
        %v1973 = vmax.f32 %v1953, 0.0
        %v1974 = vmax.f32 %v1954, 0.0
        %v1975 = vmax.f32 %v1955, 0.0
        %v1976 = vmax.f32 %v1956, 0.0
        %v1977 = vmax.f32 %v1957, 0.0
        %v1978 = vmax.f32 %v1958, 0.0
        %v1979 = vmax.f32 %v1959, 0.0
        %v1980 = vmax.f32 %v1960, 0.0
        %v1981 = vmax.f32 %v1961, 0.0
        %v1982 = vmax.f32 %v1962, 0.0
        %v1983 = vmax.f32 %v1963, 0.0
        %v1984 = vmax.f32 %v1964, 0.0
        %vm1985 = vcmask 1047559
        %vm1986 = vsmask.f32 7966
        %vm1987 = vmand %vm1985, %vm1986
        %v1988 = vld [vmem:[#allocation2] sm:$0x80]
        %v1989 = vsel %vm1987, 0, %v1988
        %1990 = vst [vmem:[#allocation2] sm:$0x80] %v1989
        %v1991 = vld [vmem:[#allocation2 + $0x18] sm:$0x80]
        %v1992 = vsel %vm1987, 0, %v1991
        %1993 = vst [vmem:[#allocation2 + $0x18] sm:$0x80] %v1992
        %v1994 = vld [vmem:[#allocation2 + $0x30] sm:$0x80]
        %v1995 = vsel %vm1987, 0, %v1994
        %1996 = vst [vmem:[#allocation2 + $0x30] sm:$0x80] %v1995
        %v1997 = vld [vmem:[#allocation2 + $0x48] sm:$0x80]
        %v1998 = vsel %vm1987, 0, %v1997
        %1999 = vst [vmem:[#allocation2 + $0x48] sm:$0x80] %v1998
        %v2000 = vld [vmem:[#allocation2 + $0x60] sm:$0x80]
        %v2001 = vsel %vm1987, 0, %v2000
        %2002 = vst [vmem:[#allocation2 + $0x60] sm:$0x80] %v2001
        %v2003 = vld [vmem:[#allocation2 + $0x78] sm:$0x80]
        %v2004 = vsel %vm1987, 0, %v2003
        %2005 = vst [vmem:[#allocation2 + $0x78] sm:$0x80] %v2004
        %v2006 = vld [vmem:[#allocation2 + $0x90] sm:$0x80]
        %v2007 = vsel %vm1987, 0, %v2006
        %2008 = vst [vmem:[#allocation2 + $0x90] sm:$0x80] %v2007
        %v2009 = vld [vmem:[#allocation2 + $0xa8] sm:$0x80]
        %v2010 = vsel %vm1987, 0, %v2009
        %2011 = vst [vmem:[#allocation2 + $0xa8] sm:$0x80] %v2010
        %v2012 = vld [vmem:[#allocation2 + $0xc0] sm:$0x80]
        %v2013 = vsel %vm1987, 0, %v2012
        %2014 = vst [vmem:[#allocation2 + $0xc0] sm:$0x80] %v2013
        %v2015 = vld [vmem:[#allocation2 + $0xd8] sm:$0x80]
        %v2016 = vsel %vm1987, 0, %v2015
        %2017 = vst [vmem:[#allocation2 + $0xd8] sm:$0x80] %v2016
        %vm2018 = vcmask 1040384
        %vm2019 = vsmask.f32 256
        %vm2020 = vmand %vm2018, %vm2019
        %v2021 = vld [vmem:[#allocation2 + $0x10] sm:$0x1]
        %v2022 = vsel %vm2020, 0, %v2021
        %2023 = vst [vmem:[#allocation2 + $0x10] sm:$0x1] %v2022
        %v2024 = vld [vmem:[#allocation2 + $0x28] sm:$0x1]
        %v2025 = vsel %vm2020, 0, %v2024
        %2026 = vst [vmem:[#allocation2 + $0x28] sm:$0x1] %v2025
        %v2027 = vld [vmem:[#allocation2 + $0x40] sm:$0x1]
        %v2028 = vsel %vm2020, 0, %v2027
        %2029 = vst [vmem:[#allocation2 + $0x40] sm:$0x1] %v2028
        %v2030 = vld [vmem:[#allocation2 + $0x58] sm:$0x1]
        %v2031 = vsel %vm2020, 0, %v2030
        %2032 = vst [vmem:[#allocation2 + $0x58] sm:$0x1] %v2031
        %v2033 = vld [vmem:[#allocation2 + $0x70] sm:$0x1]
        %v2034 = vsel %vm2020, 0, %v2033
        %2035 = vst [vmem:[#allocation2 + $0x70] sm:$0x1] %v2034
        %v2036 = vld [vmem:[#allocation2 + $0x88] sm:$0x1]
        %v2037 = vsel %vm2020, 0, %v2036
        %2038 = vst [vmem:[#allocation2 + $0x88] sm:$0x1] %v2037
        %v2039 = vld [vmem:[#allocation2 + $0xa0] sm:$0x1]
        %v2040 = vsel %vm2020, 0, %v2039
        %2041 = vst [vmem:[#allocation2 + $0xa0] sm:$0x1] %v2040
        %v2042 = vld [vmem:[#allocation2 + $0xb8] sm:$0x1]
        %v2043 = vsel %vm2020, 0, %v2042
        %2044 = vst [vmem:[#allocation2 + $0xb8] sm:$0x1] %v2043
        %v2045 = vld [vmem:[#allocation2 + $0xd0] sm:$0x1]
        %v2046 = vsel %vm2020, 0, %v2045
        %2047 = vst [vmem:[#allocation2 + $0xd0] sm:$0x1] %v2046
        %v2048 = vld [vmem:[#allocation2 + $0xe8] sm:$0x1]
        %v2049 = vsel %vm2020, 0, %v2048
        %2050 = vst [vmem:[#allocation2 + $0xe8] sm:$0x1] %v2049
        %v2051 = vpack.c.bf16 %v1966, %v1965
        %v2052 = vpack.c.bf16 %v1968, %v1967
        %v2053 = vpack.c.bf16 %v1970, %v1969
        %v2054 = vpack.c.bf16 %v1972, %v1971
        %v2055 = vpack.c.bf16 %v1974, %v1973
        %v2056 = vpack.c.bf16 %v1976, %v1975
        %v2057 = vpack.c.bf16 %v1978, %v1977
        %v2058 = vpack.c.bf16 %v1980, %v1979
        %v2059 = vpack.c.bf16 %v1982, %v1981
        %v2060 = vpack.c.bf16 %v1984, %v1983
        %2061 = vst [vmem:[#allocation2 + $0x8] sm:$0xff] %v2051
        %2062 = vst [vmem:[#allocation2 + $0x20] sm:$0xff] %v2052
        %2063 = vst [vmem:[#allocation2 + $0x38] sm:$0xff] %v2053
        %2064 = vst [vmem:[#allocation2 + $0x50] sm:$0xff] %v2054
        %2065 = vst [vmem:[#allocation2 + $0x68] sm:$0xff] %v2055
        %2066 = vst [vmem:[#allocation2 + $0x80] sm:$0xff] %v2056
        %2067 = vst [vmem:[#allocation2 + $0x98] sm:$0xff] %v2057
        %2068 = vst [vmem:[#allocation2 + $0xb0] sm:$0xff] %v2058
        %2069 = vst [vmem:[#allocation2 + $0xc8] sm:$0xff] %v2059
        %2070 = vst [vmem:[#allocation2 + $0xe0] sm:$0xff] %v2060
        %p2071 = scmp.eq.s32.totalorder %s27, 0
        // Predicated region
        $region53: #{tpu_custom_call.1} parent=47 // pred_check
          %p2072 = pneg %p2071
        $region54: #{tpu_custom_call.1} parent=47 // pred_check_branch
          %2074 = sbr.rel (%p2072) target = $region56
        $region55: #{tpu_custom_call.1} parent=47 // pred_region
          %2075 = vst [vmem:[#allocation2] sm:$0xff] 0
          %2076 = vst [vmem:[#allocation2 + $0x8] sm:$0xff] 0
          %2077 = vst [vmem:[#allocation2 + $0x10] sm:$0xff] 0
        $region56: #{tpu_custom_call.1} parent=47 // pred_fallthru
          _
        %p2078 = scmp.eq.s32.totalorder %s27, 1
        // Predicated region
        $region57: #{tpu_custom_call.1} parent=47 // pred_check
          %p2079 = pneg %p2078
        $region58: #{tpu_custom_call.1} parent=47 // pred_check_branch
          %2081 = sbr.rel (%p2079) target = $region60
        $region59: #{tpu_custom_call.1} parent=47 // pred_region
          %s2082 = scalar_lea.vmem [#allocation2], 216
          %2083 = vst [vmem:[%s2082] sm:$0xff] 0
          %2084 = vst [vmem:[%s2082 + $0x8] sm:$0xff] 0
          %2085 = vst [vmem:[%s2082 + $0x10] sm:$0xff] 0
        $region60: #{tpu_custom_call.1} parent=47 // pred_fallthru
          _
        %v2086 = vld [vmem:[#allocation2] sm:$0x80]
        %v2087 = vld [vmem:[#allocation2 + $0x8] sm:$0xff]
        %v2088 = vld [vmem:[#allocation2 + $0x18] sm:$0x80]
        %v2089 = vld [vmem:[#allocation2 + $0x20] sm:$0xff]
        %v2090 = vld [vmem:[#allocation2 + $0x30] sm:$0x80]
        %v2091 = vld [vmem:[#allocation2 + $0x38] sm:$0xff]
        %v2092 = vld [vmem:[#allocation2 + $0x48] sm:$0x80]
        %v2093 = vld [vmem:[#allocation2 + $0x50] sm:$0xff]
        %v2094 = vld [vmem:[#allocation2 + $0x60] sm:$0x80]
        %v2095 = vld [vmem:[#allocation2 + $0x68] sm:$0xff]
        %v2096 = vld [vmem:[#allocation2 + $0x78] sm:$0x80]
        %v2097 = vld [vmem:[#allocation2 + $0x80] sm:$0xff]
        %v2098 = vld [vmem:[#allocation2 + $0x90] sm:$0x80]
        %v2099 = vld [vmem:[#allocation2 + $0x98] sm:$0xff]
        %v2100 = vld [vmem:[#allocation2 + $0xa8] sm:$0x80]
        %v2101 = vld [vmem:[#allocation2 + $0xb0] sm:$0xff]
        %v2102 = vld [vmem:[#allocation2 + $0xc0] sm:$0x80]
        %v2103 = vld [vmem:[#allocation2 + $0xc8] sm:$0xff]
        %v2104 = vld [vmem:[#allocation2 + $0xd8] sm:$0x80]
        %v2105 = vld [vmem:[#allocation2 + $0xe0] sm:$0xff]
        %v2106 = vld [vmem:[#allocation2 + $0x8] sm:$0xff]
        %v2107 = vld [vmem:[#allocation2 + $0x10] sm:$0x1]
        %v2108 = vld [vmem:[#allocation2 + $0x20] sm:$0xff]
        %v2109 = vld [vmem:[#allocation2 + $0x28] sm:$0x1]
        %v2110 = vld [vmem:[#allocation2 + $0x38] sm:$0xff]
        %v2111 = vld [vmem:[#allocation2 + $0x40] sm:$0x1]
        %v2112 = vld [vmem:[#allocation2 + $0x50] sm:$0xff]
        %v2113 = vld [vmem:[#allocation2 + $0x58] sm:$0x1]
        %v2114 = vld [vmem:[#allocation2 + $0x68] sm:$0xff]
        %v2115 = vld [vmem:[#allocation2 + $0x70] sm:$0x1]
        %v2116 = vld [vmem:[#allocation2 + $0x80] sm:$0xff]
        %v2117 = vld [vmem:[#allocation2 + $0x88] sm:$0x1]
        %v2118 = vld [vmem:[#allocation2 + $0x98] sm:$0xff]
        %v2119 = vld [vmem:[#allocation2 + $0xa0] sm:$0x1]
        %v2120 = vld [vmem:[#allocation2 + $0xb0] sm:$0xff]
        %v2121 = vld [vmem:[#allocation2 + $0xb8] sm:$0x1]
        %v2122 = vld [vmem:[#allocation2 + $0xc8] sm:$0xff]
        %v2123 = vld [vmem:[#allocation2 + $0xd0] sm:$0x1]
        %v2124 = vld [vmem:[#allocation2 + $0xe0] sm:$0xff]
        %v2125 = vld [vmem:[#allocation2 + $0xe8] sm:$0x1]
        %v2127 = vshll.u32 %v2087, 16
        %v2129 = vrot.slane %v2127, 1
        %v2130 = vshrl.u32 %v2087, 16
        %v2132 = vor.u32 %v2130, %v2129
        %v2134 = vshll.u32 %v2089, 16
        %v2136 = vrot.slane %v2134, 1
        %v2137 = vshrl.u32 %v2089, 16
        %v2139 = vor.u32 %v2137, %v2136
        %v2141 = vshll.u32 %v2091, 16
        %v2143 = vrot.slane %v2141, 1
        %v2144 = vshrl.u32 %v2091, 16
        %v2146 = vor.u32 %v2144, %v2143
        %v2148 = vshll.u32 %v2093, 16
        %v2150 = vrot.slane %v2148, 1
        %v2151 = vshrl.u32 %v2093, 16
        %v2153 = vor.u32 %v2151, %v2150
        %v2155 = vshll.u32 %v2095, 16
        %v2157 = vrot.slane %v2155, 1
        %v2158 = vshrl.u32 %v2095, 16
        %v2160 = vor.u32 %v2158, %v2157
        %v2162 = vshll.u32 %v2097, 16
        %v2164 = vrot.slane %v2162, 1
        %v2165 = vshrl.u32 %v2097, 16
        %v2167 = vor.u32 %v2165, %v2164
        %v2169 = vshll.u32 %v2099, 16
        %v2171 = vrot.slane %v2169, 1
        %v2172 = vshrl.u32 %v2099, 16
        %v2174 = vor.u32 %v2172, %v2171
        %v2176 = vshll.u32 %v2101, 16
        %v2178 = vrot.slane %v2176, 1
        %v2179 = vshrl.u32 %v2101, 16
        %v2181 = vor.u32 %v2179, %v2178
        %v2183 = vshll.u32 %v2103, 16
        %v2185 = vrot.slane %v2183, 1
        %v2186 = vshrl.u32 %v2103, 16
        %v2188 = vor.u32 %v2186, %v2185
        %v2190 = vshll.u32 %v2105, 16
        %v2192 = vrot.slane %v2190, 1
        %v2193 = vshrl.u32 %v2105, 16
        %v2195 = vor.u32 %v2193, %v2192
        %v2216 = vrot.slane %v2106, 1
        %v2217 = vrot.slane %v2107, 1
        %v2218 = vsel %vm613, %v2216, %v2217
        %v2219 = vrot.slane %v2108, 1
        %v2220 = vrot.slane %v2109, 1
        %v2221 = vsel %vm613, %v2219, %v2220
        %v2222 = vrot.slane %v2110, 1
        %v2223 = vrot.slane %v2111, 1
        %v2224 = vsel %vm613, %v2222, %v2223
        %v2225 = vrot.slane %v2112, 1
        %v2226 = vrot.slane %v2113, 1
        %v2227 = vsel %vm613, %v2225, %v2226
        %v2228 = vrot.slane %v2114, 1
        %v2229 = vrot.slane %v2115, 1
        %v2230 = vsel %vm613, %v2228, %v2229
        %v2231 = vrot.slane %v2116, 1
        %v2232 = vrot.slane %v2117, 1
        %v2233 = vsel %vm613, %v2231, %v2232
        %v2234 = vrot.slane %v2118, 1
        %v2235 = vrot.slane %v2119, 1
        %v2236 = vsel %vm613, %v2234, %v2235
        %v2237 = vrot.slane %v2120, 1
        %v2238 = vrot.slane %v2121, 1
        %v2239 = vsel %vm613, %v2237, %v2238
        %v2240 = vrot.slane %v2122, 1
        %v2241 = vrot.slane %v2123, 1
        %v2242 = vsel %vm613, %v2240, %v2241
        %v2243 = vrot.slane %v2124, 1
        %v2244 = vrot.slane %v2125, 1
        %v2245 = vsel %vm613, %v2243, %v2244
        %v2247 = vshrl.u32 %v2086, 16
        %v2249 = vrot.slane %v2247, 7
        %v2250 = vrot.slane %v2130, 7
        %v2251 = vor.u32 %v2250, %v2127
        %v2252 = vsel %vm2019, %v2249, %v2251
        %v2254 = vshrl.u32 %v2129, 16
        %v2256 = vrot.slane %v2254, 7
        %v2258 = vshrl.u32 %v2132, 16
        %v2260 = vrot.slane %v2258, 7
        %v2261 = vshll.u32 %v2132, 16
        %v2263 = vor.u32 %v2260, %v2261
        %v2264 = vsel %vm2019, %v2256, %v2263
        %v2266 = vshrl.u32 %v2216, 16
        %v2268 = vrot.slane %v2266, 7
        %v2270 = vshrl.u32 %v2218, 16
        %v2272 = vrot.slane %v2270, 7
        %v2273 = vshll.u32 %v2218, 16
        %v2275 = vor.u32 %v2272, %v2273
        %v2276 = vsel %vm2019, %v2268, %v2275
        %v2278 = vshrl.u32 %v2088, 16
        %v2280 = vrot.slane %v2278, 7
        %v2281 = vrot.slane %v2137, 7
        %v2282 = vor.u32 %v2281, %v2134
        %v2283 = vsel %vm2019, %v2280, %v2282
        %v2285 = vshrl.u32 %v2136, 16
        %v2287 = vrot.slane %v2285, 7
        %v2289 = vshrl.u32 %v2139, 16
        %v2291 = vrot.slane %v2289, 7
        %v2292 = vshll.u32 %v2139, 16
        %v2294 = vor.u32 %v2291, %v2292
        %v2295 = vsel %vm2019, %v2287, %v2294
        %v2297 = vshrl.u32 %v2219, 16
        %v2299 = vrot.slane %v2297, 7
        %v2301 = vshrl.u32 %v2221, 16
        %v2303 = vrot.slane %v2301, 7
        %v2304 = vshll.u32 %v2221, 16
        %v2306 = vor.u32 %v2303, %v2304
        %v2307 = vsel %vm2019, %v2299, %v2306
        %v2309 = vshrl.u32 %v2090, 16
        %v2311 = vrot.slane %v2309, 7
        %v2312 = vrot.slane %v2144, 7
        %v2313 = vor.u32 %v2312, %v2141
        %v2314 = vsel %vm2019, %v2311, %v2313
        %v2316 = vshrl.u32 %v2143, 16
        %v2318 = vrot.slane %v2316, 7
        %v2320 = vshrl.u32 %v2146, 16
        %v2322 = vrot.slane %v2320, 7
        %v2323 = vshll.u32 %v2146, 16
        %v2325 = vor.u32 %v2322, %v2323
        %v2326 = vsel %vm2019, %v2318, %v2325
        %v2328 = vshrl.u32 %v2222, 16
        %v2330 = vrot.slane %v2328, 7
        %v2332 = vshrl.u32 %v2224, 16
        %v2334 = vrot.slane %v2332, 7
        %v2335 = vshll.u32 %v2224, 16
        %v2337 = vor.u32 %v2334, %v2335
        %v2338 = vsel %vm2019, %v2330, %v2337
        %v2340 = vshrl.u32 %v2092, 16
        %v2342 = vrot.slane %v2340, 7
        %v2343 = vrot.slane %v2151, 7
        %v2344 = vor.u32 %v2343, %v2148
        %v2345 = vsel %vm2019, %v2342, %v2344
        %v2347 = vshrl.u32 %v2150, 16
        %v2349 = vrot.slane %v2347, 7
        %v2351 = vshrl.u32 %v2153, 16
        %v2353 = vrot.slane %v2351, 7
        %v2354 = vshll.u32 %v2153, 16
        %v2356 = vor.u32 %v2353, %v2354
        %v2357 = vsel %vm2019, %v2349, %v2356
        %v2359 = vshrl.u32 %v2225, 16
        %v2361 = vrot.slane %v2359, 7
        %v2363 = vshrl.u32 %v2227, 16
        %v2365 = vrot.slane %v2363, 7
        %v2366 = vshll.u32 %v2227, 16
        %v2368 = vor.u32 %v2365, %v2366
        %v2369 = vsel %vm2019, %v2361, %v2368
        %v2371 = vshrl.u32 %v2094, 16
        %v2373 = vrot.slane %v2371, 7
        %v2374 = vrot.slane %v2158, 7
        %v2375 = vor.u32 %v2374, %v2155
        %v2376 = vsel %vm2019, %v2373, %v2375
        %v2378 = vshrl.u32 %v2157, 16
        %v2380 = vrot.slane %v2378, 7
        %v2382 = vshrl.u32 %v2160, 16
        %v2384 = vrot.slane %v2382, 7
        %v2385 = vshll.u32 %v2160, 16
        %v2387 = vor.u32 %v2384, %v2385
        %v2388 = vsel %vm2019, %v2380, %v2387
        %v2390 = vshrl.u32 %v2228, 16
        %v2392 = vrot.slane %v2390, 7
        %v2394 = vshrl.u32 %v2230, 16
        %v2396 = vrot.slane %v2394, 7
        %v2397 = vshll.u32 %v2230, 16
        %v2399 = vor.u32 %v2396, %v2397
        %v2400 = vsel %vm2019, %v2392, %v2399
        %v2402 = vshrl.u32 %v2096, 16
        %v2404 = vrot.slane %v2402, 7
        %v2405 = vrot.slane %v2165, 7
        %v2406 = vor.u32 %v2405, %v2162
        %v2407 = vsel %vm2019, %v2404, %v2406
        %v2409 = vshrl.u32 %v2164, 16
        %v2411 = vrot.slane %v2409, 7
        %v2413 = vshrl.u32 %v2167, 16
        %v2415 = vrot.slane %v2413, 7
        %v2416 = vshll.u32 %v2167, 16
        %v2418 = vor.u32 %v2415, %v2416
        %v2419 = vsel %vm2019, %v2411, %v2418
        %v2421 = vshrl.u32 %v2231, 16
        %v2423 = vrot.slane %v2421, 7
        %v2425 = vshrl.u32 %v2233, 16
        %v2427 = vrot.slane %v2425, 7
        %v2428 = vshll.u32 %v2233, 16
        %v2430 = vor.u32 %v2427, %v2428
        %v2431 = vsel %vm2019, %v2423, %v2430
        %v2433 = vshrl.u32 %v2098, 16
        %v2435 = vrot.slane %v2433, 7
        %v2436 = vrot.slane %v2172, 7
        %v2437 = vor.u32 %v2436, %v2169
        %v2438 = vsel %vm2019, %v2435, %v2437
        %v2440 = vshrl.u32 %v2171, 16
        %v2442 = vrot.slane %v2440, 7
        %v2444 = vshrl.u32 %v2174, 16
        %v2446 = vrot.slane %v2444, 7
        %v2447 = vshll.u32 %v2174, 16
        %v2449 = vor.u32 %v2446, %v2447
        %v2450 = vsel %vm2019, %v2442, %v2449
        %v2452 = vshrl.u32 %v2234, 16
        %v2454 = vrot.slane %v2452, 7
        %v2456 = vshrl.u32 %v2236, 16
        %v2458 = vrot.slane %v2456, 7
        %v2459 = vshll.u32 %v2236, 16
        %v2461 = vor.u32 %v2458, %v2459
        %v2462 = vsel %vm2019, %v2454, %v2461
        %v2464 = vshrl.u32 %v2100, 16
        %v2466 = vrot.slane %v2464, 7
        %v2467 = vrot.slane %v2179, 7
        %v2468 = vor.u32 %v2467, %v2176
        %v2469 = vsel %vm2019, %v2466, %v2468
        %v2471 = vshrl.u32 %v2178, 16
        %v2473 = vrot.slane %v2471, 7
        %v2475 = vshrl.u32 %v2181, 16
        %v2477 = vrot.slane %v2475, 7
        %v2478 = vshll.u32 %v2181, 16
        %v2480 = vor.u32 %v2477, %v2478
        %v2481 = vsel %vm2019, %v2473, %v2480
        %v2483 = vshrl.u32 %v2237, 16
        %v2485 = vrot.slane %v2483, 7
        %v2487 = vshrl.u32 %v2239, 16
        %v2489 = vrot.slane %v2487, 7
        %v2490 = vshll.u32 %v2239, 16
        %v2492 = vor.u32 %v2489, %v2490
        %v2493 = vsel %vm2019, %v2485, %v2492
        %v2518 = vld [vmem:[#allocation3] sm:$0xf]
        %v2519 = vld [vmem:[#allocation3 + $0x4] sm:$0xf]
        %v2520 = vld [vmem:[#allocation3 + $0x8] sm:$0xf]
        %v2521 = vld [vmem:[#allocation3 + $0xc] sm:$0xf]
        %v2522 = vld [vmem:[#allocation3 + $0x10] sm:$0xf]
        %v2523 = vld [vmem:[#allocation3 + $0x14] sm:$0xf]
        %v2524 = vld [vmem:[#allocation3 + $0x18] sm:$0xf]
        %v2525 = vld [vmem:[#allocation3 + $0x1c] sm:$0xf]
        %v2526 = vld [vmem:[#allocation3 + $0x20] sm:$0xf]
        %v2527 = vld [vmem:[#allocation3 + $0x24] sm:$0xf]
        %v2528 = vld [vmem:[#allocation3 + $0x28] sm:$0xf]
        %v2529 = vld [vmem:[#allocation3 + $0x2c] sm:$0xf]
        %v2530 = vld [vmem:[#allocation3 + $0x30] sm:$0xf]
        %v2531 = vld [vmem:[#allocation3 + $0x34] sm:$0xf]
        %v2532 = vld [vmem:[#allocation3 + $0x38] sm:$0xf]
        %v2533 = vld [vmem:[#allocation3 + $0x3c] sm:$0xf]
        %v2534 = vld [vmem:[#allocation3 + $0x40] sm:$0xf]
        %v2535 = vld [vmem:[#allocation3 + $0x44] sm:$0xf]
        %v2536 = vld [vmem:[#allocation3 + $0x48] sm:$0xf]
        %v2537 = vld [vmem:[#allocation3 + $0x4c] sm:$0xf]
        %v2538 = vld [vmem:[#allocation3 + $0x50] sm:$0xf]
        %v2539 = vld [vmem:[#allocation3 + $0x54] sm:$0xf]
        %v2540 = vld [vmem:[#allocation3 + $0x58] sm:$0xf]
        %v2541 = vld [vmem:[#allocation3 + $0x5c] sm:$0xf]
        %v2542 = vld [vmem:[#allocation3 + $0x60] sm:$0xf]
        %v2543 = vld [vmem:[#allocation3 + $0x64] sm:$0xf]
        %v2544 = vld [vmem:[#allocation3 + $0x68] sm:$0xf]
        %v2545 = vld [vmem:[#allocation3 + $0x6c] sm:$0xf]
        %v2546 = vld [vmem:[#allocation3 + $0x70] sm:$0xf]
        %v2547 = vld [vmem:[#allocation3 + $0x74] sm:$0xf]
        %v2548 = vld [vmem:[#allocation3 + $0x78] sm:$0xf]
        %v2549 = vld [vmem:[#allocation3 + $0x7c] sm:$0xf]
        %v2550 = vld [vmem:[#allocation3 + $0x80] sm:$0xf]
        %v2551 = vld [vmem:[#allocation3 + $0x84] sm:$0xf]
        %v2552 = vld [vmem:[#allocation3 + $0x88] sm:$0xf]
        %v2553 = vld [vmem:[#allocation3 + $0x8c] sm:$0xf]
        %v2554 = vld [vmem:[#allocation3 + $0x90] sm:$0xf]
        %v2555 = vld [vmem:[#allocation3 + $0x94] sm:$0xf]
        %v2556 = vld [vmem:[#allocation3 + $0x98] sm:$0xf]
        %v2557 = vld [vmem:[#allocation3 + $0x9c] sm:$0xf]
        %v2558 = vld [vmem:[#allocation3 + $0xa0] sm:$0xf]
        %v2559 = vld [vmem:[#allocation3 + $0xa4] sm:$0xf]
        %v2560 = vld [vmem:[#allocation3 + $0xa8] sm:$0xf]
        %v2561 = vld [vmem:[#allocation3 + $0xac] sm:$0xf]
        %v2562 = vld [vmem:[#allocation3 + $0xb0] sm:$0xf]
        %v2563 = vld [vmem:[#allocation3 + $0xb4] sm:$0xf]
        %v2564 = vld [vmem:[#allocation3 + $0xb8] sm:$0xf]
        %v2565 = vld [vmem:[#allocation3 + $0xbc] sm:$0xf]
        %v2567 = vshrl.u32 %v2102, 16
        %v2569 = vrot.slane %v2567, 7
        %v2570 = vrot.slane %v2186, 7
        %v2571 = vor.u32 %v2570, %v2183
        %v2572 = vsel %vm2019, %v2569, %v2571
        %v2574 = vshrl.u32 %v2185, 16
        %v2576 = vrot.slane %v2574, 7
        %v2578 = vshrl.u32 %v2188, 16
        %v2580 = vrot.slane %v2578, 7
        %v2581 = vshll.u32 %v2188, 16
        %v2583 = vor.u32 %v2580, %v2581
        %v2584 = vsel %vm2019, %v2576, %v2583
        %v2586 = vshrl.u32 %v2240, 16
        %v2588 = vrot.slane %v2586, 7
        %v2590 = vshrl.u32 %v2242, 16
        %v2592 = vrot.slane %v2590, 7
        %v2593 = vshll.u32 %v2242, 16
        %v2595 = vor.u32 %v2592, %v2593
        %v2596 = vsel %vm2019, %v2588, %v2595
        %s2600 = scalar_lea.vmem [#allocation3], 192
        %v2601 = vld [vmem:[%s2600] sm:$0xf]
        %v2602 = vld [vmem:[%s2600 + $0x4] sm:$0xf]
        %v2603 = vld [vmem:[%s2600 + $0x8] sm:$0xf]
        %v2604 = vld [vmem:[%s2600 + $0xc] sm:$0xf]
        %v2605 = vld [vmem:[%s2600 + $0x10] sm:$0xf]
        %v2606 = vld [vmem:[%s2600 + $0x14] sm:$0xf]
        %v2607 = vld [vmem:[%s2600 + $0x18] sm:$0xf]
        %v2608 = vld [vmem:[%s2600 + $0x1c] sm:$0xf]
        %v2609 = vld [vmem:[%s2600 + $0x20] sm:$0xf]
        %v2610 = vld [vmem:[%s2600 + $0x24] sm:$0xf]
        %v2611 = vld [vmem:[%s2600 + $0x28] sm:$0xf]
        %v2612 = vld [vmem:[%s2600 + $0x2c] sm:$0xf]
        %v2613 = vld [vmem:[%s2600 + $0x30] sm:$0xf]
        %v2614 = vld [vmem:[%s2600 + $0x34] sm:$0xf]
        %v2615 = vld [vmem:[%s2600 + $0x38] sm:$0xf]
        %v2616 = vld [vmem:[%s2600 + $0x3c] sm:$0xf]
        %v2617 = vld [vmem:[%s2600 + $0x40] sm:$0xf]
        %v2618 = vld [vmem:[%s2600 + $0x44] sm:$0xf]
        %v2619 = vld [vmem:[%s2600 + $0x48] sm:$0xf]
        %v2620 = vld [vmem:[%s2600 + $0x4c] sm:$0xf]
        %v2621 = vld [vmem:[%s2600 + $0x50] sm:$0xf]
        %v2622 = vld [vmem:[%s2600 + $0x54] sm:$0xf]
        %v2623 = vld [vmem:[%s2600 + $0x58] sm:$0xf]
        %v2624 = vld [vmem:[%s2600 + $0x5c] sm:$0xf]
        %v2625 = vld [vmem:[%s2600 + $0x60] sm:$0xf]
        %v2626 = vld [vmem:[%s2600 + $0x64] sm:$0xf]
        %v2627 = vld [vmem:[%s2600 + $0x68] sm:$0xf]
        %v2628 = vld [vmem:[%s2600 + $0x6c] sm:$0xf]
        %v2629 = vld [vmem:[%s2600 + $0x70] sm:$0xf]
        %v2630 = vld [vmem:[%s2600 + $0x74] sm:$0xf]
        %v2631 = vld [vmem:[%s2600 + $0x78] sm:$0xf]
        %v2632 = vld [vmem:[%s2600 + $0x7c] sm:$0xf]
        %v2633 = vld [vmem:[%s2600 + $0x80] sm:$0xf]
        %v2634 = vld [vmem:[%s2600 + $0x84] sm:$0xf]
        %v2635 = vld [vmem:[%s2600 + $0x88] sm:$0xf]
        %v2636 = vld [vmem:[%s2600 + $0x8c] sm:$0xf]
        %v2637 = vld [vmem:[%s2600 + $0x90] sm:$0xf]
        %v2638 = vld [vmem:[%s2600 + $0x94] sm:$0xf]
        %v2639 = vld [vmem:[%s2600 + $0x98] sm:$0xf]
        %v2640 = vld [vmem:[%s2600 + $0x9c] sm:$0xf]
        %v2641 = vld [vmem:[%s2600 + $0xa0] sm:$0xf]
        %v2642 = vld [vmem:[%s2600 + $0xa4] sm:$0xf]
        %v2643 = vld [vmem:[%s2600 + $0xa8] sm:$0xf]
        %v2644 = vld [vmem:[%s2600 + $0xac] sm:$0xf]
        %v2645 = vld [vmem:[%s2600 + $0xb0] sm:$0xf]
        %v2646 = vld [vmem:[%s2600 + $0xb4] sm:$0xf]
        %v2647 = vld [vmem:[%s2600 + $0xb8] sm:$0xf]
        %v2648 = vld [vmem:[%s2600 + $0xbc] sm:$0xf]
        %v2697 = vunpack.c.l.b16 %v2601
        %v2698 = vunpack.c.l.b16 %v2602
        %v2699 = vunpack.c.l.b16 %v2603
        %v2700 = vunpack.c.l.b16 %v2604
        %v2701 = vunpack.c.l.b16 %v2605
        %v2702 = vunpack.c.l.b16 %v2606
        %v2703 = vunpack.c.l.b16 %v2607
        %v2704 = vunpack.c.l.b16 %v2608
        %v2705 = vunpack.c.l.b16 %v2609
        %v2706 = vunpack.c.l.b16 %v2610
        %v2707 = vunpack.c.l.b16 %v2611
        %v2708 = vunpack.c.l.b16 %v2612
        %v2709 = vunpack.c.l.b16 %v2613
        %v2710 = vunpack.c.l.b16 %v2614
        %v2711 = vunpack.c.l.b16 %v2615
        %v2712 = vunpack.c.l.b16 %v2616
        %v2713 = vunpack.c.l.b16 %v2617
        %v2714 = vunpack.c.l.b16 %v2618
        %v2715 = vunpack.c.l.b16 %v2619
        %v2716 = vunpack.c.l.b16 %v2620
        %v2717 = vunpack.c.l.b16 %v2621
        %v2718 = vunpack.c.l.b16 %v2622
        %v2719 = vunpack.c.l.b16 %v2623
        %v2720 = vunpack.c.l.b16 %v2624
        %v2721 = vunpack.c.l.b16 %v2625
        %v2722 = vunpack.c.l.b16 %v2626
        %v2723 = vunpack.c.l.b16 %v2627
        %v2724 = vunpack.c.l.b16 %v2628
        %v2725 = vunpack.c.l.b16 %v2629
        %v2726 = vunpack.c.l.b16 %v2630
        %v2727 = vunpack.c.l.b16 %v2631
        %v2728 = vunpack.c.l.b16 %v2632
        %v2729 = vunpack.c.l.b16 %v2633
        %v2730 = vunpack.c.l.b16 %v2634
        %v2731 = vunpack.c.l.b16 %v2635
        %v2732 = vunpack.c.l.b16 %v2636
        %v2733 = vunpack.c.l.b16 %v2637
        %v2734 = vunpack.c.l.b16 %v2638
        %v2735 = vunpack.c.l.b16 %v2639
        %v2736 = vunpack.c.l.b16 %v2640
        %v2737 = vunpack.c.l.b16 %v2641
        %v2738 = vunpack.c.l.b16 %v2642
        %v2739 = vunpack.c.l.b16 %v2643
        %v2740 = vunpack.c.l.b16 %v2644
        %v2741 = vunpack.c.l.b16 %v2645
        %v2742 = vunpack.c.l.b16 %v2646
        %v2743 = vunpack.c.l.b16 %v2647
        %v2744 = vunpack.c.l.b16 %v2648
        %v2745 = vpack.c.b16 %v2698, %v2697
        %v2746 = vpack.c.b16 %v2700, %v2699
        %v2747 = vpack.c.b16 %v2702, %v2701
        %v2748 = vpack.c.b16 %v2704, %v2703
        %v2749 = vpack.c.b16 %v2706, %v2705
        %v2750 = vpack.c.b16 %v2708, %v2707
        %v2751 = vpack.c.b16 %v2710, %v2709
        %v2752 = vpack.c.b16 %v2712, %v2711
        %v2753 = vpack.c.b16 %v2714, %v2713
        %v2754 = vpack.c.b16 %v2716, %v2715
        %v2755 = vpack.c.b16 %v2718, %v2717
        %v2756 = vpack.c.b16 %v2720, %v2719
        %v2757 = vpack.c.b16 %v2722, %v2721
        %v2758 = vpack.c.b16 %v2724, %v2723
        %v2759 = vpack.c.b16 %v2726, %v2725
        %v2760 = vpack.c.b16 %v2728, %v2727
        %v2761 = vpack.c.b16 %v2730, %v2729
        %v2762 = vpack.c.b16 %v2732, %v2731
        %v2763 = vpack.c.b16 %v2734, %v2733
        %v2764 = vpack.c.b16 %v2736, %v2735
        %v2765 = vpack.c.b16 %v2738, %v2737
        %v2766 = vpack.c.b16 %v2740, %v2739
        %v2767 = vpack.c.b16 %v2742, %v2741
        %v2768 = vpack.c.b16 %v2744, %v2743
        %2793 = vmatprep.subr.bf16.mxu0 0
        %2794 = vmatpush1.bf16.msra.mxu0 %v2745
        %2795 = vmatprep.subr.bf16.mxu0 0
        %2796 = vmatpush1.bf16.msra.mxu0 %v2746
        %2797 = vmatprep.subr.bf16.mxu0 0
        %2798 = vmatpush1.bf16.msra.mxu0 %v2747
        %2799 = vmatprep.subr.bf16.mxu0 0
        %2800 = vmatpush1.bf16.msra.mxu0 %v2748
        %2801 = vmatprep.subr.bf16.mxu0 0
        %2802 = vmatpush1.bf16.msra.mxu0 %v2749
        %2803 = vmatprep.subr.bf16.mxu0 0
        %2804 = vmatpush1.bf16.msra.mxu0 %v2750
        %2805 = vmatprep.subr.bf16.mxu0 0
        %2806 = vmatpush1.bf16.msra.mxu0 %v2751
        %2807 = vmatprep.subr.bf16.mxu0 0
        %2808 = vmatpush1.bf16.msra.mxu0 %v2752
        %2809 = vmatprep.subr.bf16.mxu0 0
        %2810 = vmatpush1.bf16.msra.mxu0 %v2753
        %2811 = vmatprep.subr.bf16.mxu0 0
        %2812 = vmatpush1.bf16.msra.mxu0 %v2754
        %2813 = vmatprep.subr.bf16.mxu0 0
        %2814 = vmatpush1.bf16.msra.mxu0 %v2755
        %2815 = vmatprep.subr.bf16.mxu0 0
        %2816 = vmatpush1.bf16.msra.mxu0 %v2756
        %2817 = vmatprep.subr.bf16.mxu0 0
        %2818 = vmatpush1.bf16.msra.mxu0 %v2757
        %2819 = vmatprep.subr.bf16.mxu0 0
        %2820 = vmatpush1.bf16.msra.mxu0 %v2758
        %2821 = vmatprep.subr.bf16.mxu0 0
        %2822 = vmatpush1.bf16.msra.mxu0 %v2759
        %2823 = vmatprep.subr.bf16.mxu0 0
        %2824 = vmatpush1.bf16.msra.mxu0 %v2760
        %2825 = vmatprep.mubr.bf16.mxu0 %v2295
        %2826 = vmatmul.mubr.bf16.gmra.mrb[0].mxu0 %v2283
        %v2827 = vpop.f32.mrb[0].mxu0
        %v2828 = vadd.f32 0.0, %v2827
        %v2829 = vpop.f32.mrb[0].mxu0
        %v2830 = vpop.f32.mrb[0].mxu0
        %v2831 = vadd.f32 0.0, %v2830
        %v2832 = vpop.f32.mrb[0].mxu0
        %2833 = vmatprep.mubr.bf16.mxu0 %v2326
        %2834 = vmatmul.mubr.bf16.gmra.mrb[0].mxu0 %v2314
        %v2835 = vpop.f32.mrb[0].mxu0
        %v2836 = vadd.f32 0.0, %v2835
        %v2837 = vpop.f32.mrb[0].mxu0
        %v2838 = vpop.f32.mrb[0].mxu0
        %v2839 = vadd.f32 0.0, %v2838
        %v2840 = vpop.f32.mrb[0].mxu0
        %2841 = vmatprep.mubr.bf16.mxu0 %v2357
        %2842 = vmatmul.mubr.bf16.gmra.mrb[0].mxu0 %v2345
        %v2843 = vpop.f32.mrb[0].mxu0
        %v2844 = vadd.f32 0.0, %v2843
        %v2845 = vpop.f32.mrb[0].mxu0
        %v2846 = vpop.f32.mrb[0].mxu0
        %v2847 = vadd.f32 0.0, %v2846
        %v2848 = vpop.f32.mrb[0].mxu0
        %2849 = vmatprep.mubr.bf16.mxu0 %v2388
        %2850 = vmatmul.mubr.bf16.gmra.mrb[0].mxu0 %v2376
        %v2851 = vpop.f32.mrb[0].mxu0
        %v2852 = vadd.f32 0.0, %v2851
        %v2853 = vpop.f32.mrb[0].mxu0
        %v2854 = vpop.f32.mrb[0].mxu0
        %v2855 = vadd.f32 0.0, %v2854
        %v2856 = vpop.f32.mrb[0].mxu0
        %2857 = vmatprep.mubr.bf16.mxu0 %v2419
        %2858 = vmatmul.mubr.bf16.gmra.mrb[0].mxu0 %v2407
        %v2859 = vpop.f32.mrb[0].mxu0
        %v2860 = vadd.f32 0.0, %v2859
        %v2861 = vpop.f32.mrb[0].mxu0
        %v2862 = vpop.f32.mrb[0].mxu0
        %v2863 = vadd.f32 0.0, %v2862
        %v2864 = vpop.f32.mrb[0].mxu0
        %2865 = vmatprep.mubr.bf16.mxu0 %v2450
        %2866 = vmatmul.mubr.bf16.gmra.mrb[0].mxu0 %v2438
        %v2867 = vpop.f32.mrb[0].mxu0
        %v2868 = vadd.f32 0.0, %v2867
        %v2869 = vpop.f32.mrb[0].mxu0
        %v2870 = vpop.f32.mrb[0].mxu0
        %v2871 = vadd.f32 0.0, %v2870
        %v2872 = vpop.f32.mrb[0].mxu0
        %2873 = vmatprep.mubr.bf16.mxu0 %v2481
        %2874 = vmatmul.mubr.bf16.gmra.mrb[0].mxu0 %v2469
        %v2875 = vpop.f32.mrb[0].mxu0
        %v2876 = vadd.f32 0.0, %v2875
        %v2877 = vpop.f32.mrb[0].mxu0
        %v2878 = vpop.f32.mrb[0].mxu0
        %v2879 = vadd.f32 0.0, %v2878
        %v2880 = vpop.f32.mrb[0].mxu0
        %2881 = vmatprep.mubr.bf16.mxu0 %v2584
        %2882 = vmatmul.mubr.bf16.gmra.mrb[0].mxu0 %v2572
        %v2883 = vpop.f32.mrb[0].mxu0
        %v2884 = vadd.f32 0.0, %v2883
        %v2885 = vpop.f32.mrb[0].mxu0
        %v2886 = vpop.f32.mrb[0].mxu0
        %v2887 = vadd.f32 0.0, %v2886
        %v2888 = vpop.f32.mrb[0].mxu0
        %2889 = vdwg.mxu0
        %2890 = vmatprep.subr.bf16.mxu0 0
        %2891 = vmatpush1.bf16.msra.mxu0 %v2761
        %2892 = vmatprep.subr.bf16.mxu0 0
        %2893 = vmatpush1.bf16.msra.mxu0 %v2762
        %2894 = vmatprep.subr.bf16.mxu0 0
        %2895 = vmatpush1.bf16.msra.mxu0 %v2763
        %2896 = vmatprep.subr.bf16.mxu0 0
        %2897 = vmatpush1.bf16.msra.mxu0 %v2764
        %2898 = vmatprep.subr.bf16.mxu0 0
        %2899 = vmatpush1.bf16.msra.mxu0 %v2765
        %2900 = vmatprep.subr.bf16.mxu0 0
        %2901 = vmatpush1.bf16.msra.mxu0 %v2766
        %2902 = vmatprep.subr.bf16.mxu0 0
        %2903 = vmatpush1.bf16.msra.mxu0 %v2767
        %2904 = vmatprep.subr.bf16.mxu0 0
        %2905 = vmatpush1.bf16.msra.mxu0 %v2768
        %2906 = vmatprep.subr.bf16.mxu0 0
        %2907 = vmatpush1.bf16.msra.mxu0 0
        %2908 = vmatprep.subr.bf16.mxu0 0
        %2909 = vmatpush1.bf16.msra.mxu0 0
        %2910 = vmatprep.subr.bf16.mxu0 0
        %2911 = vmatpush1.bf16.msra.mxu0 0
        %2912 = vmatprep.subr.bf16.mxu0 0
        %2913 = vmatpush1.bf16.msra.mxu0 0
        %2914 = vmatprep.subr.bf16.mxu0 0
        %2915 = vmatpush1.bf16.msra.mxu0 0
        %2916 = vmatprep.subr.bf16.mxu0 0
        %2917 = vmatpush1.bf16.msra.mxu0 0
        %2918 = vmatprep.subr.bf16.mxu0 0
        %2919 = vmatpush1.bf16.msra.mxu0 0
        %2920 = vmatprep.subr.bf16.mxu0 0
        %2921 = vmatpush1.bf16.msra.mxu0 0
        %2922 = vmatprep.mubr.bf16.mxu0 0
        %2923 = vmatmul.mubr.bf16.gmra.mrb[0].mxu0 %v2307
        %v2924 = vpop.f32.mrb[0].mxu0
        %v2925 = vadd.f32 %v2828, %v2924
        %v2926 = vpop.f32.mrb[0].mxu0
        %v2927 = vpop.f32.mrb[0].mxu0
        %v2928 = vadd.f32 %v2831, %v2927
        %v2929 = vpop.f32.mrb[0].mxu0
        %2930 = vmatprep.mubr.bf16.mxu0 0
        %2931 = vmatmul.mubr.bf16.gmra.mrb[0].mxu0 %v2338
        %v2932 = vpop.f32.mrb[0].mxu0
        %v2933 = vadd.f32 %v2836, %v2932
        %v2934 = vpop.f32.mrb[0].mxu0
        %v2935 = vpop.f32.mrb[0].mxu0
        %v2936 = vadd.f32 %v2839, %v2935
        %v2937 = vpop.f32.mrb[0].mxu0
        %2938 = vmatprep.mubr.bf16.mxu0 0
        %2939 = vmatmul.mubr.bf16.gmra.mrb[0].mxu0 %v2369
        %v2940 = vpop.f32.mrb[0].mxu0
        %v2941 = vadd.f32 %v2844, %v2940
        %v2942 = vpop.f32.mrb[0].mxu0
        %v2943 = vpop.f32.mrb[0].mxu0
        %v2944 = vadd.f32 %v2847, %v2943
        %v2945 = vpop.f32.mrb[0].mxu0
        %2946 = vmatprep.mubr.bf16.mxu0 0
        %2947 = vmatmul.mubr.bf16.gmra.mrb[0].mxu0 %v2400
        %v2948 = vpop.f32.mrb[0].mxu0
        %v2949 = vadd.f32 %v2852, %v2948
        %v2950 = vpop.f32.mrb[0].mxu0
        %v2951 = vpop.f32.mrb[0].mxu0
        %v2952 = vadd.f32 %v2855, %v2951
        %v2953 = vpop.f32.mrb[0].mxu0
        %2954 = vmatprep.mubr.bf16.mxu0 0
        %2955 = vmatmul.mubr.bf16.gmra.mrb[0].mxu0 %v2431
        %v2956 = vpop.f32.mrb[0].mxu0
        %v2957 = vadd.f32 %v2860, %v2956
        %v2958 = vpop.f32.mrb[0].mxu0
        %v2959 = vpop.f32.mrb[0].mxu0
        %v2960 = vadd.f32 %v2863, %v2959
        %v2961 = vpop.f32.mrb[0].mxu0
        %2962 = vmatprep.mubr.bf16.mxu0 0
        %2963 = vmatmul.mubr.bf16.gmra.mrb[0].mxu0 %v2462
        %v2964 = vpop.f32.mrb[0].mxu0
        %v2965 = vadd.f32 %v2868, %v2964
        %v2966 = vpop.f32.mrb[0].mxu0
        %v2967 = vpop.f32.mrb[0].mxu0
        %v2968 = vadd.f32 %v2871, %v2967
        %v2969 = vpop.f32.mrb[0].mxu0
        %2970 = vmatprep.mubr.bf16.mxu0 0
        %2971 = vmatmul.mubr.bf16.gmra.mrb[0].mxu0 %v2493
        %v2972 = vpop.f32.mrb[0].mxu0
        %v2973 = vadd.f32 %v2876, %v2972
        %v2974 = vpop.f32.mrb[0].mxu0
        %v2975 = vpop.f32.mrb[0].mxu0
        %v2976 = vadd.f32 %v2879, %v2975
        %v2977 = vpop.f32.mrb[0].mxu0
        %2978 = vmatprep.mubr.bf16.mxu0 0
        %2979 = vmatmul.mubr.bf16.gmra.mrb[0].mxu0 %v2596
        %v2980 = vpop.f32.mrb[0].mxu0
        %v2981 = vadd.f32 %v2884, %v2980
        %v2982 = vpop.f32.mrb[0].mxu0
        %v2983 = vpop.f32.mrb[0].mxu0
        %v2984 = vadd.f32 %v2887, %v2983
        %v2985 = vpop.f32.mrb[0].mxu0
        %2986 = vdwg.mxu0
        %v3035 = vunpack.c.l.b16 %v2518
        %v3036 = vunpack.c.l.b16 %v2519
        %v3037 = vunpack.c.l.b16 %v2520
        %v3038 = vunpack.c.l.b16 %v2521
        %v3039 = vunpack.c.l.b16 %v2522
        %v3040 = vunpack.c.l.b16 %v2523
        %v3041 = vunpack.c.l.b16 %v2524
        %v3042 = vunpack.c.l.b16 %v2525
        %v3043 = vunpack.c.l.b16 %v2526
        %v3044 = vunpack.c.l.b16 %v2527
        %v3045 = vunpack.c.l.b16 %v2528
        %v3046 = vunpack.c.l.b16 %v2529
        %v3047 = vunpack.c.l.b16 %v2530
        %v3048 = vunpack.c.l.b16 %v2531
        %v3049 = vunpack.c.l.b16 %v2532
        %v3050 = vunpack.c.l.b16 %v2533
        %v3051 = vunpack.c.l.b16 %v2534
        %v3052 = vunpack.c.l.b16 %v2535
        %v3053 = vunpack.c.l.b16 %v2536
        %v3054 = vunpack.c.l.b16 %v2537
        %v3055 = vunpack.c.l.b16 %v2538
        %v3056 = vunpack.c.l.b16 %v2539
        %v3057 = vunpack.c.l.b16 %v2540
        %v3058 = vunpack.c.l.b16 %v2541
        %v3059 = vunpack.c.l.b16 %v2542
        %v3060 = vunpack.c.l.b16 %v2543
        %v3061 = vunpack.c.l.b16 %v2544
        %v3062 = vunpack.c.l.b16 %v2545
        %v3063 = vunpack.c.l.b16 %v2546
        %v3064 = vunpack.c.l.b16 %v2547
        %v3065 = vunpack.c.l.b16 %v2548
        %v3066 = vunpack.c.l.b16 %v2549
        %v3067 = vunpack.c.l.b16 %v2550
        %v3068 = vunpack.c.l.b16 %v2551
        %v3069 = vunpack.c.l.b16 %v2552
        %v3070 = vunpack.c.l.b16 %v2553
        %v3071 = vunpack.c.l.b16 %v2554
        %v3072 = vunpack.c.l.b16 %v2555
        %v3073 = vunpack.c.l.b16 %v2556
        %v3074 = vunpack.c.l.b16 %v2557
        %v3075 = vunpack.c.l.b16 %v2558
        %v3076 = vunpack.c.l.b16 %v2559
        %v3077 = vunpack.c.l.b16 %v2560
        %v3078 = vunpack.c.l.b16 %v2561
        %v3079 = vunpack.c.l.b16 %v2562
        %v3080 = vunpack.c.l.b16 %v2563
        %v3081 = vunpack.c.l.b16 %v2564
        %v3082 = vunpack.c.l.b16 %v2565
        %v3083 = vpack.c.b16 %v3036, %v3035
        %v3084 = vpack.c.b16 %v3038, %v3037
        %v3085 = vpack.c.b16 %v3040, %v3039
        %v3086 = vpack.c.b16 %v3042, %v3041
        %v3087 = vpack.c.b16 %v3044, %v3043
        %v3088 = vpack.c.b16 %v3046, %v3045
        %v3089 = vpack.c.b16 %v3048, %v3047
        %v3090 = vpack.c.b16 %v3050, %v3049
        %v3091 = vpack.c.b16 %v3052, %v3051
        %v3092 = vpack.c.b16 %v3054, %v3053
        %v3093 = vpack.c.b16 %v3056, %v3055
        %v3094 = vpack.c.b16 %v3058, %v3057
        %v3095 = vpack.c.b16 %v3060, %v3059
        %v3096 = vpack.c.b16 %v3062, %v3061
        %v3097 = vpack.c.b16 %v3064, %v3063
        %v3098 = vpack.c.b16 %v3066, %v3065
        %v3099 = vpack.c.b16 %v3068, %v3067
        %v3100 = vpack.c.b16 %v3070, %v3069
        %v3101 = vpack.c.b16 %v3072, %v3071
        %v3102 = vpack.c.b16 %v3074, %v3073
        %v3103 = vpack.c.b16 %v3076, %v3075
        %v3104 = vpack.c.b16 %v3078, %v3077
        %v3105 = vpack.c.b16 %v3080, %v3079
        %v3106 = vpack.c.b16 %v3082, %v3081
        %3131 = vmatprep.subr.bf16.mxu0 0
        %3132 = vmatpush1.bf16.msra.mxu0 %v3083
        %3133 = vmatprep.subr.bf16.mxu0 0
        %3134 = vmatpush1.bf16.msra.mxu0 %v3084
        %3135 = vmatprep.subr.bf16.mxu0 0
        %3136 = vmatpush1.bf16.msra.mxu0 %v3085
        %3137 = vmatprep.subr.bf16.mxu0 0
        %3138 = vmatpush1.bf16.msra.mxu0 %v3086
        %3139 = vmatprep.subr.bf16.mxu0 0
        %3140 = vmatpush1.bf16.msra.mxu0 %v3087
        %3141 = vmatprep.subr.bf16.mxu0 0
        %3142 = vmatpush1.bf16.msra.mxu0 %v3088
        %3143 = vmatprep.subr.bf16.mxu0 0
        %3144 = vmatpush1.bf16.msra.mxu0 %v3089
        %3145 = vmatprep.subr.bf16.mxu0 0
        %3146 = vmatpush1.bf16.msra.mxu0 %v3090
        %3147 = vmatprep.subr.bf16.mxu0 0
        %3148 = vmatpush1.bf16.msra.mxu0 %v3091
        %3149 = vmatprep.subr.bf16.mxu0 0
        %3150 = vmatpush1.bf16.msra.mxu0 %v3092
        %3151 = vmatprep.subr.bf16.mxu0 0
        %3152 = vmatpush1.bf16.msra.mxu0 %v3093
        %3153 = vmatprep.subr.bf16.mxu0 0
        %3154 = vmatpush1.bf16.msra.mxu0 %v3094
        %3155 = vmatprep.subr.bf16.mxu0 0
        %3156 = vmatpush1.bf16.msra.mxu0 %v3095
        %3157 = vmatprep.subr.bf16.mxu0 0
        %3158 = vmatpush1.bf16.msra.mxu0 %v3096
        %3159 = vmatprep.subr.bf16.mxu0 0
        %3160 = vmatpush1.bf16.msra.mxu0 %v3097
        %3161 = vmatprep.subr.bf16.mxu0 0
        %3162 = vmatpush1.bf16.msra.mxu0 %v3098
        %3163 = vmatprep.mubr.bf16.mxu0 %v2264
        %3164 = vmatmul.mubr.bf16.gmra.mrb[0].mxu0 %v2252
        %v3165 = vpop.f32.mrb[0].mxu0
        %v3166 = vadd.f32 %v2925, %v3165
        %v3167 = vpop.f32.mrb[0].mxu0
        %v3168 = vpop.f32.mrb[0].mxu0
        %v3169 = vadd.f32 %v2928, %v3168
        %v3170 = vpop.f32.mrb[0].mxu0
        %3171 = vmatprep.mubr.bf16.mxu0 %v2295
        %3172 = vmatmul.mubr.bf16.gmra.mrb[0].mxu0 %v2283
        %v3173 = vpop.f32.mrb[0].mxu0
        %v3174 = vadd.f32 %v2933, %v3173
        %v3175 = vpop.f32.mrb[0].mxu0
        %v3176 = vpop.f32.mrb[0].mxu0
        %v3177 = vadd.f32 %v2936, %v3176
        %v3178 = vpop.f32.mrb[0].mxu0
        %3179 = vmatprep.mubr.bf16.mxu0 %v2326
        %3180 = vmatmul.mubr.bf16.gmra.mrb[0].mxu0 %v2314
        %v3181 = vpop.f32.mrb[0].mxu0
        %v3182 = vadd.f32 %v2941, %v3181
        %v3183 = vpop.f32.mrb[0].mxu0
        %v3184 = vpop.f32.mrb[0].mxu0
        %v3185 = vadd.f32 %v2944, %v3184
        %v3186 = vpop.f32.mrb[0].mxu0
        %3187 = vmatprep.mubr.bf16.mxu0 %v2357
        %3188 = vmatmul.mubr.bf16.gmra.mrb[0].mxu0 %v2345
        %v3189 = vpop.f32.mrb[0].mxu0
        %v3190 = vadd.f32 %v2949, %v3189
        %v3191 = vpop.f32.mrb[0].mxu0
        %v3192 = vpop.f32.mrb[0].mxu0
        %v3193 = vadd.f32 %v2952, %v3192
        %v3194 = vpop.f32.mrb[0].mxu0
        %3195 = vmatprep.mubr.bf16.mxu0 %v2388
        %3196 = vmatmul.mubr.bf16.gmra.mrb[0].mxu0 %v2376
        %v3197 = vpop.f32.mrb[0].mxu0
        %v3198 = vadd.f32 %v2957, %v3197
        %v3199 = vpop.f32.mrb[0].mxu0
        %v3200 = vpop.f32.mrb[0].mxu0
        %v3201 = vadd.f32 %v2960, %v3200
        %v3202 = vpop.f32.mrb[0].mxu0
        %3203 = vmatprep.mubr.bf16.mxu0 %v2419
        %3204 = vmatmul.mubr.bf16.gmra.mrb[0].mxu0 %v2407
        %v3205 = vpop.f32.mrb[0].mxu0
        %v3206 = vadd.f32 %v2965, %v3205
        %v3207 = vpop.f32.mrb[0].mxu0
        %v3208 = vpop.f32.mrb[0].mxu0
        %v3209 = vadd.f32 %v2968, %v3208
        %v3210 = vpop.f32.mrb[0].mxu0
        %3211 = vmatprep.mubr.bf16.mxu0 %v2450
        %3212 = vmatmul.mubr.bf16.gmra.mrb[0].mxu0 %v2438
        %v3213 = vpop.f32.mrb[0].mxu0
        %v3214 = vadd.f32 %v2973, %v3213
        %v3215 = vpop.f32.mrb[0].mxu0
        %v3216 = vpop.f32.mrb[0].mxu0
        %v3217 = vadd.f32 %v2976, %v3216
        %v3218 = vpop.f32.mrb[0].mxu0
        %3219 = vmatprep.mubr.bf16.mxu0 %v2481
        %3220 = vmatmul.mubr.bf16.gmra.mrb[0].mxu0 %v2469
        %v3221 = vpop.f32.mrb[0].mxu0
        %v3222 = vadd.f32 %v2981, %v3221
        %v3223 = vpop.f32.mrb[0].mxu0
        %v3224 = vpop.f32.mrb[0].mxu0
        %v3225 = vadd.f32 %v2984, %v3224
        %v3226 = vpop.f32.mrb[0].mxu0
        %3227 = vdwg.mxu0
        %3228 = vmatprep.subr.bf16.mxu0 0
        %3229 = vmatpush1.bf16.msra.mxu0 %v3099
        %3230 = vmatprep.subr.bf16.mxu0 0
        %3231 = vmatpush1.bf16.msra.mxu0 %v3100
        %3232 = vmatprep.subr.bf16.mxu0 0
        %3233 = vmatpush1.bf16.msra.mxu0 %v3101
        %3234 = vmatprep.subr.bf16.mxu0 0
        %3235 = vmatpush1.bf16.msra.mxu0 %v3102
        %3236 = vmatprep.subr.bf16.mxu0 0
        %3237 = vmatpush1.bf16.msra.mxu0 %v3103
        %3238 = vmatprep.subr.bf16.mxu0 0
        %3239 = vmatpush1.bf16.msra.mxu0 %v3104
        %3240 = vmatprep.subr.bf16.mxu0 0
        %3241 = vmatpush1.bf16.msra.mxu0 %v3105
        %3242 = vmatprep.subr.bf16.mxu0 0
        %3243 = vmatpush1.bf16.msra.mxu0 %v3106
        %3244 = vmatprep.subr.bf16.mxu0 0
        %3245 = vmatpush1.bf16.msra.mxu0 0
        %3246 = vmatprep.subr.bf16.mxu0 0
        %3247 = vmatpush1.bf16.msra.mxu0 0
        %3248 = vmatprep.subr.bf16.mxu0 0
        %3249 = vmatpush1.bf16.msra.mxu0 0
        %3250 = vmatprep.subr.bf16.mxu0 0
        %3251 = vmatpush1.bf16.msra.mxu0 0
        %3252 = vmatprep.subr.bf16.mxu0 0
        %3253 = vmatpush1.bf16.msra.mxu0 0
        %3254 = vmatprep.subr.bf16.mxu0 0
        %3255 = vmatpush1.bf16.msra.mxu0 0
        %3256 = vmatprep.subr.bf16.mxu0 0
        %3257 = vmatpush1.bf16.msra.mxu0 0
        %3258 = vmatprep.subr.bf16.mxu0 0
        %3259 = vmatpush1.bf16.msra.mxu0 0
        %3260 = vmatprep.mubr.bf16.mxu0 0
        %3261 = vmatmul.mubr.bf16.gmra.mrb[0].mxu0 %v2276
        %v3262 = vpop.f32.mrb[0].mxu0
        %v3263 = vadd.f32 %v3166, %v3262
        %v3264 = vpop.f32.mrb[0].mxu0
        %v3265 = vpop.f32.mrb[0].mxu0
        %v3266 = vadd.f32 %v3169, %v3265
        %v3267 = vpop.f32.mrb[0].mxu0
        %3268 = vmatprep.mubr.bf16.mxu0 0
        %3269 = vmatmul.mubr.bf16.gmra.mrb[0].mxu0 %v2307
        %v3270 = vpop.f32.mrb[0].mxu0
        %v3271 = vadd.f32 %v3174, %v3270
        %v3272 = vpop.f32.mrb[0].mxu0
        %v3273 = vpop.f32.mrb[0].mxu0
        %v3274 = vadd.f32 %v3177, %v3273
        %v3275 = vpop.f32.mrb[0].mxu0
        %3276 = vmatprep.mubr.bf16.mxu0 0
        %3277 = vmatmul.mubr.bf16.gmra.mrb[0].mxu0 %v2338
        %v3278 = vpop.f32.mrb[0].mxu0
        %v3279 = vadd.f32 %v3182, %v3278
        %v3280 = vpop.f32.mrb[0].mxu0
        %v3281 = vpop.f32.mrb[0].mxu0
        %v3282 = vadd.f32 %v3185, %v3281
        %v3283 = vpop.f32.mrb[0].mxu0
        %3284 = vmatprep.mubr.bf16.mxu0 0
        %3285 = vmatmul.mubr.bf16.gmra.mrb[0].mxu0 %v2369
        %v3286 = vpop.f32.mrb[0].mxu0
        %v3287 = vadd.f32 %v3190, %v3286
        %v3288 = vpop.f32.mrb[0].mxu0
        %v3289 = vpop.f32.mrb[0].mxu0
        %v3290 = vadd.f32 %v3193, %v3289
        %v3291 = vpop.f32.mrb[0].mxu0
        %3292 = vmatprep.mubr.bf16.mxu0 0
        %3293 = vmatmul.mubr.bf16.gmra.mrb[0].mxu0 %v2400
        %v3294 = vpop.f32.mrb[0].mxu0
        %v3295 = vadd.f32 %v3198, %v3294
        %v3296 = vpop.f32.mrb[0].mxu0
        %v3297 = vpop.f32.mrb[0].mxu0
        %v3298 = vadd.f32 %v3201, %v3297
        %v3299 = vpop.f32.mrb[0].mxu0
        %3300 = vmatprep.mubr.bf16.mxu0 0
        %3301 = vmatmul.mubr.bf16.gmra.mrb[0].mxu0 %v2431
        %v3302 = vpop.f32.mrb[0].mxu0
        %v3303 = vadd.f32 %v3206, %v3302
        %v3304 = vpop.f32.mrb[0].mxu0
        %v3305 = vpop.f32.mrb[0].mxu0
        %v3306 = vadd.f32 %v3209, %v3305
        %v3307 = vpop.f32.mrb[0].mxu0
        %3308 = vmatprep.mubr.bf16.mxu0 0
        %3309 = vmatmul.mubr.bf16.gmra.mrb[0].mxu0 %v2462
        %v3310 = vpop.f32.mrb[0].mxu0
        %v3311 = vadd.f32 %v3214, %v3310
        %v3312 = vpop.f32.mrb[0].mxu0
        %v3313 = vpop.f32.mrb[0].mxu0
        %v3314 = vadd.f32 %v3217, %v3313
        %v3315 = vpop.f32.mrb[0].mxu0
        %3316 = vmatprep.mubr.bf16.mxu0 0
        %3317 = vmatmul.mubr.bf16.gmra.mrb[0].mxu0 %v2493
        %v3318 = vpop.f32.mrb[0].mxu0
        %v3319 = vadd.f32 %v3222, %v3318
        %v3320 = vpop.f32.mrb[0].mxu0
        %v3321 = vpop.f32.mrb[0].mxu0
        %v3322 = vadd.f32 %v3225, %v3321
        %v3323 = vpop.f32.mrb[0].mxu0
        %3324 = vdwg.mxu0
        %v3326 = vshrl.u32 %v2104, 16
        %v3328 = vrot.slane %v3326, 7
        %v3329 = vrot.slane %v2193, 7
        %v3330 = vor.u32 %v3329, %v2190
        %v3331 = vsel %vm2019, %v3328, %v3330
        %v3333 = vshrl.u32 %v2192, 16
        %v3335 = vrot.slane %v3333, 7
        %v3337 = vshrl.u32 %v2195, 16
        %v3339 = vrot.slane %v3337, 7
        %v3340 = vshll.u32 %v2195, 16
        %v3342 = vor.u32 %v3339, %v3340
        %v3343 = vsel %vm2019, %v3335, %v3342
        %v3345 = vshrl.u32 %v2243, 16
        %v3347 = vrot.slane %v3345, 7
        %v3349 = vshrl.u32 %v2245, 16
        %v3351 = vrot.slane %v3349, 7
        %v3352 = vshll.u32 %v2245, 16
        %v3354 = vor.u32 %v3351, %v3352
        %v3355 = vsel %vm2019, %v3347, %v3354
        %s3359 = scalar_lea.vmem [#allocation3], 384
        %v3360 = vld [vmem:[%s3359] sm:$0xf]
        %v3361 = vld [vmem:[%s3359 + $0x4] sm:$0xf]
        %v3362 = vld [vmem:[%s3359 + $0x8] sm:$0xf]
        %v3363 = vld [vmem:[%s3359 + $0xc] sm:$0xf]
        %v3364 = vld [vmem:[%s3359 + $0x10] sm:$0xf]
        %v3365 = vld [vmem:[%s3359 + $0x14] sm:$0xf]
        %v3366 = vld [vmem:[%s3359 + $0x18] sm:$0xf]
        %v3367 = vld [vmem:[%s3359 + $0x1c] sm:$0xf]
        %v3368 = vld [vmem:[%s3359 + $0x20] sm:$0xf]
        %v3369 = vld [vmem:[%s3359 + $0x24] sm:$0xf]
        %v3370 = vld [vmem:[%s3359 + $0x28] sm:$0xf]
        %v3371 = vld [vmem:[%s3359 + $0x2c] sm:$0xf]
        %v3372 = vld [vmem:[%s3359 + $0x30] sm:$0xf]
        %v3373 = vld [vmem:[%s3359 + $0x34] sm:$0xf]
        %v3374 = vld [vmem:[%s3359 + $0x38] sm:$0xf]
        %v3375 = vld [vmem:[%s3359 + $0x3c] sm:$0xf]
        %v3376 = vld [vmem:[%s3359 + $0x40] sm:$0xf]
        %v3377 = vld [vmem:[%s3359 + $0x44] sm:$0xf]
        %v3378 = vld [vmem:[%s3359 + $0x48] sm:$0xf]
        %v3379 = vld [vmem:[%s3359 + $0x4c] sm:$0xf]
        %v3380 = vld [vmem:[%s3359 + $0x50] sm:$0xf]
        %v3381 = vld [vmem:[%s3359 + $0x54] sm:$0xf]
        %v3382 = vld [vmem:[%s3359 + $0x58] sm:$0xf]
        %v3383 = vld [vmem:[%s3359 + $0x5c] sm:$0xf]
        %v3384 = vld [vmem:[%s3359 + $0x60] sm:$0xf]
        %v3385 = vld [vmem:[%s3359 + $0x64] sm:$0xf]
        %v3386 = vld [vmem:[%s3359 + $0x68] sm:$0xf]
        %v3387 = vld [vmem:[%s3359 + $0x6c] sm:$0xf]
        %v3388 = vld [vmem:[%s3359 + $0x70] sm:$0xf]
        %v3389 = vld [vmem:[%s3359 + $0x74] sm:$0xf]
        %v3390 = vld [vmem:[%s3359 + $0x78] sm:$0xf]
        %v3391 = vld [vmem:[%s3359 + $0x7c] sm:$0xf]
        %v3392 = vld [vmem:[%s3359 + $0x80] sm:$0xf]
        %v3393 = vld [vmem:[%s3359 + $0x84] sm:$0xf]
        %v3394 = vld [vmem:[%s3359 + $0x88] sm:$0xf]
        %v3395 = vld [vmem:[%s3359 + $0x8c] sm:$0xf]
        %v3396 = vld [vmem:[%s3359 + $0x90] sm:$0xf]
        %v3397 = vld [vmem:[%s3359 + $0x94] sm:$0xf]
        %v3398 = vld [vmem:[%s3359 + $0x98] sm:$0xf]
        %v3399 = vld [vmem:[%s3359 + $0x9c] sm:$0xf]
        %v3400 = vld [vmem:[%s3359 + $0xa0] sm:$0xf]
        %v3401 = vld [vmem:[%s3359 + $0xa4] sm:$0xf]
        %v3402 = vld [vmem:[%s3359 + $0xa8] sm:$0xf]
        %v3403 = vld [vmem:[%s3359 + $0xac] sm:$0xf]
        %v3404 = vld [vmem:[%s3359 + $0xb0] sm:$0xf]
        %v3405 = vld [vmem:[%s3359 + $0xb4] sm:$0xf]
        %v3406 = vld [vmem:[%s3359 + $0xb8] sm:$0xf]
        %v3407 = vld [vmem:[%s3359 + $0xbc] sm:$0xf]
        %v3456 = vunpack.c.l.b16 %v3360
        %v3457 = vunpack.c.l.b16 %v3361
        %v3458 = vunpack.c.l.b16 %v3362
        %v3459 = vunpack.c.l.b16 %v3363
        %v3460 = vunpack.c.l.b16 %v3364
        %v3461 = vunpack.c.l.b16 %v3365
        %v3462 = vunpack.c.l.b16 %v3366
        %v3463 = vunpack.c.l.b16 %v3367
        %v3464 = vunpack.c.l.b16 %v3368
        %v3465 = vunpack.c.l.b16 %v3369
        %v3466 = vunpack.c.l.b16 %v3370
        %v3467 = vunpack.c.l.b16 %v3371
        %v3468 = vunpack.c.l.b16 %v3372
        %v3469 = vunpack.c.l.b16 %v3373
        %v3470 = vunpack.c.l.b16 %v3374
        %v3471 = vunpack.c.l.b16 %v3375
        %v3472 = vunpack.c.l.b16 %v3376
        %v3473 = vunpack.c.l.b16 %v3377
        %v3474 = vunpack.c.l.b16 %v3378
        %v3475 = vunpack.c.l.b16 %v3379
        %v3476 = vunpack.c.l.b16 %v3380
        %v3477 = vunpack.c.l.b16 %v3381
        %v3478 = vunpack.c.l.b16 %v3382
        %v3479 = vunpack.c.l.b16 %v3383
        %v3480 = vunpack.c.l.b16 %v3384
        %v3481 = vunpack.c.l.b16 %v3385
        %v3482 = vunpack.c.l.b16 %v3386
        %v3483 = vunpack.c.l.b16 %v3387
        %v3484 = vunpack.c.l.b16 %v3388
        %v3485 = vunpack.c.l.b16 %v3389
        %v3486 = vunpack.c.l.b16 %v3390
        %v3487 = vunpack.c.l.b16 %v3391
        %v3488 = vunpack.c.l.b16 %v3392
        %v3489 = vunpack.c.l.b16 %v3393
        %v3490 = vunpack.c.l.b16 %v3394
        %v3491 = vunpack.c.l.b16 %v3395
        %v3492 = vunpack.c.l.b16 %v3396
        %v3493 = vunpack.c.l.b16 %v3397
        %v3494 = vunpack.c.l.b16 %v3398
        %v3495 = vunpack.c.l.b16 %v3399
        %v3496 = vunpack.c.l.b16 %v3400
        %v3497 = vunpack.c.l.b16 %v3401
        %v3498 = vunpack.c.l.b16 %v3402
        %v3499 = vunpack.c.l.b16 %v3403
        %v3500 = vunpack.c.l.b16 %v3404
        %v3501 = vunpack.c.l.b16 %v3405
        %v3502 = vunpack.c.l.b16 %v3406
        %v3503 = vunpack.c.l.b16 %v3407
        %v3504 = vpack.c.b16 %v3457, %v3456
        %v3505 = vpack.c.b16 %v3459, %v3458
        %v3506 = vpack.c.b16 %v3461, %v3460
        %v3507 = vpack.c.b16 %v3463, %v3462
        %v3508 = vpack.c.b16 %v3465, %v3464
        %v3509 = vpack.c.b16 %v3467, %v3466
        %v3510 = vpack.c.b16 %v3469, %v3468
        %v3511 = vpack.c.b16 %v3471, %v3470
        %v3512 = vpack.c.b16 %v3473, %v3472
        %v3513 = vpack.c.b16 %v3475, %v3474
        %v3514 = vpack.c.b16 %v3477, %v3476
        %v3515 = vpack.c.b16 %v3479, %v3478
        %v3516 = vpack.c.b16 %v3481, %v3480
        %v3517 = vpack.c.b16 %v3483, %v3482
        %v3518 = vpack.c.b16 %v3485, %v3484
        %v3519 = vpack.c.b16 %v3487, %v3486
        %v3520 = vpack.c.b16 %v3489, %v3488
        %v3521 = vpack.c.b16 %v3491, %v3490
        %v3522 = vpack.c.b16 %v3493, %v3492
        %v3523 = vpack.c.b16 %v3495, %v3494
        %v3524 = vpack.c.b16 %v3497, %v3496
        %v3525 = vpack.c.b16 %v3499, %v3498
        %v3526 = vpack.c.b16 %v3501, %v3500
        %v3527 = vpack.c.b16 %v3503, %v3502
        %3552 = vmatprep.subr.bf16.mxu0 0
        %3553 = vmatpush1.bf16.msra.mxu0 %v3504
        %3554 = vmatprep.subr.bf16.mxu0 0
        %3555 = vmatpush1.bf16.msra.mxu0 %v3505
        %3556 = vmatprep.subr.bf16.mxu0 0
        %3557 = vmatpush1.bf16.msra.mxu0 %v3506
        %3558 = vmatprep.subr.bf16.mxu0 0
        %3559 = vmatpush1.bf16.msra.mxu0 %v3507
        %3560 = vmatprep.subr.bf16.mxu0 0
        %3561 = vmatpush1.bf16.msra.mxu0 %v3508
        %3562 = vmatprep.subr.bf16.mxu0 0
        %3563 = vmatpush1.bf16.msra.mxu0 %v3509
        %3564 = vmatprep.subr.bf16.mxu0 0
        %3565 = vmatpush1.bf16.msra.mxu0 %v3510
        %3566 = vmatprep.subr.bf16.mxu0 0
        %3567 = vmatpush1.bf16.msra.mxu0 %v3511
        %3568 = vmatprep.subr.bf16.mxu0 0
        %3569 = vmatpush1.bf16.msra.mxu0 %v3512
        %3570 = vmatprep.subr.bf16.mxu0 0
        %3571 = vmatpush1.bf16.msra.mxu0 %v3513
        %3572 = vmatprep.subr.bf16.mxu0 0
        %3573 = vmatpush1.bf16.msra.mxu0 %v3514
        %3574 = vmatprep.subr.bf16.mxu0 0
        %3575 = vmatpush1.bf16.msra.mxu0 %v3515
        %3576 = vmatprep.subr.bf16.mxu0 0
        %3577 = vmatpush1.bf16.msra.mxu0 %v3516
        %3578 = vmatprep.subr.bf16.mxu0 0
        %3579 = vmatpush1.bf16.msra.mxu0 %v3517
        %3580 = vmatprep.subr.bf16.mxu0 0
        %3581 = vmatpush1.bf16.msra.mxu0 %v3518
        %3582 = vmatprep.subr.bf16.mxu0 0
        %3583 = vmatpush1.bf16.msra.mxu0 %v3519
        %3584 = vmatprep.mubr.bf16.mxu0 %v2326
        %3585 = vmatmul.mubr.bf16.gmra.mrb[0].mxu0 %v2314
        %v3586 = vpop.f32.mrb[0].mxu0
        %v3587 = vadd.f32 0.0, %v3586
        %v3588 = vpop.f32.mrb[0].mxu0
        %v3589 = vpop.f32.mrb[0].mxu0
        %v3590 = vadd.f32 0.0, %v3589
        %v3591 = vpop.f32.mrb[0].mxu0
        %3592 = vmatprep.mubr.bf16.mxu0 %v2357
        %3593 = vmatmul.mubr.bf16.gmra.mrb[0].mxu0 %v2345
        %v3594 = vpop.f32.mrb[0].mxu0
        %v3595 = vadd.f32 0.0, %v3594
        %v3596 = vpop.f32.mrb[0].mxu0
        %v3597 = vpop.f32.mrb[0].mxu0
        %v3598 = vadd.f32 0.0, %v3597
        %v3599 = vpop.f32.mrb[0].mxu0
        %3600 = vmatprep.mubr.bf16.mxu0 %v2388
        %3601 = vmatmul.mubr.bf16.gmra.mrb[0].mxu0 %v2376
        %v3602 = vpop.f32.mrb[0].mxu0
        %v3603 = vadd.f32 0.0, %v3602
        %v3604 = vpop.f32.mrb[0].mxu0
        %v3605 = vpop.f32.mrb[0].mxu0
        %v3606 = vadd.f32 0.0, %v3605
        %v3607 = vpop.f32.mrb[0].mxu0
        %3608 = vmatprep.mubr.bf16.mxu0 %v2419
        %3609 = vmatmul.mubr.bf16.gmra.mrb[0].mxu0 %v2407
        %v3610 = vpop.f32.mrb[0].mxu0
        %v3611 = vadd.f32 0.0, %v3610
        %v3612 = vpop.f32.mrb[0].mxu0
        %v3613 = vpop.f32.mrb[0].mxu0
        %v3614 = vadd.f32 0.0, %v3613
        %v3615 = vpop.f32.mrb[0].mxu0
        %3616 = vmatprep.mubr.bf16.mxu0 %v2450
        %3617 = vmatmul.mubr.bf16.gmra.mrb[0].mxu0 %v2438
        %v3618 = vpop.f32.mrb[0].mxu0
        %v3619 = vadd.f32 0.0, %v3618
        %v3620 = vpop.f32.mrb[0].mxu0
        %v3621 = vpop.f32.mrb[0].mxu0
        %v3622 = vadd.f32 0.0, %v3621
        %v3623 = vpop.f32.mrb[0].mxu0
        %3624 = vmatprep.mubr.bf16.mxu0 %v2481
        %3625 = vmatmul.mubr.bf16.gmra.mrb[0].mxu0 %v2469
        %v3626 = vpop.f32.mrb[0].mxu0
        %v3627 = vadd.f32 0.0, %v3626
        %v3628 = vpop.f32.mrb[0].mxu0
        %v3629 = vpop.f32.mrb[0].mxu0
        %v3630 = vadd.f32 0.0, %v3629
        %v3631 = vpop.f32.mrb[0].mxu0
        %3632 = vmatprep.mubr.bf16.mxu0 %v2584
        %3633 = vmatmul.mubr.bf16.gmra.mrb[0].mxu0 %v2572
        %v3634 = vpop.f32.mrb[0].mxu0
        %v3635 = vadd.f32 0.0, %v3634
        %v3636 = vpop.f32.mrb[0].mxu0
        %v3637 = vpop.f32.mrb[0].mxu0
        %v3638 = vadd.f32 0.0, %v3637
        %v3639 = vpop.f32.mrb[0].mxu0
        %3640 = vmatprep.mubr.bf16.mxu0 %v3343
        %3641 = vmatmul.mubr.bf16.gmra.mrb[0].mxu0 %v3331
        %v3642 = vpop.f32.mrb[0].mxu0
        %v3643 = vadd.f32 0.0, %v3642
        %v3644 = vpop.f32.mrb[0].mxu0
        %v3645 = vpop.f32.mrb[0].mxu0
        %v3646 = vadd.f32 0.0, %v3645
        %v3647 = vpop.f32.mrb[0].mxu0
        %3648 = vdwg.mxu0
        %3649 = vmatprep.subr.bf16.mxu0 0
        %3650 = vmatpush1.bf16.msra.mxu0 %v3520
        %3651 = vmatprep.subr.bf16.mxu0 0
        %3652 = vmatpush1.bf16.msra.mxu0 %v3521
        %3653 = vmatprep.subr.bf16.mxu0 0
        %3654 = vmatpush1.bf16.msra.mxu0 %v3522
        %3655 = vmatprep.subr.bf16.mxu0 0
        %3656 = vmatpush1.bf16.msra.mxu0 %v3523
        %3657 = vmatprep.subr.bf16.mxu0 0
        %3658 = vmatpush1.bf16.msra.mxu0 %v3524
        %3659 = vmatprep.subr.bf16.mxu0 0
        %3660 = vmatpush1.bf16.msra.mxu0 %v3525
        %3661 = vmatprep.subr.bf16.mxu0 0
        %3662 = vmatpush1.bf16.msra.mxu0 %v3526
        %3663 = vmatprep.subr.bf16.mxu0 0
        %3664 = vmatpush1.bf16.msra.mxu0 %v3527
        %3665 = vmatprep.subr.bf16.mxu0 0
        %3666 = vmatpush1.bf16.msra.mxu0 0
        %3667 = vmatprep.subr.bf16.mxu0 0
        %3668 = vmatpush1.bf16.msra.mxu0 0
        %3669 = vmatprep.subr.bf16.mxu0 0
        %3670 = vmatpush1.bf16.msra.mxu0 0
        %3671 = vmatprep.subr.bf16.mxu0 0
        %3672 = vmatpush1.bf16.msra.mxu0 0
        %3673 = vmatprep.subr.bf16.mxu0 0
        %3674 = vmatpush1.bf16.msra.mxu0 0
        %3675 = vmatprep.subr.bf16.mxu0 0
        %3676 = vmatpush1.bf16.msra.mxu0 0
        %3677 = vmatprep.subr.bf16.mxu0 0
        %3678 = vmatpush1.bf16.msra.mxu0 0
        %3679 = vmatprep.subr.bf16.mxu0 0
        %3680 = vmatpush1.bf16.msra.mxu0 0
        %3681 = vmatprep.mubr.bf16.mxu0 0
        %3682 = vmatmul.mubr.bf16.gmra.mrb[0].mxu0 %v2338
        %v3683 = vpop.f32.mrb[0].mxu0
        %v3684 = vadd.f32 %v3587, %v3683
        %v3685 = vpop.f32.mrb[0].mxu0
        %v3686 = vpop.f32.mrb[0].mxu0
        %v3687 = vadd.f32 %v3590, %v3686
        %v3688 = vpop.f32.mrb[0].mxu0
        %3689 = vmatprep.mubr.bf16.mxu0 0
        %3690 = vmatmul.mubr.bf16.gmra.mrb[0].mxu0 %v2369
        %v3691 = vpop.f32.mrb[0].mxu0
        %v3692 = vadd.f32 %v3595, %v3691
        %v3693 = vpop.f32.mrb[0].mxu0
        %v3694 = vpop.f32.mrb[0].mxu0
        %v3695 = vadd.f32 %v3598, %v3694
        %v3696 = vpop.f32.mrb[0].mxu0
        %3697 = vmatprep.mubr.bf16.mxu0 0
        %3698 = vmatmul.mubr.bf16.gmra.mrb[0].mxu0 %v2400
        %v3699 = vpop.f32.mrb[0].mxu0
        %v3700 = vadd.f32 %v3603, %v3699
        %v3701 = vpop.f32.mrb[0].mxu0
        %v3702 = vpop.f32.mrb[0].mxu0
        %v3703 = vadd.f32 %v3606, %v3702
        %v3704 = vpop.f32.mrb[0].mxu0
        %3705 = vmatprep.mubr.bf16.mxu0 0
        %3706 = vmatmul.mubr.bf16.gmra.mrb[0].mxu0 %v2431
        %v3707 = vpop.f32.mrb[0].mxu0
        %v3708 = vadd.f32 %v3611, %v3707
        %v3709 = vpop.f32.mrb[0].mxu0
        %v3710 = vpop.f32.mrb[0].mxu0
        %v3711 = vadd.f32 %v3614, %v3710
        %v3712 = vpop.f32.mrb[0].mxu0
        %3713 = vmatprep.mubr.bf16.mxu0 0
        %3714 = vmatmul.mubr.bf16.gmra.mrb[0].mxu0 %v2462
        %v3715 = vpop.f32.mrb[0].mxu0
        %v3716 = vadd.f32 %v3619, %v3715
        %v3717 = vpop.f32.mrb[0].mxu0
        %v3718 = vpop.f32.mrb[0].mxu0
        %v3719 = vadd.f32 %v3622, %v3718
        %v3720 = vpop.f32.mrb[0].mxu0
        %3721 = vmatprep.mubr.bf16.mxu0 0
        %3722 = vmatmul.mubr.bf16.gmra.mrb[0].mxu0 %v2493
        %v3723 = vpop.f32.mrb[0].mxu0
        %v3724 = vadd.f32 %v3627, %v3723
        %v3725 = vpop.f32.mrb[0].mxu0
        %v3726 = vpop.f32.mrb[0].mxu0
        %v3727 = vadd.f32 %v3630, %v3726
        %v3728 = vpop.f32.mrb[0].mxu0
        %3729 = vmatprep.mubr.bf16.mxu0 0
        %3730 = vmatmul.mubr.bf16.gmra.mrb[0].mxu0 %v2596
        %v3731 = vpop.f32.mrb[0].mxu0
        %v3732 = vadd.f32 %v3635, %v3731
        %v3733 = vpop.f32.mrb[0].mxu0
        %v3734 = vpop.f32.mrb[0].mxu0
        %v3735 = vadd.f32 %v3638, %v3734
        %v3736 = vpop.f32.mrb[0].mxu0
        %3737 = vmatprep.mubr.bf16.mxu0 0
        %3738 = vmatmul.mubr.bf16.gmra.mrb[0].mxu0 %v3355
        %v3739 = vpop.f32.mrb[0].mxu0
        %v3740 = vadd.f32 %v3643, %v3739
        %v3741 = vpop.f32.mrb[0].mxu0
        %v3742 = vpop.f32.mrb[0].mxu0
        %v3743 = vadd.f32 %v3646, %v3742
        %v3744 = vpop.f32.mrb[0].mxu0
        %3745 = vdwg.mxu0
        %v3746 = vadd.f32 %v3263, %v3684
        %v3747 = vadd.f32 %v3266, %v3687
        %v3748 = vadd.f32 %v3271, %v3692
        %v3749 = vadd.f32 %v3274, %v3695
        %v3750 = vadd.f32 %v3279, %v3700
        %v3751 = vadd.f32 %v3282, %v3703
        %v3752 = vadd.f32 %v3287, %v3708
        %v3753 = vadd.f32 %v3290, %v3711
        %v3754 = vadd.f32 %v3295, %v3716
        %v3755 = vadd.f32 %v3298, %v3719
        %v3756 = vadd.f32 %v3303, %v3724
        %v3757 = vadd.f32 %v3306, %v3727
        %v3758 = vadd.f32 %v3311, %v3732
        %v3759 = vadd.f32 %v3314, %v3735
        %v3760 = vadd.f32 %v3319, %v3740
        %v3761 = vadd.f32 %v3322, %v3743
        %v3762 = vld [vmem:[%s4] sm:$0x1]
        %v3764 = vlaneseq
        %v3765 = vshrl.u32 %v3764, 7
        %v3766 = vsub.s32 0, %v3765
        %v3767 = vrot.slane %v3762, %v3766
        %v3769 = vadd.f32 %v3746, %v3767
        %v3770 = vadd.f32 %v3747, %v3767
        %v3771 = vadd.f32 %v3748, %v3767
        %v3772 = vadd.f32 %v3749, %v3767
        %v3773 = vadd.f32 %v3750, %v3767
        %v3774 = vadd.f32 %v3751, %v3767
        %v3775 = vadd.f32 %v3752, %v3767
        %v3776 = vadd.f32 %v3753, %v3767
        %v3777 = vadd.f32 %v3754, %v3767
        %v3778 = vadd.f32 %v3755, %v3767
        %v3779 = vadd.f32 %v3756, %v3767
        %v3780 = vadd.f32 %v3757, %v3767
        %v3781 = vadd.f32 %v3758, %v3767
        %v3782 = vadd.f32 %v3759, %v3767
        %v3783 = vadd.f32 %v3760, %v3767
        %v3784 = vadd.f32 %v3761, %v3767
        %vm3785 = vsmask.f32 3328
        %vm3786 = vsmask.f32 7440
        %vm3787 = vmor %vm3785, %vm3786
        %v3789 = vshrl.u32 %v318, 16
        %v3791 = vrot.slane %v3789, 4
        %v3792 = vshll.u32 %v318, 16
        %v3794 = vrot.slane %v3792, 5
        %v3795 = vor.u32 %v3791, %v3794
        %v3796 = vrot.slane %v3795, 4
        %v3798 = vshll.u32 %v319, 16
        %v3800 = vrot.slane %v3798, 5
        %v3801 = vsel %vm3787, %v3796, %v3800
        %v3802 = vshrl.u32 %v319, 16
        %v3804 = vrot.slane %v3802, 4
        %v3805 = vor.u32 %v3804, %v3800
        %v3806 = vrot.slane %v3805, 4
        %v3808 = vshll.u32 %v320, 16
        %v3810 = vrot.slane %v3808, 5
        %v3811 = vsel %vm3787, %v3806, %v3810
        %v3813 = vshrl.u32 %v321, 16
        %v3815 = vrot.slane %v3813, 4
        %v3816 = vshll.u32 %v321, 16
        %v3818 = vrot.slane %v3816, 5
        %v3819 = vor.u32 %v3815, %v3818
        %v3820 = vrot.slane %v3819, 4
        %v3822 = vshll.u32 %v322, 16
        %v3824 = vrot.slane %v3822, 5
        %v3825 = vsel %vm3787, %v3820, %v3824
        %v3826 = vshrl.u32 %v322, 16
        %v3828 = vrot.slane %v3826, 4
        %v3829 = vor.u32 %v3828, %v3824
        %v3830 = vrot.slane %v3829, 4
        %v3832 = vshll.u32 %v323, 16
        %v3834 = vrot.slane %v3832, 5
        %v3835 = vsel %vm3787, %v3830, %v3834
        %v3837 = vshrl.u32 %v324, 16
        %v3839 = vrot.slane %v3837, 4
        %v3840 = vshll.u32 %v324, 16
        %v3842 = vrot.slane %v3840, 5
        %v3843 = vor.u32 %v3839, %v3842
        %v3844 = vrot.slane %v3843, 4
        %v3846 = vshll.u32 %v325, 16
        %v3848 = vrot.slane %v3846, 5
        %v3849 = vsel %vm3787, %v3844, %v3848
        %v3850 = vshrl.u32 %v325, 16
        %v3852 = vrot.slane %v3850, 4
        %v3853 = vor.u32 %v3852, %v3848
        %v3854 = vrot.slane %v3853, 4
        %v3856 = vshll.u32 %v326, 16
        %v3858 = vrot.slane %v3856, 5
        %v3859 = vsel %vm3787, %v3854, %v3858
        %v3861 = vshrl.u32 %v327, 16
        %v3863 = vrot.slane %v3861, 4
        %v3864 = vshll.u32 %v327, 16
        %v3866 = vrot.slane %v3864, 5
        %v3867 = vor.u32 %v3863, %v3866
        %v3868 = vrot.slane %v3867, 4
        %v3870 = vshll.u32 %v328, 16
        %v3872 = vrot.slane %v3870, 5
        %v3873 = vsel %vm3787, %v3868, %v3872
        %v3874 = vshrl.u32 %v328, 16
        %v3876 = vrot.slane %v3874, 4
        %v3877 = vor.u32 %v3876, %v3872
        %v3878 = vrot.slane %v3877, 4
        %v3880 = vshll.u32 %v329, 16
        %v3882 = vrot.slane %v3880, 5
        %v3883 = vsel %vm3787, %v3878, %v3882
        %v3885 = vshrl.u32 %v330, 16
        %v3887 = vrot.slane %v3885, 4
        %v3888 = vshll.u32 %v330, 16
        %v3890 = vrot.slane %v3888, 5
        %v3891 = vor.u32 %v3887, %v3890
        %v3892 = vrot.slane %v3891, 4
        %v3894 = vshll.u32 %v331, 16
        %v3896 = vrot.slane %v3894, 5
        %v3897 = vsel %vm3787, %v3892, %v3896
        %v3898 = vshrl.u32 %v331, 16
        %v3900 = vrot.slane %v3898, 4
        %v3901 = vor.u32 %v3900, %v3896
        %v3902 = vrot.slane %v3901, 4
        %v3904 = vshll.u32 %v332, 16
        %v3906 = vrot.slane %v3904, 5
        %v3907 = vsel %vm3787, %v3902, %v3906
        %v3909 = vshrl.u32 %v333, 16
        %v3911 = vrot.slane %v3909, 4
        %v3912 = vshll.u32 %v333, 16
        %v3914 = vrot.slane %v3912, 5
        %v3915 = vor.u32 %v3911, %v3914
        %v3916 = vrot.slane %v3915, 4
        %v3918 = vshll.u32 %v334, 16
        %v3920 = vrot.slane %v3918, 5
        %v3921 = vsel %vm3787, %v3916, %v3920
        %v3922 = vshrl.u32 %v334, 16
        %v3924 = vrot.slane %v3922, 4
        %v3925 = vor.u32 %v3924, %v3920
        %v3926 = vrot.slane %v3925, 4
        %v3928 = vshll.u32 %v335, 16
        %v3930 = vrot.slane %v3928, 5
        %v3931 = vsel %vm3787, %v3926, %v3930
        %v3933 = vshrl.u32 %v336, 16
        %v3935 = vrot.slane %v3933, 4
        %v3936 = vshll.u32 %v336, 16
        %v3938 = vrot.slane %v3936, 5
        %v3939 = vor.u32 %v3935, %v3938
        %v3940 = vrot.slane %v3939, 4
        %v3942 = vshll.u32 %v337, 16
        %v3944 = vrot.slane %v3942, 5
        %v3945 = vsel %vm3787, %v3940, %v3944
        %v3946 = vshrl.u32 %v337, 16
        %v3948 = vrot.slane %v3946, 4
        %v3949 = vor.u32 %v3948, %v3944
        %v3950 = vrot.slane %v3949, 4
        %v3952 = vshll.u32 %v338, 16
        %v3954 = vrot.slane %v3952, 5
        %v3955 = vsel %vm3787, %v3950, %v3954
        %v3957 = vshrl.u32 %v339, 16
        %v3959 = vrot.slane %v3957, 4
        %v3960 = vshll.u32 %v339, 16
        %v3962 = vrot.slane %v3960, 5
        %v3963 = vor.u32 %v3959, %v3962
        %v3964 = vrot.slane %v3963, 4
        %v3966 = vshll.u32 %v340, 16
        %v3968 = vrot.slane %v3966, 5
        %v3969 = vsel %vm3787, %v3964, %v3968
        %v3970 = vshrl.u32 %v340, 16
        %v3972 = vrot.slane %v3970, 4
        %v3973 = vor.u32 %v3972, %v3968
        %v3974 = vrot.slane %v3973, 4
        %v3976 = vshll.u32 %v341, 16
        %v3978 = vrot.slane %v3976, 5
        %v3979 = vsel %vm3787, %v3974, %v3978
        %v3980 = vld [vmem:[%s5] sm:$0xf]
        %v3981 = vld [vmem:[%s5 + $0x4] sm:$0xf]
        %v3982 = vld [vmem:[%s5 + $0x8] sm:$0xf]
        %v3983 = vld [vmem:[%s5 + $0xc] sm:$0xf]
        %v3984 = vld [vmem:[%s5 + $0x10] sm:$0xf]
        %v3985 = vld [vmem:[%s5 + $0x14] sm:$0xf]
        %v3986 = vld [vmem:[%s5 + $0x18] sm:$0xf]
        %v3987 = vld [vmem:[%s5 + $0x1c] sm:$0xf]
        %v3988 = vld [vmem:[%s5 + $0x20] sm:$0xf]
        %v3989 = vld [vmem:[%s5 + $0x24] sm:$0xf]
        %v3990 = vld [vmem:[%s5 + $0x28] sm:$0xf]
        %v3991 = vld [vmem:[%s5 + $0x2c] sm:$0xf]
        %v3992 = vld [vmem:[%s5 + $0x30] sm:$0xf]
        %v3993 = vld [vmem:[%s5 + $0x34] sm:$0xf]
        %v3994 = vld [vmem:[%s5 + $0x38] sm:$0xf]
        %v3995 = vld [vmem:[%s5 + $0x3c] sm:$0xf]
        %v3996 = vld [vmem:[%s6] sm:$0x1]
        %v3998 = vlaneseq
        %v3999 = vshrl.u32 %v3998, 7
        %v4000 = vsub.s32 0, %v3999
        %v4001 = vrot.slane %v3996, %v4000
        %v4003 = vunpack.c.l.b16 %v3801
        %v4004 = vunpack.c.l.b16 %v3811
        %v4005 = vunpack.c.l.b16 %v3825
        %v4006 = vunpack.c.l.b16 %v3835
        %v4007 = vunpack.c.l.b16 %v3849
        %v4008 = vunpack.c.l.b16 %v3859
        %v4009 = vunpack.c.l.b16 %v3873
        %v4010 = vunpack.c.l.b16 %v3883
        %v4011 = vunpack.c.l.b16 %v3897
        %v4012 = vunpack.c.l.b16 %v3907
        %v4013 = vunpack.c.l.b16 %v3921
        %v4014 = vunpack.c.l.b16 %v3931
        %v4015 = vunpack.c.l.b16 %v3945
        %v4016 = vunpack.c.l.b16 %v3955
        %v4017 = vunpack.c.l.b16 %v3969
        %v4018 = vunpack.c.l.b16 %v3979
        %v4019 = vpack.c.b16 %v4004, %v4003
        %v4020 = vpack.c.b16 %v4006, %v4005
        %v4021 = vpack.c.b16 %v4008, %v4007
        %v4022 = vpack.c.b16 %v4010, %v4009
        %v4023 = vpack.c.b16 %v4012, %v4011
        %v4024 = vpack.c.b16 %v4014, %v4013
        %v4025 = vpack.c.b16 %v4016, %v4015
        %v4026 = vpack.c.b16 %v4018, %v4017
        %v4051 = vunpack.c.l.b16 %v3980
        %v4052 = vunpack.c.l.b16 %v3981
        %v4053 = vunpack.c.l.b16 %v3982
        %v4054 = vunpack.c.l.b16 %v3983
        %v4055 = vunpack.c.l.b16 %v3984
        %v4056 = vunpack.c.l.b16 %v3985
        %v4057 = vunpack.c.l.b16 %v3986
        %v4058 = vunpack.c.l.b16 %v3987
        %v4059 = vunpack.c.l.b16 %v3988
        %v4060 = vunpack.c.l.b16 %v3989
        %v4061 = vunpack.c.l.b16 %v3990
        %v4062 = vunpack.c.l.b16 %v3991
        %v4063 = vunpack.c.l.b16 %v3992
        %v4064 = vunpack.c.l.b16 %v3993
        %v4065 = vunpack.c.l.b16 %v3994
        %v4066 = vunpack.c.l.b16 %v3995
        %v4067 = vpack.c.b16 %v4052, %v4051
        %v4068 = vpack.c.b16 %v4054, %v4053
        %v4069 = vpack.c.b16 %v4056, %v4055
        %v4070 = vpack.c.b16 %v4058, %v4057
        %v4071 = vpack.c.b16 %v4060, %v4059
        %v4072 = vpack.c.b16 %v4062, %v4061
        %v4073 = vpack.c.b16 %v4064, %v4063
        %v4074 = vpack.c.b16 %v4066, %v4065
        %4083 = vmatprep.subr.bf16.mxu0 0
        %4084 = vmatpush1.bf16.msra.mxu0 %v4067
        %4085 = vmatprep.subr.bf16.mxu0 0
        %4086 = vmatpush1.bf16.msra.mxu0 %v4068
        %4087 = vmatprep.subr.bf16.mxu0 0
        %4088 = vmatpush1.bf16.msra.mxu0 %v4069
        %4089 = vmatprep.subr.bf16.mxu0 0
        %4090 = vmatpush1.bf16.msra.mxu0 %v4070
        %4091 = vmatprep.subr.bf16.mxu0 0
        %4092 = vmatpush1.bf16.msra.mxu0 %v4071
        %4093 = vmatprep.subr.bf16.mxu0 0
        %4094 = vmatpush1.bf16.msra.mxu0 %v4072
        %4095 = vmatprep.subr.bf16.mxu0 0
        %4096 = vmatpush1.bf16.msra.mxu0 %v4073
        %4097 = vmatprep.subr.bf16.mxu0 0
        %4098 = vmatpush1.bf16.msra.mxu0 %v4074
        %4099 = vmatprep.subr.bf16.mxu0 0
        %4100 = vmatpush1.bf16.msra.mxu0 0
        %4101 = vmatprep.subr.bf16.mxu0 0
        %4102 = vmatpush1.bf16.msra.mxu0 0
        %4103 = vmatprep.subr.bf16.mxu0 0
        %4104 = vmatpush1.bf16.msra.mxu0 0
        %4105 = vmatprep.subr.bf16.mxu0 0
        %4106 = vmatpush1.bf16.msra.mxu0 0
        %4107 = vmatprep.subr.bf16.mxu0 0
        %4108 = vmatpush1.bf16.msra.mxu0 0
        %4109 = vmatprep.subr.bf16.mxu0 0
        %4110 = vmatpush1.bf16.msra.mxu0 0
        %4111 = vmatprep.subr.bf16.mxu0 0
        %4112 = vmatpush1.bf16.msra.mxu0 0
        %4113 = vmatprep.subr.bf16.mxu0 0
        %4114 = vmatpush1.bf16.msra.mxu0 0
        %4115 = vmatprep.mubr.bf16.mxu0 0
        %4116 = vmatmul.mubr.bf16.gmra.mrb[0].mxu0 %v4019
        %v4117 = vpop.f32.mrb[0].mxu0
        %v4118 = vadd.f32 %v4001, %v4117
        %v4119 = vpop.f32.mrb[0].mxu0
        %v4120 = vpop.f32.mrb[0].mxu0
        %v4121 = vadd.f32 %v4001, %v4120
        %v4122 = vpop.f32.mrb[0].mxu0
        %4123 = vmatprep.mubr.bf16.mxu0 0
        %4124 = vmatmul.mubr.bf16.gmra.mrb[0].mxu0 %v4020
        %v4125 = vpop.f32.mrb[0].mxu0
        %v4126 = vadd.f32 %v4001, %v4125
        %v4127 = vpop.f32.mrb[0].mxu0
        %v4128 = vpop.f32.mrb[0].mxu0
        %v4129 = vadd.f32 %v4001, %v4128
        %v4130 = vpop.f32.mrb[0].mxu0
        %4131 = vmatprep.mubr.bf16.mxu0 0
        %4132 = vmatmul.mubr.bf16.gmra.mrb[0].mxu0 %v4021
        %v4133 = vpop.f32.mrb[0].mxu0
        %v4134 = vadd.f32 %v4001, %v4133
        %v4135 = vpop.f32.mrb[0].mxu0
        %v4136 = vpop.f32.mrb[0].mxu0
        %v4137 = vadd.f32 %v4001, %v4136
        %v4138 = vpop.f32.mrb[0].mxu0
        %4139 = vmatprep.mubr.bf16.mxu0 0
        %4140 = vmatmul.mubr.bf16.gmra.mrb[0].mxu0 %v4022
        %v4141 = vpop.f32.mrb[0].mxu0
        %v4142 = vadd.f32 %v4001, %v4141
        %v4143 = vpop.f32.mrb[0].mxu0
        %v4144 = vpop.f32.mrb[0].mxu0
        %v4145 = vadd.f32 %v4001, %v4144
        %v4146 = vpop.f32.mrb[0].mxu0
        %4147 = vmatprep.mubr.bf16.mxu0 0
        %4148 = vmatmul.mubr.bf16.gmra.mrb[0].mxu0 %v4023
        %v4149 = vpop.f32.mrb[0].mxu0
        %v4150 = vadd.f32 %v4001, %v4149
        %v4151 = vpop.f32.mrb[0].mxu0
        %v4152 = vpop.f32.mrb[0].mxu0
        %v4153 = vadd.f32 %v4001, %v4152
        %v4154 = vpop.f32.mrb[0].mxu0
        %4155 = vmatprep.mubr.bf16.mxu0 0
        %4156 = vmatmul.mubr.bf16.gmra.mrb[0].mxu0 %v4024
        %v4157 = vpop.f32.mrb[0].mxu0
        %v4158 = vadd.f32 %v4001, %v4157
        %v4159 = vpop.f32.mrb[0].mxu0
        %v4160 = vpop.f32.mrb[0].mxu0
        %v4161 = vadd.f32 %v4001, %v4160
        %v4162 = vpop.f32.mrb[0].mxu0
        %4163 = vmatprep.mubr.bf16.mxu0 0
        %4164 = vmatmul.mubr.bf16.gmra.mrb[0].mxu0 %v4025
        %v4165 = vpop.f32.mrb[0].mxu0
        %v4166 = vadd.f32 %v4001, %v4165
        %v4167 = vpop.f32.mrb[0].mxu0
        %v4168 = vpop.f32.mrb[0].mxu0
        %v4169 = vadd.f32 %v4001, %v4168
        %v4170 = vpop.f32.mrb[0].mxu0
        %4171 = vmatprep.mubr.bf16.mxu0 0
        %4172 = vmatmul.mubr.bf16.gmra.mrb[0].mxu0 %v4026
        %v4173 = vpop.f32.mrb[0].mxu0
        %v4174 = vadd.f32 %v4001, %v4173
        %v4175 = vpop.f32.mrb[0].mxu0
        %v4176 = vpop.f32.mrb[0].mxu0
        %v4177 = vadd.f32 %v4001, %v4176
        %v4178 = vpop.f32.mrb[0].mxu0
        %4179 = vdwg.mxu0
        %v4180 = vadd.f32 %v3769, %v4118
        %v4181 = vadd.f32 %v3770, %v4121
        %v4182 = vadd.f32 %v3771, %v4126
        %v4183 = vadd.f32 %v3772, %v4129
        %v4184 = vadd.f32 %v3773, %v4134
        %v4185 = vadd.f32 %v3774, %v4137
        %v4186 = vadd.f32 %v3775, %v4142
        %v4187 = vadd.f32 %v3776, %v4145
        %v4188 = vadd.f32 %v3777, %v4150
        %v4189 = vadd.f32 %v3778, %v4153
        %v4190 = vadd.f32 %v3779, %v4158
        %v4191 = vadd.f32 %v3780, %v4161
        %v4192 = vadd.f32 %v3781, %v4166
        %v4193 = vadd.f32 %v3782, %v4169
        %v4194 = vadd.f32 %v3783, %v4174
        %v4195 = vadd.f32 %v3784, %v4177
        %v4196 = vmax.f32 %v4180, 0.0
        %v4197 = vmax.f32 %v4181, 0.0
        %v4198 = vmax.f32 %v4182, 0.0
        %v4199 = vmax.f32 %v4183, 0.0
        %v4200 = vmax.f32 %v4184, 0.0
        %v4201 = vmax.f32 %v4185, 0.0
        %v4202 = vmax.f32 %v4186, 0.0
        %v4203 = vmax.f32 %v4187, 0.0
        %v4204 = vmax.f32 %v4188, 0.0
        %v4205 = vmax.f32 %v4189, 0.0
        %v4206 = vmax.f32 %v4190, 0.0
        %v4207 = vmax.f32 %v4191, 0.0
        %v4208 = vmax.f32 %v4192, 0.0
        %v4209 = vmax.f32 %v4193, 0.0
        %v4210 = vmax.f32 %v4194, 0.0
        %v4211 = vmax.f32 %v4195, 0.0
        %v4212 = vpack.c.bf16 %v4197, %v4196
        %v4213 = vpack.c.bf16 %v4199, %v4198
        %v4214 = vpack.c.bf16 %v4201, %v4200
        %v4215 = vpack.c.bf16 %v4203, %v4202
        %v4216 = vpack.c.bf16 %v4205, %v4204
        %v4217 = vpack.c.bf16 %v4207, %v4206
        %v4218 = vpack.c.bf16 %v4209, %v4208
        %v4219 = vpack.c.bf16 %v4211, %v4210
        %v4228 = vunpack.c.l.b16 %v4212
        %v4229 = vunpack.c.h.b16 %v4212
        %v4230 = vunpack.c.l.b16 %v4213
        %v4231 = vunpack.c.h.b16 %v4213
        %v4232 = vunpack.c.l.b16 %v4214
        %v4233 = vunpack.c.h.b16 %v4214
        %v4234 = vunpack.c.l.b16 %v4215
        %v4235 = vunpack.c.h.b16 %v4215
        %v4236 = vunpack.c.l.b16 %v4216
        %v4237 = vunpack.c.h.b16 %v4216
        %v4238 = vunpack.c.l.b16 %v4217
        %v4239 = vunpack.c.h.b16 %v4217
        %v4240 = vunpack.c.l.b16 %v4218
        %v4241 = vunpack.c.h.b16 %v4218
        %v4242 = vunpack.c.l.b16 %v4219
        %v4243 = vunpack.c.h.b16 %v4219
        %v4244 = vpack.c.b16 %v4228, %v4228
        %v4245 = vpack.c.b16 %v4229, %v4229
        %v4246 = vpack.c.b16 %v4230, %v4230
        %v4247 = vpack.c.b16 %v4231, %v4231
        %v4248 = vpack.c.b16 %v4232, %v4232
        %v4249 = vpack.c.b16 %v4233, %v4233
        %v4250 = vpack.c.b16 %v4234, %v4234
        %v4251 = vpack.c.b16 %v4235, %v4235
        %v4252 = vpack.c.b16 %v4236, %v4236
        %v4253 = vpack.c.b16 %v4237, %v4237
        %v4254 = vpack.c.b16 %v4238, %v4238
        %v4255 = vpack.c.b16 %v4239, %v4239
        %v4256 = vpack.c.b16 %v4240, %v4240
        %v4257 = vpack.c.b16 %v4241, %v4241
        %v4258 = vpack.c.b16 %v4242, %v4242
        %v4259 = vpack.c.b16 %v4243, %v4243
        %4276 = vst [vmem:[%s300] sm:$0xf] %v4244
        %4277 = vst [vmem:[%s300 + $0x4] sm:$0xf] %v4245
        %4278 = vst [vmem:[%s300 + $0x8] sm:$0xf] %v4246
        %4279 = vst [vmem:[%s300 + $0xc] sm:$0xf] %v4247
        %4280 = vst [vmem:[%s300 + $0x10] sm:$0xf] %v4248
        %4281 = vst [vmem:[%s300 + $0x14] sm:$0xf] %v4249
        %4282 = vst [vmem:[%s300 + $0x18] sm:$0xf] %v4250
        %4283 = vst [vmem:[%s300 + $0x1c] sm:$0xf] %v4251
        %4284 = vst [vmem:[%s300 + $0x20] sm:$0xf] %v4252
        %4285 = vst [vmem:[%s300 + $0x24] sm:$0xf] %v4253
        %4286 = vst [vmem:[%s300 + $0x28] sm:$0xf] %v4254
        %4287 = vst [vmem:[%s300 + $0x2c] sm:$0xf] %v4255
        %4288 = vst [vmem:[%s300 + $0x30] sm:$0xf] %v4256
        %4289 = vst [vmem:[%s300 + $0x34] sm:$0xf] %v4257
        %4290 = vst [vmem:[%s300 + $0x38] sm:$0xf] %v4258
        %4291 = vst [vmem:[%s300 + $0x3c] sm:$0xf] %v4259
        %s4292 = sand.u32 %s196, 1
        %s4293 = scalar_lea.sflag [#allocation5], %s4292
        %s4294 = sand.u32 %s196, 1
        %s4295 = smul.addr %s4294, 64
        %s4296 = scalar_lea.vmem [#allocation6], %s4295
        // Predicated region
        $region61: #{tpu_custom_call.1} parent=47 // pred_check
          %p4297 = pneg %p206
        $region62: #{tpu_custom_call.1} parent=47 // pred_check_branch
          %4299 = sbr.rel (%p4297) target = $region64
        $region63: #{tpu_custom_call.1} parent=47 // pred_region
          %s4300 = smul.u32 8, %s27
          %s4302 = ssub.s32 1024, 1024
          %4303 = vsyncadd %s4293, %s4302
          %s4304 = smul.addr %s4300, 2
          %s4305 = smul.addr %s26, 32
          %s4306 = sadd.s32 %s4304, %s4305
          %s4307 = smul.addr %s4306, 64
          %s4308 = scalar_lea.hbm %s7, %s4307
          %s4309 = sshll.u32 %s4296, 4
          %s4310 = int_to_ptr.vmem [resolvable:$true] %s4309
          %4315 = dma.vmem_to_hbm [thread:$0]  %s4310, 1024, %s4308, %s4293, 64, 64, 4
        $region64: #{tpu_custom_call.1} parent=47 // pred_fallthru
          _
      $region48: #{tpu_custom_call.1} parent=5 // pred_fallthru
        _
      %p4316 = scmp.le.s32.totalorder 2, %s17
      // Predicated region
      $region65: #{tpu_custom_call.1} parent=5 // pred_check
        %p4317 = pneg %p4316
      $region66: #{tpu_custom_call.1} parent=5 // pred_check_branch
        %4319 = sbr.rel (%p4317) target = $region68
      $region67: #{tpu_custom_call.1} parent=5 // pred_region
        %s4320 = ssub.s32 %s17, 2
        // Predicated region
        $region69: #{tpu_custom_call.1} parent=67 // pred_check
          %p4321 = pneg %p212
        $region70: #{tpu_custom_call.1} parent=67 // pred_check_branch
          %4323 = sbr.rel (%p4321) target = $region72
        $region71: #{tpu_custom_call.1} parent=67 // pred_region
          %s4324 = sand.u32 %s197, 1
          %s4325 = scalar_lea.sflag [#allocation5], %s4324
          %s4326 = sand.u32 %s197, 1
          %s4327 = smul.addr %s4326, 64
          %s4328 = scalar_lea.vmem [#allocation6], %s4327
          %4329 = dma.done %s4325, 1024
        $region72: #{tpu_custom_call.1} parent=67 // pred_fallthru
          _
      $region68: #{tpu_custom_call.1} parent=5 // pred_fallthru
        _
    $region6: #{tpu_custom_call.1} parent=1 // loop_footer
      %s21 = sadd.s32 1, %s17
    $region7: #{tpu_custom_call.1} parent=1 // loop_footer_branch
      %16 = sbr.rel target = $region3
    $region8: #{tpu_custom_call.1} parent=1 // loop_exit
      _
    %4330 = vsyncpa [#allocation4], 1
    %s4331 = scalar_lea.sflag [#allocation4], 1
    %4332 = vsyncpa %s4331, 1
    %4333 = vsyncpa [#allocation5], 1
    %s4334 = scalar_lea.sflag [#allocation5], 1
    %4335 = vsyncpa %s4334, 1

// kernel: tpu_custom_call.1
$region0: #{tpu_custom_call.1}
  #allocation0 [shape = 'u32[]', space=smem, size = 0x4, offset = 0x4, fixed_abs, tag = 'smem constant byte address 0x4 - core index']
  #allocation1 [shape = 'u32[144,128]{1,0:T(1,128)}', space=vmem, size = 0x12000, scoped, tag = 'internal scratch']
  #allocation2 [shape = 'bf16[10,48,128]{2,1,0:T(16,128)(2,1)}', space=vmem, size = 0x1e000, scoped, tag = 'scratch operand']
  %s0 = inlined_call_operand.vmem [shape: bf16[2,20,18,128], index: 0, kind: input, shape index: {}]
  %s1 = inlined_call_operand.vmem [shape: bf16[3,384,128], index: 1, kind: input, shape index: {}]
  %s2 = inlined_call_operand.vmem [shape: f32[1,128], index: 2, kind: input, shape index: {}]
  %s3 = inlined_call_operand.hbm [shape: bf16[3,384,128], index: 3, kind: input, shape index: {}]
  %s4 = inlined_call_operand.vmem [shape: f32[1,128], index: 4, kind: input, shape index: {}]
  %s5 = inlined_call_operand.vmem [shape: bf16[128,128], index: 5, kind: input, shape index: {}]
  %s6 = inlined_call_operand.vmem [shape: f32[1,128], index: 6, kind: input, shape index: {}]
  %s7 = inlined_call_operand.hbm [shape: bf16[2,16,16,128], index: 7, kind: output, shape index: {}]
  %s8 = sld [smem:[#allocation0]]
  $region73: #{tpu_custom_call.1} parent=0
    _
  %s10 = ssub.s32 1, %s8
  %s11 = scalar_select 0, %s10, %s8
  $region1: #{tpu_custom_call.1} parent=0
    #allocation3 [shape = 'u8[294912]{0}', space=vmem, size = 0x48000, scoped, tag = 'input window, operand 3, single buffered']
    #allocation4 [shape = 's32[2]{0}', space=sflag, size = 0x8, scoped, tag = 'scoped memory for tpu_custom_call.1']
    #allocation5 [shape = 's32[2]{0}', space=sflag, size = 0x8, scoped, tag = 'scoped memory for tpu_custom_call.1']
    #allocation6 [shape = 'u8[65536]{0}', space=vmem, size = 0x10000, scoped, tag = 'output window, operand 0']
    %12 = vsyncpa [#allocation4], 0
    %13 = vsyncpa [#allocation5], 0
    %s14 = scalar_lea.sflag [#allocation5], 1
    %15 = vsyncpa %s14, 0
    loop: start=0, step=1, limit=6
    $region2: #{tpu_custom_call.1} parent=1 // loop_pre_header
      _
    $region3: #{tpu_custom_call.1} parent=1 // loop_header
      %s17 = sphi 0, %s21
      %p18 = scmp.ge.s32.totalorder %s17, 6
      %s24 = sphi 0, %s36
      %s25 = sphi 0, %s32
      %s26 = sphi 0, %s24
      %s27 = sphi 0, %s25
      %s28 = sphi 0, %s26
      %s29 = sphi 0, %s27
      %s39 = sphi 0, %s41
      %s42 = sphi 0, %s39
      %s43 = sphi 0, %s42
      %s59 = sphi 0, %s43
      %s63 = sphi 0, %s63
      %s65 = sphi 0, %s63
      %s66 = sphi 0, %s65
      %s80 = sphi 0, %s66
      %s84 = sphi 0, %s84
      %s86 = sphi 0, %s84
      %s87 = sphi 0, %s86
      %s101 = sphi 0, %s87
      %s105 = sphi 0, %s105
      %s107 = sphi 0, %s105
      %s108 = sphi 0, %s107
      %s122 = sphi 0, %s108
      %s126 = sphi 0, %s126
      %s128 = sphi 0, %s126
      %s129 = sphi 0, %s128
      %s143 = sphi 0, %s129
      %s147 = sphi 0, %s147
      %s149 = sphi 0, %s147
      %s150 = sphi 0, %s149
      %s164 = sphi 0, %s150
      %s168 = sphi 0, %s168
      %s170 = sphi 0, %s168
      %s171 = sphi 0, %s170
      %s185 = sphi 0, %s171
      %s193 = sphi 0, %s195
      %s196 = sphi 0, %s193
      %s197 = sphi 0, %s196
      %s213 = sphi 0, %s197
    $region4: #{tpu_custom_call.1} parent=1 // loop_header_branch
      %20 = sbr.rel (%p18) target = $region8
    $region5: #{tpu_custom_call.1} parent=1 // loop_body
      %s22 = ssub.s32 %s17, 1
      %s23 = ssub.s32 %s17, 2
      %s30 = sadd.s32 1, %s25
      %p31 = scmp.ge.s32.totalorder %s30, 2
      %s32 = scalar_select %p31, 0, %s30
      %s33 = sadd.s32 1, %s24
      %s34 = scalar_select %p31, %s33, %s24
      %p35 = scmp.ge.s32.totalorder %s34, 2
      %s36 = scalar_select %p35, 0, %s34
      %s37 = ssub.s32 %s24, %s36
      %p38 = scmp.eq.s32.totalorder %s37, 0
      %s40 = sadd.s32 %s39, 1
      %s41 = scalar_select %p38, %s39, %s40
      %p44 = pneg %p38
      %p45 = scmp.eq.s32.totalorder %s17, 3
      %p46 = por %p44, %p45
      %p47 = scmp.ne.s32.totalorder %s39, %s42
      %p48 = scmp.eq.s32.totalorder %s17, 0
      %p49 = por %p47, %p48
      %p50 = scmp.ne.s32.totalorder %s39, %s42
      %p51 = scmp.eq.s32.totalorder %s22, 3
      %p52 = por %p50, %p51
      %p53 = scmp.ne.s32.totalorder %s42, %s43
      %p54 = scmp.eq.s32.totalorder %s22, 0
      %p55 = por %p53, %p54
      %p56 = scmp.ne.s32.totalorder %s42, %s43
      %p57 = scmp.eq.s32.totalorder %s23, 3
      %p58 = por %p56, %p57
      %p60 = scmp.ne.s32.totalorder %s43, %s59
      %p61 = scmp.eq.s32.totalorder %s23, 0
      %p62 = por %p60, %p61
      %s64 = sadd.s32 %s63, 1
      %p67 = scmp.eq.s32.totalorder %s17, 3
      %p68 = scmp.ne.s32.totalorder %s63, %s65
      %p69 = scmp.eq.s32.totalorder %s17, 0
      %p70 = por %p68, %p69
      %p71 = scmp.ne.s32.totalorder %s63, %s65
      %p72 = scmp.eq.s32.totalorder %s22, 3
      %p73 = por %p71, %p72
      %p74 = scmp.ne.s32.totalorder %s65, %s66
      %p75 = scmp.eq.s32.totalorder %s22, 0
      %p76 = por %p74, %p75
      %p77 = scmp.ne.s32.totalorder %s65, %s66
      %p78 = scmp.eq.s32.totalorder %s23, 3
      %p79 = por %p77, %p78
      %p81 = scmp.ne.s32.totalorder %s66, %s80
      %p82 = scmp.eq.s32.totalorder %s23, 0
      %p83 = por %p81, %p82
      %s85 = sadd.s32 %s84, 1
      %p88 = scmp.eq.s32.totalorder %s17, 3
      %p89 = scmp.ne.s32.totalorder %s84, %s86
      %p90 = scmp.eq.s32.totalorder %s17, 0
      %p91 = por %p89, %p90
      %p92 = scmp.ne.s32.totalorder %s84, %s86
      %p93 = scmp.eq.s32.totalorder %s22, 3
      %p94 = por %p92, %p93
      %p95 = scmp.ne.s32.totalorder %s86, %s87
      %p96 = scmp.eq.s32.totalorder %s22, 0
      %p97 = por %p95, %p96
      %p98 = scmp.ne.s32.totalorder %s86, %s87
      %p99 = scmp.eq.s32.totalorder %s23, 3
      %p100 = por %p98, %p99
      %p102 = scmp.ne.s32.totalorder %s87, %s101
      %p103 = scmp.eq.s32.totalorder %s23, 0
      %p104 = por %p102, %p103
      %s106 = sadd.s32 %s105, 1
      %p109 = scmp.eq.s32.totalorder %s17, 3
      %p110 = scmp.ne.s32.totalorder %s105, %s107
      %p111 = scmp.eq.s32.totalorder %s17, 0
      %p112 = por %p110, %p111
      %p113 = scmp.ne.s32.totalorder %s105, %s107
      %p114 = scmp.eq.s32.totalorder %s22, 3
      %p115 = por %p113, %p114
      %p116 = scmp.ne.s32.totalorder %s107, %s108
      %p117 = scmp.eq.s32.totalorder %s22, 0
      %p118 = por %p116, %p117
      %p119 = scmp.ne.s32.totalorder %s107, %s108
      %p120 = scmp.eq.s32.totalorder %s23, 3
      %p121 = por %p119, %p120
      %p123 = scmp.ne.s32.totalorder %s108, %s122
      %p124 = scmp.eq.s32.totalorder %s23, 0
      %p125 = por %p123, %p124
      %s127 = sadd.s32 %s126, 1
      %p130 = scmp.eq.s32.totalorder %s17, 3
      %p131 = scmp.ne.s32.totalorder %s126, %s128
      %p132 = scmp.eq.s32.totalorder %s17, 0
      %p133 = por %p131, %p132
      %p134 = scmp.ne.s32.totalorder %s126, %s128
      %p135 = scmp.eq.s32.totalorder %s22, 3
      %p136 = por %p134, %p135
      %p137 = scmp.ne.s32.totalorder %s128, %s129
      %p138 = scmp.eq.s32.totalorder %s22, 0
      %p139 = por %p137, %p138
      %p140 = scmp.ne.s32.totalorder %s128, %s129
      %p141 = scmp.eq.s32.totalorder %s23, 3
      %p142 = por %p140, %p141
      %p144 = scmp.ne.s32.totalorder %s129, %s143
      %p145 = scmp.eq.s32.totalorder %s23, 0
      %p146 = por %p144, %p145
      %s148 = sadd.s32 %s147, 1
      %p151 = scmp.eq.s32.totalorder %s17, 3
      %p152 = scmp.ne.s32.totalorder %s147, %s149
      %p153 = scmp.eq.s32.totalorder %s17, 0
      %p154 = por %p152, %p153
      %p155 = scmp.ne.s32.totalorder %s147, %s149
      %p156 = scmp.eq.s32.totalorder %s22, 3
      %p157 = por %p155, %p156
      %p158 = scmp.ne.s32.totalorder %s149, %s150
      %p159 = scmp.eq.s32.totalorder %s22, 0
      %p160 = por %p158, %p159
      %p161 = scmp.ne.s32.totalorder %s149, %s150
      %p162 = scmp.eq.s32.totalorder %s23, 3
      %p163 = por %p161, %p162
      %p165 = scmp.ne.s32.totalorder %s150, %s164
      %p166 = scmp.eq.s32.totalorder %s23, 0
      %p167 = por %p165, %p166
      %s169 = sadd.s32 %s168, 1
      %p172 = scmp.eq.s32.totalorder %s17, 3
      %p173 = scmp.ne.s32.totalorder %s168, %s170
      %p174 = scmp.eq.s32.totalorder %s17, 0
      %p175 = por %p173, %p174
      %p176 = scmp.ne.s32.totalorder %s168, %s170
      %p177 = scmp.eq.s32.totalorder %s22, 3
      %p178 = por %p176, %p177
      %p179 = scmp.ne.s32.totalorder %s170, %s171
      %p180 = scmp.eq.s32.totalorder %s22, 0
      %p181 = por %p179, %p180
      %p182 = scmp.ne.s32.totalorder %s170, %s171
      %p183 = scmp.eq.s32.totalorder %s23, 3
      %p184 = por %p182, %p183
      %p186 = scmp.ne.s32.totalorder %s171, %s185
      %p187 = scmp.eq.s32.totalorder %s23, 0
      %p188 = por %p186, %p187
      %s189 = ssub.s32 %s24, %s36
      %s190 = ssub.s32 %s25, %s32
      %s191 = sor.u32 %s189, %s190
      %p192 = scmp.eq.s32.totalorder %s191, 0
      %s194 = sadd.s32 %s193, 1
      %s195 = scalar_select %p192, %s193, %s194
      %p198 = pneg %p192
      %p199 = scmp.eq.s32.totalorder %s17, 3
      %p200 = por %p198, %p199
      %p201 = scmp.ne.s32.totalorder %s193, %s196
      %p202 = scmp.eq.s32.totalorder %s17, 0
      %p203 = por %p201, %p202
      %p204 = scmp.ne.s32.totalorder %s193, %s196
      %p205 = scmp.eq.s32.totalorder %s22, 3
      %p206 = por %p204, %p205
      %p207 = scmp.ne.s32.totalorder %s196, %s197
      %p208 = scmp.eq.s32.totalorder %s22, 0
      %p209 = por %p207, %p208
      %p210 = scmp.ne.s32.totalorder %s196, %s197
      %p211 = scmp.eq.s32.totalorder %s23, 3
      %p212 = por %p210, %p211
      %p214 = scmp.ne.s32.totalorder %s197, %s213
      %p215 = scmp.eq.s32.totalorder %s23, 0
      %p216 = por %p214, %p215
      %p217 = scmp.le.s32.totalorder 1, %s17
      %p218 = scmp.lt.s32.totalorder %s17, 5
      %p219 = pnand %p217, %p218
      %p220 = pneg %p219
      // Predicated region
      $region9: #{tpu_custom_call.1} parent=5 // pred_check
        _
      $region10: #{tpu_custom_call.1} parent=5 // pred_check_branch
        %222 = sbr.rel (%p219) target = $region12
      $region11: #{tpu_custom_call.1} parent=5 // pred_region
        %s223 = ssub.s32 %s17, 1
        // Predicated region
        $region13: #{tpu_custom_call.1} parent=11 // pred_check
          %p224 = pneg %p76
        $region14: #{tpu_custom_call.1} parent=11 // pred_check_branch
          %226 = sbr.rel (%p224) target = $region16
        $region15: #{tpu_custom_call.1} parent=11 // pred_region
          _
        $region16: #{tpu_custom_call.1} parent=11 // pred_fallthru
          _
        // Predicated region
        $region17: #{tpu_custom_call.1} parent=11 // pred_check
          %p227 = pneg %p97
        $region18: #{tpu_custom_call.1} parent=11 // pred_check_branch
          %229 = sbr.rel (%p227) target = $region20
        $region19: #{tpu_custom_call.1} parent=11 // pred_region
          _
        $region20: #{tpu_custom_call.1} parent=11 // pred_fallthru
          _
        // Predicated region
        $region21: #{tpu_custom_call.1} parent=11 // pred_check
          %p230 = pneg %p118
        $region22: #{tpu_custom_call.1} parent=11 // pred_check_branch
          %232 = sbr.rel (%p230) target = $region24
        $region23: #{tpu_custom_call.1} parent=11 // pred_region
          %s234 = ssub.s32 9216, 9216
          %235 = vsyncadd [#allocation4], %s234
          %s236 = sshll.u32 [#allocation3], 4
          %s237 = int_to_ptr.vmem [resolvable:$true] %s236
          %242 = dma.hbm_to_vmem [thread:$0]  %s3, 9216, %s237, [#allocation4], 64, 64, 4
        $region24: #{tpu_custom_call.1} parent=11 // pred_fallthru
          _
        // Predicated region
        $region25: #{tpu_custom_call.1} parent=11 // pred_check
          %p243 = pneg %p139
        $region26: #{tpu_custom_call.1} parent=11 // pred_check_branch
          %245 = sbr.rel (%p243) target = $region28
        $region27: #{tpu_custom_call.1} parent=11 // pred_region
          _
        $region28: #{tpu_custom_call.1} parent=11 // pred_fallthru
          _
        // Predicated region
        $region29: #{tpu_custom_call.1} parent=11 // pred_check
          %p246 = pneg %p160
        $region30: #{tpu_custom_call.1} parent=11 // pred_check_branch
          %248 = sbr.rel (%p246) target = $region32
        $region31: #{tpu_custom_call.1} parent=11 // pred_region
          _
        $region32: #{tpu_custom_call.1} parent=11 // pred_fallthru
          _
        // Predicated region
        $region33: #{tpu_custom_call.1} parent=11 // pred_check
          %p249 = pneg %p181
        $region34: #{tpu_custom_call.1} parent=11 // pred_check_branch
          %251 = sbr.rel (%p249) target = $region36
        $region35: #{tpu_custom_call.1} parent=11 // pred_region
          _
        $region36: #{tpu_custom_call.1} parent=11 // pred_fallthru
          _
      $region12: #{tpu_custom_call.1} parent=5 // pred_fallthru
        _
      %p252 = scmp.lt.s32.totalorder %s17, 4
      // Predicated region
      $region37: #{tpu_custom_call.1} parent=5 // pred_check
        %p253 = pneg %p252
      $region38: #{tpu_custom_call.1} parent=5 // pred_check_branch
        %255 = sbr.rel (%p253) target = $region40
      $region39: #{tpu_custom_call.1} parent=5 // pred_region
        // Predicated region
        $region41: #{tpu_custom_call.1} parent=39 // pred_check
          %p256 = pneg %p49
        $region42: #{tpu_custom_call.1} parent=39 // pred_check_branch
          %258 = sbr.rel (%p256) target = $region44
        $region43: #{tpu_custom_call.1} parent=39 // pred_region
          %p259 = scmp.lt.s32.totalorder %s24, 1
          %s260 = scalar_select %p259, %s24, 1
          %s261 = smul.addr %s260, 60
          %s262 = smul.addr %s261, 4
          %s263 = scalar_lea.vmem %s0, %s262
        $region44: #{tpu_custom_call.1} parent=39 // pred_fallthru
          _
      $region40: #{tpu_custom_call.1} parent=5 // pred_fallthru
        _
      %p264 = scmp.le.s32.totalorder 1, %s17
      %p265 = scmp.lt.s32.totalorder %s17, 5
      %p266 = pnand %p264, %p265
      %p267 = pneg %p266
      // Predicated region
      $region45: #{tpu_custom_call.1} parent=5 // pred_check
        _
      $region46: #{tpu_custom_call.1} parent=5 // pred_check_branch
        %269 = sbr.rel (%p266) target = $region48
      $region47: #{tpu_custom_call.1} parent=5 // pred_region
        %s270 = ssub.s32 %s17, 1
        // Predicated region
        $region49: #{tpu_custom_call.1} parent=47 // pred_check
          %p271 = pneg %p118
        $region50: #{tpu_custom_call.1} parent=47 // pred_check_branch
          %273 = sbr.rel (%p271) target = $region52
        $region51: #{tpu_custom_call.1} parent=47 // pred_region
          %274 = dma.done [#allocation4], 9216
        $region52: #{tpu_custom_call.1} parent=47 // pred_fallthru
          _
        %p275 = scmp.lt.s32.totalorder %s26, 1
        %s276 = scalar_select %p275, %s26, 1
        %s277 = smul.addr %s276, 60
        %s278 = smul.addr %s277, 4
        %s279 = scalar_lea.vmem %s0, %s278
        %p280 = pneg %p55
        %p281 = pneg %p52
        %p282 = pneg %p76
        %p283 = pneg %p73
        %p284 = pneg %p97
        %p285 = pneg %p94
        %p286 = pneg %p118
        %p287 = pneg %p115
        %p288 = pneg %p139
        %p289 = pneg %p136
        %p290 = pneg %p160
        %p291 = pneg %p157
        %p292 = pneg %p181
        %p293 = pneg %p178
        %p294 = pneg %p209
        %p295 = pneg %p206
        %s296 = sand.u32 %s196, 1
        %s297 = scalar_lea.sflag [#allocation5], %s296
        %s298 = sand.u32 %s196, 1
        %s299 = smul.addr %s298, 64
        %s300 = scalar_lea.vmem [#allocation6], %s299
        %p301 = scmp.lt.s32.totalorder %s26, 1
        %s302 = scalar_select %p301, %s26, 1
        %s303 = smul.addr %s302, 60
        %s304 = smul.addr %s303, 4
        %s305 = scalar_lea.vmem %s0, %s304
        %s306 = smul.u32 8, %s27
        %s308 = smul.u32 %s27, 8
        %s309 = smul.u32 %s308, 3
        %s310 = smul.addr %s309, 4
        %s311 = scalar_lea.vmem %s305, %s310
        %v312 = vld [vmem:[%s311] sm:$0xf]
        %v313 = vld [vmem:[%s311 + $0x4] sm:$0xf]
        %v314 = vld [vmem:[%s311 + $0x8] sm:$0x1]
        %v315 = vld [vmem:[%s311 + $0xc] sm:$0xf]
        %v316 = vld [vmem:[%s311 + $0x10] sm:$0xf]
        %v317 = vld [vmem:[%s311 + $0x14] sm:$0x1]
        %v318 = vld [vmem:[%s311 + $0x18] sm:$0xf]
        %v319 = vld [vmem:[%s311 + $0x1c] sm:$0xf]
        %v320 = vld [vmem:[%s311 + $0x20] sm:$0x1]
        %v321 = vld [vmem:[%s311 + $0x24] sm:$0xf]
        %v322 = vld [vmem:[%s311 + $0x28] sm:$0xf]
        %v323 = vld [vmem:[%s311 + $0x2c] sm:$0x1]
        %v324 = vld [vmem:[%s311 + $0x30] sm:$0xf]
        %v325 = vld [vmem:[%s311 + $0x34] sm:$0xf]
        %v326 = vld [vmem:[%s311 + $0x38] sm:$0x1]
        %v327 = vld [vmem:[%s311 + $0x3c] sm:$0xf]
        %v328 = vld [vmem:[%s311 + $0x40] sm:$0xf]
        %v329 = vld [vmem:[%s311 + $0x44] sm:$0x1]
        %v330 = vld [vmem:[%s311 + $0x48] sm:$0xf]
        %v331 = vld [vmem:[%s311 + $0x4c] sm:$0xf]
        %v332 = vld [vmem:[%s311 + $0x50] sm:$0x1]
        %v333 = vld [vmem:[%s311 + $0x54] sm:$0xf]
        %v334 = vld [vmem:[%s311 + $0x58] sm:$0xf]
        %v335 = vld [vmem:[%s311 + $0x5c] sm:$0x1]
        %v336 = vld [vmem:[%s311 + $0x60] sm:$0xf]
        %v337 = vld [vmem:[%s311 + $0x64] sm:$0xf]
        %v338 = vld [vmem:[%s311 + $0x68] sm:$0x1]
        %v339 = vld [vmem:[%s311 + $0x6c] sm:$0xf]
        %v340 = vld [vmem:[%s311 + $0x70] sm:$0xf]
        %v341 = vld [vmem:[%s311 + $0x74] sm:$0x1]
        %v342 = vld [vmem:[%s311 + $0x78] sm:$0xf]
        %v343 = vld [vmem:[%s311 + $0x7c] sm:$0xf]
        %v344 = vld [vmem:[%s311 + $0x80] sm:$0x1]
        %v345 = vld [vmem:[%s311 + $0x84] sm:$0xf]
        %v346 = vld [vmem:[%s311 + $0x88] sm:$0xf]
        %v347 = vld [vmem:[%s311 + $0x8c] sm:$0x1]
        %v372 = vunpack.c.l.b16 %v312
        %v373 = vunpack.c.l.b16 %v313
        %v374 = vunpack.c.l.b16 %v315
        %v375 = vunpack.c.l.b16 %v316
        %v376 = vunpack.c.l.b16 %v318
        %v377 = vunpack.c.l.b16 %v319
        %v378 = vunpack.c.l.b16 %v321
        %v379 = vunpack.c.l.b16 %v322
        %v380 = vunpack.c.l.b16 %v324
        %v381 = vunpack.c.l.b16 %v325
        %v382 = vunpack.c.l.b16 %v327
        %v383 = vunpack.c.l.b16 %v328
        %v384 = vunpack.c.l.b16 %v330
        %v385 = vunpack.c.l.b16 %v331
        %v386 = vunpack.c.l.b16 %v333
        %v387 = vunpack.c.l.b16 %v334
        %v388 = vunpack.c.l.b16 %v336
        %v389 = vunpack.c.l.b16 %v337
        %v390 = vunpack.c.l.b16 %v339
        %v391 = vunpack.c.l.b16 %v340
        %v392 = vunpack.c.l.b16 %v342
        %v393 = vunpack.c.l.b16 %v343
        %v394 = vunpack.c.l.b16 %v345
        %v395 = vunpack.c.l.b16 %v346
        %v396 = vpack.c.b16 %v373, %v372
        %v397 = vpack.c.b16 %v375, %v374
        %v398 = vpack.c.b16 %v377, %v376
        %v399 = vpack.c.b16 %v379, %v378
        %v400 = vpack.c.b16 %v381, %v380
        %v401 = vpack.c.b16 %v383, %v382
        %v402 = vpack.c.b16 %v385, %v384
        %v403 = vpack.c.b16 %v387, %v386
        %v404 = vpack.c.b16 %v389, %v388
        %v405 = vpack.c.b16 %v391, %v390
        %v406 = vpack.c.b16 %v393, %v392
        %v407 = vpack.c.b16 %v395, %v394
        %v432 = vunpack.c.l.b16 %v314
        %v433 = vunpack.c.l.b16 %v317
        %v434 = vunpack.c.l.b16 %v320
        %v435 = vunpack.c.l.b16 %v323
        %v436 = vunpack.c.l.b16 %v326
        %v437 = vunpack.c.l.b16 %v329
        %v438 = vunpack.c.l.b16 %v332
        %v439 = vunpack.c.l.b16 %v335
        %v440 = vunpack.c.l.b16 %v338
        %v441 = vunpack.c.l.b16 %v341
        %v442 = vunpack.c.l.b16 %v344
        %v443 = vunpack.c.l.b16 %v347
        %v444 = vpack.c.b16 %v432, %v432
        %v445 = vpack.c.b16 %v433, %v433
        %v446 = vpack.c.b16 %v434, %v434
        %v447 = vpack.c.b16 %v435, %v435
        %v448 = vpack.c.b16 %v436, %v436
        %v449 = vpack.c.b16 %v437, %v437
        %v450 = vpack.c.b16 %v438, %v438
        %v451 = vpack.c.b16 %v439, %v439
        %v452 = vpack.c.b16 %v440, %v440
        %v453 = vpack.c.b16 %v441, %v441
        %v454 = vpack.c.b16 %v442, %v442
        %v455 = vpack.c.b16 %v443, %v443
        %vm456 = vsmask.f32 7424
        %v458 = vshrl.u32 %v396, 16
        %v460 = vshll.u32 %v396, 16
        %v462 = vrot.slane %v460, 1
        %v463 = vor.u32 %v458, %v462
        %v465 = vshll.u32 %v444, 16
        %v467 = vrot.slane %v465, 1
        %v468 = vsel %vm456, %v463, %v467
        %v470 = vshrl.u32 %v397, 16
        %v472 = vshll.u32 %v397, 16
        %v474 = vrot.slane %v472, 1
        %v475 = vor.u32 %v470, %v474
        %v477 = vshll.u32 %v445, 16
        %v479 = vrot.slane %v477, 1
        %v480 = vsel %vm456, %v475, %v479
        %v482 = vshrl.u32 %v398, 16
        %v484 = vshll.u32 %v398, 16
        %v486 = vrot.slane %v484, 1
        %v487 = vor.u32 %v482, %v486
        %v489 = vshll.u32 %v446, 16
        %v491 = vrot.slane %v489, 1
        %v492 = vsel %vm456, %v487, %v491
        %v494 = vshrl.u32 %v399, 16
        %v496 = vshll.u32 %v399, 16
        %v498 = vrot.slane %v496, 1
        %v499 = vor.u32 %v494, %v498
        %v501 = vshll.u32 %v447, 16
        %v503 = vrot.slane %v501, 1
        %v504 = vsel %vm456, %v499, %v503
        %v506 = vshrl.u32 %v400, 16
        %v508 = vshll.u32 %v400, 16
        %v510 = vrot.slane %v508, 1
        %v511 = vor.u32 %v506, %v510
        %v513 = vshll.u32 %v448, 16
        %v515 = vrot.slane %v513, 1
        %v516 = vsel %vm456, %v511, %v515
        %v518 = vshrl.u32 %v401, 16
        %v520 = vshll.u32 %v401, 16
        %v522 = vrot.slane %v520, 1
        %v523 = vor.u32 %v518, %v522
        %v525 = vshll.u32 %v449, 16
        %v527 = vrot.slane %v525, 1
        %v528 = vsel %vm456, %v523, %v527
        %v530 = vshrl.u32 %v402, 16
        %v532 = vshll.u32 %v402, 16
        %v534 = vrot.slane %v532, 1
        %v535 = vor.u32 %v530, %v534
        %v537 = vshll.u32 %v450, 16
        %v539 = vrot.slane %v537, 1
        %v540 = vsel %vm456, %v535, %v539
        %v542 = vshrl.u32 %v403, 16
        %v544 = vshll.u32 %v403, 16
        %v546 = vrot.slane %v544, 1
        %v547 = vor.u32 %v542, %v546
        %v549 = vshll.u32 %v451, 16
        %v551 = vrot.slane %v549, 1
        %v552 = vsel %vm456, %v547, %v551
        %v554 = vshrl.u32 %v404, 16
        %v556 = vshll.u32 %v404, 16
        %v558 = vrot.slane %v556, 1
        %v559 = vor.u32 %v554, %v558
        %v561 = vshll.u32 %v452, 16
        %v563 = vrot.slane %v561, 1
        %v564 = vsel %vm456, %v559, %v563
        %v566 = vshrl.u32 %v405, 16
        %v568 = vshll.u32 %v405, 16
        %v570 = vrot.slane %v568, 1
        %v571 = vor.u32 %v566, %v570
        %v573 = vshll.u32 %v453, 16
        %v575 = vrot.slane %v573, 1
        %v576 = vsel %vm456, %v571, %v575
        %v578 = vshrl.u32 %v406, 16
        %v580 = vshll.u32 %v406, 16
        %v582 = vrot.slane %v580, 1
        %v583 = vor.u32 %v578, %v582
        %v585 = vshll.u32 %v454, 16
        %v587 = vrot.slane %v585, 1
        %v588 = vsel %vm456, %v583, %v587
        %v590 = vshrl.u32 %v407, 16
        %v592 = vshll.u32 %v407, 16
        %v594 = vrot.slane %v592, 1
        %v595 = vor.u32 %v590, %v594
        %v597 = vshll.u32 %v455, 16
        %v599 = vrot.slane %v597, 1
        %v600 = vsel %vm456, %v595, %v599
        %vm613 = vcmask 1046528
        %v614 = vrot.slane %v396, 1
        %v615 = vrot.slane %v444, 1
        %v616 = vsel %vm613, %v614, %v615
        %v617 = vrot.slane %v397, 1
        %v618 = vrot.slane %v445, 1
        %v619 = vsel %vm613, %v617, %v618
        %v620 = vrot.slane %v398, 1
        %v621 = vrot.slane %v446, 1
        %v622 = vsel %vm613, %v620, %v621
        %v623 = vrot.slane %v399, 1
        %v624 = vrot.slane %v447, 1
        %v625 = vsel %vm613, %v623, %v624
        %v626 = vrot.slane %v400, 1
        %v627 = vrot.slane %v448, 1
        %v628 = vsel %vm613, %v626, %v627
        %v629 = vrot.slane %v401, 1
        %v630 = vrot.slane %v449, 1
        %v631 = vsel %vm613, %v629, %v630
        %v632 = vrot.slane %v402, 1
        %v633 = vrot.slane %v450, 1
        %v634 = vsel %vm613, %v632, %v633
        %v635 = vrot.slane %v403, 1
        %v636 = vrot.slane %v451, 1
        %v637 = vsel %vm613, %v635, %v636
        %v638 = vrot.slane %v404, 1
        %v639 = vrot.slane %v452, 1
        %v640 = vsel %vm613, %v638, %v639
        %v641 = vrot.slane %v405, 1
        %v642 = vrot.slane %v453, 1
        %v643 = vsel %vm613, %v641, %v642
        %v644 = vrot.slane %v406, 1
        %v645 = vrot.slane %v454, 1
        %v646 = vsel %vm613, %v644, %v645
        %v647 = vrot.slane %v407, 1
        %v648 = vrot.slane %v455, 1
        %v649 = vsel %vm613, %v647, %v648
        %v662 = vld [vmem:[%s1] sm:$0xf]
        %v663 = vld [vmem:[%s1 + $0x4] sm:$0xf]
        %v664 = vld [vmem:[%s1 + $0x8] sm:$0xf]
        %v665 = vld [vmem:[%s1 + $0xc] sm:$0xf]
        %v666 = vld [vmem:[%s1 + $0x10] sm:$0xf]
        %v667 = vld [vmem:[%s1 + $0x14] sm:$0xf]
        %v668 = vld [vmem:[%s1 + $0x18] sm:$0xf]
        %v669 = vld [vmem:[%s1 + $0x1c] sm:$0xf]
        %v670 = vld [vmem:[%s1 + $0x20] sm:$0xf]
        %v671 = vld [vmem:[%s1 + $0x24] sm:$0xf]
        %v672 = vld [vmem:[%s1 + $0x28] sm:$0xf]
        %v673 = vld [vmem:[%s1 + $0x2c] sm:$0xf]
        %v674 = vld [vmem:[%s1 + $0x30] sm:$0xf]
        %v675 = vld [vmem:[%s1 + $0x34] sm:$0xf]
        %v676 = vld [vmem:[%s1 + $0x38] sm:$0xf]
        %v677 = vld [vmem:[%s1 + $0x3c] sm:$0xf]
        %v678 = vld [vmem:[%s1 + $0x40] sm:$0xf]
        %v679 = vld [vmem:[%s1 + $0x44] sm:$0xf]
        %v680 = vld [vmem:[%s1 + $0x48] sm:$0xf]
        %v681 = vld [vmem:[%s1 + $0x4c] sm:$0xf]
        %v682 = vld [vmem:[%s1 + $0x50] sm:$0xf]
        %v683 = vld [vmem:[%s1 + $0x54] sm:$0xf]
        %v684 = vld [vmem:[%s1 + $0x58] sm:$0xf]
        %v685 = vld [vmem:[%s1 + $0x5c] sm:$0xf]
        %v686 = vld [vmem:[%s1 + $0x60] sm:$0xf]
        %v687 = vld [vmem:[%s1 + $0x64] sm:$0xf]
        %v688 = vld [vmem:[%s1 + $0x68] sm:$0xf]
        %v689 = vld [vmem:[%s1 + $0x6c] sm:$0xf]
        %v690 = vld [vmem:[%s1 + $0x70] sm:$0xf]
        %v691 = vld [vmem:[%s1 + $0x74] sm:$0xf]
        %v692 = vld [vmem:[%s1 + $0x78] sm:$0xf]
        %v693 = vld [vmem:[%s1 + $0x7c] sm:$0xf]
        %v694 = vld [vmem:[%s1 + $0x80] sm:$0xf]
        %v695 = vld [vmem:[%s1 + $0x84] sm:$0xf]
        %v696 = vld [vmem:[%s1 + $0x88] sm:$0xf]
        %v697 = vld [vmem:[%s1 + $0x8c] sm:$0xf]
        %v698 = vld [vmem:[%s1 + $0x90] sm:$0xf]
        %v699 = vld [vmem:[%s1 + $0x94] sm:$0xf]
        %v700 = vld [vmem:[%s1 + $0x98] sm:$0xf]
        %v701 = vld [vmem:[%s1 + $0x9c] sm:$0xf]
        %v702 = vld [vmem:[%s1 + $0xa0] sm:$0xf]
        %v703 = vld [vmem:[%s1 + $0xa4] sm:$0xf]
        %v704 = vld [vmem:[%s1 + $0xa8] sm:$0xf]
        %v705 = vld [vmem:[%s1 + $0xac] sm:$0xf]
        %v706 = vld [vmem:[%s1 + $0xb0] sm:$0xf]
        %v707 = vld [vmem:[%s1 + $0xb4] sm:$0xf]
        %v708 = vld [vmem:[%s1 + $0xb8] sm:$0xf]
        %v709 = vld [vmem:[%s1 + $0xbc] sm:$0xf]
        %s710 = scalar_lea.vmem %s1, 192
        %v711 = vld [vmem:[%s710] sm:$0xf]
        %v712 = vld [vmem:[%s710 + $0x4] sm:$0xf]
        %v713 = vld [vmem:[%s710 + $0x8] sm:$0xf]
        %v714 = vld [vmem:[%s710 + $0xc] sm:$0xf]
        %v715 = vld [vmem:[%s710 + $0x10] sm:$0xf]
        %v716 = vld [vmem:[%s710 + $0x14] sm:$0xf]
        %v717 = vld [vmem:[%s710 + $0x18] sm:$0xf]
        %v718 = vld [vmem:[%s710 + $0x1c] sm:$0xf]
        %v719 = vld [vmem:[%s710 + $0x20] sm:$0xf]
        %v720 = vld [vmem:[%s710 + $0x24] sm:$0xf]
        %v721 = vld [vmem:[%s710 + $0x28] sm:$0xf]
        %v722 = vld [vmem:[%s710 + $0x2c] sm:$0xf]
        %v723 = vld [vmem:[%s710 + $0x30] sm:$0xf]
        %v724 = vld [vmem:[%s710 + $0x34] sm:$0xf]
        %v725 = vld [vmem:[%s710 + $0x38] sm:$0xf]
        %v726 = vld [vmem:[%s710 + $0x3c] sm:$0xf]
        %v727 = vld [vmem:[%s710 + $0x40] sm:$0xf]
        %v728 = vld [vmem:[%s710 + $0x44] sm:$0xf]
        %v729 = vld [vmem:[%s710 + $0x48] sm:$0xf]
        %v730 = vld [vmem:[%s710 + $0x4c] sm:$0xf]
        %v731 = vld [vmem:[%s710 + $0x50] sm:$0xf]
        %v732 = vld [vmem:[%s710 + $0x54] sm:$0xf]
        %v733 = vld [vmem:[%s710 + $0x58] sm:$0xf]
        %v734 = vld [vmem:[%s710 + $0x5c] sm:$0xf]
        %v735 = vld [vmem:[%s710 + $0x60] sm:$0xf]
        %v736 = vld [vmem:[%s710 + $0x64] sm:$0xf]
        %v737 = vld [vmem:[%s710 + $0x68] sm:$0xf]
        %v738 = vld [vmem:[%s710 + $0x6c] sm:$0xf]
        %v739 = vld [vmem:[%s710 + $0x70] sm:$0xf]
        %v740 = vld [vmem:[%s710 + $0x74] sm:$0xf]
        %v741 = vld [vmem:[%s710 + $0x78] sm:$0xf]
        %v742 = vld [vmem:[%s710 + $0x7c] sm:$0xf]
        %v743 = vld [vmem:[%s710 + $0x80] sm:$0xf]
        %v744 = vld [vmem:[%s710 + $0x84] sm:$0xf]
        %v745 = vld [vmem:[%s710 + $0x88] sm:$0xf]
        %v746 = vld [vmem:[%s710 + $0x8c] sm:$0xf]
        %v747 = vld [vmem:[%s710 + $0x90] sm:$0xf]
        %v748 = vld [vmem:[%s710 + $0x94] sm:$0xf]
        %v749 = vld [vmem:[%s710 + $0x98] sm:$0xf]
        %v750 = vld [vmem:[%s710 + $0x9c] sm:$0xf]
        %v751 = vld [vmem:[%s710 + $0xa0] sm:$0xf]
        %v752 = vld [vmem:[%s710 + $0xa4] sm:$0xf]
        %v753 = vld [vmem:[%s710 + $0xa8] sm:$0xf]
        %v754 = vld [vmem:[%s710 + $0xac] sm:$0xf]
        %v755 = vld [vmem:[%s710 + $0xb0] sm:$0xf]
        %v756 = vld [vmem:[%s710 + $0xb4] sm:$0xf]
        %v757 = vld [vmem:[%s710 + $0xb8] sm:$0xf]
        %v758 = vld [vmem:[%s710 + $0xbc] sm:$0xf]
        %v807 = vunpack.c.l.b16 %v711
        %v808 = vunpack.c.l.b16 %v712
        %v809 = vunpack.c.l.b16 %v713
        %v810 = vunpack.c.l.b16 %v714
        %v811 = vunpack.c.l.b16 %v715
        %v812 = vunpack.c.l.b16 %v716
        %v813 = vunpack.c.l.b16 %v717
        %v814 = vunpack.c.l.b16 %v718
        %v815 = vunpack.c.l.b16 %v719
        %v816 = vunpack.c.l.b16 %v720
        %v817 = vunpack.c.l.b16 %v721
        %v818 = vunpack.c.l.b16 %v722
        %v819 = vunpack.c.l.b16 %v723
        %v820 = vunpack.c.l.b16 %v724
        %v821 = vunpack.c.l.b16 %v725
        %v822 = vunpack.c.l.b16 %v726
        %v823 = vunpack.c.l.b16 %v727
        %v824 = vunpack.c.l.b16 %v728
        %v825 = vunpack.c.l.b16 %v729
        %v826 = vunpack.c.l.b16 %v730
        %v827 = vunpack.c.l.b16 %v731
        %v828 = vunpack.c.l.b16 %v732
        %v829 = vunpack.c.l.b16 %v733
        %v830 = vunpack.c.l.b16 %v734
        %v831 = vunpack.c.l.b16 %v735
        %v832 = vunpack.c.l.b16 %v736
        %v833 = vunpack.c.l.b16 %v737
        %v834 = vunpack.c.l.b16 %v738
        %v835 = vunpack.c.l.b16 %v739
        %v836 = vunpack.c.l.b16 %v740
        %v837 = vunpack.c.l.b16 %v741
        %v838 = vunpack.c.l.b16 %v742
        %v839 = vunpack.c.l.b16 %v743
        %v840 = vunpack.c.l.b16 %v744
        %v841 = vunpack.c.l.b16 %v745
        %v842 = vunpack.c.l.b16 %v746
        %v843 = vunpack.c.l.b16 %v747
        %v844 = vunpack.c.l.b16 %v748
        %v845 = vunpack.c.l.b16 %v749
        %v846 = vunpack.c.l.b16 %v750
        %v847 = vunpack.c.l.b16 %v751
        %v848 = vunpack.c.l.b16 %v752
        %v849 = vunpack.c.l.b16 %v753
        %v850 = vunpack.c.l.b16 %v754
        %v851 = vunpack.c.l.b16 %v755
        %v852 = vunpack.c.l.b16 %v756
        %v853 = vunpack.c.l.b16 %v757
        %v854 = vunpack.c.l.b16 %v758
        %v855 = vpack.c.b16 %v808, %v807
        %v856 = vpack.c.b16 %v810, %v809
        %v857 = vpack.c.b16 %v812, %v811
        %v858 = vpack.c.b16 %v814, %v813
        %v859 = vpack.c.b16 %v816, %v815
        %v860 = vpack.c.b16 %v818, %v817
        %v861 = vpack.c.b16 %v820, %v819
        %v862 = vpack.c.b16 %v822, %v821
        %v863 = vpack.c.b16 %v824, %v823
        %v864 = vpack.c.b16 %v826, %v825
        %v865 = vpack.c.b16 %v828, %v827
        %v866 = vpack.c.b16 %v830, %v829
        %v867 = vpack.c.b16 %v832, %v831
        %v868 = vpack.c.b16 %v834, %v833
        %v869 = vpack.c.b16 %v836, %v835
        %v870 = vpack.c.b16 %v838, %v837
        %v871 = vpack.c.b16 %v840, %v839
        %v872 = vpack.c.b16 %v842, %v841
        %v873 = vpack.c.b16 %v844, %v843
        %v874 = vpack.c.b16 %v846, %v845
        %v875 = vpack.c.b16 %v848, %v847
        %v876 = vpack.c.b16 %v850, %v849
        %v877 = vpack.c.b16 %v852, %v851
        %v878 = vpack.c.b16 %v854, %v853
        %903 = vmatprep.subr.bf16.mxu0 0
        %904 = vmatpush1.bf16.msra.mxu0 %v855
        %905 = vmatprep.subr.bf16.mxu0 0
        %906 = vmatpush1.bf16.msra.mxu0 %v856
        %907 = vmatprep.subr.bf16.mxu0 0
        %908 = vmatpush1.bf16.msra.mxu0 %v857
        %909 = vmatprep.subr.bf16.mxu0 0
        %910 = vmatpush1.bf16.msra.mxu0 %v858
        %911 = vmatprep.subr.bf16.mxu0 0
        %912 = vmatpush1.bf16.msra.mxu0 %v859
        %913 = vmatprep.subr.bf16.mxu0 0
        %914 = vmatpush1.bf16.msra.mxu0 %v860
        %915 = vmatprep.subr.bf16.mxu0 0
        %916 = vmatpush1.bf16.msra.mxu0 %v861
        %917 = vmatprep.subr.bf16.mxu0 0
        %918 = vmatpush1.bf16.msra.mxu0 %v862
        %919 = vmatprep.subr.bf16.mxu0 0
        %920 = vmatpush1.bf16.msra.mxu0 %v863
        %921 = vmatprep.subr.bf16.mxu0 0
        %922 = vmatpush1.bf16.msra.mxu0 %v864
        %923 = vmatprep.subr.bf16.mxu0 0
        %924 = vmatpush1.bf16.msra.mxu0 %v865
        %925 = vmatprep.subr.bf16.mxu0 0
        %926 = vmatpush1.bf16.msra.mxu0 %v866
        %927 = vmatprep.subr.bf16.mxu0 0
        %928 = vmatpush1.bf16.msra.mxu0 %v867
        %929 = vmatprep.subr.bf16.mxu0 0
        %930 = vmatpush1.bf16.msra.mxu0 %v868
        %931 = vmatprep.subr.bf16.mxu0 0
        %932 = vmatpush1.bf16.msra.mxu0 %v869
        %933 = vmatprep.subr.bf16.mxu0 0
        %934 = vmatpush1.bf16.msra.mxu0 %v870
        %935 = vmatprep.mubr.bf16.mxu0 %v480
        %936 = vmatmul.mubr.bf16.gmra.mrb[0].mxu0 %v397
        %v937 = vpop.f32.mrb[0].mxu0
        %v938 = vadd.f32 0.0, %v937
        %v939 = vpop.f32.mrb[0].mxu0
        %v940 = vpop.f32.mrb[0].mxu0
        %v941 = vadd.f32 0.0, %v940
        %v942 = vpop.f32.mrb[0].mxu0
        %943 = vmatprep.mubr.bf16.mxu0 %v492
        %944 = vmatmul.mubr.bf16.gmra.mrb[0].mxu0 %v398
        %v945 = vpop.f32.mrb[0].mxu0
        %v946 = vadd.f32 0.0, %v945
        %v947 = vpop.f32.mrb[0].mxu0
        %v948 = vpop.f32.mrb[0].mxu0
        %v949 = vadd.f32 0.0, %v948
        %v950 = vpop.f32.mrb[0].mxu0
        %951 = vmatprep.mubr.bf16.mxu0 %v504
        %952 = vmatmul.mubr.bf16.gmra.mrb[0].mxu0 %v399
        %v953 = vpop.f32.mrb[0].mxu0
        %v954 = vadd.f32 0.0, %v953
        %v955 = vpop.f32.mrb[0].mxu0
        %v956 = vpop.f32.mrb[0].mxu0
        %v957 = vadd.f32 0.0, %v956
        %v958 = vpop.f32.mrb[0].mxu0
        %959 = vmatprep.mubr.bf16.mxu0 %v516
        %960 = vmatmul.mubr.bf16.gmra.mrb[0].mxu0 %v400
        %v961 = vpop.f32.mrb[0].mxu0
        %v962 = vadd.f32 0.0, %v961
        %v963 = vpop.f32.mrb[0].mxu0
        %v964 = vpop.f32.mrb[0].mxu0
        %v965 = vadd.f32 0.0, %v964
        %v966 = vpop.f32.mrb[0].mxu0
        %967 = vmatprep.mubr.bf16.mxu0 %v528
        %968 = vmatmul.mubr.bf16.gmra.mrb[0].mxu0 %v401
        %v969 = vpop.f32.mrb[0].mxu0
        %v970 = vadd.f32 0.0, %v969
        %v971 = vpop.f32.mrb[0].mxu0
        %v972 = vpop.f32.mrb[0].mxu0
        %v973 = vadd.f32 0.0, %v972
        %v974 = vpop.f32.mrb[0].mxu0
        %975 = vmatprep.mubr.bf16.mxu0 %v540
        %976 = vmatmul.mubr.bf16.gmra.mrb[0].mxu0 %v402
        %v977 = vpop.f32.mrb[0].mxu0
        %v978 = vadd.f32 0.0, %v977
        %v979 = vpop.f32.mrb[0].mxu0
        %v980 = vpop.f32.mrb[0].mxu0
        %v981 = vadd.f32 0.0, %v980
        %v982 = vpop.f32.mrb[0].mxu0
        %983 = vmatprep.mubr.bf16.mxu0 %v552
        %984 = vmatmul.mubr.bf16.gmra.mrb[0].mxu0 %v403
        %v985 = vpop.f32.mrb[0].mxu0
        %v986 = vadd.f32 0.0, %v985
        %v987 = vpop.f32.mrb[0].mxu0
        %v988 = vpop.f32.mrb[0].mxu0
        %v989 = vadd.f32 0.0, %v988
        %v990 = vpop.f32.mrb[0].mxu0
        %991 = vmatprep.mubr.bf16.mxu0 %v564
        %992 = vmatmul.mubr.bf16.gmra.mrb[0].mxu0 %v404
        %v993 = vpop.f32.mrb[0].mxu0
        %v994 = vadd.f32 0.0, %v993
        %v995 = vpop.f32.mrb[0].mxu0
        %v996 = vpop.f32.mrb[0].mxu0
        %v997 = vadd.f32 0.0, %v996
        %v998 = vpop.f32.mrb[0].mxu0
        %999 = vmatprep.mubr.bf16.mxu0 %v576
        %1000 = vmatmul.mubr.bf16.gmra.mrb[0].mxu0 %v405
        %v1001 = vpop.f32.mrb[0].mxu0
        %v1002 = vadd.f32 0.0, %v1001
        %v1003 = vpop.f32.mrb[0].mxu0
        %v1004 = vpop.f32.mrb[0].mxu0
        %v1005 = vadd.f32 0.0, %v1004
        %v1006 = vpop.f32.mrb[0].mxu0
        %1007 = vmatprep.mubr.bf16.mxu0 %v588
        %1008 = vmatmul.mubr.bf16.gmra.mrb[0].mxu0 %v406
        %v1009 = vpop.f32.mrb[0].mxu0
        %v1010 = vadd.f32 0.0, %v1009
        %v1011 = vpop.f32.mrb[0].mxu0
        %v1012 = vpop.f32.mrb[0].mxu0
        %v1013 = vadd.f32 0.0, %v1012
        %v1014 = vpop.f32.mrb[0].mxu0
        %1015 = vdwg.mxu0
        %1016 = vmatprep.subr.bf16.mxu0 0
        %1017 = vmatpush1.bf16.msra.mxu0 %v871
        %1018 = vmatprep.subr.bf16.mxu0 0
        %1019 = vmatpush1.bf16.msra.mxu0 %v872
        %1020 = vmatprep.subr.bf16.mxu0 0
        %1021 = vmatpush1.bf16.msra.mxu0 %v873
        %1022 = vmatprep.subr.bf16.mxu0 0
        %1023 = vmatpush1.bf16.msra.mxu0 %v874
        %1024 = vmatprep.subr.bf16.mxu0 0
        %1025 = vmatpush1.bf16.msra.mxu0 %v875
        %1026 = vmatprep.subr.bf16.mxu0 0
        %1027 = vmatpush1.bf16.msra.mxu0 %v876
        %1028 = vmatprep.subr.bf16.mxu0 0
        %1029 = vmatpush1.bf16.msra.mxu0 %v877
        %1030 = vmatprep.subr.bf16.mxu0 0
        %1031 = vmatpush1.bf16.msra.mxu0 %v878
        %1032 = vmatprep.subr.bf16.mxu0 0
        %1033 = vmatpush1.bf16.msra.mxu0 0
        %1034 = vmatprep.subr.bf16.mxu0 0
        %1035 = vmatpush1.bf16.msra.mxu0 0
        %1036 = vmatprep.subr.bf16.mxu0 0
        %1037 = vmatpush1.bf16.msra.mxu0 0
        %1038 = vmatprep.subr.bf16.mxu0 0
        %1039 = vmatpush1.bf16.msra.mxu0 0
        %1040 = vmatprep.subr.bf16.mxu0 0
        %1041 = vmatpush1.bf16.msra.mxu0 0
        %1042 = vmatprep.subr.bf16.mxu0 0
        %1043 = vmatpush1.bf16.msra.mxu0 0
        %1044 = vmatprep.subr.bf16.mxu0 0
        %1045 = vmatpush1.bf16.msra.mxu0 0
        %1046 = vmatprep.subr.bf16.mxu0 0
        %1047 = vmatpush1.bf16.msra.mxu0 0
        %1048 = vmatprep.mubr.bf16.mxu0 0
        %1049 = vmatmul.mubr.bf16.gmra.mrb[0].mxu0 %v619
        %v1050 = vpop.f32.mrb[0].mxu0
        %v1051 = vadd.f32 %v938, %v1050
        %v1052 = vpop.f32.mrb[0].mxu0
        %v1053 = vpop.f32.mrb[0].mxu0
        %v1054 = vadd.f32 %v941, %v1053
        %v1055 = vpop.f32.mrb[0].mxu0
        %1056 = vmatprep.mubr.bf16.mxu0 0
        %1057 = vmatmul.mubr.bf16.gmra.mrb[0].mxu0 %v622
        %v1058 = vpop.f32.mrb[0].mxu0
        %v1059 = vadd.f32 %v946, %v1058
        %v1060 = vpop.f32.mrb[0].mxu0
        %v1061 = vpop.f32.mrb[0].mxu0
        %v1062 = vadd.f32 %v949, %v1061
        %v1063 = vpop.f32.mrb[0].mxu0
        %1064 = vmatprep.mubr.bf16.mxu0 0
        %1065 = vmatmul.mubr.bf16.gmra.mrb[0].mxu0 %v625
        %v1066 = vpop.f32.mrb[0].mxu0
        %v1067 = vadd.f32 %v954, %v1066
        %v1068 = vpop.f32.mrb[0].mxu0
        %v1069 = vpop.f32.mrb[0].mxu0
        %v1070 = vadd.f32 %v957, %v1069
        %v1071 = vpop.f32.mrb[0].mxu0
        %1072 = vmatprep.mubr.bf16.mxu0 0
        %1073 = vmatmul.mubr.bf16.gmra.mrb[0].mxu0 %v628
        %v1074 = vpop.f32.mrb[0].mxu0
        %v1075 = vadd.f32 %v962, %v1074
        %v1076 = vpop.f32.mrb[0].mxu0
        %v1077 = vpop.f32.mrb[0].mxu0
        %v1078 = vadd.f32 %v965, %v1077
        %v1079 = vpop.f32.mrb[0].mxu0
        %1080 = vmatprep.mubr.bf16.mxu0 0
        %1081 = vmatmul.mubr.bf16.gmra.mrb[0].mxu0 %v631
        %v1082 = vpop.f32.mrb[0].mxu0
        %v1083 = vadd.f32 %v970, %v1082
        %v1084 = vpop.f32.mrb[0].mxu0
        %v1085 = vpop.f32.mrb[0].mxu0
        %v1086 = vadd.f32 %v973, %v1085
        %v1087 = vpop.f32.mrb[0].mxu0
        %1088 = vmatprep.mubr.bf16.mxu0 0
        %1089 = vmatmul.mubr.bf16.gmra.mrb[0].mxu0 %v634
        %v1090 = vpop.f32.mrb[0].mxu0
        %v1091 = vadd.f32 %v978, %v1090
        %v1092 = vpop.f32.mrb[0].mxu0
        %v1093 = vpop.f32.mrb[0].mxu0
        %v1094 = vadd.f32 %v981, %v1093
        %v1095 = vpop.f32.mrb[0].mxu0
        %1096 = vmatprep.mubr.bf16.mxu0 0
        %1097 = vmatmul.mubr.bf16.gmra.mrb[0].mxu0 %v637
        %v1098 = vpop.f32.mrb[0].mxu0
        %v1099 = vadd.f32 %v986, %v1098
        %v1100 = vpop.f32.mrb[0].mxu0
        %v1101 = vpop.f32.mrb[0].mxu0
        %v1102 = vadd.f32 %v989, %v1101
        %v1103 = vpop.f32.mrb[0].mxu0
        %1104 = vmatprep.mubr.bf16.mxu0 0
        %1105 = vmatmul.mubr.bf16.gmra.mrb[0].mxu0 %v640
        %v1106 = vpop.f32.mrb[0].mxu0
        %v1107 = vadd.f32 %v994, %v1106
        %v1108 = vpop.f32.mrb[0].mxu0
        %v1109 = vpop.f32.mrb[0].mxu0
        %v1110 = vadd.f32 %v997, %v1109
        %v1111 = vpop.f32.mrb[0].mxu0
        %1112 = vmatprep.mubr.bf16.mxu0 0
        %1113 = vmatmul.mubr.bf16.gmra.mrb[0].mxu0 %v643
        %v1114 = vpop.f32.mrb[0].mxu0
        %v1115 = vadd.f32 %v1002, %v1114
        %v1116 = vpop.f32.mrb[0].mxu0
        %v1117 = vpop.f32.mrb[0].mxu0
        %v1118 = vadd.f32 %v1005, %v1117
        %v1119 = vpop.f32.mrb[0].mxu0
        %1120 = vmatprep.mubr.bf16.mxu0 0
        %1121 = vmatmul.mubr.bf16.gmra.mrb[0].mxu0 %v646
        %v1122 = vpop.f32.mrb[0].mxu0
        %v1123 = vadd.f32 %v1010, %v1122
        %v1124 = vpop.f32.mrb[0].mxu0
        %v1125 = vpop.f32.mrb[0].mxu0
        %v1126 = vadd.f32 %v1013, %v1125
        %v1127 = vpop.f32.mrb[0].mxu0
        %1128 = vdwg.mxu0
        %v1177 = vunpack.c.l.b16 %v662
        %v1178 = vunpack.c.l.b16 %v663
        %v1179 = vunpack.c.l.b16 %v664
        %v1180 = vunpack.c.l.b16 %v665
        %v1181 = vunpack.c.l.b16 %v666
        %v1182 = vunpack.c.l.b16 %v667
        %v1183 = vunpack.c.l.b16 %v668
        %v1184 = vunpack.c.l.b16 %v669
        %v1185 = vunpack.c.l.b16 %v670
        %v1186 = vunpack.c.l.b16 %v671
        %v1187 = vunpack.c.l.b16 %v672
        %v1188 = vunpack.c.l.b16 %v673
        %v1189 = vunpack.c.l.b16 %v674
        %v1190 = vunpack.c.l.b16 %v675
        %v1191 = vunpack.c.l.b16 %v676
        %v1192 = vunpack.c.l.b16 %v677
        %v1193 = vunpack.c.l.b16 %v678
        %v1194 = vunpack.c.l.b16 %v679
        %v1195 = vunpack.c.l.b16 %v680
        %v1196 = vunpack.c.l.b16 %v681
        %v1197 = vunpack.c.l.b16 %v682
        %v1198 = vunpack.c.l.b16 %v683
        %v1199 = vunpack.c.l.b16 %v684
        %v1200 = vunpack.c.l.b16 %v685
        %v1201 = vunpack.c.l.b16 %v686
        %v1202 = vunpack.c.l.b16 %v687
        %v1203 = vunpack.c.l.b16 %v688
        %v1204 = vunpack.c.l.b16 %v689
        %v1205 = vunpack.c.l.b16 %v690
        %v1206 = vunpack.c.l.b16 %v691
        %v1207 = vunpack.c.l.b16 %v692
        %v1208 = vunpack.c.l.b16 %v693
        %v1209 = vunpack.c.l.b16 %v694
        %v1210 = vunpack.c.l.b16 %v695
        %v1211 = vunpack.c.l.b16 %v696
        %v1212 = vunpack.c.l.b16 %v697
        %v1213 = vunpack.c.l.b16 %v698
        %v1214 = vunpack.c.l.b16 %v699
        %v1215 = vunpack.c.l.b16 %v700
        %v1216 = vunpack.c.l.b16 %v701
        %v1217 = vunpack.c.l.b16 %v702
        %v1218 = vunpack.c.l.b16 %v703
        %v1219 = vunpack.c.l.b16 %v704
        %v1220 = vunpack.c.l.b16 %v705
        %v1221 = vunpack.c.l.b16 %v706
        %v1222 = vunpack.c.l.b16 %v707
        %v1223 = vunpack.c.l.b16 %v708
        %v1224 = vunpack.c.l.b16 %v709
        %v1225 = vpack.c.b16 %v1178, %v1177
        %v1226 = vpack.c.b16 %v1180, %v1179
        %v1227 = vpack.c.b16 %v1182, %v1181
        %v1228 = vpack.c.b16 %v1184, %v1183
        %v1229 = vpack.c.b16 %v1186, %v1185
        %v1230 = vpack.c.b16 %v1188, %v1187
        %v1231 = vpack.c.b16 %v1190, %v1189
        %v1232 = vpack.c.b16 %v1192, %v1191
        %v1233 = vpack.c.b16 %v1194, %v1193
        %v1234 = vpack.c.b16 %v1196, %v1195
        %v1235 = vpack.c.b16 %v1198, %v1197
        %v1236 = vpack.c.b16 %v1200, %v1199
        %v1237 = vpack.c.b16 %v1202, %v1201
        %v1238 = vpack.c.b16 %v1204, %v1203
        %v1239 = vpack.c.b16 %v1206, %v1205
        %v1240 = vpack.c.b16 %v1208, %v1207
        %v1241 = vpack.c.b16 %v1210, %v1209
        %v1242 = vpack.c.b16 %v1212, %v1211
        %v1243 = vpack.c.b16 %v1214, %v1213
        %v1244 = vpack.c.b16 %v1216, %v1215
        %v1245 = vpack.c.b16 %v1218, %v1217
        %v1246 = vpack.c.b16 %v1220, %v1219
        %v1247 = vpack.c.b16 %v1222, %v1221
        %v1248 = vpack.c.b16 %v1224, %v1223
        %1273 = vmatprep.subr.bf16.mxu0 0
        %1274 = vmatpush1.bf16.msra.mxu0 %v1225
        %1275 = vmatprep.subr.bf16.mxu0 0
        %1276 = vmatpush1.bf16.msra.mxu0 %v1226
        %1277 = vmatprep.subr.bf16.mxu0 0
        %1278 = vmatpush1.bf16.msra.mxu0 %v1227
        %1279 = vmatprep.subr.bf16.mxu0 0
        %1280 = vmatpush1.bf16.msra.mxu0 %v1228
        %1281 = vmatprep.subr.bf16.mxu0 0
        %1282 = vmatpush1.bf16.msra.mxu0 %v1229
        %1283 = vmatprep.subr.bf16.mxu0 0
        %1284 = vmatpush1.bf16.msra.mxu0 %v1230
        %1285 = vmatprep.subr.bf16.mxu0 0
        %1286 = vmatpush1.bf16.msra.mxu0 %v1231
        %1287 = vmatprep.subr.bf16.mxu0 0
        %1288 = vmatpush1.bf16.msra.mxu0 %v1232
        %1289 = vmatprep.subr.bf16.mxu0 0
        %1290 = vmatpush1.bf16.msra.mxu0 %v1233
        %1291 = vmatprep.subr.bf16.mxu0 0
        %1292 = vmatpush1.bf16.msra.mxu0 %v1234
        %1293 = vmatprep.subr.bf16.mxu0 0
        %1294 = vmatpush1.bf16.msra.mxu0 %v1235
        %1295 = vmatprep.subr.bf16.mxu0 0
        %1296 = vmatpush1.bf16.msra.mxu0 %v1236
        %1297 = vmatprep.subr.bf16.mxu0 0
        %1298 = vmatpush1.bf16.msra.mxu0 %v1237
        %1299 = vmatprep.subr.bf16.mxu0 0
        %1300 = vmatpush1.bf16.msra.mxu0 %v1238
        %1301 = vmatprep.subr.bf16.mxu0 0
        %1302 = vmatpush1.bf16.msra.mxu0 %v1239
        %1303 = vmatprep.subr.bf16.mxu0 0
        %1304 = vmatpush1.bf16.msra.mxu0 %v1240
        %1305 = vmatprep.mubr.bf16.mxu0 %v468
        %1306 = vmatmul.mubr.bf16.gmra.mrb[0].mxu0 %v396
        %v1307 = vpop.f32.mrb[0].mxu0
        %v1308 = vadd.f32 %v1051, %v1307
        %v1309 = vpop.f32.mrb[0].mxu0
        %v1310 = vpop.f32.mrb[0].mxu0
        %v1311 = vadd.f32 %v1054, %v1310
        %v1312 = vpop.f32.mrb[0].mxu0
        %1313 = vmatprep.mubr.bf16.mxu0 %v480
        %1314 = vmatmul.mubr.bf16.gmra.mrb[0].mxu0 %v397
        %v1315 = vpop.f32.mrb[0].mxu0
        %v1316 = vadd.f32 %v1059, %v1315
        %v1317 = vpop.f32.mrb[0].mxu0
        %v1318 = vpop.f32.mrb[0].mxu0
        %v1319 = vadd.f32 %v1062, %v1318
        %v1320 = vpop.f32.mrb[0].mxu0
        %1321 = vmatprep.mubr.bf16.mxu0 %v492
        %1322 = vmatmul.mubr.bf16.gmra.mrb[0].mxu0 %v398
        %v1323 = vpop.f32.mrb[0].mxu0
        %v1324 = vadd.f32 %v1067, %v1323
        %v1325 = vpop.f32.mrb[0].mxu0
        %v1326 = vpop.f32.mrb[0].mxu0
        %v1327 = vadd.f32 %v1070, %v1326
        %v1328 = vpop.f32.mrb[0].mxu0
        %1329 = vmatprep.mubr.bf16.mxu0 %v504
        %1330 = vmatmul.mubr.bf16.gmra.mrb[0].mxu0 %v399
        %v1331 = vpop.f32.mrb[0].mxu0
        %v1332 = vadd.f32 %v1075, %v1331
        %v1333 = vpop.f32.mrb[0].mxu0
        %v1334 = vpop.f32.mrb[0].mxu0
        %v1335 = vadd.f32 %v1078, %v1334
        %v1336 = vpop.f32.mrb[0].mxu0
        %1337 = vmatprep.mubr.bf16.mxu0 %v516
        %1338 = vmatmul.mubr.bf16.gmra.mrb[0].mxu0 %v400
        %v1339 = vpop.f32.mrb[0].mxu0
        %v1340 = vadd.f32 %v1083, %v1339
        %v1341 = vpop.f32.mrb[0].mxu0
        %v1342 = vpop.f32.mrb[0].mxu0
        %v1343 = vadd.f32 %v1086, %v1342
        %v1344 = vpop.f32.mrb[0].mxu0
        %1345 = vmatprep.mubr.bf16.mxu0 %v528
        %1346 = vmatmul.mubr.bf16.gmra.mrb[0].mxu0 %v401
        %v1347 = vpop.f32.mrb[0].mxu0
        %v1348 = vadd.f32 %v1091, %v1347
        %v1349 = vpop.f32.mrb[0].mxu0
        %v1350 = vpop.f32.mrb[0].mxu0
        %v1351 = vadd.f32 %v1094, %v1350
        %v1352 = vpop.f32.mrb[0].mxu0
        %1353 = vmatprep.mubr.bf16.mxu0 %v540
        %1354 = vmatmul.mubr.bf16.gmra.mrb[0].mxu0 %v402
        %v1355 = vpop.f32.mrb[0].mxu0
        %v1356 = vadd.f32 %v1099, %v1355
        %v1357 = vpop.f32.mrb[0].mxu0
        %v1358 = vpop.f32.mrb[0].mxu0
        %v1359 = vadd.f32 %v1102, %v1358
        %v1360 = vpop.f32.mrb[0].mxu0
        %1361 = vmatprep.mubr.bf16.mxu0 %v552
        %1362 = vmatmul.mubr.bf16.gmra.mrb[0].mxu0 %v403
        %v1363 = vpop.f32.mrb[0].mxu0
        %v1364 = vadd.f32 %v1107, %v1363
        %v1365 = vpop.f32.mrb[0].mxu0
        %v1366 = vpop.f32.mrb[0].mxu0
        %v1367 = vadd.f32 %v1110, %v1366
        %v1368 = vpop.f32.mrb[0].mxu0
        %1369 = vmatprep.mubr.bf16.mxu0 %v564
        %1370 = vmatmul.mubr.bf16.gmra.mrb[0].mxu0 %v404
        %v1371 = vpop.f32.mrb[0].mxu0
        %v1372 = vadd.f32 %v1115, %v1371
        %v1373 = vpop.f32.mrb[0].mxu0
        %v1374 = vpop.f32.mrb[0].mxu0
        %v1375 = vadd.f32 %v1118, %v1374
        %v1376 = vpop.f32.mrb[0].mxu0
        %1377 = vmatprep.mubr.bf16.mxu0 %v576
        %1378 = vmatmul.mubr.bf16.gmra.mrb[0].mxu0 %v405
        %v1379 = vpop.f32.mrb[0].mxu0
        %v1380 = vadd.f32 %v1123, %v1379
        %v1381 = vpop.f32.mrb[0].mxu0
        %v1382 = vpop.f32.mrb[0].mxu0
        %v1383 = vadd.f32 %v1126, %v1382
        %v1384 = vpop.f32.mrb[0].mxu0
        %1385 = vdwg.mxu0
        %1386 = vmatprep.subr.bf16.mxu0 0
        %1387 = vmatpush1.bf16.msra.mxu0 %v1241
        %1388 = vmatprep.subr.bf16.mxu0 0
        %1389 = vmatpush1.bf16.msra.mxu0 %v1242
        %1390 = vmatprep.subr.bf16.mxu0 0
        %1391 = vmatpush1.bf16.msra.mxu0 %v1243
        %1392 = vmatprep.subr.bf16.mxu0 0
        %1393 = vmatpush1.bf16.msra.mxu0 %v1244
        %1394 = vmatprep.subr.bf16.mxu0 0
        %1395 = vmatpush1.bf16.msra.mxu0 %v1245
        %1396 = vmatprep.subr.bf16.mxu0 0
        %1397 = vmatpush1.bf16.msra.mxu0 %v1246
        %1398 = vmatprep.subr.bf16.mxu0 0
        %1399 = vmatpush1.bf16.msra.mxu0 %v1247
        %1400 = vmatprep.subr.bf16.mxu0 0
        %1401 = vmatpush1.bf16.msra.mxu0 %v1248
        %1402 = vmatprep.subr.bf16.mxu0 0
        %1403 = vmatpush1.bf16.msra.mxu0 0
        %1404 = vmatprep.subr.bf16.mxu0 0
        %1405 = vmatpush1.bf16.msra.mxu0 0
        %1406 = vmatprep.subr.bf16.mxu0 0
        %1407 = vmatpush1.bf16.msra.mxu0 0
        %1408 = vmatprep.subr.bf16.mxu0 0
        %1409 = vmatpush1.bf16.msra.mxu0 0
        %1410 = vmatprep.subr.bf16.mxu0 0
        %1411 = vmatpush1.bf16.msra.mxu0 0
        %1412 = vmatprep.subr.bf16.mxu0 0
        %1413 = vmatpush1.bf16.msra.mxu0 0
        %1414 = vmatprep.subr.bf16.mxu0 0
        %1415 = vmatpush1.bf16.msra.mxu0 0
        %1416 = vmatprep.subr.bf16.mxu0 0
        %1417 = vmatpush1.bf16.msra.mxu0 0
        %1418 = vmatprep.mubr.bf16.mxu0 0
        %1419 = vmatmul.mubr.bf16.gmra.mrb[0].mxu0 %v616
        %v1420 = vpop.f32.mrb[0].mxu0
        %v1421 = vadd.f32 %v1308, %v1420
        %v1422 = vpop.f32.mrb[0].mxu0
        %v1423 = vpop.f32.mrb[0].mxu0
        %v1424 = vadd.f32 %v1311, %v1423
        %v1425 = vpop.f32.mrb[0].mxu0
        %1426 = vmatprep.mubr.bf16.mxu0 0
        %1427 = vmatmul.mubr.bf16.gmra.mrb[0].mxu0 %v619
        %v1428 = vpop.f32.mrb[0].mxu0
        %v1429 = vadd.f32 %v1316, %v1428
        %v1430 = vpop.f32.mrb[0].mxu0
        %v1431 = vpop.f32.mrb[0].mxu0
        %v1432 = vadd.f32 %v1319, %v1431
        %v1433 = vpop.f32.mrb[0].mxu0
        %1434 = vmatprep.mubr.bf16.mxu0 0
        %1435 = vmatmul.mubr.bf16.gmra.mrb[0].mxu0 %v622
        %v1436 = vpop.f32.mrb[0].mxu0
        %v1437 = vadd.f32 %v1324, %v1436
        %v1438 = vpop.f32.mrb[0].mxu0
        %v1439 = vpop.f32.mrb[0].mxu0
        %v1440 = vadd.f32 %v1327, %v1439
        %v1441 = vpop.f32.mrb[0].mxu0
        %1442 = vmatprep.mubr.bf16.mxu0 0
        %1443 = vmatmul.mubr.bf16.gmra.mrb[0].mxu0 %v625
        %v1444 = vpop.f32.mrb[0].mxu0
        %v1445 = vadd.f32 %v1332, %v1444
        %v1446 = vpop.f32.mrb[0].mxu0
        %v1447 = vpop.f32.mrb[0].mxu0
        %v1448 = vadd.f32 %v1335, %v1447
        %v1449 = vpop.f32.mrb[0].mxu0
        %1450 = vmatprep.mubr.bf16.mxu0 0
        %1451 = vmatmul.mubr.bf16.gmra.mrb[0].mxu0 %v628
        %v1452 = vpop.f32.mrb[0].mxu0
        %v1453 = vadd.f32 %v1340, %v1452
        %v1454 = vpop.f32.mrb[0].mxu0
        %v1455 = vpop.f32.mrb[0].mxu0
        %v1456 = vadd.f32 %v1343, %v1455
        %v1457 = vpop.f32.mrb[0].mxu0
        %1458 = vmatprep.mubr.bf16.mxu0 0
        %1459 = vmatmul.mubr.bf16.gmra.mrb[0].mxu0 %v631
        %v1460 = vpop.f32.mrb[0].mxu0
        %v1461 = vadd.f32 %v1348, %v1460
        %v1462 = vpop.f32.mrb[0].mxu0
        %v1463 = vpop.f32.mrb[0].mxu0
        %v1464 = vadd.f32 %v1351, %v1463
        %v1465 = vpop.f32.mrb[0].mxu0
        %1466 = vmatprep.mubr.bf16.mxu0 0
        %1467 = vmatmul.mubr.bf16.gmra.mrb[0].mxu0 %v634
        %v1468 = vpop.f32.mrb[0].mxu0
        %v1469 = vadd.f32 %v1356, %v1468
        %v1470 = vpop.f32.mrb[0].mxu0
        %v1471 = vpop.f32.mrb[0].mxu0
        %v1472 = vadd.f32 %v1359, %v1471
        %v1473 = vpop.f32.mrb[0].mxu0
        %1474 = vmatprep.mubr.bf16.mxu0 0
        %1475 = vmatmul.mubr.bf16.gmra.mrb[0].mxu0 %v637
        %v1476 = vpop.f32.mrb[0].mxu0
        %v1477 = vadd.f32 %v1364, %v1476
        %v1478 = vpop.f32.mrb[0].mxu0
        %v1479 = vpop.f32.mrb[0].mxu0
        %v1480 = vadd.f32 %v1367, %v1479
        %v1481 = vpop.f32.mrb[0].mxu0
        %1482 = vmatprep.mubr.bf16.mxu0 0
        %1483 = vmatmul.mubr.bf16.gmra.mrb[0].mxu0 %v640
        %v1484 = vpop.f32.mrb[0].mxu0
        %v1485 = vadd.f32 %v1372, %v1484
        %v1486 = vpop.f32.mrb[0].mxu0
        %v1487 = vpop.f32.mrb[0].mxu0
        %v1488 = vadd.f32 %v1375, %v1487
        %v1489 = vpop.f32.mrb[0].mxu0
        %1490 = vmatprep.mubr.bf16.mxu0 0
        %1491 = vmatmul.mubr.bf16.gmra.mrb[0].mxu0 %v643
        %v1492 = vpop.f32.mrb[0].mxu0
        %v1493 = vadd.f32 %v1380, %v1492
        %v1494 = vpop.f32.mrb[0].mxu0
        %v1495 = vpop.f32.mrb[0].mxu0
        %v1496 = vadd.f32 %v1383, %v1495
        %v1497 = vpop.f32.mrb[0].mxu0
        %1498 = vdwg.mxu0
        %s1499 = scalar_lea.vmem %s1, 384
        %v1500 = vld [vmem:[%s1499] sm:$0xf]
        %v1501 = vld [vmem:[%s1499 + $0x4] sm:$0xf]
        %v1502 = vld [vmem:[%s1499 + $0x8] sm:$0xf]
        %v1503 = vld [vmem:[%s1499 + $0xc] sm:$0xf]
        %v1504 = vld [vmem:[%s1499 + $0x10] sm:$0xf]
        %v1505 = vld [vmem:[%s1499 + $0x14] sm:$0xf]
        %v1506 = vld [vmem:[%s1499 + $0x18] sm:$0xf]
        %v1507 = vld [vmem:[%s1499 + $0x1c] sm:$0xf]
        %v1508 = vld [vmem:[%s1499 + $0x20] sm:$0xf]
        %v1509 = vld [vmem:[%s1499 + $0x24] sm:$0xf]
        %v1510 = vld [vmem:[%s1499 + $0x28] sm:$0xf]
        %v1511 = vld [vmem:[%s1499 + $0x2c] sm:$0xf]
        %v1512 = vld [vmem:[%s1499 + $0x30] sm:$0xf]
        %v1513 = vld [vmem:[%s1499 + $0x34] sm:$0xf]
        %v1514 = vld [vmem:[%s1499 + $0x38] sm:$0xf]
        %v1515 = vld [vmem:[%s1499 + $0x3c] sm:$0xf]
        %v1516 = vld [vmem:[%s1499 + $0x40] sm:$0xf]
        %v1517 = vld [vmem:[%s1499 + $0x44] sm:$0xf]
        %v1518 = vld [vmem:[%s1499 + $0x48] sm:$0xf]
        %v1519 = vld [vmem:[%s1499 + $0x4c] sm:$0xf]
        %v1520 = vld [vmem:[%s1499 + $0x50] sm:$0xf]
        %v1521 = vld [vmem:[%s1499 + $0x54] sm:$0xf]
        %v1522 = vld [vmem:[%s1499 + $0x58] sm:$0xf]
        %v1523 = vld [vmem:[%s1499 + $0x5c] sm:$0xf]
        %v1524 = vld [vmem:[%s1499 + $0x60] sm:$0xf]
        %v1525 = vld [vmem:[%s1499 + $0x64] sm:$0xf]
        %v1526 = vld [vmem:[%s1499 + $0x68] sm:$0xf]
        %v1527 = vld [vmem:[%s1499 + $0x6c] sm:$0xf]
        %v1528 = vld [vmem:[%s1499 + $0x70] sm:$0xf]
        %v1529 = vld [vmem:[%s1499 + $0x74] sm:$0xf]
        %v1530 = vld [vmem:[%s1499 + $0x78] sm:$0xf]
        %v1531 = vld [vmem:[%s1499 + $0x7c] sm:$0xf]
        %v1532 = vld [vmem:[%s1499 + $0x80] sm:$0xf]
        %v1533 = vld [vmem:[%s1499 + $0x84] sm:$0xf]
        %v1534 = vld [vmem:[%s1499 + $0x88] sm:$0xf]
        %v1535 = vld [vmem:[%s1499 + $0x8c] sm:$0xf]
        %v1536 = vld [vmem:[%s1499 + $0x90] sm:$0xf]
        %v1537 = vld [vmem:[%s1499 + $0x94] sm:$0xf]
        %v1538 = vld [vmem:[%s1499 + $0x98] sm:$0xf]
        %v1539 = vld [vmem:[%s1499 + $0x9c] sm:$0xf]
        %v1540 = vld [vmem:[%s1499 + $0xa0] sm:$0xf]
        %v1541 = vld [vmem:[%s1499 + $0xa4] sm:$0xf]
        %v1542 = vld [vmem:[%s1499 + $0xa8] sm:$0xf]
        %v1543 = vld [vmem:[%s1499 + $0xac] sm:$0xf]
        %v1544 = vld [vmem:[%s1499 + $0xb0] sm:$0xf]
        %v1545 = vld [vmem:[%s1499 + $0xb4] sm:$0xf]
        %v1546 = vld [vmem:[%s1499 + $0xb8] sm:$0xf]
        %v1547 = vld [vmem:[%s1499 + $0xbc] sm:$0xf]
        %v1596 = vunpack.c.l.b16 %v1500
        %v1597 = vunpack.c.l.b16 %v1501
        %v1598 = vunpack.c.l.b16 %v1502
        %v1599 = vunpack.c.l.b16 %v1503
        %v1600 = vunpack.c.l.b16 %v1504
        %v1601 = vunpack.c.l.b16 %v1505
        %v1602 = vunpack.c.l.b16 %v1506
        %v1603 = vunpack.c.l.b16 %v1507
        %v1604 = vunpack.c.l.b16 %v1508
        %v1605 = vunpack.c.l.b16 %v1509
        %v1606 = vunpack.c.l.b16 %v1510
        %v1607 = vunpack.c.l.b16 %v1511
        %v1608 = vunpack.c.l.b16 %v1512
        %v1609 = vunpack.c.l.b16 %v1513
        %v1610 = vunpack.c.l.b16 %v1514
        %v1611 = vunpack.c.l.b16 %v1515
        %v1612 = vunpack.c.l.b16 %v1516
        %v1613 = vunpack.c.l.b16 %v1517
        %v1614 = vunpack.c.l.b16 %v1518
        %v1615 = vunpack.c.l.b16 %v1519
        %v1616 = vunpack.c.l.b16 %v1520
        %v1617 = vunpack.c.l.b16 %v1521
        %v1618 = vunpack.c.l.b16 %v1522
        %v1619 = vunpack.c.l.b16 %v1523
        %v1620 = vunpack.c.l.b16 %v1524
        %v1621 = vunpack.c.l.b16 %v1525
        %v1622 = vunpack.c.l.b16 %v1526
        %v1623 = vunpack.c.l.b16 %v1527
        %v1624 = vunpack.c.l.b16 %v1528
        %v1625 = vunpack.c.l.b16 %v1529
        %v1626 = vunpack.c.l.b16 %v1530
        %v1627 = vunpack.c.l.b16 %v1531
        %v1628 = vunpack.c.l.b16 %v1532
        %v1629 = vunpack.c.l.b16 %v1533
        %v1630 = vunpack.c.l.b16 %v1534
        %v1631 = vunpack.c.l.b16 %v1535
        %v1632 = vunpack.c.l.b16 %v1536
        %v1633 = vunpack.c.l.b16 %v1537
        %v1634 = vunpack.c.l.b16 %v1538
        %v1635 = vunpack.c.l.b16 %v1539
        %v1636 = vunpack.c.l.b16 %v1540
        %v1637 = vunpack.c.l.b16 %v1541
        %v1638 = vunpack.c.l.b16 %v1542
        %v1639 = vunpack.c.l.b16 %v1543
        %v1640 = vunpack.c.l.b16 %v1544
        %v1641 = vunpack.c.l.b16 %v1545
        %v1642 = vunpack.c.l.b16 %v1546
        %v1643 = vunpack.c.l.b16 %v1547
        %v1644 = vpack.c.b16 %v1597, %v1596
        %v1645 = vpack.c.b16 %v1599, %v1598
        %v1646 = vpack.c.b16 %v1601, %v1600
        %v1647 = vpack.c.b16 %v1603, %v1602
        %v1648 = vpack.c.b16 %v1605, %v1604
        %v1649 = vpack.c.b16 %v1607, %v1606
        %v1650 = vpack.c.b16 %v1609, %v1608
        %v1651 = vpack.c.b16 %v1611, %v1610
        %v1652 = vpack.c.b16 %v1613, %v1612
        %v1653 = vpack.c.b16 %v1615, %v1614
        %v1654 = vpack.c.b16 %v1617, %v1616
        %v1655 = vpack.c.b16 %v1619, %v1618
        %v1656 = vpack.c.b16 %v1621, %v1620
        %v1657 = vpack.c.b16 %v1623, %v1622
        %v1658 = vpack.c.b16 %v1625, %v1624
        %v1659 = vpack.c.b16 %v1627, %v1626
        %v1660 = vpack.c.b16 %v1629, %v1628
        %v1661 = vpack.c.b16 %v1631, %v1630
        %v1662 = vpack.c.b16 %v1633, %v1632
        %v1663 = vpack.c.b16 %v1635, %v1634
        %v1664 = vpack.c.b16 %v1637, %v1636
        %v1665 = vpack.c.b16 %v1639, %v1638
        %v1666 = vpack.c.b16 %v1641, %v1640
        %v1667 = vpack.c.b16 %v1643, %v1642
        %1692 = vmatprep.subr.bf16.mxu0 0
        %1693 = vmatpush1.bf16.msra.mxu0 %v1644
        %1694 = vmatprep.subr.bf16.mxu0 0
        %1695 = vmatpush1.bf16.msra.mxu0 %v1645
        %1696 = vmatprep.subr.bf16.mxu0 0
        %1697 = vmatpush1.bf16.msra.mxu0 %v1646
        %1698 = vmatprep.subr.bf16.mxu0 0
        %1699 = vmatpush1.bf16.msra.mxu0 %v1647
        %1700 = vmatprep.subr.bf16.mxu0 0
        %1701 = vmatpush1.bf16.msra.mxu0 %v1648
        %1702 = vmatprep.subr.bf16.mxu0 0
        %1703 = vmatpush1.bf16.msra.mxu0 %v1649
        %1704 = vmatprep.subr.bf16.mxu0 0
        %1705 = vmatpush1.bf16.msra.mxu0 %v1650
        %1706 = vmatprep.subr.bf16.mxu0 0
        %1707 = vmatpush1.bf16.msra.mxu0 %v1651
        %1708 = vmatprep.subr.bf16.mxu0 0
        %1709 = vmatpush1.bf16.msra.mxu0 %v1652
        %1710 = vmatprep.subr.bf16.mxu0 0
        %1711 = vmatpush1.bf16.msra.mxu0 %v1653
        %1712 = vmatprep.subr.bf16.mxu0 0
        %1713 = vmatpush1.bf16.msra.mxu0 %v1654
        %1714 = vmatprep.subr.bf16.mxu0 0
        %1715 = vmatpush1.bf16.msra.mxu0 %v1655
        %1716 = vmatprep.subr.bf16.mxu0 0
        %1717 = vmatpush1.bf16.msra.mxu0 %v1656
        %1718 = vmatprep.subr.bf16.mxu0 0
        %1719 = vmatpush1.bf16.msra.mxu0 %v1657
        %1720 = vmatprep.subr.bf16.mxu0 0
        %1721 = vmatpush1.bf16.msra.mxu0 %v1658
        %1722 = vmatprep.subr.bf16.mxu0 0
        %1723 = vmatpush1.bf16.msra.mxu0 %v1659
        %1724 = vmatprep.mubr.bf16.mxu0 %v492
        %1725 = vmatmul.mubr.bf16.gmra.mrb[0].mxu0 %v398
        %v1726 = vpop.f32.mrb[0].mxu0
        %v1727 = vadd.f32 0.0, %v1726
        %v1728 = vpop.f32.mrb[0].mxu0
        %v1729 = vpop.f32.mrb[0].mxu0
        %v1730 = vadd.f32 0.0, %v1729
        %v1731 = vpop.f32.mrb[0].mxu0
        %1732 = vmatprep.mubr.bf16.mxu0 %v504
        %1733 = vmatmul.mubr.bf16.gmra.mrb[0].mxu0 %v399
        %v1734 = vpop.f32.mrb[0].mxu0
        %v1735 = vadd.f32 0.0, %v1734
        %v1736 = vpop.f32.mrb[0].mxu0
        %v1737 = vpop.f32.mrb[0].mxu0
        %v1738 = vadd.f32 0.0, %v1737
        %v1739 = vpop.f32.mrb[0].mxu0
        %1740 = vmatprep.mubr.bf16.mxu0 %v516
        %1741 = vmatmul.mubr.bf16.gmra.mrb[0].mxu0 %v400
        %v1742 = vpop.f32.mrb[0].mxu0
        %v1743 = vadd.f32 0.0, %v1742
        %v1744 = vpop.f32.mrb[0].mxu0
        %v1745 = vpop.f32.mrb[0].mxu0
        %v1746 = vadd.f32 0.0, %v1745
        %v1747 = vpop.f32.mrb[0].mxu0
        %1748 = vmatprep.mubr.bf16.mxu0 %v528
        %1749 = vmatmul.mubr.bf16.gmra.mrb[0].mxu0 %v401
        %v1750 = vpop.f32.mrb[0].mxu0
        %v1751 = vadd.f32 0.0, %v1750
        %v1752 = vpop.f32.mrb[0].mxu0
        %v1753 = vpop.f32.mrb[0].mxu0
        %v1754 = vadd.f32 0.0, %v1753
        %v1755 = vpop.f32.mrb[0].mxu0
        %1756 = vmatprep.mubr.bf16.mxu0 %v540
        %1757 = vmatmul.mubr.bf16.gmra.mrb[0].mxu0 %v402
        %v1758 = vpop.f32.mrb[0].mxu0
        %v1759 = vadd.f32 0.0, %v1758
        %v1760 = vpop.f32.mrb[0].mxu0
        %v1761 = vpop.f32.mrb[0].mxu0
        %v1762 = vadd.f32 0.0, %v1761
        %v1763 = vpop.f32.mrb[0].mxu0
        %1764 = vmatprep.mubr.bf16.mxu0 %v552
        %1765 = vmatmul.mubr.bf16.gmra.mrb[0].mxu0 %v403
        %v1766 = vpop.f32.mrb[0].mxu0
        %v1767 = vadd.f32 0.0, %v1766
        %v1768 = vpop.f32.mrb[0].mxu0
        %v1769 = vpop.f32.mrb[0].mxu0
        %v1770 = vadd.f32 0.0, %v1769
        %v1771 = vpop.f32.mrb[0].mxu0
        %1772 = vmatprep.mubr.bf16.mxu0 %v564
        %1773 = vmatmul.mubr.bf16.gmra.mrb[0].mxu0 %v404
        %v1774 = vpop.f32.mrb[0].mxu0
        %v1775 = vadd.f32 0.0, %v1774
        %v1776 = vpop.f32.mrb[0].mxu0
        %v1777 = vpop.f32.mrb[0].mxu0
        %v1778 = vadd.f32 0.0, %v1777
        %v1779 = vpop.f32.mrb[0].mxu0
        %1780 = vmatprep.mubr.bf16.mxu0 %v576
        %1781 = vmatmul.mubr.bf16.gmra.mrb[0].mxu0 %v405
        %v1782 = vpop.f32.mrb[0].mxu0
        %v1783 = vadd.f32 0.0, %v1782
        %v1784 = vpop.f32.mrb[0].mxu0
        %v1785 = vpop.f32.mrb[0].mxu0
        %v1786 = vadd.f32 0.0, %v1785
        %v1787 = vpop.f32.mrb[0].mxu0
        %1788 = vmatprep.mubr.bf16.mxu0 %v588
        %1789 = vmatmul.mubr.bf16.gmra.mrb[0].mxu0 %v406
        %v1790 = vpop.f32.mrb[0].mxu0
        %v1791 = vadd.f32 0.0, %v1790
        %v1792 = vpop.f32.mrb[0].mxu0
        %v1793 = vpop.f32.mrb[0].mxu0
        %v1794 = vadd.f32 0.0, %v1793
        %v1795 = vpop.f32.mrb[0].mxu0
        %1796 = vmatprep.mubr.bf16.mxu0 %v600
        %1797 = vmatmul.mubr.bf16.gmra.mrb[0].mxu0 %v407
        %v1798 = vpop.f32.mrb[0].mxu0
        %v1799 = vadd.f32 0.0, %v1798
        %v1800 = vpop.f32.mrb[0].mxu0
        %v1801 = vpop.f32.mrb[0].mxu0
        %v1802 = vadd.f32 0.0, %v1801
        %v1803 = vpop.f32.mrb[0].mxu0
        %1804 = vdwg.mxu0
        %1805 = vmatprep.subr.bf16.mxu0 0
        %1806 = vmatpush1.bf16.msra.mxu0 %v1660
        %1807 = vmatprep.subr.bf16.mxu0 0
        %1808 = vmatpush1.bf16.msra.mxu0 %v1661
        %1809 = vmatprep.subr.bf16.mxu0 0
        %1810 = vmatpush1.bf16.msra.mxu0 %v1662
        %1811 = vmatprep.subr.bf16.mxu0 0
        %1812 = vmatpush1.bf16.msra.mxu0 %v1663
        %1813 = vmatprep.subr.bf16.mxu0 0
        %1814 = vmatpush1.bf16.msra.mxu0 %v1664
        %1815 = vmatprep.subr.bf16.mxu0 0
        %1816 = vmatpush1.bf16.msra.mxu0 %v1665
        %1817 = vmatprep.subr.bf16.mxu0 0
        %1818 = vmatpush1.bf16.msra.mxu0 %v1666
        %1819 = vmatprep.subr.bf16.mxu0 0
        %1820 = vmatpush1.bf16.msra.mxu0 %v1667
        %1821 = vmatprep.subr.bf16.mxu0 0
        %1822 = vmatpush1.bf16.msra.mxu0 0
        %1823 = vmatprep.subr.bf16.mxu0 0
        %1824 = vmatpush1.bf16.msra.mxu0 0
        %1825 = vmatprep.subr.bf16.mxu0 0
        %1826 = vmatpush1.bf16.msra.mxu0 0
        %1827 = vmatprep.subr.bf16.mxu0 0
        %1828 = vmatpush1.bf16.msra.mxu0 0
        %1829 = vmatprep.subr.bf16.mxu0 0
        %1830 = vmatpush1.bf16.msra.mxu0 0
        %1831 = vmatprep.subr.bf16.mxu0 0
        %1832 = vmatpush1.bf16.msra.mxu0 0
        %1833 = vmatprep.subr.bf16.mxu0 0
        %1834 = vmatpush1.bf16.msra.mxu0 0
        %1835 = vmatprep.subr.bf16.mxu0 0
        %1836 = vmatpush1.bf16.msra.mxu0 0
        %1837 = vmatprep.mubr.bf16.mxu0 0
        %1838 = vmatmul.mubr.bf16.gmra.mrb[0].mxu0 %v622
        %v1839 = vpop.f32.mrb[0].mxu0
        %v1840 = vadd.f32 %v1727, %v1839
        %v1841 = vpop.f32.mrb[0].mxu0
        %v1842 = vpop.f32.mrb[0].mxu0
        %v1843 = vadd.f32 %v1730, %v1842
        %v1844 = vpop.f32.mrb[0].mxu0
        %1845 = vmatprep.mubr.bf16.mxu0 0
        %1846 = vmatmul.mubr.bf16.gmra.mrb[0].mxu0 %v625
        %v1847 = vpop.f32.mrb[0].mxu0
        %v1848 = vadd.f32 %v1735, %v1847
        %v1849 = vpop.f32.mrb[0].mxu0
        %v1850 = vpop.f32.mrb[0].mxu0
        %v1851 = vadd.f32 %v1738, %v1850
        %v1852 = vpop.f32.mrb[0].mxu0
        %1853 = vmatprep.mubr.bf16.mxu0 0
        %1854 = vmatmul.mubr.bf16.gmra.mrb[0].mxu0 %v628
        %v1855 = vpop.f32.mrb[0].mxu0
        %v1856 = vadd.f32 %v1743, %v1855
        %v1857 = vpop.f32.mrb[0].mxu0
        %v1858 = vpop.f32.mrb[0].mxu0
        %v1859 = vadd.f32 %v1746, %v1858
        %v1860 = vpop.f32.mrb[0].mxu0
        %1861 = vmatprep.mubr.bf16.mxu0 0
        %1862 = vmatmul.mubr.bf16.gmra.mrb[0].mxu0 %v631
        %v1863 = vpop.f32.mrb[0].mxu0
        %v1864 = vadd.f32 %v1751, %v1863
        %v1865 = vpop.f32.mrb[0].mxu0
        %v1866 = vpop.f32.mrb[0].mxu0
        %v1867 = vadd.f32 %v1754, %v1866
        %v1868 = vpop.f32.mrb[0].mxu0
        %1869 = vmatprep.mubr.bf16.mxu0 0
        %1870 = vmatmul.mubr.bf16.gmra.mrb[0].mxu0 %v634
        %v1871 = vpop.f32.mrb[0].mxu0
        %v1872 = vadd.f32 %v1759, %v1871
        %v1873 = vpop.f32.mrb[0].mxu0
        %v1874 = vpop.f32.mrb[0].mxu0
        %v1875 = vadd.f32 %v1762, %v1874
        %v1876 = vpop.f32.mrb[0].mxu0
        %1877 = vmatprep.mubr.bf16.mxu0 0
        %1878 = vmatmul.mubr.bf16.gmra.mrb[0].mxu0 %v637
        %v1879 = vpop.f32.mrb[0].mxu0
        %v1880 = vadd.f32 %v1767, %v1879
        %v1881 = vpop.f32.mrb[0].mxu0
        %v1882 = vpop.f32.mrb[0].mxu0
        %v1883 = vadd.f32 %v1770, %v1882
        %v1884 = vpop.f32.mrb[0].mxu0
        %1885 = vmatprep.mubr.bf16.mxu0 0
        %1886 = vmatmul.mubr.bf16.gmra.mrb[0].mxu0 %v640
        %v1887 = vpop.f32.mrb[0].mxu0
        %v1888 = vadd.f32 %v1775, %v1887
        %v1889 = vpop.f32.mrb[0].mxu0
        %v1890 = vpop.f32.mrb[0].mxu0
        %v1891 = vadd.f32 %v1778, %v1890
        %v1892 = vpop.f32.mrb[0].mxu0
        %1893 = vmatprep.mubr.bf16.mxu0 0
        %1894 = vmatmul.mubr.bf16.gmra.mrb[0].mxu0 %v643
        %v1895 = vpop.f32.mrb[0].mxu0
        %v1896 = vadd.f32 %v1783, %v1895
        %v1897 = vpop.f32.mrb[0].mxu0
        %v1898 = vpop.f32.mrb[0].mxu0
        %v1899 = vadd.f32 %v1786, %v1898
        %v1900 = vpop.f32.mrb[0].mxu0
        %1901 = vmatprep.mubr.bf16.mxu0 0
        %1902 = vmatmul.mubr.bf16.gmra.mrb[0].mxu0 %v646
        %v1903 = vpop.f32.mrb[0].mxu0
        %v1904 = vadd.f32 %v1791, %v1903
        %v1905 = vpop.f32.mrb[0].mxu0
        %v1906 = vpop.f32.mrb[0].mxu0
        %v1907 = vadd.f32 %v1794, %v1906
        %v1908 = vpop.f32.mrb[0].mxu0
        %1909 = vmatprep.mubr.bf16.mxu0 0
        %1910 = vmatmul.mubr.bf16.gmra.mrb[0].mxu0 %v649
        %v1911 = vpop.f32.mrb[0].mxu0
        %v1912 = vadd.f32 %v1799, %v1911
        %v1913 = vpop.f32.mrb[0].mxu0
        %v1914 = vpop.f32.mrb[0].mxu0
        %v1915 = vadd.f32 %v1802, %v1914
        %v1916 = vpop.f32.mrb[0].mxu0
        %1917 = vdwg.mxu0
        %v1918 = vadd.f32 %v1421, %v1840
        %v1919 = vadd.f32 %v1424, %v1843
        %v1920 = vadd.f32 %v1429, %v1848
        %v1921 = vadd.f32 %v1432, %v1851
        %v1922 = vadd.f32 %v1437, %v1856
        %v1923 = vadd.f32 %v1440, %v1859
        %v1924 = vadd.f32 %v1445, %v1864
        %v1925 = vadd.f32 %v1448, %v1867
        %v1926 = vadd.f32 %v1453, %v1872
        %v1927 = vadd.f32 %v1456, %v1875
        %v1928 = vadd.f32 %v1461, %v1880
        %v1929 = vadd.f32 %v1464, %v1883
        %v1930 = vadd.f32 %v1469, %v1888
        %v1931 = vadd.f32 %v1472, %v1891
        %v1932 = vadd.f32 %v1477, %v1896
        %v1933 = vadd.f32 %v1480, %v1899
        %v1934 = vadd.f32 %v1485, %v1904
        %v1935 = vadd.f32 %v1488, %v1907
        %v1936 = vadd.f32 %v1493, %v1912
        %v1937 = vadd.f32 %v1496, %v1915
        %v1938 = vld [vmem:[%s2] sm:$0x1]
        %v1940 = vlaneseq
        %v1941 = vshrl.u32 %v1940, 7
        %v1942 = vsub.s32 0, %v1941
        %v1943 = vrot.slane %v1938, %v1942
        %v1945 = vadd.f32 %v1918, %v1943
        %v1946 = vadd.f32 %v1919, %v1943
        %v1947 = vadd.f32 %v1920, %v1943
        %v1948 = vadd.f32 %v1921, %v1943
        %v1949 = vadd.f32 %v1922, %v1943
        %v1950 = vadd.f32 %v1923, %v1943
        %v1951 = vadd.f32 %v1924, %v1943
        %v1952 = vadd.f32 %v1925, %v1943
        %v1953 = vadd.f32 %v1926, %v1943
        %v1954 = vadd.f32 %v1927, %v1943
        %v1955 = vadd.f32 %v1928, %v1943
        %v1956 = vadd.f32 %v1929, %v1943
        %v1957 = vadd.f32 %v1930, %v1943
        %v1958 = vadd.f32 %v1931, %v1943
        %v1959 = vadd.f32 %v1932, %v1943
        %v1960 = vadd.f32 %v1933, %v1943
        %v1961 = vadd.f32 %v1934, %v1943
        %v1962 = vadd.f32 %v1935, %v1943
        %v1963 = vadd.f32 %v1936, %v1943
        %v1964 = vadd.f32 %v1937, %v1943
        %v1965 = vmax.f32 %v1945, 0.0
        %v1966 = vmax.f32 %v1946, 0.0
        %v1967 = vmax.f32 %v1947, 0.0
        %v1968 = vmax.f32 %v1948, 0.0
        %v1969 = vmax.f32 %v1949, 0.0
        %v1970 = vmax.f32 %v1950, 0.0
        %v1971 = vmax.f32 %v1951, 0.0
        %v1972 = vmax.f32 %v1952, 0.0
        %v1973 = vmax.f32 %v1953, 0.0
        %v1974 = vmax.f32 %v1954, 0.0
        %v1975 = vmax.f32 %v1955, 0.0
        %v1976 = vmax.f32 %v1956, 0.0
        %v1977 = vmax.f32 %v1957, 0.0
        %v1978 = vmax.f32 %v1958, 0.0
        %v1979 = vmax.f32 %v1959, 0.0
        %v1980 = vmax.f32 %v1960, 0.0
        %v1981 = vmax.f32 %v1961, 0.0
        %v1982 = vmax.f32 %v1962, 0.0
        %v1983 = vmax.f32 %v1963, 0.0
        %v1984 = vmax.f32 %v1964, 0.0
        %vm1985 = vcmask 1047559
        %vm1986 = vsmask.f32 7966
        %vm1987 = vmand %vm1985, %vm1986
        %v1988 = vld [vmem:[#allocation2] sm:$0x80]
        %v1989 = vsel %vm1987, 0, %v1988
        %1990 = vst [vmem:[#allocation2] sm:$0x80] %v1989
        %v1991 = vld [vmem:[#allocation2 + $0x18] sm:$0x80]
        %v1992 = vsel %vm1987, 0, %v1991
        %1993 = vst [vmem:[#allocation2 + $0x18] sm:$0x80] %v1992
        %v1994 = vld [vmem:[#allocation2 + $0x30] sm:$0x80]
        %v1995 = vsel %vm1987, 0, %v1994
        %1996 = vst [vmem:[#allocation2 + $0x30] sm:$0x80] %v1995
        %v1997 = vld [vmem:[#allocation2 + $0x48] sm:$0x80]
        %v1998 = vsel %vm1987, 0, %v1997
        %1999 = vst [vmem:[#allocation2 + $0x48] sm:$0x80] %v1998
        %v2000 = vld [vmem:[#allocation2 + $0x60] sm:$0x80]
        %v2001 = vsel %vm1987, 0, %v2000
        %2002 = vst [vmem:[#allocation2 + $0x60] sm:$0x80] %v2001
        %v2003 = vld [vmem:[#allocation2 + $0x78] sm:$0x80]
        %v2004 = vsel %vm1987, 0, %v2003
        %2005 = vst [vmem:[#allocation2 + $0x78] sm:$0x80] %v2004
        %v2006 = vld [vmem:[#allocation2 + $0x90] sm:$0x80]
        %v2007 = vsel %vm1987, 0, %v2006
        %2008 = vst [vmem:[#allocation2 + $0x90] sm:$0x80] %v2007
        %v2009 = vld [vmem:[#allocation2 + $0xa8] sm:$0x80]
        %v2010 = vsel %vm1987, 0, %v2009
        %2011 = vst [vmem:[#allocation2 + $0xa8] sm:$0x80] %v2010
        %v2012 = vld [vmem:[#allocation2 + $0xc0] sm:$0x80]
        %v2013 = vsel %vm1987, 0, %v2012
        %2014 = vst [vmem:[#allocation2 + $0xc0] sm:$0x80] %v2013
        %v2015 = vld [vmem:[#allocation2 + $0xd8] sm:$0x80]
        %v2016 = vsel %vm1987, 0, %v2015
        %2017 = vst [vmem:[#allocation2 + $0xd8] sm:$0x80] %v2016
        %vm2018 = vcmask 1040384
        %vm2019 = vsmask.f32 256
        %vm2020 = vmand %vm2018, %vm2019
        %v2021 = vld [vmem:[#allocation2 + $0x10] sm:$0x1]
        %v2022 = vsel %vm2020, 0, %v2021
        %2023 = vst [vmem:[#allocation2 + $0x10] sm:$0x1] %v2022
        %v2024 = vld [vmem:[#allocation2 + $0x28] sm:$0x1]
        %v2025 = vsel %vm2020, 0, %v2024
        %2026 = vst [vmem:[#allocation2 + $0x28] sm:$0x1] %v2025
        %v2027 = vld [vmem:[#allocation2 + $0x40] sm:$0x1]
        %v2028 = vsel %vm2020, 0, %v2027
        %2029 = vst [vmem:[#allocation2 + $0x40] sm:$0x1] %v2028
        %v2030 = vld [vmem:[#allocation2 + $0x58] sm:$0x1]
        %v2031 = vsel %vm2020, 0, %v2030
        %2032 = vst [vmem:[#allocation2 + $0x58] sm:$0x1] %v2031
        %v2033 = vld [vmem:[#allocation2 + $0x70] sm:$0x1]
        %v2034 = vsel %vm2020, 0, %v2033
        %2035 = vst [vmem:[#allocation2 + $0x70] sm:$0x1] %v2034
        %v2036 = vld [vmem:[#allocation2 + $0x88] sm:$0x1]
        %v2037 = vsel %vm2020, 0, %v2036
        %2038 = vst [vmem:[#allocation2 + $0x88] sm:$0x1] %v2037
        %v2039 = vld [vmem:[#allocation2 + $0xa0] sm:$0x1]
        %v2040 = vsel %vm2020, 0, %v2039
        %2041 = vst [vmem:[#allocation2 + $0xa0] sm:$0x1] %v2040
        %v2042 = vld [vmem:[#allocation2 + $0xb8] sm:$0x1]
        %v2043 = vsel %vm2020, 0, %v2042
        %2044 = vst [vmem:[#allocation2 + $0xb8] sm:$0x1] %v2043
        %v2045 = vld [vmem:[#allocation2 + $0xd0] sm:$0x1]
        %v2046 = vsel %vm2020, 0, %v2045
        %2047 = vst [vmem:[#allocation2 + $0xd0] sm:$0x1] %v2046
        %v2048 = vld [vmem:[#allocation2 + $0xe8] sm:$0x1]
        %v2049 = vsel %vm2020, 0, %v2048
        %2050 = vst [vmem:[#allocation2 + $0xe8] sm:$0x1] %v2049
        %v2051 = vpack.c.bf16 %v1966, %v1965
        %v2052 = vpack.c.bf16 %v1968, %v1967
        %v2053 = vpack.c.bf16 %v1970, %v1969
        %v2054 = vpack.c.bf16 %v1972, %v1971
        %v2055 = vpack.c.bf16 %v1974, %v1973
        %v2056 = vpack.c.bf16 %v1976, %v1975
        %v2057 = vpack.c.bf16 %v1978, %v1977
        %v2058 = vpack.c.bf16 %v1980, %v1979
        %v2059 = vpack.c.bf16 %v1982, %v1981
        %v2060 = vpack.c.bf16 %v1984, %v1983
        %2061 = vst [vmem:[#allocation2 + $0x8] sm:$0xff] %v2051
        %2062 = vst [vmem:[#allocation2 + $0x20] sm:$0xff] %v2052
        %2063 = vst [vmem:[#allocation2 + $0x38] sm:$0xff] %v2053
        %2064 = vst [vmem:[#allocation2 + $0x50] sm:$0xff] %v2054
        %2065 = vst [vmem:[#allocation2 + $0x68] sm:$0xff] %v2055
        %2066 = vst [vmem:[#allocation2 + $0x80] sm:$0xff] %v2056
        %2067 = vst [vmem:[#allocation2 + $0x98] sm:$0xff] %v2057
        %2068 = vst [vmem:[#allocation2 + $0xb0] sm:$0xff] %v2058
        %2069 = vst [vmem:[#allocation2 + $0xc8] sm:$0xff] %v2059
        %2070 = vst [vmem:[#allocation2 + $0xe0] sm:$0xff] %v2060
        %p2071 = scmp.eq.s32.totalorder %s27, 0
        // Predicated region
        $region53: #{tpu_custom_call.1} parent=47 // pred_check
          %p2072 = pneg %p2071
        $region54: #{tpu_custom_call.1} parent=47 // pred_check_branch
          %2074 = sbr.rel (%p2072) target = $region56
        $region55: #{tpu_custom_call.1} parent=47 // pred_region
          %2075 = vst [vmem:[#allocation2] sm:$0xff] 0
          %2076 = vst [vmem:[#allocation2 + $0x8] sm:$0xff] 0
          %2077 = vst [vmem:[#allocation2 + $0x10] sm:$0xff] 0
        $region56: #{tpu_custom_call.1} parent=47 // pred_fallthru
          _
        %p2078 = scmp.eq.s32.totalorder %s27, 1
        // Predicated region
        $region57: #{tpu_custom_call.1} parent=47 // pred_check
          %p2079 = pneg %p2078
        $region58: #{tpu_custom_call.1} parent=47 // pred_check_branch
          %2081 = sbr.rel (%p2079) target = $region60
        $region59: #{tpu_custom_call.1} parent=47 // pred_region
          %s2082 = scalar_lea.vmem [#allocation2], 216
          %2083 = vst [vmem:[%s2082] sm:$0xff] 0
          %2084 = vst [vmem:[%s2082 + $0x8] sm:$0xff] 0
          %2085 = vst [vmem:[%s2082 + $0x10] sm:$0xff] 0
        $region60: #{tpu_custom_call.1} parent=47 // pred_fallthru
          _
        %v2086 = vld [vmem:[#allocation2] sm:$0x80]
        %v2087 = vld [vmem:[#allocation2 + $0x8] sm:$0xff]
        %v2088 = vld [vmem:[#allocation2 + $0x18] sm:$0x80]
        %v2089 = vld [vmem:[#allocation2 + $0x20] sm:$0xff]
        %v2090 = vld [vmem:[#allocation2 + $0x30] sm:$0x80]
        %v2091 = vld [vmem:[#allocation2 + $0x38] sm:$0xff]
        %v2092 = vld [vmem:[#allocation2 + $0x48] sm:$0x80]
        %v2093 = vld [vmem:[#allocation2 + $0x50] sm:$0xff]
        %v2094 = vld [vmem:[#allocation2 + $0x60] sm:$0x80]
        %v2095 = vld [vmem:[#allocation2 + $0x68] sm:$0xff]
        %v2096 = vld [vmem:[#allocation2 + $0x78] sm:$0x80]
        %v2097 = vld [vmem:[#allocation2 + $0x80] sm:$0xff]
        %v2098 = vld [vmem:[#allocation2 + $0x90] sm:$0x80]
        %v2099 = vld [vmem:[#allocation2 + $0x98] sm:$0xff]
        %v2100 = vld [vmem:[#allocation2 + $0xa8] sm:$0x80]
        %v2101 = vld [vmem:[#allocation2 + $0xb0] sm:$0xff]
        %v2102 = vld [vmem:[#allocation2 + $0xc0] sm:$0x80]
        %v2103 = vld [vmem:[#allocation2 + $0xc8] sm:$0xff]
        %v2104 = vld [vmem:[#allocation2 + $0xd8] sm:$0x80]
        %v2105 = vld [vmem:[#allocation2 + $0xe0] sm:$0xff]
        %v2106 = vld [vmem:[#allocation2 + $0x8] sm:$0xff]
        %v2107 = vld [vmem:[#allocation2 + $0x10] sm:$0x1]
        %v2108 = vld [vmem:[#allocation2 + $0x20] sm:$0xff]
        %v2109 = vld [vmem:[#allocation2 + $0x28] sm:$0x1]
        %v2110 = vld [vmem:[#allocation2 + $0x38] sm:$0xff]
        %v2111 = vld [vmem:[#allocation2 + $0x40] sm:$0x1]
        %v2112 = vld [vmem:[#allocation2 + $0x50] sm:$0xff]
        %v2113 = vld [vmem:[#allocation2 + $0x58] sm:$0x1]
        %v2114 = vld [vmem:[#allocation2 + $0x68] sm:$0xff]
        %v2115 = vld [vmem:[#allocation2 + $0x70] sm:$0x1]
        %v2116 = vld [vmem:[#allocation2 + $0x80] sm:$0xff]
        %v2117 = vld [vmem:[#allocation2 + $0x88] sm:$0x1]
        %v2118 = vld [vmem:[#allocation2 + $0x98] sm:$0xff]
        %v2119 = vld [vmem:[#allocation2 + $0xa0] sm:$0x1]
        %v2120 = vld [vmem:[#allocation2 + $0xb0] sm:$0xff]
        %v2121 = vld [vmem:[#allocation2 + $0xb8] sm:$0x1]
        %v2122 = vld [vmem:[#allocation2 + $0xc8] sm:$0xff]
        %v2123 = vld [vmem:[#allocation2 + $0xd0] sm:$0x1]
        %v2124 = vld [vmem:[#allocation2 + $0xe0] sm:$0xff]
        %v2125 = vld [vmem:[#allocation2 + $0xe8] sm:$0x1]
        %v2127 = vshll.u32 %v2087, 16
        %v2129 = vrot.slane %v2127, 1
        %v2130 = vshrl.u32 %v2087, 16
        %v2132 = vor.u32 %v2130, %v2129
        %v2134 = vshll.u32 %v2089, 16
        %v2136 = vrot.slane %v2134, 1
        %v2137 = vshrl.u32 %v2089, 16
        %v2139 = vor.u32 %v2137, %v2136
        %v2141 = vshll.u32 %v2091, 16
        %v2143 = vrot.slane %v2141, 1
        %v2144 = vshrl.u32 %v2091, 16
        %v2146 = vor.u32 %v2144, %v2143
        %v2148 = vshll.u32 %v2093, 16
        %v2150 = vrot.slane %v2148, 1
        %v2151 = vshrl.u32 %v2093, 16
        %v2153 = vor.u32 %v2151, %v2150
        %v2155 = vshll.u32 %v2095, 16
        %v2157 = vrot.slane %v2155, 1
        %v2158 = vshrl.u32 %v2095, 16
        %v2160 = vor.u32 %v2158, %v2157
        %v2162 = vshll.u32 %v2097, 16
        %v2164 = vrot.slane %v2162, 1
        %v2165 = vshrl.u32 %v2097, 16
        %v2167 = vor.u32 %v2165, %v2164
        %v2169 = vshll.u32 %v2099, 16
        %v2171 = vrot.slane %v2169, 1
        %v2172 = vshrl.u32 %v2099, 16
        %v2174 = vor.u32 %v2172, %v2171
        %v2176 = vshll.u32 %v2101, 16
        %v2178 = vrot.slane %v2176, 1
        %v2179 = vshrl.u32 %v2101, 16
        %v2181 = vor.u32 %v2179, %v2178
        %v2183 = vshll.u32 %v2103, 16
        %v2185 = vrot.slane %v2183, 1
        %v2186 = vshrl.u32 %v2103, 16
        %v2188 = vor.u32 %v2186, %v2185
        %v2190 = vshll.u32 %v2105, 16
        %v2192 = vrot.slane %v2190, 1
        %v2193 = vshrl.u32 %v2105, 16
        %v2195 = vor.u32 %v2193, %v2192
        %v2216 = vrot.slane %v2106, 1
        %v2217 = vrot.slane %v2107, 1
        %v2218 = vsel %vm613, %v2216, %v2217
        %v2219 = vrot.slane %v2108, 1
        %v2220 = vrot.slane %v2109, 1
        %v2221 = vsel %vm613, %v2219, %v2220
        %v2222 = vrot.slane %v2110, 1
        %v2223 = vrot.slane %v2111, 1
        %v2224 = vsel %vm613, %v2222, %v2223
        %v2225 = vrot.slane %v2112, 1
        %v2226 = vrot.slane %v2113, 1
        %v2227 = vsel %vm613, %v2225, %v2226
        %v2228 = vrot.slane %v2114, 1
        %v2229 = vrot.slane %v2115, 1
        %v2230 = vsel %vm613, %v2228, %v2229
        %v2231 = vrot.slane %v2116, 1
        %v2232 = vrot.slane %v2117, 1
        %v2233 = vsel %vm613, %v2231, %v2232
        %v2234 = vrot.slane %v2118, 1
        %v2235 = vrot.slane %v2119, 1
        %v2236 = vsel %vm613, %v2234, %v2235
        %v2237 = vrot.slane %v2120, 1
        %v2238 = vrot.slane %v2121, 1
        %v2239 = vsel %vm613, %v2237, %v2238
        %v2240 = vrot.slane %v2122, 1
        %v2241 = vrot.slane %v2123, 1
        %v2242 = vsel %vm613, %v2240, %v2241
        %v2243 = vrot.slane %v2124, 1
        %v2244 = vrot.slane %v2125, 1
        %v2245 = vsel %vm613, %v2243, %v2244
        %v2247 = vshrl.u32 %v2086, 16
        %v2249 = vrot.slane %v2247, 7
        %v2250 = vrot.slane %v2130, 7
        %v2251 = vor.u32 %v2250, %v2127
        %v2252 = vsel %vm2019, %v2249, %v2251
        %v2254 = vshrl.u32 %v2129, 16
        %v2256 = vrot.slane %v2254, 7
        %v2258 = vshrl.u32 %v2132, 16
        %v2260 = vrot.slane %v2258, 7
        %v2261 = vshll.u32 %v2132, 16
        %v2263 = vor.u32 %v2260, %v2261
        %v2264 = vsel %vm2019, %v2256, %v2263
        %v2266 = vshrl.u32 %v2216, 16
        %v2268 = vrot.slane %v2266, 7
        %v2270 = vshrl.u32 %v2218, 16
        %v2272 = vrot.slane %v2270, 7
        %v2273 = vshll.u32 %v2218, 16
        %v2275 = vor.u32 %v2272, %v2273
        %v2276 = vsel %vm2019, %v2268, %v2275
        %v2278 = vshrl.u32 %v2088, 16
        %v2280 = vrot.slane %v2278, 7
        %v2281 = vrot.slane %v2137, 7
        %v2282 = vor.u32 %v2281, %v2134
        %v2283 = vsel %vm2019, %v2280, %v2282
        %v2285 = vshrl.u32 %v2136, 16
        %v2287 = vrot.slane %v2285, 7
        %v2289 = vshrl.u32 %v2139, 16
        %v2291 = vrot.slane %v2289, 7
        %v2292 = vshll.u32 %v2139, 16
        %v2294 = vor.u32 %v2291, %v2292
        %v2295 = vsel %vm2019, %v2287, %v2294
        %v2297 = vshrl.u32 %v2219, 16
        %v2299 = vrot.slane %v2297, 7
        %v2301 = vshrl.u32 %v2221, 16
        %v2303 = vrot.slane %v2301, 7
        %v2304 = vshll.u32 %v2221, 16
        %v2306 = vor.u32 %v2303, %v2304
        %v2307 = vsel %vm2019, %v2299, %v2306
        %v2309 = vshrl.u32 %v2090, 16
        %v2311 = vrot.slane %v2309, 7
        %v2312 = vrot.slane %v2144, 7
        %v2313 = vor.u32 %v2312, %v2141
        %v2314 = vsel %vm2019, %v2311, %v2313
        %v2316 = vshrl.u32 %v2143, 16
        %v2318 = vrot.slane %v2316, 7
        %v2320 = vshrl.u32 %v2146, 16
        %v2322 = vrot.slane %v2320, 7
        %v2323 = vshll.u32 %v2146, 16
        %v2325 = vor.u32 %v2322, %v2323
        %v2326 = vsel %vm2019, %v2318, %v2325
        %v2328 = vshrl.u32 %v2222, 16
        %v2330 = vrot.slane %v2328, 7
        %v2332 = vshrl.u32 %v2224, 16
        %v2334 = vrot.slane %v2332, 7
        %v2335 = vshll.u32 %v2224, 16
        %v2337 = vor.u32 %v2334, %v2335
        %v2338 = vsel %vm2019, %v2330, %v2337
        %v2340 = vshrl.u32 %v2092, 16
        %v2342 = vrot.slane %v2340, 7
        %v2343 = vrot.slane %v2151, 7
        %v2344 = vor.u32 %v2343, %v2148
        %v2345 = vsel %vm2019, %v2342, %v2344
        %v2347 = vshrl.u32 %v2150, 16
        %v2349 = vrot.slane %v2347, 7
        %v2351 = vshrl.u32 %v2153, 16
        %v2353 = vrot.slane %v2351, 7
        %v2354 = vshll.u32 %v2153, 16
        %v2356 = vor.u32 %v2353, %v2354
        %v2357 = vsel %vm2019, %v2349, %v2356
        %v2359 = vshrl.u32 %v2225, 16
        %v2361 = vrot.slane %v2359, 7
        %v2363 = vshrl.u32 %v2227, 16
        %v2365 = vrot.slane %v2363, 7
        %v2366 = vshll.u32 %v2227, 16
        %v2368 = vor.u32 %v2365, %v2366
        %v2369 = vsel %vm2019, %v2361, %v2368
        %v2371 = vshrl.u32 %v2094, 16
        %v2373 = vrot.slane %v2371, 7
        %v2374 = vrot.slane %v2158, 7
        %v2375 = vor.u32 %v2374, %v2155
        %v2376 = vsel %vm2019, %v2373, %v2375
        %v2378 = vshrl.u32 %v2157, 16
        %v2380 = vrot.slane %v2378, 7
        %v2382 = vshrl.u32 %v2160, 16
        %v2384 = vrot.slane %v2382, 7
        %v2385 = vshll.u32 %v2160, 16
        %v2387 = vor.u32 %v2384, %v2385
        %v2388 = vsel %vm2019, %v2380, %v2387
        %v2390 = vshrl.u32 %v2228, 16
        %v2392 = vrot.slane %v2390, 7
        %v2394 = vshrl.u32 %v2230, 16
        %v2396 = vrot.slane %v2394, 7
        %v2397 = vshll.u32 %v2230, 16
        %v2399 = vor.u32 %v2396, %v2397
        %v2400 = vsel %vm2019, %v2392, %v2399
        %v2402 = vshrl.u32 %v2096, 16
        %v2404 = vrot.slane %v2402, 7
        %v2405 = vrot.slane %v2165, 7
        %v2406 = vor.u32 %v2405, %v2162
        %v2407 = vsel %vm2019, %v2404, %v2406
        %v2409 = vshrl.u32 %v2164, 16
        %v2411 = vrot.slane %v2409, 7
        %v2413 = vshrl.u32 %v2167, 16
        %v2415 = vrot.slane %v2413, 7
        %v2416 = vshll.u32 %v2167, 16
        %v2418 = vor.u32 %v2415, %v2416
        %v2419 = vsel %vm2019, %v2411, %v2418
        %v2421 = vshrl.u32 %v2231, 16
        %v2423 = vrot.slane %v2421, 7
        %v2425 = vshrl.u32 %v2233, 16
        %v2427 = vrot.slane %v2425, 7
        %v2428 = vshll.u32 %v2233, 16
        %v2430 = vor.u32 %v2427, %v2428
        %v2431 = vsel %vm2019, %v2423, %v2430
        %v2433 = vshrl.u32 %v2098, 16
        %v2435 = vrot.slane %v2433, 7
        %v2436 = vrot.slane %v2172, 7
        %v2437 = vor.u32 %v2436, %v2169
        %v2438 = vsel %vm2019, %v2435, %v2437
        %v2440 = vshrl.u32 %v2171, 16
        %v2442 = vrot.slane %v2440, 7
        %v2444 = vshrl.u32 %v2174, 16
        %v2446 = vrot.slane %v2444, 7
        %v2447 = vshll.u32 %v2174, 16
        %v2449 = vor.u32 %v2446, %v2447
        %v2450 = vsel %vm2019, %v2442, %v2449
        %v2452 = vshrl.u32 %v2234, 16
        %v2454 = vrot.slane %v2452, 7
        %v2456 = vshrl.u32 %v2236, 16
        %v2458 = vrot.slane %v2456, 7
        %v2459 = vshll.u32 %v2236, 16
        %v2461 = vor.u32 %v2458, %v2459
        %v2462 = vsel %vm2019, %v2454, %v2461
        %v2464 = vshrl.u32 %v2100, 16
        %v2466 = vrot.slane %v2464, 7
        %v2467 = vrot.slane %v2179, 7
        %v2468 = vor.u32 %v2467, %v2176
        %v2469 = vsel %vm2019, %v2466, %v2468
        %v2471 = vshrl.u32 %v2178, 16
        %v2473 = vrot.slane %v2471, 7
        %v2475 = vshrl.u32 %v2181, 16
        %v2477 = vrot.slane %v2475, 7
        %v2478 = vshll.u32 %v2181, 16
        %v2480 = vor.u32 %v2477, %v2478
        %v2481 = vsel %vm2019, %v2473, %v2480
        %v2483 = vshrl.u32 %v2237, 16
        %v2485 = vrot.slane %v2483, 7
        %v2487 = vshrl.u32 %v2239, 16
        %v2489 = vrot.slane %v2487, 7
        %v2490 = vshll.u32 %v2239, 16
        %v2492 = vor.u32 %v2489, %v2490
        %v2493 = vsel %vm2019, %v2485, %v2492
        %v2518 = vld [vmem:[#allocation3] sm:$0xf]
        %v2519 = vld [vmem:[#allocation3 + $0x4] sm:$0xf]
        %v2520 = vld [vmem:[#allocation3 + $0x8] sm:$0xf]
        %v2521 = vld [vmem:[#allocation3 + $0xc] sm:$0xf]
        %v2522 = vld [vmem:[#allocation3 + $0x10] sm:$0xf]
        %v2523 = vld [vmem:[#allocation3 + $0x14] sm:$0xf]
        %v2524 = vld [vmem:[#allocation3 + $0x18] sm:$0xf]
        %v2525 = vld [vmem:[#allocation3 + $0x1c] sm:$0xf]
        %v2526 = vld [vmem:[#allocation3 + $0x20] sm:$0xf]
        %v2527 = vld [vmem:[#allocation3 + $0x24] sm:$0xf]
        %v2528 = vld [vmem:[#allocation3 + $0x28] sm:$0xf]
        %v2529 = vld [vmem:[#allocation3 + $0x2c] sm:$0xf]
        %v2530 = vld [vmem:[#allocation3 + $0x30] sm:$0xf]
        %v2531 = vld [vmem:[#allocation3 + $0x34] sm:$0xf]
        %v2532 = vld [vmem:[#allocation3 + $0x38] sm:$0xf]
        %v2533 = vld [vmem:[#allocation3 + $0x3c] sm:$0xf]
        %v2534 = vld [vmem:[#allocation3 + $0x40] sm:$0xf]
        %v2535 = vld [vmem:[#allocation3 + $0x44] sm:$0xf]
        %v2536 = vld [vmem:[#allocation3 + $0x48] sm:$0xf]
        %v2537 = vld [vmem:[#allocation3 + $0x4c] sm:$0xf]
        %v2538 = vld [vmem:[#allocation3 + $0x50] sm:$0xf]
        %v2539 = vld [vmem:[#allocation3 + $0x54] sm:$0xf]
        %v2540 = vld [vmem:[#allocation3 + $0x58] sm:$0xf]
        %v2541 = vld [vmem:[#allocation3 + $0x5c] sm:$0xf]
        %v2542 = vld [vmem:[#allocation3 + $0x60] sm:$0xf]
        %v2543 = vld [vmem:[#allocation3 + $0x64] sm:$0xf]
        %v2544 = vld [vmem:[#allocation3 + $0x68] sm:$0xf]
        %v2545 = vld [vmem:[#allocation3 + $0x6c] sm:$0xf]
        %v2546 = vld [vmem:[#allocation3 + $0x70] sm:$0xf]
        %v2547 = vld [vmem:[#allocation3 + $0x74] sm:$0xf]
        %v2548 = vld [vmem:[#allocation3 + $0x78] sm:$0xf]
        %v2549 = vld [vmem:[#allocation3 + $0x7c] sm:$0xf]
        %v2550 = vld [vmem:[#allocation3 + $0x80] sm:$0xf]
        %v2551 = vld [vmem:[#allocation3 + $0x84] sm:$0xf]
        %v2552 = vld [vmem:[#allocation3 + $0x88] sm:$0xf]
        %v2553 = vld [vmem:[#allocation3 + $0x8c] sm:$0xf]
        %v2554 = vld [vmem:[#allocation3 + $0x90] sm:$0xf]
        %v2555 = vld [vmem:[#allocation3 + $0x94] sm:$0xf]
        %v2556 = vld [vmem:[#allocation3 + $0x98] sm:$0xf]
        %v2557 = vld [vmem:[#allocation3 + $0x9c] sm:$0xf]
        %v2558 = vld [vmem:[#allocation3 + $0xa0] sm:$0xf]
        %v2559 = vld [vmem:[#allocation3 + $0xa4] sm:$0xf]
        %v2560 = vld [vmem:[#allocation3 + $0xa8] sm:$0xf]
        %v2561 = vld [vmem:[#allocation3 + $0xac] sm:$0xf]
        %v2562 = vld [vmem:[#allocation3 + $0xb0] sm:$0xf]
        %v2563 = vld [vmem:[#allocation3 + $0xb4] sm:$0xf]
        %v2564 = vld [vmem:[#allocation3 + $0xb8] sm:$0xf]
        %v2565 = vld [vmem:[#allocation3 + $0xbc] sm:$0xf]
        %v2567 = vshrl.u32 %v2102, 16
        %v2569 = vrot.slane %v2567, 7
        %v2570 = vrot.slane %v2186, 7
        %v2571 = vor.u32 %v2570, %v2183
        %v2572 = vsel %vm2019, %v2569, %v2571
        %v2574 = vshrl.u32 %v2185, 16
        %v2576 = vrot.slane %v2574, 7
        %v2578 = vshrl.u32 %v2188, 16
        %v2580 = vrot.slane %v2578, 7
        %v2581 = vshll.u32 %v2188, 16
        %v2583 = vor.u32 %v2580, %v2581
        %v2584 = vsel %vm2019, %v2576, %v2583
        %v2586 = vshrl.u32 %v2240, 16
        %v2588 = vrot.slane %v2586, 7
        %v2590 = vshrl.u32 %v2242, 16
        %v2592 = vrot.slane %v2590, 7
        %v2593 = vshll.u32 %v2242, 16
        %v2595 = vor.u32 %v2592, %v2593
        %v2596 = vsel %vm2019, %v2588, %v2595
        %s2600 = scalar_lea.vmem [#allocation3], 192
        %v2601 = vld [vmem:[%s2600] sm:$0xf]
        %v2602 = vld [vmem:[%s2600 + $0x4] sm:$0xf]
        %v2603 = vld [vmem:[%s2600 + $0x8] sm:$0xf]
        %v2604 = vld [vmem:[%s2600 + $0xc] sm:$0xf]
        %v2605 = vld [vmem:[%s2600 + $0x10] sm:$0xf]
        %v2606 = vld [vmem:[%s2600 + $0x14] sm:$0xf]
        %v2607 = vld [vmem:[%s2600 + $0x18] sm:$0xf]
        %v2608 = vld [vmem:[%s2600 + $0x1c] sm:$0xf]
        %v2609 = vld [vmem:[%s2600 + $0x20] sm:$0xf]
        %v2610 = vld [vmem:[%s2600 + $0x24] sm:$0xf]
        %v2611 = vld [vmem:[%s2600 + $0x28] sm:$0xf]
        %v2612 = vld [vmem:[%s2600 + $0x2c] sm:$0xf]
        %v2613 = vld [vmem:[%s2600 + $0x30] sm:$0xf]
        %v2614 = vld [vmem:[%s2600 + $0x34] sm:$0xf]
        %v2615 = vld [vmem:[%s2600 + $0x38] sm:$0xf]
        %v2616 = vld [vmem:[%s2600 + $0x3c] sm:$0xf]
        %v2617 = vld [vmem:[%s2600 + $0x40] sm:$0xf]
        %v2618 = vld [vmem:[%s2600 + $0x44] sm:$0xf]
        %v2619 = vld [vmem:[%s2600 + $0x48] sm:$0xf]
        %v2620 = vld [vmem:[%s2600 + $0x4c] sm:$0xf]
        %v2621 = vld [vmem:[%s2600 + $0x50] sm:$0xf]
        %v2622 = vld [vmem:[%s2600 + $0x54] sm:$0xf]
        %v2623 = vld [vmem:[%s2600 + $0x58] sm:$0xf]
        %v2624 = vld [vmem:[%s2600 + $0x5c] sm:$0xf]
        %v2625 = vld [vmem:[%s2600 + $0x60] sm:$0xf]
        %v2626 = vld [vmem:[%s2600 + $0x64] sm:$0xf]
        %v2627 = vld [vmem:[%s2600 + $0x68] sm:$0xf]
        %v2628 = vld [vmem:[%s2600 + $0x6c] sm:$0xf]
        %v2629 = vld [vmem:[%s2600 + $0x70] sm:$0xf]
        %v2630 = vld [vmem:[%s2600 + $0x74] sm:$0xf]
        %v2631 = vld [vmem:[%s2600 + $0x78] sm:$0xf]
        %v2632 = vld [vmem:[%s2600 + $0x7c] sm:$0xf]
        %v2633 = vld [vmem:[%s2600 + $0x80] sm:$0xf]
        %v2634 = vld [vmem:[%s2600 + $0x84] sm:$0xf]
        %v2635 = vld [vmem:[%s2600 + $0x88] sm:$0xf]
        %v2636 = vld [vmem:[%s2600 + $0x8c] sm:$0xf]
        %v2637 = vld [vmem:[%s2600 + $0x90] sm:$0xf]
        %v2638 = vld [vmem:[%s2600 + $0x94] sm:$0xf]
        %v2639 = vld [vmem:[%s2600 + $0x98] sm:$0xf]
        %v2640 = vld [vmem:[%s2600 + $0x9c] sm:$0xf]
        %v2641 = vld [vmem:[%s2600 + $0xa0] sm:$0xf]
        %v2642 = vld [vmem:[%s2600 + $0xa4] sm:$0xf]
        %v2643 = vld [vmem:[%s2600 + $0xa8] sm:$0xf]
        %v2644 = vld [vmem:[%s2600 + $0xac] sm:$0xf]
        %v2645 = vld [vmem:[%s2600 + $0xb0] sm:$0xf]
        %v2646 = vld [vmem:[%s2600 + $0xb4] sm:$0xf]
        %v2647 = vld [vmem:[%s2600 + $0xb8] sm:$0xf]
        %v2648 = vld [vmem:[%s2600 + $0xbc] sm:$0xf]
        %v2697 = vunpack.c.l.b16 %v2601
        %v2698 = vunpack.c.l.b16 %v2602
        %v2699 = vunpack.c.l.b16 %v2603
        %v2700 = vunpack.c.l.b16 %v2604
        %v2701 = vunpack.c.l.b16 %v2605
        %v2702 = vunpack.c.l.b16 %v2606
        %v2703 = vunpack.c.l.b16 %v2607
        %v2704 = vunpack.c.l.b16 %v2608
        %v2705 = vunpack.c.l.b16 %v2609
        %v2706 = vunpack.c.l.b16 %v2610
        %v2707 = vunpack.c.l.b16 %v2611
        %v2708 = vunpack.c.l.b16 %v2612
        %v2709 = vunpack.c.l.b16 %v2613
        %v2710 = vunpack.c.l.b16 %v2614
        %v2711 = vunpack.c.l.b16 %v2615
        %v2712 = vunpack.c.l.b16 %v2616
        %v2713 = vunpack.c.l.b16 %v2617
        %v2714 = vunpack.c.l.b16 %v2618
        %v2715 = vunpack.c.l.b16 %v2619
        %v2716 = vunpack.c.l.b16 %v2620
        %v2717 = vunpack.c.l.b16 %v2621
        %v2718 = vunpack.c.l.b16 %v2622
        %v2719 = vunpack.c.l.b16 %v2623
        %v2720 = vunpack.c.l.b16 %v2624
        %v2721 = vunpack.c.l.b16 %v2625
        %v2722 = vunpack.c.l.b16 %v2626
        %v2723 = vunpack.c.l.b16 %v2627
        %v2724 = vunpack.c.l.b16 %v2628
        %v2725 = vunpack.c.l.b16 %v2629
        %v2726 = vunpack.c.l.b16 %v2630
        %v2727 = vunpack.c.l.b16 %v2631
        %v2728 = vunpack.c.l.b16 %v2632
        %v2729 = vunpack.c.l.b16 %v2633
        %v2730 = vunpack.c.l.b16 %v2634
        %v2731 = vunpack.c.l.b16 %v2635
        %v2732 = vunpack.c.l.b16 %v2636
        %v2733 = vunpack.c.l.b16 %v2637
        %v2734 = vunpack.c.l.b16 %v2638
        %v2735 = vunpack.c.l.b16 %v2639
        %v2736 = vunpack.c.l.b16 %v2640
        %v2737 = vunpack.c.l.b16 %v2641
        %v2738 = vunpack.c.l.b16 %v2642
        %v2739 = vunpack.c.l.b16 %v2643
        %v2740 = vunpack.c.l.b16 %v2644
        %v2741 = vunpack.c.l.b16 %v2645
        %v2742 = vunpack.c.l.b16 %v2646
        %v2743 = vunpack.c.l.b16 %v2647
        %v2744 = vunpack.c.l.b16 %v2648
        %v2745 = vpack.c.b16 %v2698, %v2697
        %v2746 = vpack.c.b16 %v2700, %v2699
        %v2747 = vpack.c.b16 %v2702, %v2701
        %v2748 = vpack.c.b16 %v2704, %v2703
        %v2749 = vpack.c.b16 %v2706, %v2705
        %v2750 = vpack.c.b16 %v2708, %v2707
        %v2751 = vpack.c.b16 %v2710, %v2709
        %v2752 = vpack.c.b16 %v2712, %v2711
        %v2753 = vpack.c.b16 %v2714, %v2713
        %v2754 = vpack.c.b16 %v2716, %v2715
        %v2755 = vpack.c.b16 %v2718, %v2717
        %v2756 = vpack.c.b16 %v2720, %v2719
        %v2757 = vpack.c.b16 %v2722, %v2721
        %v2758 = vpack.c.b16 %v2724, %v2723
        %v2759 = vpack.c.b16 %v2726, %v2725
        %v2760 = vpack.c.b16 %v2728, %v2727
        %v2761 = vpack.c.b16 %v2730, %v2729
        %v2762 = vpack.c.b16 %v2732, %v2731
        %v2763 = vpack.c.b16 %v2734, %v2733
        %v2764 = vpack.c.b16 %v2736, %v2735
        %v2765 = vpack.c.b16 %v2738, %v2737
        %v2766 = vpack.c.b16 %v2740, %v2739
        %v2767 = vpack.c.b16 %v2742, %v2741
        %v2768 = vpack.c.b16 %v2744, %v2743
        %2793 = vmatprep.subr.bf16.mxu0 0
        %2794 = vmatpush1.bf16.msra.mxu0 %v2745
        %2795 = vmatprep.subr.bf16.mxu0 0
        %2796 = vmatpush1.bf16.msra.mxu0 %v2746
        %2797 = vmatprep.subr.bf16.mxu0 0
        %2798 = vmatpush1.bf16.msra.mxu0 %v2747
        %2799 = vmatprep.subr.bf16.mxu0 0
        %2800 = vmatpush1.bf16.msra.mxu0 %v2748
        %2801 = vmatprep.subr.bf16.mxu0 0
        %2802 = vmatpush1.bf16.msra.mxu0 %v2749
        %2803 = vmatprep.subr.bf16.mxu0 0
        %2804 = vmatpush1.bf16.msra.mxu0 %v2750
        %2805 = vmatprep.subr.bf16.mxu0 0
        %2806 = vmatpush1.bf16.msra.mxu0 %v2751
        %2807 = vmatprep.subr.bf16.mxu0 0
        %2808 = vmatpush1.bf16.msra.mxu0 %v2752
        %2809 = vmatprep.subr.bf16.mxu0 0
        %2810 = vmatpush1.bf16.msra.mxu0 %v2753
        %2811 = vmatprep.subr.bf16.mxu0 0
        %2812 = vmatpush1.bf16.msra.mxu0 %v2754
        %2813 = vmatprep.subr.bf16.mxu0 0
        %2814 = vmatpush1.bf16.msra.mxu0 %v2755
        %2815 = vmatprep.subr.bf16.mxu0 0
        %2816 = vmatpush1.bf16.msra.mxu0 %v2756
        %2817 = vmatprep.subr.bf16.mxu0 0
        %2818 = vmatpush1.bf16.msra.mxu0 %v2757
        %2819 = vmatprep.subr.bf16.mxu0 0
        %2820 = vmatpush1.bf16.msra.mxu0 %v2758
        %2821 = vmatprep.subr.bf16.mxu0 0
        %2822 = vmatpush1.bf16.msra.mxu0 %v2759
        %2823 = vmatprep.subr.bf16.mxu0 0
        %2824 = vmatpush1.bf16.msra.mxu0 %v2760
        %2825 = vmatprep.mubr.bf16.mxu0 %v2295
        %2826 = vmatmul.mubr.bf16.gmra.mrb[0].mxu0 %v2283
        %v2827 = vpop.f32.mrb[0].mxu0
        %v2828 = vadd.f32 0.0, %v2827
        %v2829 = vpop.f32.mrb[0].mxu0
        %v2830 = vpop.f32.mrb[0].mxu0
        %v2831 = vadd.f32 0.0, %v2830
        %v2832 = vpop.f32.mrb[0].mxu0
        %2833 = vmatprep.mubr.bf16.mxu0 %v2326
        %2834 = vmatmul.mubr.bf16.gmra.mrb[0].mxu0 %v2314
        %v2835 = vpop.f32.mrb[0].mxu0
        %v2836 = vadd.f32 0.0, %v2835
        %v2837 = vpop.f32.mrb[0].mxu0
        %v2838 = vpop.f32.mrb[0].mxu0
        %v2839 = vadd.f32 0.0, %v2838
        %v2840 = vpop.f32.mrb[0].mxu0
        %2841 = vmatprep.mubr.bf16.mxu0 %v2357
        %2842 = vmatmul.mubr.bf16.gmra.mrb[0].mxu0 %v2345
        %v2843 = vpop.f32.mrb[0].mxu0
        %v2844 = vadd.f32 0.0, %v2843
        %v2845 = vpop.f32.mrb[0].mxu0
        %v2846 = vpop.f32.mrb[0].mxu0
        %v2847 = vadd.f32 0.0, %v2846
        %v2848 = vpop.f32.mrb[0].mxu0
        %2849 = vmatprep.mubr.bf16.mxu0 %v2388
        %2850 = vmatmul.mubr.bf16.gmra.mrb[0].mxu0 %v2376
        %v2851 = vpop.f32.mrb[0].mxu0
        %v2852 = vadd.f32 0.0, %v2851
        %v2853 = vpop.f32.mrb[0].mxu0
        %v2854 = vpop.f32.mrb[0].mxu0
        %v2855 = vadd.f32 0.0, %v2854
        %v2856 = vpop.f32.mrb[0].mxu0
        %2857 = vmatprep.mubr.bf16.mxu0 %v2419
        %2858 = vmatmul.mubr.bf16.gmra.mrb[0].mxu0 %v2407
        %v2859 = vpop.f32.mrb[0].mxu0
        %v2860 = vadd.f32 0.0, %v2859
        %v2861 = vpop.f32.mrb[0].mxu0
        %v2862 = vpop.f32.mrb[0].mxu0
        %v2863 = vadd.f32 0.0, %v2862
        %v2864 = vpop.f32.mrb[0].mxu0
        %2865 = vmatprep.mubr.bf16.mxu0 %v2450
        %2866 = vmatmul.mubr.bf16.gmra.mrb[0].mxu0 %v2438
        %v2867 = vpop.f32.mrb[0].mxu0
        %v2868 = vadd.f32 0.0, %v2867
        %v2869 = vpop.f32.mrb[0].mxu0
        %v2870 = vpop.f32.mrb[0].mxu0
        %v2871 = vadd.f32 0.0, %v2870
        %v2872 = vpop.f32.mrb[0].mxu0
        %2873 = vmatprep.mubr.bf16.mxu0 %v2481
        %2874 = vmatmul.mubr.bf16.gmra.mrb[0].mxu0 %v2469
        %v2875 = vpop.f32.mrb[0].mxu0
        %v2876 = vadd.f32 0.0, %v2875
        %v2877 = vpop.f32.mrb[0].mxu0
        %v2878 = vpop.f32.mrb[0].mxu0
        %v2879 = vadd.f32 0.0, %v2878
        %v2880 = vpop.f32.mrb[0].mxu0
        %2881 = vmatprep.mubr.bf16.mxu0 %v2584
        %2882 = vmatmul.mubr.bf16.gmra.mrb[0].mxu0 %v2572
        %v2883 = vpop.f32.mrb[0].mxu0
        %v2884 = vadd.f32 0.0, %v2883
        %v2885 = vpop.f32.mrb[0].mxu0
        %v2886 = vpop.f32.mrb[0].mxu0
        %v2887 = vadd.f32 0.0, %v2886
        %v2888 = vpop.f32.mrb[0].mxu0
        %2889 = vdwg.mxu0
        %2890 = vmatprep.subr.bf16.mxu0 0
        %2891 = vmatpush1.bf16.msra.mxu0 %v2761
        %2892 = vmatprep.subr.bf16.mxu0 0
        %2893 = vmatpush1.bf16.msra.mxu0 %v2762
        %2894 = vmatprep.subr.bf16.mxu0 0
        %2895 = vmatpush1.bf16.msra.mxu0 %v2763
        %2896 = vmatprep.subr.bf16.mxu0 0
        %2897 = vmatpush1.bf16.msra.mxu0 %v2764
        %2898 = vmatprep.subr.bf16.mxu0 0
        %2899 = vmatpush1.bf16.msra.mxu0 %v2765
        %2900 = vmatprep.subr.bf16.mxu0 0
        %2901 = vmatpush1.bf16.msra.mxu0 %v2766
        %2902 = vmatprep.subr.bf16.mxu0 0
        %2903 = vmatpush1.bf16.msra.mxu0 %v2767
        %2904 = vmatprep.subr.bf16.mxu0 0
        %2905 = vmatpush1.bf16.msra.mxu0 %v2768
        %2906 = vmatprep.subr.bf16.mxu0 0
        %2907 = vmatpush1.bf16.msra.mxu0 0
        %2908 = vmatprep.subr.bf16.mxu0 0
        %2909 = vmatpush1.bf16.msra.mxu0 0
        %2910 = vmatprep.subr.bf16.mxu0 0
        %2911 = vmatpush1.bf16.msra.mxu0 0
        %2912 = vmatprep.subr.bf16.mxu0 0
        %2913 = vmatpush1.bf16.msra.mxu0 0
        %2914 = vmatprep.subr.bf16.mxu0 0
        %2915 = vmatpush1.bf16.msra.mxu0 0
        %2916 = vmatprep.subr.bf16.mxu0 0
        %2917 = vmatpush1.bf16.msra.mxu0 0
        %2918 = vmatprep.subr.bf16.mxu0 0
        %2919 = vmatpush1.bf16.msra.mxu0 0
        %2920 = vmatprep.subr.bf16.mxu0 0
        %2921 = vmatpush1.bf16.msra.mxu0 0
        %2922 = vmatprep.mubr.bf16.mxu0 0
        %2923 = vmatmul.mubr.bf16.gmra.mrb[0].mxu0 %v2307
        %v2924 = vpop.f32.mrb[0].mxu0
        %v2925 = vadd.f32 %v2828, %v2924
        %v2926 = vpop.f32.mrb[0].mxu0
        %v2927 = vpop.f32.mrb[0].mxu0
        %v2928 = vadd.f32 %v2831, %v2927
        %v2929 = vpop.f32.mrb[0].mxu0
        %2930 = vmatprep.mubr.bf16.mxu0 0
        %2931 = vmatmul.mubr.bf16.gmra.mrb[0].mxu0 %v2338
        %v2932 = vpop.f32.mrb[0].mxu0
        %v2933 = vadd.f32 %v2836, %v2932
        %v2934 = vpop.f32.mrb[0].mxu0
        %v2935 = vpop.f32.mrb[0].mxu0
        %v2936 = vadd.f32 %v2839, %v2935
        %v2937 = vpop.f32.mrb[0].mxu0
        %2938 = vmatprep.mubr.bf16.mxu0 0
        %2939 = vmatmul.mubr.bf16.gmra.mrb[0].mxu0 %v2369
        %v2940 = vpop.f32.mrb[0].mxu0
        %v2941 = vadd.f32 %v2844, %v2940
        %v2942 = vpop.f32.mrb[0].mxu0
        %v2943 = vpop.f32.mrb[0].mxu0
        %v2944 = vadd.f32 %v2847, %v2943
        %v2945 = vpop.f32.mrb[0].mxu0
        %2946 = vmatprep.mubr.bf16.mxu0 0
        %2947 = vmatmul.mubr.bf16.gmra.mrb[0].mxu0 %v2400
        %v2948 = vpop.f32.mrb[0].mxu0
        %v2949 = vadd.f32 %v2852, %v2948
        %v2950 = vpop.f32.mrb[0].mxu0
        %v2951 = vpop.f32.mrb[0].mxu0
        %v2952 = vadd.f32 %v2855, %v2951
        %v2953 = vpop.f32.mrb[0].mxu0
        %2954 = vmatprep.mubr.bf16.mxu0 0
        %2955 = vmatmul.mubr.bf16.gmra.mrb[0].mxu0 %v2431
        %v2956 = vpop.f32.mrb[0].mxu0
        %v2957 = vadd.f32 %v2860, %v2956
        %v2958 = vpop.f32.mrb[0].mxu0
        %v2959 = vpop.f32.mrb[0].mxu0
        %v2960 = vadd.f32 %v2863, %v2959
        %v2961 = vpop.f32.mrb[0].mxu0
        %2962 = vmatprep.mubr.bf16.mxu0 0
        %2963 = vmatmul.mubr.bf16.gmra.mrb[0].mxu0 %v2462
        %v2964 = vpop.f32.mrb[0].mxu0
        %v2965 = vadd.f32 %v2868, %v2964
        %v2966 = vpop.f32.mrb[0].mxu0
        %v2967 = vpop.f32.mrb[0].mxu0
        %v2968 = vadd.f32 %v2871, %v2967
        %v2969 = vpop.f32.mrb[0].mxu0
        %2970 = vmatprep.mubr.bf16.mxu0 0
        %2971 = vmatmul.mubr.bf16.gmra.mrb[0].mxu0 %v2493
        %v2972 = vpop.f32.mrb[0].mxu0
        %v2973 = vadd.f32 %v2876, %v2972
        %v2974 = vpop.f32.mrb[0].mxu0
        %v2975 = vpop.f32.mrb[0].mxu0
        %v2976 = vadd.f32 %v2879, %v2975
        %v2977 = vpop.f32.mrb[0].mxu0
        %2978 = vmatprep.mubr.bf16.mxu0 0
        %2979 = vmatmul.mubr.bf16.gmra.mrb[0].mxu0 %v2596
        %v2980 = vpop.f32.mrb[0].mxu0
        %v2981 = vadd.f32 %v2884, %v2980
        %v2982 = vpop.f32.mrb[0].mxu0
        %v2983 = vpop.f32.mrb[0].mxu0
        %v2984 = vadd.f32 %v2887, %v2983
        %v2985 = vpop.f32.mrb[0].mxu0
        %2986 = vdwg.mxu0
        %v3035 = vunpack.c.l.b16 %v2518
        %v3036 = vunpack.c.l.b16 %v2519
        %v3037 = vunpack.c.l.b16 %v2520
        %v3038 = vunpack.c.l.b16 %v2521
        %v3039 = vunpack.c.l.b16 %v2522
        %v3040 = vunpack.c.l.b16 %v2523
        %v3041 = vunpack.c.l.b16 %v2524
        %v3042 = vunpack.c.l.b16 %v2525
        %v3043 = vunpack.c.l.b16 %v2526
        %v3044 = vunpack.c.l.b16 %v2527
        %v3045 = vunpack.c.l.b16 %v2528
        %v3046 = vunpack.c.l.b16 %v2529
        %v3047 = vunpack.c.l.b16 %v2530
        %v3048 = vunpack.c.l.b16 %v2531
        %v3049 = vunpack.c.l.b16 %v2532
        %v3050 = vunpack.c.l.b16 %v2533
        %v3051 = vunpack.c.l.b16 %v2534
        %v3052 = vunpack.c.l.b16 %v2535
        %v3053 = vunpack.c.l.b16 %v2536
        %v3054 = vunpack.c.l.b16 %v2537
        %v3055 = vunpack.c.l.b16 %v2538
        %v3056 = vunpack.c.l.b16 %v2539
        %v3057 = vunpack.c.l.b16 %v2540
        %v3058 = vunpack.c.l.b16 %v2541
        %v3059 = vunpack.c.l.b16 %v2542
        %v3060 = vunpack.c.l.b16 %v2543
        %v3061 = vunpack.c.l.b16 %v2544
        %v3062 = vunpack.c.l.b16 %v2545
        %v3063 = vunpack.c.l.b16 %v2546
        %v3064 = vunpack.c.l.b16 %v2547
        %v3065 = vunpack.c.l.b16 %v2548
        %v3066 = vunpack.c.l.b16 %v2549
        %v3067 = vunpack.c.l.b16 %v2550
        %v3068 = vunpack.c.l.b16 %v2551
        %v3069 = vunpack.c.l.b16 %v2552
        %v3070 = vunpack.c.l.b16 %v2553
        %v3071 = vunpack.c.l.b16 %v2554
        %v3072 = vunpack.c.l.b16 %v2555
        %v3073 = vunpack.c.l.b16 %v2556
        %v3074 = vunpack.c.l.b16 %v2557
        %v3075 = vunpack.c.l.b16 %v2558
        %v3076 = vunpack.c.l.b16 %v2559
        %v3077 = vunpack.c.l.b16 %v2560
        %v3078 = vunpack.c.l.b16 %v2561
        %v3079 = vunpack.c.l.b16 %v2562
        %v3080 = vunpack.c.l.b16 %v2563
        %v3081 = vunpack.c.l.b16 %v2564
        %v3082 = vunpack.c.l.b16 %v2565
        %v3083 = vpack.c.b16 %v3036, %v3035
        %v3084 = vpack.c.b16 %v3038, %v3037
        %v3085 = vpack.c.b16 %v3040, %v3039
        %v3086 = vpack.c.b16 %v3042, %v3041
        %v3087 = vpack.c.b16 %v3044, %v3043
        %v3088 = vpack.c.b16 %v3046, %v3045
        %v3089 = vpack.c.b16 %v3048, %v3047
        %v3090 = vpack.c.b16 %v3050, %v3049
        %v3091 = vpack.c.b16 %v3052, %v3051
        %v3092 = vpack.c.b16 %v3054, %v3053
        %v3093 = vpack.c.b16 %v3056, %v3055
        %v3094 = vpack.c.b16 %v3058, %v3057
        %v3095 = vpack.c.b16 %v3060, %v3059
        %v3096 = vpack.c.b16 %v3062, %v3061
        %v3097 = vpack.c.b16 %v3064, %v3063
        %v3098 = vpack.c.b16 %v3066, %v3065
        %v3099 = vpack.c.b16 %v3068, %v3067
        %v3100 = vpack.c.b16 %v3070, %v3069
        %v3101 = vpack.c.b16 %v3072, %v3071
        %v3102 = vpack.c.b16 %v3074, %v3073
        %v3103 = vpack.c.b16 %v3076, %v3075
        %v3104 = vpack.c.b16 %v3078, %v3077
        %v3105 = vpack.c.b16 %v3080, %v3079
        %v3106 = vpack.c.b16 %v3082, %v3081
        %3131 = vmatprep.subr.bf16.mxu0 0
        %3132 = vmatpush1.bf16.msra.mxu0 %v3083
        %3133 = vmatprep.subr.bf16.mxu0 0
        %3134 = vmatpush1.bf16.msra.mxu0 %v3084
        %3135 = vmatprep.subr.bf16.mxu0 0
        %3136 = vmatpush1.bf16.msra.mxu0 %v3085
        %3137 = vmatprep.subr.bf16.mxu0 0
        %3138 = vmatpush1.bf16.msra.mxu0 %v3086
        %3139 = vmatprep.subr.bf16.mxu0 0
        %3140 = vmatpush1.bf16.msra.mxu0 %v3087
        %3141 = vmatprep.subr.bf16.mxu0 0
        %3142 = vmatpush1.bf16.msra.mxu0 %v3088
        %3143 = vmatprep.subr.bf16.mxu0 0
        %3144 = vmatpush1.bf16.msra.mxu0 %v3089
        %3145 = vmatprep.subr.bf16.mxu0 0
        %3146 = vmatpush1.bf16.msra.mxu0 %v3090
        %3147 = vmatprep.subr.bf16.mxu0 0
        %3148 = vmatpush1.bf16.msra.mxu0 %v3091
        %3149 = vmatprep.subr.bf16.mxu0 0
        %3150 = vmatpush1.bf16.msra.mxu0 %v3092
        %3151 = vmatprep.subr.bf16.mxu0 0
        %3152 = vmatpush1.bf16.msra.mxu0 %v3093
        %3153 = vmatprep.subr.bf16.mxu0 0
        %3154 = vmatpush1.bf16.msra.mxu0 %v3094
        %3155 = vmatprep.subr.bf16.mxu0 0
        %3156 = vmatpush1.bf16.msra.mxu0 %v3095
        %3157 = vmatprep.subr.bf16.mxu0 0
        %3158 = vmatpush1.bf16.msra.mxu0 %v3096
        %3159 = vmatprep.subr.bf16.mxu0 0
        %3160 = vmatpush1.bf16.msra.mxu0 %v3097
        %3161 = vmatprep.subr.bf16.mxu0 0
        %3162 = vmatpush1.bf16.msra.mxu0 %v3098
        %3163 = vmatprep.mubr.bf16.mxu0 %v2264
        %3164 = vmatmul.mubr.bf16.gmra.mrb[0].mxu0 %v2252
        %v3165 = vpop.f32.mrb[0].mxu0
        %v3166 = vadd.f32 %v2925, %v3165
        %v3167 = vpop.f32.mrb[0].mxu0
        %v3168 = vpop.f32.mrb[0].mxu0
        %v3169 = vadd.f32 %v2928, %v3168
        %v3170 = vpop.f32.mrb[0].mxu0
        %3171 = vmatprep.mubr.bf16.mxu0 %v2295
        %3172 = vmatmul.mubr.bf16.gmra.mrb[0].mxu0 %v2283
        %v3173 = vpop.f32.mrb[0].mxu0
        %v3174 = vadd.f32 %v2933, %v3173
        %v3175 = vpop.f32.mrb[0].mxu0
        %v3176 = vpop.f32.mrb[0].mxu0
        %v3177 = vadd.f32 %v2936, %v3176
        %v3178 = vpop.f32.mrb[0].mxu0
        %3179 = vmatprep.mubr.bf16.mxu0 %v2326
        %3180 = vmatmul.mubr.bf16.gmra.mrb[0].mxu0 %v2314
        %v3181 = vpop.f32.mrb[0].mxu0
        %v3182 = vadd.f32 %v2941, %v3181
        %v3183 = vpop.f32.mrb[0].mxu0
        %v3184 = vpop.f32.mrb[0].mxu0
        %v3185 = vadd.f32 %v2944, %v3184
        %v3186 = vpop.f32.mrb[0].mxu0
        %3187 = vmatprep.mubr.bf16.mxu0 %v2357
        %3188 = vmatmul.mubr.bf16.gmra.mrb[0].mxu0 %v2345
        %v3189 = vpop.f32.mrb[0].mxu0
        %v3190 = vadd.f32 %v2949, %v3189
        %v3191 = vpop.f32.mrb[0].mxu0
        %v3192 = vpop.f32.mrb[0].mxu0
        %v3193 = vadd.f32 %v2952, %v3192
        %v3194 = vpop.f32.mrb[0].mxu0
        %3195 = vmatprep.mubr.bf16.mxu0 %v2388
        %3196 = vmatmul.mubr.bf16.gmra.mrb[0].mxu0 %v2376
        %v3197 = vpop.f32.mrb[0].mxu0
        %v3198 = vadd.f32 %v2957, %v3197
        %v3199 = vpop.f32.mrb[0].mxu0
        %v3200 = vpop.f32.mrb[0].mxu0
        %v3201 = vadd.f32 %v2960, %v3200
        %v3202 = vpop.f32.mrb[0].mxu0
        %3203 = vmatprep.mubr.bf16.mxu0 %v2419
        %3204 = vmatmul.mubr.bf16.gmra.mrb[0].mxu0 %v2407
        %v3205 = vpop.f32.mrb[0].mxu0
        %v3206 = vadd.f32 %v2965, %v3205
        %v3207 = vpop.f32.mrb[0].mxu0
        %v3208 = vpop.f32.mrb[0].mxu0
        %v3209 = vadd.f32 %v2968, %v3208
        %v3210 = vpop.f32.mrb[0].mxu0
        %3211 = vmatprep.mubr.bf16.mxu0 %v2450
        %3212 = vmatmul.mubr.bf16.gmra.mrb[0].mxu0 %v2438
        %v3213 = vpop.f32.mrb[0].mxu0
        %v3214 = vadd.f32 %v2973, %v3213
        %v3215 = vpop.f32.mrb[0].mxu0
        %v3216 = vpop.f32.mrb[0].mxu0
        %v3217 = vadd.f32 %v2976, %v3216
        %v3218 = vpop.f32.mrb[0].mxu0
        %3219 = vmatprep.mubr.bf16.mxu0 %v2481
        %3220 = vmatmul.mubr.bf16.gmra.mrb[0].mxu0 %v2469
        %v3221 = vpop.f32.mrb[0].mxu0
        %v3222 = vadd.f32 %v2981, %v3221
        %v3223 = vpop.f32.mrb[0].mxu0
        %v3224 = vpop.f32.mrb[0].mxu0
        %v3225 = vadd.f32 %v2984, %v3224
        %v3226 = vpop.f32.mrb[0].mxu0
        %3227 = vdwg.mxu0
        %3228 = vmatprep.subr.bf16.mxu0 0
        %3229 = vmatpush1.bf16.msra.mxu0 %v3099
        %3230 = vmatprep.subr.bf16.mxu0 0
        %3231 = vmatpush1.bf16.msra.mxu0 %v3100
        %3232 = vmatprep.subr.bf16.mxu0 0
        %3233 = vmatpush1.bf16.msra.mxu0 %v3101
        %3234 = vmatprep.subr.bf16.mxu0 0
        %3235 = vmatpush1.bf16.msra.mxu0 %v3102
        %3236 = vmatprep.subr.bf16.mxu0 0
        %3237 = vmatpush1.bf16.msra.mxu0 %v3103
        %3238 = vmatprep.subr.bf16.mxu0 0
        %3239 = vmatpush1.bf16.msra.mxu0 %v3104
        %3240 = vmatprep.subr.bf16.mxu0 0
        %3241 = vmatpush1.bf16.msra.mxu0 %v3105
        %3242 = vmatprep.subr.bf16.mxu0 0
        %3243 = vmatpush1.bf16.msra.mxu0 %v3106
        %3244 = vmatprep.subr.bf16.mxu0 0
        %3245 = vmatpush1.bf16.msra.mxu0 0
        %3246 = vmatprep.subr.bf16.mxu0 0
        %3247 = vmatpush1.bf16.msra.mxu0 0
        %3248 = vmatprep.subr.bf16.mxu0 0
        %3249 = vmatpush1.bf16.msra.mxu0 0
        %3250 = vmatprep.subr.bf16.mxu0 0
        %3251 = vmatpush1.bf16.msra.mxu0 0
        %3252 = vmatprep.subr.bf16.mxu0 0
        %3253 = vmatpush1.bf16.msra.mxu0 0
        %3254 = vmatprep.subr.bf16.mxu0 0
        %3255 = vmatpush1.bf16.msra.mxu0 0
        %3256 = vmatprep.subr.bf16.mxu0 0
        %3257 = vmatpush1.bf16.msra.mxu0 0
        %3258 = vmatprep.subr.bf16.mxu0 0
        %3259 = vmatpush1.bf16.msra.mxu0 0
        %3260 = vmatprep.mubr.bf16.mxu0 0
        %3261 = vmatmul.mubr.bf16.gmra.mrb[0].mxu0 %v2276
        %v3262 = vpop.f32.mrb[0].mxu0
        %v3263 = vadd.f32 %v3166, %v3262
        %v3264 = vpop.f32.mrb[0].mxu0
        %v3265 = vpop.f32.mrb[0].mxu0
        %v3266 = vadd.f32 %v3169, %v3265
        %v3267 = vpop.f32.mrb[0].mxu0
        %3268 = vmatprep.mubr.bf16.mxu0 0
        %3269 = vmatmul.mubr.bf16.gmra.mrb[0].mxu0 %v2307
        %v3270 = vpop.f32.mrb[0].mxu0
        %v3271 = vadd.f32 %v3174, %v3270
        %v3272 = vpop.f32.mrb[0].mxu0
        %v3273 = vpop.f32.mrb[0].mxu0
        %v3274 = vadd.f32 %v3177, %v3273
        %v3275 = vpop.f32.mrb[0].mxu0
        %3276 = vmatprep.mubr.bf16.mxu0 0
        %3277 = vmatmul.mubr.bf16.gmra.mrb[0].mxu0 %v2338
        %v3278 = vpop.f32.mrb[0].mxu0
        %v3279 = vadd.f32 %v3182, %v3278
        %v3280 = vpop.f32.mrb[0].mxu0
        %v3281 = vpop.f32.mrb[0].mxu0
        %v3282 = vadd.f32 %v3185, %v3281
        %v3283 = vpop.f32.mrb[0].mxu0
        %3284 = vmatprep.mubr.bf16.mxu0 0
        %3285 = vmatmul.mubr.bf16.gmra.mrb[0].mxu0 %v2369
        %v3286 = vpop.f32.mrb[0].mxu0
        %v3287 = vadd.f32 %v3190, %v3286
        %v3288 = vpop.f32.mrb[0].mxu0
        %v3289 = vpop.f32.mrb[0].mxu0
        %v3290 = vadd.f32 %v3193, %v3289
        %v3291 = vpop.f32.mrb[0].mxu0
        %3292 = vmatprep.mubr.bf16.mxu0 0
        %3293 = vmatmul.mubr.bf16.gmra.mrb[0].mxu0 %v2400
        %v3294 = vpop.f32.mrb[0].mxu0
        %v3295 = vadd.f32 %v3198, %v3294
        %v3296 = vpop.f32.mrb[0].mxu0
        %v3297 = vpop.f32.mrb[0].mxu0
        %v3298 = vadd.f32 %v3201, %v3297
        %v3299 = vpop.f32.mrb[0].mxu0
        %3300 = vmatprep.mubr.bf16.mxu0 0
        %3301 = vmatmul.mubr.bf16.gmra.mrb[0].mxu0 %v2431
        %v3302 = vpop.f32.mrb[0].mxu0
        %v3303 = vadd.f32 %v3206, %v3302
        %v3304 = vpop.f32.mrb[0].mxu0
        %v3305 = vpop.f32.mrb[0].mxu0
        %v3306 = vadd.f32 %v3209, %v3305
        %v3307 = vpop.f32.mrb[0].mxu0
        %3308 = vmatprep.mubr.bf16.mxu0 0
        %3309 = vmatmul.mubr.bf16.gmra.mrb[0].mxu0 %v2462
        %v3310 = vpop.f32.mrb[0].mxu0
        %v3311 = vadd.f32 %v3214, %v3310
        %v3312 = vpop.f32.mrb[0].mxu0
        %v3313 = vpop.f32.mrb[0].mxu0
        %v3314 = vadd.f32 %v3217, %v3313
        %v3315 = vpop.f32.mrb[0].mxu0
        %3316 = vmatprep.mubr.bf16.mxu0 0
        %3317 = vmatmul.mubr.bf16.gmra.mrb[0].mxu0 %v2493
        %v3318 = vpop.f32.mrb[0].mxu0
        %v3319 = vadd.f32 %v3222, %v3318
        %v3320 = vpop.f32.mrb[0].mxu0
        %v3321 = vpop.f32.mrb[0].mxu0
        %v3322 = vadd.f32 %v3225, %v3321
        %v3323 = vpop.f32.mrb[0].mxu0
        %3324 = vdwg.mxu0
        %v3326 = vshrl.u32 %v2104, 16
        %v3328 = vrot.slane %v3326, 7
        %v3329 = vrot.slane %v2193, 7
        %v3330 = vor.u32 %v3329, %v2190
        %v3331 = vsel %vm2019, %v3328, %v3330
        %v3333 = vshrl.u32 %v2192, 16
        %v3335 = vrot.slane %v3333, 7
        %v3337 = vshrl.u32 %v2195, 16
        %v3339 = vrot.slane %v3337, 7
        %v3340 = vshll.u32 %v2195, 16
        %v3342 = vor.u32 %v3339, %v3340
        %v3343 = vsel %vm2019, %v3335, %v3342
        %v3345 = vshrl.u32 %v2243, 16
        %v3347 = vrot.slane %v3345, 7
        %v3349 = vshrl.u32 %v2245, 16
        %v3351 = vrot.slane %v3349, 7
        %v3352 = vshll.u32 %v2245, 16
        %v3354 = vor.u32 %v3351, %v3352
        %v3355 = vsel %vm2019, %v3347, %v3354
        %s3359 = scalar_lea.vmem [#allocation3], 384
        %v3360 = vld [vmem:[%s3359] sm:$0xf]
        %v3361 = vld [vmem:[%s3359 + $0x4] sm:$0xf]
        %v3362 = vld [vmem:[%s3359 + $0x8] sm:$0xf]
        %v3363 = vld [vmem:[%s3359 + $0xc] sm:$0xf]
        %v3364 = vld [vmem:[%s3359 + $0x10] sm:$0xf]
        %v3365 = vld [vmem:[%s3359 + $0x14] sm:$0xf]
        %v3366 = vld [vmem:[%s3359 + $0x18] sm:$0xf]
        %v3367 = vld [vmem:[%s3359 + $0x1c] sm:$0xf]
        %v3368 = vld [vmem:[%s3359 + $0x20] sm:$0xf]
        %v3369 = vld [vmem:[%s3359 + $0x24] sm:$0xf]
        %v3370 = vld [vmem:[%s3359 + $0x28] sm:$0xf]
        %v3371 = vld [vmem:[%s3359 + $0x2c] sm:$0xf]
        %v3372 = vld [vmem:[%s3359 + $0x30] sm:$0xf]
        %v3373 = vld [vmem:[%s3359 + $0x34] sm:$0xf]
        %v3374 = vld [vmem:[%s3359 + $0x38] sm:$0xf]
        %v3375 = vld [vmem:[%s3359 + $0x3c] sm:$0xf]
        %v3376 = vld [vmem:[%s3359 + $0x40] sm:$0xf]
        %v3377 = vld [vmem:[%s3359 + $0x44] sm:$0xf]
        %v3378 = vld [vmem:[%s3359 + $0x48] sm:$0xf]
        %v3379 = vld [vmem:[%s3359 + $0x4c] sm:$0xf]
        %v3380 = vld [vmem:[%s3359 + $0x50] sm:$0xf]
        %v3381 = vld [vmem:[%s3359 + $0x54] sm:$0xf]
        %v3382 = vld [vmem:[%s3359 + $0x58] sm:$0xf]
        %v3383 = vld [vmem:[%s3359 + $0x5c] sm:$0xf]
        %v3384 = vld [vmem:[%s3359 + $0x60] sm:$0xf]
        %v3385 = vld [vmem:[%s3359 + $0x64] sm:$0xf]
        %v3386 = vld [vmem:[%s3359 + $0x68] sm:$0xf]
        %v3387 = vld [vmem:[%s3359 + $0x6c] sm:$0xf]
        %v3388 = vld [vmem:[%s3359 + $0x70] sm:$0xf]
        %v3389 = vld [vmem:[%s3359 + $0x74] sm:$0xf]
        %v3390 = vld [vmem:[%s3359 + $0x78] sm:$0xf]
        %v3391 = vld [vmem:[%s3359 + $0x7c] sm:$0xf]
        %v3392 = vld [vmem:[%s3359 + $0x80] sm:$0xf]
        %v3393 = vld [vmem:[%s3359 + $0x84] sm:$0xf]
        %v3394 = vld [vmem:[%s3359 + $0x88] sm:$0xf]
        %v3395 = vld [vmem:[%s3359 + $0x8c] sm:$0xf]
        %v3396 = vld [vmem:[%s3359 + $0x90] sm:$0xf]
        %v3397 = vld [vmem:[%s3359 + $0x94] sm:$0xf]
        %v3398 = vld [vmem:[%s3359 + $0x98] sm:$0xf]
        %v3399 = vld [vmem:[%s3359 + $0x9c] sm:$0xf]
        %v3400 = vld [vmem:[%s3359 + $0xa0] sm:$0xf]
        %v3401 = vld [vmem:[%s3359 + $0xa4] sm:$0xf]
        %v3402 = vld [vmem:[%s3359 + $0xa8] sm:$0xf]
        %v3403 = vld [vmem:[%s3359 + $0xac] sm:$0xf]
        %v3404 = vld [vmem:[%s3359 + $0xb0] sm:$0xf]
        %v3405 = vld [vmem:[%s3359 + $0xb4] sm:$0xf]
        %v3406 = vld [vmem:[%s3359 + $0xb8] sm:$0xf]
        %v3407 = vld [vmem:[%s3359 + $0xbc] sm:$0xf]
        %v3456 = vunpack.c.l.b16 %v3360
        %v3457 = vunpack.c.l.b16 %v3361
        %v3458 = vunpack.c.l.b16 %v3362
        %v3459 = vunpack.c.l.b16 %v3363
        %v3460 = vunpack.c.l.b16 %v3364
        %v3461 = vunpack.c.l.b16 %v3365
        %v3462 = vunpack.c.l.b16 %v3366
        %v3463 = vunpack.c.l.b16 %v3367
        %v3464 = vunpack.c.l.b16 %v3368
        %v3465 = vunpack.c.l.b16 %v3369
        %v3466 = vunpack.c.l.b16 %v3370
        %v3467 = vunpack.c.l.b16 %v3371
        %v3468 = vunpack.c.l.b16 %v3372
        %v3469 = vunpack.c.l.b16 %v3373
        %v3470 = vunpack.c.l.b16 %v3374
        %v3471 = vunpack.c.l.b16 %v3375
        %v3472 = vunpack.c.l.b16 %v3376
        %v3473 = vunpack.c.l.b16 %v3377
        %v3474 = vunpack.c.l.b16 %v3378
        %v3475 = vunpack.c.l.b16 %v3379
        %v3476 = vunpack.c.l.b16 %v3380
        %v3477 = vunpack.c.l.b16 %v3381
        %v3478 = vunpack.c.l.b16 %v3382
        %v3479 = vunpack.c.l.b16 %v3383
        %v3480 = vunpack.c.l.b16 %v3384
        %v3481 = vunpack.c.l.b16 %v3385
        %v3482 = vunpack.c.l.b16 %v3386
        %v3483 = vunpack.c.l.b16 %v3387
        %v3484 = vunpack.c.l.b16 %v3388
        %v3485 = vunpack.c.l.b16 %v3389
        %v3486 = vunpack.c.l.b16 %v3390
        %v3487 = vunpack.c.l.b16 %v3391
        %v3488 = vunpack.c.l.b16 %v3392
        %v3489 = vunpack.c.l.b16 %v3393
        %v3490 = vunpack.c.l.b16 %v3394
        %v3491 = vunpack.c.l.b16 %v3395
        %v3492 = vunpack.c.l.b16 %v3396
        %v3493 = vunpack.c.l.b16 %v3397
        %v3494 = vunpack.c.l.b16 %v3398
        %v3495 = vunpack.c.l.b16 %v3399
        %v3496 = vunpack.c.l.b16 %v3400
        %v3497 = vunpack.c.l.b16 %v3401
        %v3498 = vunpack.c.l.b16 %v3402
        %v3499 = vunpack.c.l.b16 %v3403
        %v3500 = vunpack.c.l.b16 %v3404
        %v3501 = vunpack.c.l.b16 %v3405
        %v3502 = vunpack.c.l.b16 %v3406
        %v3503 = vunpack.c.l.b16 %v3407
        %v3504 = vpack.c.b16 %v3457, %v3456
        %v3505 = vpack.c.b16 %v3459, %v3458
        %v3506 = vpack.c.b16 %v3461, %v3460
        %v3507 = vpack.c.b16 %v3463, %v3462
        %v3508 = vpack.c.b16 %v3465, %v3464
        %v3509 = vpack.c.b16 %v3467, %v3466
        %v3510 = vpack.c.b16 %v3469, %v3468
        %v3511 = vpack.c.b16 %v3471, %v3470
        %v3512 = vpack.c.b16 %v3473, %v3472
        %v3513 = vpack.c.b16 %v3475, %v3474
        %v3514 = vpack.c.b16 %v3477, %v3476
        %v3515 = vpack.c.b16 %v3479, %v3478
        %v3516 = vpack.c.b16 %v3481, %v3480
        %v3517 = vpack.c.b16 %v3483, %v3482
        %v3518 = vpack.c.b16 %v3485, %v3484
        %v3519 = vpack.c.b16 %v3487, %v3486
        %v3520 = vpack.c.b16 %v3489, %v3488
        %v3521 = vpack.c.b16 %v3491, %v3490
        %v3522 = vpack.c.b16 %v3493, %v3492
        %v3523 = vpack.c.b16 %v3495, %v3494
        %v3524 = vpack.c.b16 %v3497, %v3496
        %v3525 = vpack.c.b16 %v3499, %v3498
        %v3526 = vpack.c.b16 %v3501, %v3500
        %v3527 = vpack.c.b16 %v3503, %v3502
        %3552 = vmatprep.subr.bf16.mxu0 0
        %3553 = vmatpush1.bf16.msra.mxu0 %v3504
        %3554 = vmatprep.subr.bf16.mxu0 0
        %3555 = vmatpush1.bf16.msra.mxu0 %v3505
        %3556 = vmatprep.subr.bf16.mxu0 0
        %3557 = vmatpush1.bf16.msra.mxu0 %v3506
        %3558 = vmatprep.subr.bf16.mxu0 0
        %3559 = vmatpush1.bf16.msra.mxu0 %v3507
        %3560 = vmatprep.subr.bf16.mxu0 0
        %3561 = vmatpush1.bf16.msra.mxu0 %v3508
        %3562 = vmatprep.subr.bf16.mxu0 0
        %3563 = vmatpush1.bf16.msra.mxu0 %v3509
        %3564 = vmatprep.subr.bf16.mxu0 0
        %3565 = vmatpush1.bf16.msra.mxu0 %v3510
        %3566 = vmatprep.subr.bf16.mxu0 0
        %3567 = vmatpush1.bf16.msra.mxu0 %v3511
        %3568 = vmatprep.subr.bf16.mxu0 0
        %3569 = vmatpush1.bf16.msra.mxu0 %v3512
        %3570 = vmatprep.subr.bf16.mxu0 0
        %3571 = vmatpush1.bf16.msra.mxu0 %v3513
        %3572 = vmatprep.subr.bf16.mxu0 0
        %3573 = vmatpush1.bf16.msra.mxu0 %v3514
        %3574 = vmatprep.subr.bf16.mxu0 0
        %3575 = vmatpush1.bf16.msra.mxu0 %v3515
        %3576 = vmatprep.subr.bf16.mxu0 0
        %3577 = vmatpush1.bf16.msra.mxu0 %v3516
        %3578 = vmatprep.subr.bf16.mxu0 0
        %3579 = vmatpush1.bf16.msra.mxu0 %v3517
        %3580 = vmatprep.subr.bf16.mxu0 0
        %3581 = vmatpush1.bf16.msra.mxu0 %v3518
        %3582 = vmatprep.subr.bf16.mxu0 0
        %3583 = vmatpush1.bf16.msra.mxu0 %v3519
        %3584 = vmatprep.mubr.bf16.mxu0 %v2326
        %3585 = vmatmul.mubr.bf16.gmra.mrb[0].mxu0 %v2314
        %v3586 = vpop.f32.mrb[0].mxu0
        %v3587 = vadd.f32 0.0, %v3586
        %v3588 = vpop.f32.mrb[0].mxu0
        %v3589 = vpop.f32.mrb[0].mxu0
        %v3590 = vadd.f32 0.0, %v3589
        %v3591 = vpop.f32.mrb[0].mxu0
        %3592 = vmatprep.mubr.bf16.mxu0 %v2357
        %3593 = vmatmul.mubr.bf16.gmra.mrb[0].mxu0 %v2345
        %v3594 = vpop.f32.mrb[0].mxu0
        %v3595 = vadd.f32 0.0, %v3594
        %v3596 = vpop.f32.mrb[0].mxu0
        %v3597 = vpop.f32.mrb[0].mxu0
        %v3598 = vadd.f32 0.0, %v3597
        %v3599 = vpop.f32.mrb[0].mxu0
        %3600 = vmatprep.mubr.bf16.mxu0 %v2388
        %3601 = vmatmul.mubr.bf16.gmra.mrb[0].mxu0 %v2376
        %v3602 = vpop.f32.mrb[0].mxu0
        %v3603 = vadd.f32 0.0, %v3602
        %v3604 = vpop.f32.mrb[0].mxu0
        %v3605 = vpop.f32.mrb[0].mxu0
        %v3606 = vadd.f32 0.0, %v3605
        %v3607 = vpop.f32.mrb[0].mxu0
        %3608 = vmatprep.mubr.bf16.mxu0 %v2419
        %3609 = vmatmul.mubr.bf16.gmra.mrb[0].mxu0 %v2407
        %v3610 = vpop.f32.mrb[0].mxu0
        %v3611 = vadd.f32 0.0, %v3610
        %v3612 = vpop.f32.mrb[0].mxu0
        %v3613 = vpop.f32.mrb[0].mxu0
        %v3614 = vadd.f32 0.0, %v3613
        %v3615 = vpop.f32.mrb[0].mxu0
        %3616 = vmatprep.mubr.bf16.mxu0 %v2450
        %3617 = vmatmul.mubr.bf16.gmra.mrb[0].mxu0 %v2438
        %v3618 = vpop.f32.mrb[0].mxu0
        %v3619 = vadd.f32 0.0, %v3618
        %v3620 = vpop.f32.mrb[0].mxu0
        %v3621 = vpop.f32.mrb[0].mxu0
        %v3622 = vadd.f32 0.0, %v3621
        %v3623 = vpop.f32.mrb[0].mxu0
        %3624 = vmatprep.mubr.bf16.mxu0 %v2481
        %3625 = vmatmul.mubr.bf16.gmra.mrb[0].mxu0 %v2469
        %v3626 = vpop.f32.mrb[0].mxu0
        %v3627 = vadd.f32 0.0, %v3626
        %v3628 = vpop.f32.mrb[0].mxu0
        %v3629 = vpop.f32.mrb[0].mxu0
        %v3630 = vadd.f32 0.0, %v3629
        %v3631 = vpop.f32.mrb[0].mxu0
        %3632 = vmatprep.mubr.bf16.mxu0 %v2584
        %3633 = vmatmul.mubr.bf16.gmra.mrb[0].mxu0 %v2572
        %v3634 = vpop.f32.mrb[0].mxu0
        %v3635 = vadd.f32 0.0, %v3634
        %v3636 = vpop.f32.mrb[0].mxu0
        %v3637 = vpop.f32.mrb[0].mxu0
        %v3638 = vadd.f32 0.0, %v3637
        %v3639 = vpop.f32.mrb[0].mxu0
        %3640 = vmatprep.mubr.bf16.mxu0 %v3343
        %3641 = vmatmul.mubr.bf16.gmra.mrb[0].mxu0 %v3331
        %v3642 = vpop.f32.mrb[0].mxu0
        %v3643 = vadd.f32 0.0, %v3642
        %v3644 = vpop.f32.mrb[0].mxu0
        %v3645 = vpop.f32.mrb[0].mxu0
        %v3646 = vadd.f32 0.0, %v3645
        %v3647 = vpop.f32.mrb[0].mxu0
        %3648 = vdwg.mxu0
        %3649 = vmatprep.subr.bf16.mxu0 0
        %3650 = vmatpush1.bf16.msra.mxu0 %v3520
        %3651 = vmatprep.subr.bf16.mxu0 0
        %3652 = vmatpush1.bf16.msra.mxu0 %v3521
        %3653 = vmatprep.subr.bf16.mxu0 0
        %3654 = vmatpush1.bf16.msra.mxu0 %v3522
        %3655 = vmatprep.subr.bf16.mxu0 0
        %3656 = vmatpush1.bf16.msra.mxu0 %v3523
        %3657 = vmatprep.subr.bf16.mxu0 0
        %3658 = vmatpush1.bf16.msra.mxu0 %v3524
        %3659 = vmatprep.subr.bf16.mxu0 0
        %3660 = vmatpush1.bf16.msra.mxu0 %v3525
        %3661 = vmatprep.subr.bf16.mxu0 0
        %3662 = vmatpush1.bf16.msra.mxu0 %v3526
        %3663 = vmatprep.subr.bf16.mxu0 0
        %3664 = vmatpush1.bf16.msra.mxu0 %v3527
        %3665 = vmatprep.subr.bf16.mxu0 0
        %3666 = vmatpush1.bf16.msra.mxu0 0
        %3667 = vmatprep.subr.bf16.mxu0 0
        %3668 = vmatpush1.bf16.msra.mxu0 0
        %3669 = vmatprep.subr.bf16.mxu0 0
        %3670 = vmatpush1.bf16.msra.mxu0 0
        %3671 = vmatprep.subr.bf16.mxu0 0
        %3672 = vmatpush1.bf16.msra.mxu0 0
        %3673 = vmatprep.subr.bf16.mxu0 0
        %3674 = vmatpush1.bf16.msra.mxu0 0
        %3675 = vmatprep.subr.bf16.mxu0 0
        %3676 = vmatpush1.bf16.msra.mxu0 0
        %3677 = vmatprep.subr.bf16.mxu0 0
        %3678 = vmatpush1.bf16.msra.mxu0 0
        %3679 = vmatprep.subr.bf16.mxu0 0
        %3680 = vmatpush1.bf16.msra.mxu0 0
        %3681 = vmatprep.mubr.bf16.mxu0 0
        %3682 = vmatmul.mubr.bf16.gmra.mrb[0].mxu0 %v2338
        %v3683 = vpop.f32.mrb[0].mxu0
        %v3684 = vadd.f32 %v3587, %v3683
        %v3685 = vpop.f32.mrb[0].mxu0
        %v3686 = vpop.f32.mrb[0].mxu0
        %v3687 = vadd.f32 %v3590, %v3686
        %v3688 = vpop.f32.mrb[0].mxu0
        %3689 = vmatprep.mubr.bf16.mxu0 0
        %3690 = vmatmul.mubr.bf16.gmra.mrb[0].mxu0 %v2369
        %v3691 = vpop.f32.mrb[0].mxu0
        %v3692 = vadd.f32 %v3595, %v3691
        %v3693 = vpop.f32.mrb[0].mxu0
        %v3694 = vpop.f32.mrb[0].mxu0
        %v3695 = vadd.f32 %v3598, %v3694
        %v3696 = vpop.f32.mrb[0].mxu0
        %3697 = vmatprep.mubr.bf16.mxu0 0
        %3698 = vmatmul.mubr.bf16.gmra.mrb[0].mxu0 %v2400
        %v3699 = vpop.f32.mrb[0].mxu0
        %v3700 = vadd.f32 %v3603, %v3699
        %v3701 = vpop.f32.mrb[0].mxu0
        %v3702 = vpop.f32.mrb[0].mxu0
        %v3703 = vadd.f32 %v3606, %v3702
        %v3704 = vpop.f32.mrb[0].mxu0
        %3705 = vmatprep.mubr.bf16.mxu0 0
        %3706 = vmatmul.mubr.bf16.gmra.mrb[0].mxu0 %v2431
        %v3707 = vpop.f32.mrb[0].mxu0
        %v3708 = vadd.f32 %v3611, %v3707
        %v3709 = vpop.f32.mrb[0].mxu0
        %v3710 = vpop.f32.mrb[0].mxu0
        %v3711 = vadd.f32 %v3614, %v3710
        %v3712 = vpop.f32.mrb[0].mxu0
        %3713 = vmatprep.mubr.bf16.mxu0 0
        %3714 = vmatmul.mubr.bf16.gmra.mrb[0].mxu0 %v2462
        %v3715 = vpop.f32.mrb[0].mxu0
        %v3716 = vadd.f32 %v3619, %v3715
        %v3717 = vpop.f32.mrb[0].mxu0
        %v3718 = vpop.f32.mrb[0].mxu0
        %v3719 = vadd.f32 %v3622, %v3718
        %v3720 = vpop.f32.mrb[0].mxu0
        %3721 = vmatprep.mubr.bf16.mxu0 0
        %3722 = vmatmul.mubr.bf16.gmra.mrb[0].mxu0 %v2493
        %v3723 = vpop.f32.mrb[0].mxu0
        %v3724 = vadd.f32 %v3627, %v3723
        %v3725 = vpop.f32.mrb[0].mxu0
        %v3726 = vpop.f32.mrb[0].mxu0
        %v3727 = vadd.f32 %v3630, %v3726
        %v3728 = vpop.f32.mrb[0].mxu0
        %3729 = vmatprep.mubr.bf16.mxu0 0
        %3730 = vmatmul.mubr.bf16.gmra.mrb[0].mxu0 %v2596
        %v3731 = vpop.f32.mrb[0].mxu0
        %v3732 = vadd.f32 %v3635, %v3731
        %v3733 = vpop.f32.mrb[0].mxu0
        %v3734 = vpop.f32.mrb[0].mxu0
        %v3735 = vadd.f32 %v3638, %v3734
        %v3736 = vpop.f32.mrb[0].mxu0
        %3737 = vmatprep.mubr.bf16.mxu0 0
        %3738 = vmatmul.mubr.bf16.gmra.mrb[0].mxu0 %v3355
        %v3739 = vpop.f32.mrb[0].mxu0
        %v3740 = vadd.f32 %v3643, %v3739
        %v3741 = vpop.f32.mrb[0].mxu0
        %v3742 = vpop.f32.mrb[0].mxu0
        %v3743 = vadd.f32 %v3646, %v3742
        %v3744 = vpop.f32.mrb[0].mxu0
        %3745 = vdwg.mxu0
        %v3746 = vadd.f32 %v3263, %v3684
        %v3747 = vadd.f32 %v3266, %v3687
        %v3748 = vadd.f32 %v3271, %v3692
        %v3749 = vadd.f32 %v3274, %v3695
        %v3750 = vadd.f32 %v3279, %v3700
        %v3751 = vadd.f32 %v3282, %v3703
        %v3752 = vadd.f32 %v3287, %v3708
        %v3753 = vadd.f32 %v3290, %v3711
        %v3754 = vadd.f32 %v3295, %v3716
        %v3755 = vadd.f32 %v3298, %v3719
        %v3756 = vadd.f32 %v3303, %v3724
        %v3757 = vadd.f32 %v3306, %v3727
        %v3758 = vadd.f32 %v3311, %v3732
        %v3759 = vadd.f32 %v3314, %v3735
        %v3760 = vadd.f32 %v3319, %v3740
        %v3761 = vadd.f32 %v3322, %v3743
        %v3762 = vld [vmem:[%s4] sm:$0x1]
        %v3764 = vlaneseq
        %v3765 = vshrl.u32 %v3764, 7
        %v3766 = vsub.s32 0, %v3765
        %v3767 = vrot.slane %v3762, %v3766
        %v3769 = vadd.f32 %v3746, %v3767
        %v3770 = vadd.f32 %v3747, %v3767
        %v3771 = vadd.f32 %v3748, %v3767
        %v3772 = vadd.f32 %v3749, %v3767
        %v3773 = vadd.f32 %v3750, %v3767
        %v3774 = vadd.f32 %v3751, %v3767
        %v3775 = vadd.f32 %v3752, %v3767
        %v3776 = vadd.f32 %v3753, %v3767
        %v3777 = vadd.f32 %v3754, %v3767
        %v3778 = vadd.f32 %v3755, %v3767
        %v3779 = vadd.f32 %v3756, %v3767
        %v3780 = vadd.f32 %v3757, %v3767
        %v3781 = vadd.f32 %v3758, %v3767
        %v3782 = vadd.f32 %v3759, %v3767
        %v3783 = vadd.f32 %v3760, %v3767
        %v3784 = vadd.f32 %v3761, %v3767
        %vm3785 = vsmask.f32 3328
        %vm3786 = vsmask.f32 7440
        %vm3787 = vmor %vm3785, %vm3786
        %v3789 = vshrl.u32 %v318, 16
        %v3791 = vrot.slane %v3789, 4
        %v3792 = vshll.u32 %v318, 16
        %v3794 = vrot.slane %v3792, 5
        %v3795 = vor.u32 %v3791, %v3794
        %v3796 = vrot.slane %v3795, 4
        %v3798 = vshll.u32 %v319, 16
        %v3800 = vrot.slane %v3798, 5
        %v3801 = vsel %vm3787, %v3796, %v3800
        %v3802 = vshrl.u32 %v319, 16
        %v3804 = vrot.slane %v3802, 4
        %v3805 = vor.u32 %v3804, %v3800
        %v3806 = vrot.slane %v3805, 4
        %v3808 = vshll.u32 %v320, 16
        %v3810 = vrot.slane %v3808, 5
        %v3811 = vsel %vm3787, %v3806, %v3810
        %v3813 = vshrl.u32 %v321, 16
        %v3815 = vrot.slane %v3813, 4
        %v3816 = vshll.u32 %v321, 16
        %v3818 = vrot.slane %v3816, 5
        %v3819 = vor.u32 %v3815, %v3818
        %v3820 = vrot.slane %v3819, 4
        %v3822 = vshll.u32 %v322, 16
        %v3824 = vrot.slane %v3822, 5
        %v3825 = vsel %vm3787, %v3820, %v3824
        %v3826 = vshrl.u32 %v322, 16
        %v3828 = vrot.slane %v3826, 4
        %v3829 = vor.u32 %v3828, %v3824
        %v3830 = vrot.slane %v3829, 4
        %v3832 = vshll.u32 %v323, 16
        %v3834 = vrot.slane %v3832, 5
        %v3835 = vsel %vm3787, %v3830, %v3834
        %v3837 = vshrl.u32 %v324, 16
        %v3839 = vrot.slane %v3837, 4
        %v3840 = vshll.u32 %v324, 16
        %v3842 = vrot.slane %v3840, 5
        %v3843 = vor.u32 %v3839, %v3842
        %v3844 = vrot.slane %v3843, 4
        %v3846 = vshll.u32 %v325, 16
        %v3848 = vrot.slane %v3846, 5
        %v3849 = vsel %vm3787, %v3844, %v3848
        %v3850 = vshrl.u32 %v325, 16
        %v3852 = vrot.slane %v3850, 4
        %v3853 = vor.u32 %v3852, %v3848
        %v3854 = vrot.slane %v3853, 4
        %v3856 = vshll.u32 %v326, 16
        %v3858 = vrot.slane %v3856, 5
        %v3859 = vsel %vm3787, %v3854, %v3858
        %v3861 = vshrl.u32 %v327, 16
        %v3863 = vrot.slane %v3861, 4
        %v3864 = vshll.u32 %v327, 16
        %v3866 = vrot.slane %v3864, 5
        %v3867 = vor.u32 %v3863, %v3866
        %v3868 = vrot.slane %v3867, 4
        %v3870 = vshll.u32 %v328, 16
        %v3872 = vrot.slane %v3870, 5
        %v3873 = vsel %vm3787, %v3868, %v3872
        %v3874 = vshrl.u32 %v328, 16
        %v3876 = vrot.slane %v3874, 4
        %v3877 = vor.u32 %v3876, %v3872
        %v3878 = vrot.slane %v3877, 4
        %v3880 = vshll.u32 %v329, 16
        %v3882 = vrot.slane %v3880, 5
        %v3883 = vsel %vm3787, %v3878, %v3882
        %v3885 = vshrl.u32 %v330, 16
        %v3887 = vrot.slane %v3885, 4
        %v3888 = vshll.u32 %v330, 16
        %v3890 = vrot.slane %v3888, 5
        %v3891 = vor.u32 %v3887, %v3890
        %v3892 = vrot.slane %v3891, 4
        %v3894 = vshll.u32 %v331, 16
        %v3896 = vrot.slane %v3894, 5
        %v3897 = vsel %vm3787, %v3892, %v3896
        %v3898 = vshrl.u32 %v331, 16
        %v3900 = vrot.slane %v3898, 4
        %v3901 = vor.u32 %v3900, %v3896
        %v3902 = vrot.slane %v3901, 4
        %v3904 = vshll.u32 %v332, 16
        %v3906 = vrot.slane %v3904, 5
        %v3907 = vsel %vm3787, %v3902, %v3906
        %v3909 = vshrl.u32 %v333, 16
        %v3911 = vrot.slane %v3909, 4
        %v3912 = vshll.u32 %v333, 16
        %v3914 = vrot.slane %v3912, 5
        %v3915 = vor.u32 %v3911, %v3914
        %v3916 = vrot.slane %v3915, 4
        %v3918 = vshll.u32 %v334, 16
        %v3920 = vrot.slane %v3918, 5
        %v3921 = vsel %vm3787, %v3916, %v3920
        %v3922 = vshrl.u32 %v334, 16
        %v3924 = vrot.slane %v3922, 4
        %v3925 = vor.u32 %v3924, %v3920
        %v3926 = vrot.slane %v3925, 4
        %v3928 = vshll.u32 %v335, 16
        %v3930 = vrot.slane %v3928, 5
        %v3931 = vsel %vm3787, %v3926, %v3930
        %v3933 = vshrl.u32 %v336, 16
        %v3935 = vrot.slane %v3933, 4
        %v3936 = vshll.u32 %v336, 16
        %v3938 = vrot.slane %v3936, 5
        %v3939 = vor.u32 %v3935, %v3938
        %v3940 = vrot.slane %v3939, 4
        %v3942 = vshll.u32 %v337, 16
        %v3944 = vrot.slane %v3942, 5
        %v3945 = vsel %vm3787, %v3940, %v3944
        %v3946 = vshrl.u32 %v337, 16
        %v3948 = vrot.slane %v3946, 4
        %v3949 = vor.u32 %v3948, %v3944
        %v3950 = vrot.slane %v3949, 4
        %v3952 = vshll.u32 %v338, 16
        %v3954 = vrot.slane %v3952, 5
        %v3955 = vsel %vm3787, %v3950, %v3954
        %v3957 = vshrl.u32 %v339, 16
        %v3959 = vrot.slane %v3957, 4
        %v3960 = vshll.u32 %v339, 16
        %v3962 = vrot.slane %v3960, 5
        %v3963 = vor.u32 %v3959, %v3962
        %v3964 = vrot.slane %v3963, 4
        %v3966 = vshll.u32 %v340, 16
        %v3968 = vrot.slane %v3966, 5
        %v3969 = vsel %vm3787, %v3964, %v3968
        %v3970 = vshrl.u32 %v340, 16
        %v3972 = vrot.slane %v3970, 4
        %v3973 = vor.u32 %v3972, %v3968
        %v3974 = vrot.slane %v3973, 4
        %v3976 = vshll.u32 %v341, 16
        %v3978 = vrot.slane %v3976, 5
        %v3979 = vsel %vm3787, %v3974, %v3978
        %v3980 = vld [vmem:[%s5] sm:$0xf]
        %v3981 = vld [vmem:[%s5 + $0x4] sm:$0xf]
        %v3982 = vld [vmem:[%s5 + $0x8] sm:$0xf]
        %v3983 = vld [vmem:[%s5 + $0xc] sm:$0xf]
        %v3984 = vld [vmem:[%s5 + $0x10] sm:$0xf]
        %v3985 = vld [vmem:[%s5 + $0x14] sm:$0xf]
        %v3986 = vld [vmem:[%s5 + $0x18] sm:$0xf]
        %v3987 = vld [vmem:[%s5 + $0x1c] sm:$0xf]
        %v3988 = vld [vmem:[%s5 + $0x20] sm:$0xf]
        %v3989 = vld [vmem:[%s5 + $0x24] sm:$0xf]
        %v3990 = vld [vmem:[%s5 + $0x28] sm:$0xf]
        %v3991 = vld [vmem:[%s5 + $0x2c] sm:$0xf]
        %v3992 = vld [vmem:[%s5 + $0x30] sm:$0xf]
        %v3993 = vld [vmem:[%s5 + $0x34] sm:$0xf]
        %v3994 = vld [vmem:[%s5 + $0x38] sm:$0xf]
        %v3995 = vld [vmem:[%s5 + $0x3c] sm:$0xf]
        %v3996 = vld [vmem:[%s6] sm:$0x1]
        %v3998 = vlaneseq
        %v3999 = vshrl.u32 %v3998, 7
        %v4000 = vsub.s32 0, %v3999
        %v4001 = vrot.slane %v3996, %v4000
        %v4003 = vunpack.c.l.b16 %v3801
        %v4004 = vunpack.c.l.b16 %v3811
        %v4005 = vunpack.c.l.b16 %v3825
        %v4006 = vunpack.c.l.b16 %v3835
        %v4007 = vunpack.c.l.b16 %v3849
        %v4008 = vunpack.c.l.b16 %v3859
        %v4009 = vunpack.c.l.b16 %v3873
        %v4010 = vunpack.c.l.b16 %v3883
        %v4011 = vunpack.c.l.b16 %v3897
        %v4012 = vunpack.c.l.b16 %v3907
        %v4013 = vunpack.c.l.b16 %v3921
        %v4014 = vunpack.c.l.b16 %v3931
        %v4015 = vunpack.c.l.b16 %v3945
        %v4016 = vunpack.c.l.b16 %v3955
        %v4017 = vunpack.c.l.b16 %v3969
        %v4018 = vunpack.c.l.b16 %v3979
        %v4019 = vpack.c.b16 %v4004, %v4003
        %v4020 = vpack.c.b16 %v4006, %v4005
        %v4021 = vpack.c.b16 %v4008, %v4007
        %v4022 = vpack.c.b16 %v4010, %v4009
        %v4023 = vpack.c.b16 %v4012, %v4011
        %v4024 = vpack.c.b16 %v4014, %v4013
        %v4025 = vpack.c.b16 %v4016, %v4015
        %v4026 = vpack.c.b16 %v4018, %v4017
        %v4051 = vunpack.c.l.b16 %v3980
        %v4052 = vunpack.c.l.b16 %v3981
        %v4053 = vunpack.c.l.b16 %v3982
        %v4054 = vunpack.c.l.b16 %v3983
        %v4055 = vunpack.c.l.b16 %v3984
        %v4056 = vunpack.c.l.b16 %v3985
        %v4057 = vunpack.c.l.b16 %v3986
        %v4058 = vunpack.c.l.b16 %v3987
        %v4059 = vunpack.c.l.b16 %v3988
        %v4060 = vunpack.c.l.b16 %v3989
        %v4061 = vunpack.c.l.b16 %v3990
        %v4062 = vunpack.c.l.b16 %v3991
        %v4063 = vunpack.c.l.b16 %v3992
        %v4064 = vunpack.c.l.b16 %v3993
        %v4065 = vunpack.c.l.b16 %v3994
        %v4066 = vunpack.c.l.b16 %v3995
        %v4067 = vpack.c.b16 %v4052, %v4051
        %v4068 = vpack.c.b16 %v4054, %v4053
        %v4069 = vpack.c.b16 %v4056, %v4055
        %v4070 = vpack.c.b16 %v4058, %v4057
        %v4071 = vpack.c.b16 %v4060, %v4059
        %v4072 = vpack.c.b16 %v4062, %v4061
        %v4073 = vpack.c.b16 %v4064, %v4063
        %v4074 = vpack.c.b16 %v4066, %v4065
        %4083 = vmatprep.subr.bf16.mxu0 0
        %4084 = vmatpush1.bf16.msra.mxu0 %v4067
        %4085 = vmatprep.subr.bf16.mxu0 0
        %4086 = vmatpush1.bf16.msra.mxu0 %v4068
        %4087 = vmatprep.subr.bf16.mxu0 0
        %4088 = vmatpush1.bf16.msra.mxu0 %v4069
        %4089 = vmatprep.subr.bf16.mxu0 0
        %4090 = vmatpush1.bf16.msra.mxu0 %v4070
        %4091 = vmatprep.subr.bf16.mxu0 0
        %4092 = vmatpush1.bf16.msra.mxu0 %v4071
        %4093 = vmatprep.subr.bf16.mxu0 0
        %4094 = vmatpush1.bf16.msra.mxu0 %v4072
        %4095 = vmatprep.subr.bf16.mxu0 0
        %4096 = vmatpush1.bf16.msra.mxu0 %v4073
        %4097 = vmatprep.subr.bf16.mxu0 0
        %4098 = vmatpush1.bf16.msra.mxu0 %v4074
        %4099 = vmatprep.subr.bf16.mxu0 0
        %4100 = vmatpush1.bf16.msra.mxu0 0
        %4101 = vmatprep.subr.bf16.mxu0 0
        %4102 = vmatpush1.bf16.msra.mxu0 0
        %4103 = vmatprep.subr.bf16.mxu0 0
        %4104 = vmatpush1.bf16.msra.mxu0 0
        %4105 = vmatprep.subr.bf16.mxu0 0
        %4106 = vmatpush1.bf16.msra.mxu0 0
        %4107 = vmatprep.subr.bf16.mxu0 0
        %4108 = vmatpush1.bf16.msra.mxu0 0
        %4109 = vmatprep.subr.bf16.mxu0 0
        %4110 = vmatpush1.bf16.msra.mxu0 0
        %4111 = vmatprep.subr.bf16.mxu0 0
        %4112 = vmatpush1.bf16.msra.mxu0 0
        %4113 = vmatprep.subr.bf16.mxu0 0
        %4114 = vmatpush1.bf16.msra.mxu0 0
        %4115 = vmatprep.mubr.bf16.mxu0 0
        %4116 = vmatmul.mubr.bf16.gmra.mrb[0].mxu0 %v4019
        %v4117 = vpop.f32.mrb[0].mxu0
        %v4118 = vadd.f32 %v4001, %v4117
        %v4119 = vpop.f32.mrb[0].mxu0
        %v4120 = vpop.f32.mrb[0].mxu0
        %v4121 = vadd.f32 %v4001, %v4120
        %v4122 = vpop.f32.mrb[0].mxu0
        %4123 = vmatprep.mubr.bf16.mxu0 0
        %4124 = vmatmul.mubr.bf16.gmra.mrb[0].mxu0 %v4020
        %v4125 = vpop.f32.mrb[0].mxu0
        %v4126 = vadd.f32 %v4001, %v4125
        %v4127 = vpop.f32.mrb[0].mxu0
        %v4128 = vpop.f32.mrb[0].mxu0
        %v4129 = vadd.f32 %v4001, %v4128
        %v4130 = vpop.f32.mrb[0].mxu0
        %4131 = vmatprep.mubr.bf16.mxu0 0
        %4132 = vmatmul.mubr.bf16.gmra.mrb[0].mxu0 %v4021
        %v4133 = vpop.f32.mrb[0].mxu0
        %v4134 = vadd.f32 %v4001, %v4133
        %v4135 = vpop.f32.mrb[0].mxu0
        %v4136 = vpop.f32.mrb[0].mxu0
        %v4137 = vadd.f32 %v4001, %v4136
        %v4138 = vpop.f32.mrb[0].mxu0
        %4139 = vmatprep.mubr.bf16.mxu0 0
        %4140 = vmatmul.mubr.bf16.gmra.mrb[0].mxu0 %v4022
        %v4141 = vpop.f32.mrb[0].mxu0
        %v4142 = vadd.f32 %v4001, %v4141
        %v4143 = vpop.f32.mrb[0].mxu0
        %v4144 = vpop.f32.mrb[0].mxu0
        %v4145 = vadd.f32 %v4001, %v4144
        %v4146 = vpop.f32.mrb[0].mxu0
        %4147 = vmatprep.mubr.bf16.mxu0 0
        %4148 = vmatmul.mubr.bf16.gmra.mrb[0].mxu0 %v4023
        %v4149 = vpop.f32.mrb[0].mxu0
        %v4150 = vadd.f32 %v4001, %v4149
        %v4151 = vpop.f32.mrb[0].mxu0
        %v4152 = vpop.f32.mrb[0].mxu0
        %v4153 = vadd.f32 %v4001, %v4152
        %v4154 = vpop.f32.mrb[0].mxu0
        %4155 = vmatprep.mubr.bf16.mxu0 0
        %4156 = vmatmul.mubr.bf16.gmra.mrb[0].mxu0 %v4024
        %v4157 = vpop.f32.mrb[0].mxu0
        %v4158 = vadd.f32 %v4001, %v4157
        %v4159 = vpop.f32.mrb[0].mxu0
        %v4160 = vpop.f32.mrb[0].mxu0
        %v4161 = vadd.f32 %v4001, %v4160
        %v4162 = vpop.f32.mrb[0].mxu0
        %4163 = vmatprep.mubr.bf16.mxu0 0
        %4164 = vmatmul.mubr.bf16.gmra.mrb[0].mxu0 %v4025
        %v4165 = vpop.f32.mrb[0].mxu0
        %v4166 = vadd.f32 %v4001, %v4165
        %v4167 = vpop.f32.mrb[0].mxu0
        %v4168 = vpop.f32.mrb[0].mxu0
        %v4169 = vadd.f32 %v4001, %v4168
        %v4170 = vpop.f32.mrb[0].mxu0
        %4171 = vmatprep.mubr.bf16.mxu0 0
        %4172 = vmatmul.mubr.bf16.gmra.mrb[0].mxu0 %v4026
        %v4173 = vpop.f32.mrb[0].mxu0
        %v4174 = vadd.f32 %v4001, %v4173
        %v4175 = vpop.f32.mrb[0].mxu0
        %v4176 = vpop.f32.mrb[0].mxu0
        %v4177 = vadd.f32 %v4001, %v4176
        %v4178 = vpop.f32.mrb[0].mxu0
        %4179 = vdwg.mxu0
        %v4180 = vadd.f32 %v3769, %v4118
        %v4181 = vadd.f32 %v3770, %v4121
        %v4182 = vadd.f32 %v3771, %v4126
        %v4183 = vadd.f32 %v3772, %v4129
        %v4184 = vadd.f32 %v3773, %v4134
        %v4185 = vadd.f32 %v3774, %v4137
        %v4186 = vadd.f32 %v3775, %v4142
        %v4187 = vadd.f32 %v3776, %v4145
        %v4188 = vadd.f32 %v3777, %v4150
        %v4189 = vadd.f32 %v3778, %v4153
        %v4190 = vadd.f32 %v3779, %v4158
        %v4191 = vadd.f32 %v3780, %v4161
        %v4192 = vadd.f32 %v3781, %v4166
        %v4193 = vadd.f32 %v3782, %v4169
        %v4194 = vadd.f32 %v3783, %v4174
        %v4195 = vadd.f32 %v3784, %v4177
        %v4196 = vmax.f32 %v4180, 0.0
        %v4197 = vmax.f32 %v4181, 0.0
        %v4198 = vmax.f32 %v4182, 0.0
        %v4199 = vmax.f32 %v4183, 0.0
        %v4200 = vmax.f32 %v4184, 0.0
        %v4201 = vmax.f32 %v4185, 0.0
        %v4202 = vmax.f32 %v4186, 0.0
        %v4203 = vmax.f32 %v4187, 0.0
        %v4204 = vmax.f32 %v4188, 0.0
        %v4205 = vmax.f32 %v4189, 0.0
        %v4206 = vmax.f32 %v4190, 0.0
        %v4207 = vmax.f32 %v4191, 0.0
        %v4208 = vmax.f32 %v4192, 0.0
        %v4209 = vmax.f32 %v4193, 0.0
        %v4210 = vmax.f32 %v4194, 0.0
        %v4211 = vmax.f32 %v4195, 0.0
        %v4212 = vpack.c.bf16 %v4197, %v4196
        %v4213 = vpack.c.bf16 %v4199, %v4198
        %v4214 = vpack.c.bf16 %v4201, %v4200
        %v4215 = vpack.c.bf16 %v4203, %v4202
        %v4216 = vpack.c.bf16 %v4205, %v4204
        %v4217 = vpack.c.bf16 %v4207, %v4206
        %v4218 = vpack.c.bf16 %v4209, %v4208
        %v4219 = vpack.c.bf16 %v4211, %v4210
        %v4228 = vunpack.c.l.b16 %v4212
        %v4229 = vunpack.c.h.b16 %v4212
        %v4230 = vunpack.c.l.b16 %v4213
        %v4231 = vunpack.c.h.b16 %v4213
        %v4232 = vunpack.c.l.b16 %v4214
        %v4233 = vunpack.c.h.b16 %v4214
        %v4234 = vunpack.c.l.b16 %v4215
        %v4235 = vunpack.c.h.b16 %v4215
        %v4236 = vunpack.c.l.b16 %v4216
        %v4237 = vunpack.c.h.b16 %v4216
        %v4238 = vunpack.c.l.b16 %v4217
        %v4239 = vunpack.c.h.b16 %v4217
        %v4240 = vunpack.c.l.b16 %v4218
        %v4241 = vunpack.c.h.b16 %v4218
        %v4242 = vunpack.c.l.b16 %v4219
        %v4243 = vunpack.c.h.b16 %v4219
        %v4244 = vpack.c.b16 %v4228, %v4228
        %v4245 = vpack.c.b16 %v4229, %v4229
        %v4246 = vpack.c.b16 %v4230, %v4230
        %v4247 = vpack.c.b16 %v4231, %v4231
        %v4248 = vpack.c.b16 %v4232, %v4232
        %v4249 = vpack.c.b16 %v4233, %v4233
        %v4250 = vpack.c.b16 %v4234, %v4234
        %v4251 = vpack.c.b16 %v4235, %v4235
        %v4252 = vpack.c.b16 %v4236, %v4236
        %v4253 = vpack.c.b16 %v4237, %v4237
        %v4254 = vpack.c.b16 %v4238, %v4238
        %v4255 = vpack.c.b16 %v4239, %v4239
        %v4256 = vpack.c.b16 %v4240, %v4240
        %v4257 = vpack.c.b16 %v4241, %v4241
        %v4258 = vpack.c.b16 %v4242, %v4242
        %v4259 = vpack.c.b16 %v4243, %v4243
        %4276 = vst [vmem:[%s300] sm:$0xf] %v4244
        %4277 = vst [vmem:[%s300 + $0x4] sm:$0xf] %v4245
        %4278 = vst [vmem:[%s300 + $0x8] sm:$0xf] %v4246
        %4279 = vst [vmem:[%s300 + $0xc] sm:$0xf] %v4247
        %4280 = vst [vmem:[%s300 + $0x10] sm:$0xf] %v4248
        %4281 = vst [vmem:[%s300 + $0x14] sm:$0xf] %v4249
        %4282 = vst [vmem:[%s300 + $0x18] sm:$0xf] %v4250
        %4283 = vst [vmem:[%s300 + $0x1c] sm:$0xf] %v4251
        %4284 = vst [vmem:[%s300 + $0x20] sm:$0xf] %v4252
        %4285 = vst [vmem:[%s300 + $0x24] sm:$0xf] %v4253
        %4286 = vst [vmem:[%s300 + $0x28] sm:$0xf] %v4254
        %4287 = vst [vmem:[%s300 + $0x2c] sm:$0xf] %v4255
        %4288 = vst [vmem:[%s300 + $0x30] sm:$0xf] %v4256
        %4289 = vst [vmem:[%s300 + $0x34] sm:$0xf] %v4257
        %4290 = vst [vmem:[%s300 + $0x38] sm:$0xf] %v4258
        %4291 = vst [vmem:[%s300 + $0x3c] sm:$0xf] %v4259
        %s4292 = sand.u32 %s196, 1
        %s4293 = scalar_lea.sflag [#allocation5], %s4292
        %s4294 = sand.u32 %s196, 1
        %s4295 = smul.addr %s4294, 64
        %s4296 = scalar_lea.vmem [#allocation6], %s4295
        // Predicated region
        $region61: #{tpu_custom_call.1} parent=47 // pred_check
          %p4297 = pneg %p206
        $region62: #{tpu_custom_call.1} parent=47 // pred_check_branch
          %4299 = sbr.rel (%p4297) target = $region64
        $region63: #{tpu_custom_call.1} parent=47 // pred_region
          %s4300 = smul.u32 8, %s27
          %s4302 = ssub.s32 1024, 1024
          %4303 = vsyncadd %s4293, %s4302
          %s4304 = smul.addr %s4300, 2
          %s4305 = smul.addr %s26, 32
          %s4306 = sadd.s32 %s4304, %s4305
          %s4307 = smul.addr %s4306, 64
          %s4308 = scalar_lea.hbm %s7, %s4307
          %s4309 = sshll.u32 %s4296, 4
          %s4310 = int_to_ptr.vmem [resolvable:$true] %s4309
          %4315 = dma.vmem_to_hbm [thread:$0]  %s4310, 1024, %s4308, %s4293, 64, 64, 4
        $region64: #{tpu_custom_call.1} parent=47 // pred_fallthru
          _
      $region48: #{tpu_custom_call.1} parent=5 // pred_fallthru
        _
      %p4316 = scmp.le.s32.totalorder 2, %s17
      // Predicated region
      $region65: #{tpu_custom_call.1} parent=5 // pred_check
        %p4317 = pneg %p4316
      $region66: #{tpu_custom_call.1} parent=5 // pred_check_branch
        %4319 = sbr.rel (%p4317) target = $region68
      $region67: #{tpu_custom_call.1} parent=5 // pred_region
        %s4320 = ssub.s32 %s17, 2
        // Predicated region
        $region69: #{tpu_custom_call.1} parent=67 // pred_check
          %p4321 = pneg %p212
        $region70: #{tpu_custom_call.1} parent=67 // pred_check_branch
          %4323 = sbr.rel (%p4321) target = $region72
        $region71: #{tpu_custom_call.1} parent=67 // pred_region
          %s4324 = sand.u32 %s197, 1
          %s4325 = scalar_lea.sflag [#allocation5], %s4324
          %s4326 = sand.u32 %s197, 1
          %s4327 = smul.addr %s4326, 64
          %s4328 = scalar_lea.vmem [#allocation6], %s4327
          %4329 = dma.done %s4325, 1024
        $region72: #{tpu_custom_call.1} parent=67 // pred_fallthru
          _
      $region68: #{tpu_custom_call.1} parent=5 // pred_fallthru
        _
    $region6: #{tpu_custom_call.1} parent=1 // loop_footer
      %s21 = sadd.s32 1, %s17
    $region7: #{tpu_custom_call.1} parent=1 // loop_footer_branch
      %16 = sbr.rel target = $region3
    $region8: #{tpu_custom_call.1} parent=1 // loop_exit
      _
    %4330 = vsyncpa [#allocation4], 1
    %s4331 = scalar_lea.sflag [#allocation4], 1
    %4332 = vsyncpa %s4331, 1
    %4333 = vsyncpa [#allocation5], 1
    %s4334 = scalar_lea.sflag [#allocation5], 1
    %4335 = vsyncpa %s4334, 1

</llo_original>
